<compile_context>
chip_gen: v6e
topology: v6e:2x2x1
jax: 0.10.0
libtpu: 0.0.40
codegen_flags: <defaults>
</compile_context>

<pallas_src>
import jax
import jax.numpy as jnp
from jax import lax
from jax.experimental import pallas as pl
from jax.experimental.pallas import tpu as pltpu


# ----------------------------- Pallas kernel --------------------------------

def _conv_act_pool_kernel(x_ref, w_ref, b_ref, o_ref):
    """Fused conv-as-GEMM + bias + LeakyReLU + MaxPool2d(2).

    x_ref: (4, tm, K) im2col patches, one slab per 2x2-pool-window corner.
    w_ref: (K, N) reshaped conv weight, b_ref: (1, N) bias, o_ref: (tm, N) pooled activations.
    LeakyReLU is strictly monotone, so max(act(.)) == act(max(.)) exactly; applying act then max
    matches torch's act -> pool order bit-for-bit.
    """
    w = w_ref[...]                                   # weight stays resident across all 4 dots
    b = b_ref[...]
    out = None
    for g in range(4):                               # static unroll over the 4 pool corners
        y = jnp.dot(x_ref[g], w, preferred_element_type=jnp.float32) + b
        y = jnp.where(y >= 0.0, y, 0.01 * y)         # nn.LeakyReLU default slope
        out = y if out is None else jnp.maximum(out, y)
    o_ref[...] = out.astype(o_ref.dtype)


def conv_act_pool(patches, w, b):
    """patches: (4, M, K) f32, w: (K, N) f32, b: (N,) f32 -> (M, N) f32 pooled activations."""
    G, M, K = patches.shape
    N = w.shape[1]
    assert G == 4
    # 2 parallel M-tiles when legal (keeps both v7x TensorCores busy); otherwise a single step.
    m_tiles = 2 if (M % 2 == 0 and (M // 2) % 8 == 0) else 1
    tm = M // m_tiles
    return pl.pallas_call(
        _conv_act_pool_kernel,
        out_shape=jax.ShapeDtypeStruct((M, N), jnp.float32),
        grid=(m_tiles,),
        in_specs=[
            pl.BlockSpec((G, tm, K), lambda i: (0, i, 0)),
            pl.BlockSpec((K, N), lambda i: (0, 0)),
            pl.BlockSpec((1, N), lambda i: (0, 0)),
        ],
        out_specs=pl.BlockSpec((tm, N), lambda i: (i, 0)),
        compiler_params=pltpu.CompilerParams(dimension_semantics=("parallel",)),
    )(patches, w, b.reshape(1, N))


# ----------------------------- im2col glue ----------------------------------

def _pool_corner_patches(x_nhwc, k, conv_stride, out_hw):
    """im2col patches for a VALID conv (kernel k, stride conv_stride) followed by MaxPool2d(2).

    Returns (4, B*out_hw*out_hw, k*k*C): leading axis = the four 2x2 pool-window corners,
    rows ordered (b, i, j) row-major, feature order (kh, kw, c) -> matches the conv weight
    transposed to (kh, kw, C, O).  Features stay on the last (lane) axis: no big transposes.
    """
    B, H, W, C = x_nhwc.shape
    s = 2 * conv_stride                       # stride between adjacent pooled output positions
    groups = []
    for dh in (0, 1):
        for dw in (0, 1):
            feats = []
            for kh in range(k):
                for kw in range(k):
                    r0 = conv_stride * dh + kh
                    c0 = conv_stride * dw + kw
                    feats.append(
                        x_nhwc[:,
                               r0:r0 + s * (out_hw - 1) + 1:s,
                               c0:c0 + s * (out_hw - 1) + 1:s,
                               :])             # (B, out_hw, out_hw, C)
            g = jnp.concatenate(feats, axis=-1)             # (B, out_hw, out_hw, k*k*C)
            groups.append(g.reshape(B * out_hw * out_hw, k * k * C))
    return jnp.stack(groups, axis=0)


# ----------------------------- forward ---------------------------------------

def forward(data, params):
    """Pallas forward of nn_model.  data: (B, 3, 100, 100) f32 -> (B, 5) f32."""
    B = data.shape[0]
    x = jnp.transpose(data, (0, 2, 3, 1))                      # NCHW -> NHWC, once (tiny)

    # conv1 (3->10, k=5, s=2) + LeakyReLU + maxpool2x2 : one fused Pallas call
    p1 = _pool_corner_patches(x, k=5, conv_stride=2, out_hw=24)        # (4, B*576, 75)
    w1 = params["w1"].transpose(2, 3, 1, 0).reshape(75, 10)            # OIHW -> (kh,kw,C,O)
    y1 = conv_act_pool(p1, w1, params["b1"])                           # (B*576, 10)
    y1 = y1.reshape(B, 24, 24, 10)                                     # NHWC, no transpose

    # conv2 (10->20, k=5, s=2) + LeakyReLU + maxpool2x2 : one fused Pallas call
    p2 = _pool_corner_patches(y1, k=5, conv_stride=2, out_hw=5)        # (4, B*25, 250)
    w2 = params["w2"].transpose(2, 3, 1, 0).reshape(250, 20)           # (250, 20)
    y2 = conv_act_pool(p2, w2, params["b2"])                           # (B*25, 20)

    # fc (500 -> 5): inlined as a plain dot (a dedicated kernel here is pure launch overhead).
    # Flatten stays NHWC; the tiny fc weight is permuted from torch's NCHW-flatten order.
    flat = y2.reshape(B, 500)                                          # cols = h*100 + w*20 + c
    wf_nhwc = params["wf"].reshape(5, 20, 5, 5).transpose(0, 2, 3, 1).reshape(5, 500)
    return flat @ wf_nhwc.T + params["bf"]


# ----------------------------- pure-JAX reference ----------------------------

def _ref_forward(data, params):
    dn = ("NCHW", "OIHW", "NCHW")
    y = lax.conv_general_dilated(data, params["w1"], (2, 2), "VALID", dimension_numbers=dn)
    y = y + params["b1"][None, :, None, None]
    y = jnp.where(y >= 0.0, y, 0.01 * y)
    y = lax.reduce_window(y, -jnp.inf, lax.max, (1, 1, 2, 2), (1, 1, 2, 2), "VALID")
    y = lax.conv_general_dilated(y, params["w2"], (2, 2), "VALID", dimension_numbers=dn)
    y = y + params["b2"][None, :, None, None]
    y = jnp.where(y >= 0.0, y, 0.01 * y)
    y = lax.reduce_window(y, -jnp.inf, lax.max, (1, 1, 2, 2), (1, 1, 2, 2), "VALID")
    y = y.reshape(y.shape[0], -1)
    return y @ params["wf"].T + params["bf"]


# ----------------------------- main -------------------------------------------

if __name__ == "__main__":
    key = jax.random.PRNGKey(0)
    k1, k2, k3, k4, k5, k6, kx = jax.random.split(key, 7)

    # Deterministic synthetic parameters (shapes from nn_model.__init__).
    params = dict(
        w1=jax.random.normal(k1, (10, 3, 5, 5), jnp.float32) * 0.10,
        b1=jax.random.normal(k2, (10,), jnp.float32) * 0.10,
        w2=jax.random.normal(k3, (20, 10, 5, 5), jnp.float32) * 0.05,
        b2=jax.random.normal(k4, (20,), jnp.float32) * 0.05,
        wf=jax.random.normal(k5, (5, 500), jnp.float32) * 0.05,
        bf=jax.random.normal(k6, (5,), jnp.float32) * 0.05,
    )
    # 100x100 spatial is required so the flattened feature size is 20*5*5 = 500 (fc in_features).
    data = jax.random.normal(kx, (2, 3, 100, 100), jnp.float32)

    out = jax.jit(forward)(data, params)
    out = jax.block_until_ready(out)
    assert out.shape == (2, 5)

    ref = _ref_forward(data, params)
    assert jnp.allclose(out, ref, rtol=1e-3, atol=1e-3), "Pallas output mismatch vs JAX reference"

    print("KERNEL_OK")
</pallas_src>

<mosaic_0001>
module attributes {stable_mosaic.version = 11 : i64} {
  func.func @_conv_act_pool_kernel(%arg0: i32, %arg1: memref<4x576x75xf32, #tpu.memory_space<vmem>>, %arg2: memref<75x10xf32, #tpu.memory_space<vmem>>, %arg3: memref<1x10xf32, #tpu.memory_space<vmem>>, %arg4: memref<576x10xf32, #tpu.memory_space<vmem>>) attributes {dimension_semantics = [#tpu.dimension_semantics<parallel>], iteration_bounds = array<i64: 2>, scalar_prefetch = 0 : i64, scratch_operands = 0 : i64, tpu.core_type = #tpu.core_type<tc>, window_params = [{transform_indices = @transform_0, window_bounds = array<i64: 4, 576, 75>}, {pipeline_mode = #tpu.pipeline_mode<synchronous>, transform_indices = @transform_1, window_bounds = array<i64: 75, 10>}, {pipeline_mode = #tpu.pipeline_mode<synchronous>, transform_indices = @transform_2, window_bounds = array<i64: 1, 10>}, {transform_indices = @transform_3, window_bounds = array<i64: 576, 10>}]} {
    %c0 = arith.constant 0 : index
    %c0_0 = arith.constant 0 : index
    %0 = vector.load %arg2[%c0, %c0_0] : memref<75x10xf32, #tpu.memory_space<vmem>>, vector<75x10xf32>
    %c0_1 = arith.constant 0 : index
    %c0_2 = arith.constant 0 : index
    %1 = vector.load %arg3[%c0_1, %c0_2] : memref<1x10xf32, #tpu.memory_space<vmem>>, vector<1x10xf32>
    %c0_3 = arith.constant 0 : index
    %c0_4 = arith.constant 0 : index
    %c0_5 = arith.constant 0 : index
    %2 = vector.load %arg1[%c0_3, %c0_4, %c0_5] : memref<4x576x75xf32, #tpu.memory_space<vmem>>, vector<1x576x75xf32>
    %3 = vector.shape_cast %2 : vector<1x576x75xf32> to vector<576x75xf32>
    %cst = arith.constant dense<0.000000e+00> : vector<576x10xf32>
    %4 = tpu.matmul %3, %0, %cst {dimension_numbers = #tpu.dot_dimension_numbers<[1], [0], [0], [1], [0, 0, 1, 1], [], []>} : vector<576x75xf32>, vector<75x10xf32>, vector<576x10xf32> -> vector<576x10xf32>
    %5 = vector.broadcast %1 : vector<1x10xf32> to vector<576x10xf32>
    %6 = arith.addf %4, %5 : vector<576x10xf32>
    %cst_6 = arith.constant 0.000000e+00 : f32
    %7 = vector.broadcast %cst_6 : f32 to vector<576x10xf32>
    %8 = arith.cmpf oge, %6, %7 : vector<576x10xf32>
    %cst_7 = arith.constant 0.00999999977 : f32
    %9 = vector.broadcast %cst_7 : f32 to vector<576x10xf32>
    %10 = arith.mulf %9, %6 : vector<576x10xf32>
    %11 = arith.select %8, %6, %10 : vector<576x10xi1>, vector<576x10xf32>
    %c1 = arith.constant 1 : index
    %c0_8 = arith.constant 0 : index
    %c0_9 = arith.constant 0 : index
    %12 = vector.load %arg1[%c1, %c0_8, %c0_9] : memref<4x576x75xf32, #tpu.memory_space<vmem>>, vector<1x576x75xf32>
    %13 = vector.shape_cast %12 : vector<1x576x75xf32> to vector<576x75xf32>
    %cst_10 = arith.constant dense<0.000000e+00> : vector<576x10xf32>
    %14 = tpu.matmul %13, %0, %cst_10 {dimension_numbers = #tpu.dot_dimension_numbers<[1], [0], [0], [1], [0, 0, 1, 1], [], []>} : vector<576x75xf32>, vector<75x10xf32>, vector<576x10xf32> -> vector<576x10xf32>
    %15 = vector.broadcast %1 : vector<1x10xf32> to vector<576x10xf32>
    %16 = arith.addf %14, %15 : vector<576x10xf32>
    %cst_11 = arith.constant 0.000000e+00 : f32
    %17 = vector.broadcast %cst_11 : f32 to vector<576x10xf32>
    %18 = arith.cmpf oge, %16, %17 : vector<576x10xf32>
    %cst_12 = arith.constant 0.00999999977 : f32
    %19 = vector.broadcast %cst_12 : f32 to vector<576x10xf32>
    %20 = arith.mulf %19, %16 : vector<576x10xf32>
    %21 = arith.select %18, %16, %20 : vector<576x10xi1>, vector<576x10xf32>
    %22 = arith.maximumf %11, %21 : vector<576x10xf32>
    %c2 = arith.constant 2 : index
    %c0_13 = arith.constant 0 : index
    %c0_14 = arith.constant 0 : index
    %23 = vector.load %arg1[%c2, %c0_13, %c0_14] : memref<4x576x75xf32, #tpu.memory_space<vmem>>, vector<1x576x75xf32>
    %24 = vector.shape_cast %23 : vector<1x576x75xf32> to vector<576x75xf32>
    %cst_15 = arith.constant dense<0.000000e+00> : vector<576x10xf32>
    %25 = tpu.matmul %24, %0, %cst_15 {dimension_numbers = #tpu.dot_dimension_numbers<[1], [0], [0], [1], [0, 0, 1, 1], [], []>} : vector<576x75xf32>, vector<75x10xf32>, vector<576x10xf32> -> vector<576x10xf32>
    %26 = vector.broadcast %1 : vector<1x10xf32> to vector<576x10xf32>
    %27 = arith.addf %25, %26 : vector<576x10xf32>
    %cst_16 = arith.constant 0.000000e+00 : f32
    %28 = vector.broadcast %cst_16 : f32 to vector<576x10xf32>
    %29 = arith.cmpf oge, %27, %28 : vector<576x10xf32>
    %cst_17 = arith.constant 0.00999999977 : f32
    %30 = vector.broadcast %cst_17 : f32 to vector<576x10xf32>
    %31 = arith.mulf %30, %27 : vector<576x10xf32>
    %32 = arith.select %29, %27, %31 : vector<576x10xi1>, vector<576x10xf32>
    %33 = arith.maximumf %22, %32 : vector<576x10xf32>
    %c3 = arith.constant 3 : index
    %c0_18 = arith.constant 0 : index
    %c0_19 = arith.constant 0 : index
    %34 = vector.load %arg1[%c3, %c0_18, %c0_19] : memref<4x576x75xf32, #tpu.memory_space<vmem>>, vector<1x576x75xf32>
    %35 = vector.shape_cast %34 : vector<1x576x75xf32> to vector<576x75xf32>
    %cst_20 = arith.constant dense<0.000000e+00> : vector<576x10xf32>
    %36 = tpu.matmul %35, %0, %cst_20 {dimension_numbers = #tpu.dot_dimension_numbers<[1], [0], [0], [1], [0, 0, 1, 1], [], []>} : vector<576x75xf32>, vector<75x10xf32>, vector<576x10xf32> -> vector<576x10xf32>
    %37 = vector.broadcast %1 : vector<1x10xf32> to vector<576x10xf32>
    %38 = arith.addf %36, %37 : vector<576x10xf32>
    %cst_21 = arith.constant 0.000000e+00 : f32
    %39 = vector.broadcast %cst_21 : f32 to vector<576x10xf32>
    %40 = arith.cmpf oge, %38, %39 : vector<576x10xf32>
    %cst_22 = arith.constant 0.00999999977 : f32
    %41 = vector.broadcast %cst_22 : f32 to vector<576x10xf32>
    %42 = arith.mulf %41, %38 : vector<576x10xf32>
    %43 = arith.select %40, %38, %42 : vector<576x10xi1>, vector<576x10xf32>
    %44 = arith.maximumf %33, %43 : vector<576x10xf32>
    %c0_23 = arith.constant 0 : index
    %c0_24 = arith.constant 0 : index
    %45 = vector.load %arg4[%c0_23, %c0_24] : memref<576x10xf32, #tpu.memory_space<vmem>>, vector<576x10xf32>
    tpu.vector_store %arg4[%c0_23, %c0_24], %44 {strides = array<i32>} : memref<576x10xf32, #tpu.memory_space<vmem>>, vector<576x10xf32>,
    return
  }
  func.func @transform_0(%arg0: i32) -> (i32, i32, i32) {
    %c0_i32 = arith.constant 0 : i32
    %c0_i32_0 = arith.constant 0 : i32
    %c0_i32_1 = arith.constant 0 : i32
    return %c0_i32, %arg0, %c0_i32_0 : i32, i32, i32
  }
  func.func @transform_1(%arg0: i32) -> (i32, i32) {
    %c0_i32 = arith.constant 0 : i32
    %c0_i32_0 = arith.constant 0 : i32
    %c0_i32_1 = arith.constant 0 : i32
    return %c0_i32, %c0_i32_0 : i32, i32
  }
  func.func @transform_2(%arg0: i32) -> (i32, i32) {
    %c0_i32 = arith.constant 0 : i32
    %c0_i32_0 = arith.constant 0 : i32
    %c0_i32_1 = arith.constant 0 : i32
    return %c0_i32, %c0_i32_0 : i32, i32
  }
  func.func @transform_3(%arg0: i32) -> (i32, i32) {
    %c0_i32 = arith.constant 0 : i32
    %c0_i32_0 = arith.constant 0 : i32
    return %arg0, %c0_i32 : i32, i32
  }
}

module attributes {stable_mosaic.version = 11 : i64} {
  func.func @_conv_act_pool_kernel(%arg0: i32, %arg1: memref<4x50x250xf32, #tpu.memory_space<vmem>>, %arg2: memref<250x20xf32, #tpu.memory_space<vmem>>, %arg3: memref<1x20xf32, #tpu.memory_space<vmem>>, %arg4: memref<50x20xf32, #tpu.memory_space<vmem>>) attributes {dimension_semantics = [#tpu.dimension_semantics<parallel>], iteration_bounds = array<i64: 1>, scalar_prefetch = 0 : i64, scratch_operands = 0 : i64, tpu.core_type = #tpu.core_type<tc>, window_params = [{transform_indices = @transform_0, window_bounds = array<i64: 4, 50, 250>}, {pipeline_mode = #tpu.pipeline_mode<synchronous>, transform_indices = @transform_1, window_bounds = array<i64: 250, 20>}, {pipeline_mode = #tpu.pipeline_mode<synchronous>, transform_indices = @transform_2, window_bounds = array<i64: 1, 20>}, {transform_indices = @transform_3, window_bounds = array<i64: 50, 20>}]} {
    %c0 = arith.constant 0 : index
    %c0_0 = arith.constant 0 : index
    %0 = vector.load %arg2[%c0, %c0_0] : memref<250x20xf32, #tpu.memory_space<vmem>>, vector<250x20xf32>
    %c0_1 = arith.constant 0 : index
    %c0_2 = arith.constant 0 : index
    %1 = vector.load %arg3[%c0_1, %c0_2] : memref<1x20xf32, #tpu.memory_space<vmem>>, vector<1x20xf32>
    %c0_3 = arith.constant 0 : index
    %c0_4 = arith.constant 0 : index
    %c0_5 = arith.constant 0 : index
    %2 = vector.load %arg1[%c0_3, %c0_4, %c0_5] : memref<4x50x250xf32, #tpu.memory_space<vmem>>, vector<1x50x250xf32>
    %3 = vector.shape_cast %2 : vector<1x50x250xf32> to vector<50x250xf32>
    %cst = arith.constant dense<0.000000e+00> : vector<50x20xf32>
    %4 = tpu.matmul %3, %0, %cst {dimension_numbers = #tpu.dot_dimension_numbers<[1], [0], [0], [1], [0, 0, 1, 1], [], []>} : vector<50x250xf32>, vector<250x20xf32>, vector<50x20xf32> -> vector<50x20xf32>
    %5 = vector.broadcast %1 : vector<1x20xf32> to vector<50x20xf32>
    %6 = arith.addf %4, %5 : vector<50x20xf32>
    %cst_6 = arith.constant 0.000000e+00 : f32
    %7 = vector.broadcast %cst_6 : f32 to vector<50x20xf32>
    %8 = arith.cmpf oge, %6, %7 : vector<50x20xf32>
    %cst_7 = arith.constant 0.00999999977 : f32
    %9 = vector.broadcast %cst_7 : f32 to vector<50x20xf32>
    %10 = arith.mulf %9, %6 : vector<50x20xf32>
    %11 = arith.select %8, %6, %10 : vector<50x20xi1>, vector<50x20xf32>
    %c1 = arith.constant 1 : index
    %c0_8 = arith.constant 0 : index
    %c0_9 = arith.constant 0 : index
    %12 = vector.load %arg1[%c1, %c0_8, %c0_9] : memref<4x50x250xf32, #tpu.memory_space<vmem>>, vector<1x50x250xf32>
    %13 = vector.shape_cast %12 : vector<1x50x250xf32> to vector<50x250xf32>
    %cst_10 = arith.constant dense<0.000000e+00> : vector<50x20xf32>
    %14 = tpu.matmul %13, %0, %cst_10 {dimension_numbers = #tpu.dot_dimension_numbers<[1], [0], [0], [1], [0, 0, 1, 1], [], []>} : vector<50x250xf32>, vector<250x20xf32>, vector<50x20xf32> -> vector<50x20xf32>
    %15 = vector.broadcast %1 : vector<1x20xf32> to vector<50x20xf32>
    %16 = arith.addf %14, %15 : vector<50x20xf32>
    %cst_11 = arith.constant 0.000000e+00 : f32
    %17 = vector.broadcast %cst_11 : f32 to vector<50x20xf32>
    %18 = arith.cmpf oge, %16, %17 : vector<50x20xf32>
    %cst_12 = arith.constant 0.00999999977 : f32
    %19 = vector.broadcast %cst_12 : f32 to vector<50x20xf32>
    %20 = arith.mulf %19, %16 : vector<50x20xf32>
    %21 = arith.select %18, %16, %20 : vector<50x20xi1>, vector<50x20xf32>
    %22 = arith.maximumf %11, %21 : vector<50x20xf32>
    %c2 = arith.constant 2 : index
    %c0_13 = arith.constant 0 : index
    %c0_14 = arith.constant 0 : index
    %23 = vector.load %arg1[%c2, %c0_13, %c0_14] : memref<4x50x250xf32, #tpu.memory_space<vmem>>, vector<1x50x250xf32>
    %24 = vector.shape_cast %23 : vector<1x50x250xf32> to vector<50x250xf32>
    %cst_15 = arith.constant dense<0.000000e+00> : vector<50x20xf32>
    %25 = tpu.matmul %24, %0, %cst_15 {dimension_numbers = #tpu.dot_dimension_numbers<[1], [0], [0], [1], [0, 0, 1, 1], [], []>} : vector<50x250xf32>, vector<250x20xf32>, vector<50x20xf32> -> vector<50x20xf32>
    %26 = vector.broadcast %1 : vector<1x20xf32> to vector<50x20xf32>
    %27 = arith.addf %25, %26 : vector<50x20xf32>
    %cst_16 = arith.constant 0.000000e+00 : f32
    %28 = vector.broadcast %cst_16 : f32 to vector<50x20xf32>
    %29 = arith.cmpf oge, %27, %28 : vector<50x20xf32>
    %cst_17 = arith.constant 0.00999999977 : f32
    %30 = vector.broadcast %cst_17 : f32 to vector<50x20xf32>
    %31 = arith.mulf %30, %27 : vector<50x20xf32>
    %32 = arith.select %29, %27, %31 : vector<50x20xi1>, vector<50x20xf32>
    %33 = arith.maximumf %22, %32 : vector<50x20xf32>
    %c3 = arith.constant 3 : index
    %c0_18 = arith.constant 0 : index
    %c0_19 = arith.constant 0 : index
    %34 = vector.load %arg1[%c3, %c0_18, %c0_19] : memref<4x50x250xf32, #tpu.memory_space<vmem>>, vector<1x50x250xf32>
    %35 = vector.shape_cast %34 : vector<1x50x250xf32> to vector<50x250xf32>
    %cst_20 = arith.constant dense<0.000000e+00> : vector<50x20xf32>
    %36 = tpu.matmul %35, %0, %cst_20 {dimension_numbers = #tpu.dot_dimension_numbers<[1], [0], [0], [1], [0, 0, 1, 1], [], []>} : vector<50x250xf32>, vector<250x20xf32>, vector<50x20xf32> -> vector<50x20xf32>
    %37 = vector.broadcast %1 : vector<1x20xf32> to vector<50x20xf32>
    %38 = arith.addf %36, %37 : vector<50x20xf32>
    %cst_21 = arith.constant 0.000000e+00 : f32
    %39 = vector.broadcast %cst_21 : f32 to vector<50x20xf32>
    %40 = arith.cmpf oge, %38, %39 : vector<50x20xf32>
    %cst_22 = arith.constant 0.00999999977 : f32
    %41 = vector.broadcast %cst_22 : f32 to vector<50x20xf32>
    %42 = arith.mulf %41, %38 : vector<50x20xf32>
    %43 = arith.select %40, %38, %42 : vector<50x20xi1>, vector<50x20xf32>
    %44 = arith.maximumf %33, %43 : vector<50x20xf32>
    %c0_23 = arith.constant 0 : index
    %c0_24 = arith.constant 0 : index
    %45 = vector.load %arg4[%c0_23, %c0_24] : memref<50x20xf32, #tpu.memory_space<vmem>>, vector<50x20xf32>
    tpu.vector_store %arg4[%c0_23, %c0_24], %44 {strides = array<i32>} : memref<50x20xf32, #tpu.memory_space<vmem>>, vector<50x20xf32>,
    return
  }
  func.func @transform_0(%arg0: i32) -> (i32, i32, i32) {
    %c0_i32 = arith.constant 0 : i32
    %c0_i32_0 = arith.constant 0 : i32
    %c0_i32_1 = arith.constant 0 : i32
    return %c0_i32, %arg0, %c0_i32_0 : i32, i32, i32
  }
  func.func @transform_1(%arg0: i32) -> (i32, i32) {
    %c0_i32 = arith.constant 0 : i32
    %c0_i32_0 = arith.constant 0 : i32
    %c0_i32_1 = arith.constant 0 : i32
    return %c0_i32, %c0_i32_0 : i32, i32
  }
  func.func @transform_2(%arg0: i32) -> (i32, i32) {
    %c0_i32 = arith.constant 0 : i32
    %c0_i32_0 = arith.constant 0 : i32
    %c0_i32_1 = arith.constant 0 : i32
    return %c0_i32, %c0_i32_0 : i32, i32
  }
  func.func @transform_3(%arg0: i32) -> (i32, i32) {
    %c0_i32 = arith.constant 0 : i32
    %c0_i32_0 = arith.constant 0 : i32
    return %arg0, %c0_i32 : i32, i32
  }
}

</mosaic_0001>

<llo_original>
// kernel: forward.2
$region0: #{forward.2}
  #allocation0 [shape = 'u32[]', space=smem, size = 0x4, offset = 0x4, fixed_abs, tag = 'smem constant byte address 0x4 - core index']
  #allocation1 [shape = 'u32[144,128]{1,0:T(1,128)}', space=vmem, size = 0x12000, scoped, tag = 'internal scratch']
  %s0 = inlined_call_operand.vmem [shape: f32[4,1152,75], index: 0, kind: input, shape index: {}]
  %s1 = inlined_call_operand.vmem [shape: f32[75,10], index: 1, kind: input, shape index: {}]
  %s2 = inlined_call_operand.vmem [shape: f32[1,10], index: 2, kind: input, shape index: {}]
  %s3 = inlined_call_operand.vmem [shape: f32[1152,10], index: 3, kind: output, shape index: {}]
  %s4 = sld [smem:[#allocation0]]
  $region83: #{forward.2} parent=0
    _
  %s6 = ssub.s32 1, %s4
  %s7 = scalar_select 0, %s6, %s4
  $region1: #{forward.2} parent=0
    #allocation2 [shape = 'u8[2359296]{0}', space=vmem, size = 0x240000, scoped, tag = 'input window, operand 0']
    loop: start=0, step=1, limit=4
    $region2: #{forward.2} parent=1 // loop_pre_header
      _
    $region3: #{forward.2} parent=1 // loop_header
      %s9 = sphi 0, %s13
      %p10 = scmp.ge.s32.totalorder %s9, 4
      %s19 = sphi 0, %s21
      %s22 = sphi 0, %s19
      %s23 = sphi 0, %s22
      %s39 = sphi 0, %s23
      %s43 = sphi 0, %s43
      %s45 = sphi 0, %s43
      %s46 = sphi 0, %s45
      %s60 = sphi 0, %s46
      %s64 = sphi 0, %s64
      %s66 = sphi 0, %s64
      %s67 = sphi 0, %s66
      %s81 = sphi 0, %s67
      %s87 = sphi 0, %s89
      %s90 = sphi 0, %s87
      %s91 = sphi 0, %s90
      %s107 = sphi 0, %s91
    $region4: #{forward.2} parent=1 // loop_header_branch
      %12 = sbr.rel (%p10) target = $region8
    $region5: #{forward.2} parent=1 // loop_body
      %s14 = ssub.s32 %s9, 1
      %s15 = ssub.s32 %s9, 2
      %s16 = sadd.s32 %s9, 1
      %s17 = ssub.s32 %s9, %s16
      %p18 = scmp.eq.s32.totalorder %s17, 0
      %s20 = sadd.s32 %s19, 1
      %s21 = scalar_select %p18, %s19, %s20
      %p24 = pneg %p18
      %p25 = scmp.eq.s32.totalorder %s9, 1
      %p26 = por %p24, %p25
      %p27 = scmp.ne.s32.totalorder %s19, %s22
      %p28 = scmp.eq.s32.totalorder %s9, 0
      %p29 = por %p27, %p28
      %p30 = scmp.ne.s32.totalorder %s19, %s22
      %p31 = scmp.eq.s32.totalorder %s14, 1
      %p32 = por %p30, %p31
      %p33 = scmp.ne.s32.totalorder %s22, %s23
      %p34 = scmp.eq.s32.totalorder %s14, 0
      %p35 = por %p33, %p34
      %p36 = scmp.ne.s32.totalorder %s22, %s23
      %p37 = scmp.eq.s32.totalorder %s15, 1
      %p38 = por %p36, %p37
      %p40 = scmp.ne.s32.totalorder %s23, %s39
      %p41 = scmp.eq.s32.totalorder %s15, 0
      %p42 = por %p40, %p41
      %s44 = sadd.s32 %s43, 1
      %p47 = scmp.eq.s32.totalorder %s9, 1
      %p48 = scmp.ne.s32.totalorder %s43, %s45
      %p49 = scmp.eq.s32.totalorder %s9, 0
      %p50 = por %p48, %p49
      %p51 = scmp.ne.s32.totalorder %s43, %s45
      %p52 = scmp.eq.s32.totalorder %s14, 1
      %p53 = por %p51, %p52
      %p54 = scmp.ne.s32.totalorder %s45, %s46
      %p55 = scmp.eq.s32.totalorder %s14, 0
      %p56 = por %p54, %p55
      %p57 = scmp.ne.s32.totalorder %s45, %s46
      %p58 = scmp.eq.s32.totalorder %s15, 1
      %p59 = por %p57, %p58
      %p61 = scmp.ne.s32.totalorder %s46, %s60
      %p62 = scmp.eq.s32.totalorder %s15, 0
      %p63 = por %p61, %p62
      %s65 = sadd.s32 %s64, 1
      %p68 = scmp.eq.s32.totalorder %s9, 1
      %p69 = scmp.ne.s32.totalorder %s64, %s66
      %p70 = scmp.eq.s32.totalorder %s9, 0
      %p71 = por %p69, %p70
      %p72 = scmp.ne.s32.totalorder %s64, %s66
      %p73 = scmp.eq.s32.totalorder %s14, 1
      %p74 = por %p72, %p73
      %p75 = scmp.ne.s32.totalorder %s66, %s67
      %p76 = scmp.eq.s32.totalorder %s14, 0
      %p77 = por %p75, %p76
      %p78 = scmp.ne.s32.totalorder %s66, %s67
      %p79 = scmp.eq.s32.totalorder %s15, 1
      %p80 = por %p78, %p79
      %p82 = scmp.ne.s32.totalorder %s67, %s81
      %p83 = scmp.eq.s32.totalorder %s15, 0
      %p84 = por %p82, %p83
      %s85 = ssub.s32 %s9, %s16
      %p86 = scmp.eq.s32.totalorder %s85, 0
      %s88 = sadd.s32 %s87, 1
      %s89 = scalar_select %p86, %s87, %s88
      %p92 = pneg %p86
      %p93 = scmp.eq.s32.totalorder %s9, 1
      %p94 = por %p92, %p93
      %p95 = scmp.ne.s32.totalorder %s87, %s90
      %p96 = scmp.eq.s32.totalorder %s9, 0
      %p97 = por %p95, %p96
      %p98 = scmp.ne.s32.totalorder %s87, %s90
      %p99 = scmp.eq.s32.totalorder %s14, 1
      %p100 = por %p98, %p99
      %p101 = scmp.ne.s32.totalorder %s90, %s91
      %p102 = scmp.eq.s32.totalorder %s14, 0
      %p103 = por %p101, %p102
      %p104 = scmp.ne.s32.totalorder %s90, %s91
      %p105 = scmp.eq.s32.totalorder %s15, 1
      %p106 = por %p104, %p105
      %p108 = scmp.ne.s32.totalorder %s91, %s107
      %p109 = scmp.eq.s32.totalorder %s15, 0
      %p110 = por %p108, %p109
      %p111 = scmp.le.s32.totalorder 1, %s9
      %p112 = scmp.lt.s32.totalorder %s9, 3
      %p113 = pnand %p111, %p112
      %p114 = pneg %p113
      // Predicated region
      $region9: #{forward.2} parent=5 // pred_check
        _
      $region10: #{forward.2} parent=5 // pred_check_branch
        %116 = sbr.rel (%p113) target = $region12
      $region11: #{forward.2} parent=5 // pred_region
        %s117 = ssub.s32 %s9, 1
        // Predicated region
        $region13: #{forward.2} parent=11 // pred_check
          %p118 = pneg %p56
        $region14: #{forward.2} parent=11 // pred_check_branch
          %120 = sbr.rel (%p118) target = $region16
        $region15: #{forward.2} parent=11 // pred_region
          _
        $region16: #{forward.2} parent=11 // pred_fallthru
          _
        // Predicated region
        $region17: #{forward.2} parent=11 // pred_check
          %p121 = pneg %p77
        $region18: #{forward.2} parent=11 // pred_check_branch
          %123 = sbr.rel (%p121) target = $region20
        $region19: #{forward.2} parent=11 // pred_region
          _
        $region20: #{forward.2} parent=11 // pred_fallthru
          _
      $region12: #{forward.2} parent=5 // pred_fallthru
        _
      %p124 = scmp.lt.s32.totalorder %s9, 2
      // Predicated region
      $region21: #{forward.2} parent=5 // pred_check
        %p125 = pneg %p124
      $region22: #{forward.2} parent=5 // pred_check_branch
        %127 = sbr.rel (%p125) target = $region24
      $region23: #{forward.2} parent=5 // pred_region
        // Predicated region
        $region25: #{forward.2} parent=23 // pred_check
          %p128 = pneg %p29
        $region26: #{forward.2} parent=23 // pred_check_branch
          %130 = sbr.rel (%p128) target = $region28
        $region27: #{forward.2} parent=23 // pred_region
          %s131 = sand.u32 %s19, 1
          %s132 = sand.u32 %s19, 1
          %s133 = smul.addr %s132, 2304
          %s134 = scalar_lea.vmem [#allocation2], %s133
          %s135 = smul.u32 72, %s9
          %s136 = smul.addr %s135, 8
          %s137 = scalar_lea.vmem %s0, %s136
          // Predicated region
          $region29: #{forward.2} parent=27 // pred_check
            _
          $region30: #{forward.2} parent=27 // pred_check_branch
            %139 = sbr.rel (0) target = $region32
          $region31: #{forward.2} parent=27 // pred_region
            // Predicated region
            $region33: #{forward.2} parent=31 // pred_check
              _
            $region34: #{forward.2} parent=31 // pred_check_branch
              %141 = sbr.rel (0) target = $region36
            $region35: #{forward.2} parent=31 // pred_region
              // Predicated region
              $region48: #{forward.2} parent=35 // pred_check
                _
              $region49: #{forward.2} parent=35 // pred_check_branch
                %731 = sbr.rel (0) target = $region51
              $region50: #{forward.2} parent=35 // pred_region
                loop: start=0, step=1, limit=1
                $region52: #{forward.2} parent=50 // loop_pre_header
                  _
                $region53: #{forward.2} parent=50 // loop_header
                  %s733 = sphi 0, %s737
                  %p734 = scmp.ge.s32.totalorder %s733, 1
                  %s738 = sphi %s137, %s137
                  %s739 = sphi %s134, %s134
                $region54: #{forward.2} parent=50 // loop_header_branch
                  %736 = sbr.rel (%p734) target = $region58
                $region55: #{forward.2} parent=50 // loop_body
                  %v740 = vld [vmem:[%s738] sm:$0xff]
                  %741 = vst [vmem:[%s739] sm:$0xff] %v740
                  %v742 = vld [vmem:[%s738 + $0x8] sm:$0xff]
                  %743 = vst [vmem:[%s739 + $0x8] sm:$0xff] %v742
                  %v744 = vld [vmem:[%s738 + $0x10] sm:$0xff]
                  %745 = vst [vmem:[%s739 + $0x10] sm:$0xff] %v744
                  %v746 = vld [vmem:[%s738 + $0x18] sm:$0xff]
                  %747 = vst [vmem:[%s739 + $0x18] sm:$0xff] %v746
                  %v748 = vld [vmem:[%s738 + $0x20] sm:$0xff]
                  %749 = vst [vmem:[%s739 + $0x20] sm:$0xff] %v748
                  %v750 = vld [vmem:[%s738 + $0x28] sm:$0xff]
                  %751 = vst [vmem:[%s739 + $0x28] sm:$0xff] %v750
                  %v752 = vld [vmem:[%s738 + $0x30] sm:$0xff]
                  %753 = vst [vmem:[%s739 + $0x30] sm:$0xff] %v752
                  %v754 = vld [vmem:[%s738 + $0x38] sm:$0xff]
                  %755 = vst [vmem:[%s739 + $0x38] sm:$0xff] %v754
                  %v756 = vld [vmem:[%s738 + $0x40] sm:$0xff]
                  %757 = vst [vmem:[%s739 + $0x40] sm:$0xff] %v756
                  %v758 = vld [vmem:[%s738 + $0x48] sm:$0xff]
                  %759 = vst [vmem:[%s739 + $0x48] sm:$0xff] %v758
                  %v760 = vld [vmem:[%s738 + $0x50] sm:$0xff]
                  %761 = vst [vmem:[%s739 + $0x50] sm:$0xff] %v760
                  %v762 = vld [vmem:[%s738 + $0x58] sm:$0xff]
                  %763 = vst [vmem:[%s739 + $0x58] sm:$0xff] %v762
                  %v764 = vld [vmem:[%s738 + $0x60] sm:$0xff]
                  %765 = vst [vmem:[%s739 + $0x60] sm:$0xff] %v764
                  %v766 = vld [vmem:[%s738 + $0x68] sm:$0xff]
                  %767 = vst [vmem:[%s739 + $0x68] sm:$0xff] %v766
                  %v768 = vld [vmem:[%s738 + $0x70] sm:$0xff]
                  %769 = vst [vmem:[%s739 + $0x70] sm:$0xff] %v768
                  %v770 = vld [vmem:[%s738 + $0x78] sm:$0xff]
                  %771 = vst [vmem:[%s739 + $0x78] sm:$0xff] %v770
                  %v772 = vld [vmem:[%s738 + $0x80] sm:$0xff]
                  %773 = vst [vmem:[%s739 + $0x80] sm:$0xff] %v772
                  %v774 = vld [vmem:[%s738 + $0x88] sm:$0xff]
                  %775 = vst [vmem:[%s739 + $0x88] sm:$0xff] %v774
                  %v776 = vld [vmem:[%s738 + $0x90] sm:$0xff]
                  %777 = vst [vmem:[%s739 + $0x90] sm:$0xff] %v776
                  %v778 = vld [vmem:[%s738 + $0x98] sm:$0xff]
                  %779 = vst [vmem:[%s739 + $0x98] sm:$0xff] %v778
                  %v780 = vld [vmem:[%s738 + $0xa0] sm:$0xff]
                  %781 = vst [vmem:[%s739 + $0xa0] sm:$0xff] %v780
                  %v782 = vld [vmem:[%s738 + $0xa8] sm:$0xff]
                  %783 = vst [vmem:[%s739 + $0xa8] sm:$0xff] %v782
                  %v784 = vld [vmem:[%s738 + $0xb0] sm:$0xff]
                  %785 = vst [vmem:[%s739 + $0xb0] sm:$0xff] %v784
                  %v786 = vld [vmem:[%s738 + $0xb8] sm:$0xff]
                  %787 = vst [vmem:[%s739 + $0xb8] sm:$0xff] %v786
                  %v788 = vld [vmem:[%s738 + $0xc0] sm:$0xff]
                  %789 = vst [vmem:[%s739 + $0xc0] sm:$0xff] %v788
                  %v790 = vld [vmem:[%s738 + $0xc8] sm:$0xff]
                  %791 = vst [vmem:[%s739 + $0xc8] sm:$0xff] %v790
                  %v792 = vld [vmem:[%s738 + $0xd0] sm:$0xff]
                  %793 = vst [vmem:[%s739 + $0xd0] sm:$0xff] %v792
                  %v794 = vld [vmem:[%s738 + $0xd8] sm:$0xff]
                  %795 = vst [vmem:[%s739 + $0xd8] sm:$0xff] %v794
                  %v796 = vld [vmem:[%s738 + $0xe0] sm:$0xff]
                  %797 = vst [vmem:[%s739 + $0xe0] sm:$0xff] %v796
                  %v798 = vld [vmem:[%s738 + $0xe8] sm:$0xff]
                  %799 = vst [vmem:[%s739 + $0xe8] sm:$0xff] %v798
                  %v800 = vld [vmem:[%s738 + $0xf0] sm:$0xff]
                  %801 = vst [vmem:[%s739 + $0xf0] sm:$0xff] %v800
                  %v802 = vld [vmem:[%s738 + $0xf8] sm:$0xff]
                  %803 = vst [vmem:[%s739 + $0xf8] sm:$0xff] %v802
                  %v804 = vld [vmem:[%s738 + $0x100] sm:$0xff]
                  %805 = vst [vmem:[%s739 + $0x100] sm:$0xff] %v804
                  %v806 = vld [vmem:[%s738 + $0x108] sm:$0xff]
                  %807 = vst [vmem:[%s739 + $0x108] sm:$0xff] %v806
                  %v808 = vld [vmem:[%s738 + $0x110] sm:$0xff]
                  %809 = vst [vmem:[%s739 + $0x110] sm:$0xff] %v808
                  %v810 = vld [vmem:[%s738 + $0x118] sm:$0xff]
                  %811 = vst [vmem:[%s739 + $0x118] sm:$0xff] %v810
                  %v812 = vld [vmem:[%s738 + $0x120] sm:$0xff]
                  %813 = vst [vmem:[%s739 + $0x120] sm:$0xff] %v812
                  %v814 = vld [vmem:[%s738 + $0x128] sm:$0xff]
                  %815 = vst [vmem:[%s739 + $0x128] sm:$0xff] %v814
                  %v816 = vld [vmem:[%s738 + $0x130] sm:$0xff]
                  %817 = vst [vmem:[%s739 + $0x130] sm:$0xff] %v816
                  %v818 = vld [vmem:[%s738 + $0x138] sm:$0xff]
                  %819 = vst [vmem:[%s739 + $0x138] sm:$0xff] %v818
                  %v820 = vld [vmem:[%s738 + $0x140] sm:$0xff]
                  %821 = vst [vmem:[%s739 + $0x140] sm:$0xff] %v820
                  %v822 = vld [vmem:[%s738 + $0x148] sm:$0xff]
                  %823 = vst [vmem:[%s739 + $0x148] sm:$0xff] %v822
                  %v824 = vld [vmem:[%s738 + $0x150] sm:$0xff]
                  %825 = vst [vmem:[%s739 + $0x150] sm:$0xff] %v824
                  %v826 = vld [vmem:[%s738 + $0x158] sm:$0xff]
                  %827 = vst [vmem:[%s739 + $0x158] sm:$0xff] %v826
                  %v828 = vld [vmem:[%s738 + $0x160] sm:$0xff]
                  %829 = vst [vmem:[%s739 + $0x160] sm:$0xff] %v828
                  %v830 = vld [vmem:[%s738 + $0x168] sm:$0xff]
                  %831 = vst [vmem:[%s739 + $0x168] sm:$0xff] %v830
                  %v832 = vld [vmem:[%s738 + $0x170] sm:$0xff]
                  %833 = vst [vmem:[%s739 + $0x170] sm:$0xff] %v832
                  %v834 = vld [vmem:[%s738 + $0x178] sm:$0xff]
                  %835 = vst [vmem:[%s739 + $0x178] sm:$0xff] %v834
                  %v836 = vld [vmem:[%s738 + $0x180] sm:$0xff]
                  %837 = vst [vmem:[%s739 + $0x180] sm:$0xff] %v836
                  %v838 = vld [vmem:[%s738 + $0x188] sm:$0xff]
                  %839 = vst [vmem:[%s739 + $0x188] sm:$0xff] %v838
                  %v840 = vld [vmem:[%s738 + $0x190] sm:$0xff]
                  %841 = vst [vmem:[%s739 + $0x190] sm:$0xff] %v840
                  %v842 = vld [vmem:[%s738 + $0x198] sm:$0xff]
                  %843 = vst [vmem:[%s739 + $0x198] sm:$0xff] %v842
                  %v844 = vld [vmem:[%s738 + $0x1a0] sm:$0xff]
                  %845 = vst [vmem:[%s739 + $0x1a0] sm:$0xff] %v844
                  %v846 = vld [vmem:[%s738 + $0x1a8] sm:$0xff]
                  %847 = vst [vmem:[%s739 + $0x1a8] sm:$0xff] %v846
                  %v848 = vld [vmem:[%s738 + $0x1b0] sm:$0xff]
                  %849 = vst [vmem:[%s739 + $0x1b0] sm:$0xff] %v848
                  %v850 = vld [vmem:[%s738 + $0x1b8] sm:$0xff]
                  %851 = vst [vmem:[%s739 + $0x1b8] sm:$0xff] %v850
                  %v852 = vld [vmem:[%s738 + $0x1c0] sm:$0xff]
                  %853 = vst [vmem:[%s739 + $0x1c0] sm:$0xff] %v852
                  %v854 = vld [vmem:[%s738 + $0x1c8] sm:$0xff]
                  %855 = vst [vmem:[%s739 + $0x1c8] sm:$0xff] %v854
                  %v856 = vld [vmem:[%s738 + $0x1d0] sm:$0xff]
                  %857 = vst [vmem:[%s739 + $0x1d0] sm:$0xff] %v856
                  %v858 = vld [vmem:[%s738 + $0x1d8] sm:$0xff]
                  %859 = vst [vmem:[%s739 + $0x1d8] sm:$0xff] %v858
                  %v860 = vld [vmem:[%s738 + $0x1e0] sm:$0xff]
                  %861 = vst [vmem:[%s739 + $0x1e0] sm:$0xff] %v860
                  %v862 = vld [vmem:[%s738 + $0x1e8] sm:$0xff]
                  %863 = vst [vmem:[%s739 + $0x1e8] sm:$0xff] %v862
                  %v864 = vld [vmem:[%s738 + $0x1f0] sm:$0xff]
                  %865 = vst [vmem:[%s739 + $0x1f0] sm:$0xff] %v864
                  %v866 = vld [vmem:[%s738 + $0x1f8] sm:$0xff]
                  %867 = vst [vmem:[%s739 + $0x1f8] sm:$0xff] %v866
                  %v868 = vld [vmem:[%s738 + $0x200] sm:$0xff]
                  %869 = vst [vmem:[%s739 + $0x200] sm:$0xff] %v868
                  %v870 = vld [vmem:[%s738 + $0x208] sm:$0xff]
                  %871 = vst [vmem:[%s739 + $0x208] sm:$0xff] %v870
                  %v872 = vld [vmem:[%s738 + $0x210] sm:$0xff]
                  %873 = vst [vmem:[%s739 + $0x210] sm:$0xff] %v872
                  %v874 = vld [vmem:[%s738 + $0x218] sm:$0xff]
                  %875 = vst [vmem:[%s739 + $0x218] sm:$0xff] %v874
                  %v876 = vld [vmem:[%s738 + $0x220] sm:$0xff]
                  %877 = vst [vmem:[%s739 + $0x220] sm:$0xff] %v876
                  %v878 = vld [vmem:[%s738 + $0x228] sm:$0xff]
                  %879 = vst [vmem:[%s739 + $0x228] sm:$0xff] %v878
                  %v880 = vld [vmem:[%s738 + $0x230] sm:$0xff]
                  %881 = vst [vmem:[%s739 + $0x230] sm:$0xff] %v880
                  %v882 = vld [vmem:[%s738 + $0x238] sm:$0xff]
                  %883 = vst [vmem:[%s739 + $0x238] sm:$0xff] %v882
                  %v884 = vld [vmem:[%s738 + $0x480] sm:$0xff]
                  %885 = vst [vmem:[%s739 + $0x240] sm:$0xff] %v884
                  %v886 = vld [vmem:[%s738 + $0x488] sm:$0xff]
                  %887 = vst [vmem:[%s739 + $0x248] sm:$0xff] %v886
                  %v888 = vld [vmem:[%s738 + $0x490] sm:$0xff]
                  %889 = vst [vmem:[%s739 + $0x250] sm:$0xff] %v888
                  %v890 = vld [vmem:[%s738 + $0x498] sm:$0xff]
                  %891 = vst [vmem:[%s739 + $0x258] sm:$0xff] %v890
                  %v892 = vld [vmem:[%s738 + $0x4a0] sm:$0xff]
                  %893 = vst [vmem:[%s739 + $0x260] sm:$0xff] %v892
                  %v894 = vld [vmem:[%s738 + $0x4a8] sm:$0xff]
                  %895 = vst [vmem:[%s739 + $0x268] sm:$0xff] %v894
                  %v896 = vld [vmem:[%s738 + $0x4b0] sm:$0xff]
                  %897 = vst [vmem:[%s739 + $0x270] sm:$0xff] %v896
                  %v898 = vld [vmem:[%s738 + $0x4b8] sm:$0xff]
                  %899 = vst [vmem:[%s739 + $0x278] sm:$0xff] %v898
                  %v900 = vld [vmem:[%s738 + $0x4c0] sm:$0xff]
                  %901 = vst [vmem:[%s739 + $0x280] sm:$0xff] %v900
                  %v902 = vld [vmem:[%s738 + $0x4c8] sm:$0xff]
                  %903 = vst [vmem:[%s739 + $0x288] sm:$0xff] %v902
                  %v904 = vld [vmem:[%s738 + $0x4d0] sm:$0xff]
                  %905 = vst [vmem:[%s739 + $0x290] sm:$0xff] %v904
                  %v906 = vld [vmem:[%s738 + $0x4d8] sm:$0xff]
                  %907 = vst [vmem:[%s739 + $0x298] sm:$0xff] %v906
                  %v908 = vld [vmem:[%s738 + $0x4e0] sm:$0xff]
                  %909 = vst [vmem:[%s739 + $0x2a0] sm:$0xff] %v908
                  %v910 = vld [vmem:[%s738 + $0x4e8] sm:$0xff]
                  %911 = vst [vmem:[%s739 + $0x2a8] sm:$0xff] %v910
                  %v912 = vld [vmem:[%s738 + $0x4f0] sm:$0xff]
                  %913 = vst [vmem:[%s739 + $0x2b0] sm:$0xff] %v912
                  %v914 = vld [vmem:[%s738 + $0x4f8] sm:$0xff]
                  %915 = vst [vmem:[%s739 + $0x2b8] sm:$0xff] %v914
                  %v916 = vld [vmem:[%s738 + $0x500] sm:$0xff]
                  %917 = vst [vmem:[%s739 + $0x2c0] sm:$0xff] %v916
                  %v918 = vld [vmem:[%s738 + $0x508] sm:$0xff]
                  %919 = vst [vmem:[%s739 + $0x2c8] sm:$0xff] %v918
                  %v920 = vld [vmem:[%s738 + $0x510] sm:$0xff]
                  %921 = vst [vmem:[%s739 + $0x2d0] sm:$0xff] %v920
                  %v922 = vld [vmem:[%s738 + $0x518] sm:$0xff]
                  %923 = vst [vmem:[%s739 + $0x2d8] sm:$0xff] %v922
                  %v924 = vld [vmem:[%s738 + $0x520] sm:$0xff]
                  %925 = vst [vmem:[%s739 + $0x2e0] sm:$0xff] %v924
                  %v926 = vld [vmem:[%s738 + $0x528] sm:$0xff]
                  %927 = vst [vmem:[%s739 + $0x2e8] sm:$0xff] %v926
                  %v928 = vld [vmem:[%s738 + $0x530] sm:$0xff]
                  %929 = vst [vmem:[%s739 + $0x2f0] sm:$0xff] %v928
                  %v930 = vld [vmem:[%s738 + $0x538] sm:$0xff]
                  %931 = vst [vmem:[%s739 + $0x2f8] sm:$0xff] %v930
                  %v932 = vld [vmem:[%s738 + $0x540] sm:$0xff]
                  %933 = vst [vmem:[%s739 + $0x300] sm:$0xff] %v932
                  %v934 = vld [vmem:[%s738 + $0x548] sm:$0xff]
                  %935 = vst [vmem:[%s739 + $0x308] sm:$0xff] %v934
                  %v936 = vld [vmem:[%s738 + $0x550] sm:$0xff]
                  %937 = vst [vmem:[%s739 + $0x310] sm:$0xff] %v936
                  %v938 = vld [vmem:[%s738 + $0x558] sm:$0xff]
                  %939 = vst [vmem:[%s739 + $0x318] sm:$0xff] %v938
                  %v940 = vld [vmem:[%s738 + $0x560] sm:$0xff]
                  %941 = vst [vmem:[%s739 + $0x320] sm:$0xff] %v940
                  %v942 = vld [vmem:[%s738 + $0x568] sm:$0xff]
                  %943 = vst [vmem:[%s739 + $0x328] sm:$0xff] %v942
                  %v944 = vld [vmem:[%s738 + $0x570] sm:$0xff]
                  %945 = vst [vmem:[%s739 + $0x330] sm:$0xff] %v944
                  %v946 = vld [vmem:[%s738 + $0x578] sm:$0xff]
                  %947 = vst [vmem:[%s739 + $0x338] sm:$0xff] %v946
                  %v948 = vld [vmem:[%s738 + $0x580] sm:$0xff]
                  %949 = vst [vmem:[%s739 + $0x340] sm:$0xff] %v948
                  %v950 = vld [vmem:[%s738 + $0x588] sm:$0xff]
                  %951 = vst [vmem:[%s739 + $0x348] sm:$0xff] %v950
                  %v952 = vld [vmem:[%s738 + $0x590] sm:$0xff]
                  %953 = vst [vmem:[%s739 + $0x350] sm:$0xff] %v952
                  %v954 = vld [vmem:[%s738 + $0x598] sm:$0xff]
                  %955 = vst [vmem:[%s739 + $0x358] sm:$0xff] %v954
                  %v956 = vld [vmem:[%s738 + $0x5a0] sm:$0xff]
                  %957 = vst [vmem:[%s739 + $0x360] sm:$0xff] %v956
                  %v958 = vld [vmem:[%s738 + $0x5a8] sm:$0xff]
                  %959 = vst [vmem:[%s739 + $0x368] sm:$0xff] %v958
                  %v960 = vld [vmem:[%s738 + $0x5b0] sm:$0xff]
                  %961 = vst [vmem:[%s739 + $0x370] sm:$0xff] %v960
                  %v962 = vld [vmem:[%s738 + $0x5b8] sm:$0xff]
                  %963 = vst [vmem:[%s739 + $0x378] sm:$0xff] %v962
                  %v964 = vld [vmem:[%s738 + $0x5c0] sm:$0xff]
                  %965 = vst [vmem:[%s739 + $0x380] sm:$0xff] %v964
                  %v966 = vld [vmem:[%s738 + $0x5c8] sm:$0xff]
                  %967 = vst [vmem:[%s739 + $0x388] sm:$0xff] %v966
                  %v968 = vld [vmem:[%s738 + $0x5d0] sm:$0xff]
                  %969 = vst [vmem:[%s739 + $0x390] sm:$0xff] %v968
                  %v970 = vld [vmem:[%s738 + $0x5d8] sm:$0xff]
                  %971 = vst [vmem:[%s739 + $0x398] sm:$0xff] %v970
                  %v972 = vld [vmem:[%s738 + $0x5e0] sm:$0xff]
                  %973 = vst [vmem:[%s739 + $0x3a0] sm:$0xff] %v972
                  %v974 = vld [vmem:[%s738 + $0x5e8] sm:$0xff]
                  %975 = vst [vmem:[%s739 + $0x3a8] sm:$0xff] %v974
                  %v976 = vld [vmem:[%s738 + $0x5f0] sm:$0xff]
                  %977 = vst [vmem:[%s739 + $0x3b0] sm:$0xff] %v976
                  %v978 = vld [vmem:[%s738 + $0x5f8] sm:$0xff]
                  %979 = vst [vmem:[%s739 + $0x3b8] sm:$0xff] %v978
                  %v980 = vld [vmem:[%s738 + $0x600] sm:$0xff]
                  %981 = vst [vmem:[%s739 + $0x3c0] sm:$0xff] %v980
                  %v982 = vld [vmem:[%s738 + $0x608] sm:$0xff]
                  %983 = vst [vmem:[%s739 + $0x3c8] sm:$0xff] %v982
                  %v984 = vld [vmem:[%s738 + $0x610] sm:$0xff]
                  %985 = vst [vmem:[%s739 + $0x3d0] sm:$0xff] %v984
                  %v986 = vld [vmem:[%s738 + $0x618] sm:$0xff]
                  %987 = vst [vmem:[%s739 + $0x3d8] sm:$0xff] %v986
                  %v988 = vld [vmem:[%s738 + $0x620] sm:$0xff]
                  %989 = vst [vmem:[%s739 + $0x3e0] sm:$0xff] %v988
                  %v990 = vld [vmem:[%s738 + $0x628] sm:$0xff]
                  %991 = vst [vmem:[%s739 + $0x3e8] sm:$0xff] %v990
                  %v992 = vld [vmem:[%s738 + $0x630] sm:$0xff]
                  %993 = vst [vmem:[%s739 + $0x3f0] sm:$0xff] %v992
                  %v994 = vld [vmem:[%s738 + $0x638] sm:$0xff]
                  %995 = vst [vmem:[%s739 + $0x3f8] sm:$0xff] %v994
                  %v996 = vld [vmem:[%s738 + $0x640] sm:$0xff]
                  %997 = vst [vmem:[%s739 + $0x400] sm:$0xff] %v996
                  %v998 = vld [vmem:[%s738 + $0x648] sm:$0xff]
                  %999 = vst [vmem:[%s739 + $0x408] sm:$0xff] %v998
                  %v1000 = vld [vmem:[%s738 + $0x650] sm:$0xff]
                  %1001 = vst [vmem:[%s739 + $0x410] sm:$0xff] %v1000
                  %v1002 = vld [vmem:[%s738 + $0x658] sm:$0xff]
                  %1003 = vst [vmem:[%s739 + $0x418] sm:$0xff] %v1002
                  %v1004 = vld [vmem:[%s738 + $0x660] sm:$0xff]
                  %1005 = vst [vmem:[%s739 + $0x420] sm:$0xff] %v1004
                  %v1006 = vld [vmem:[%s738 + $0x668] sm:$0xff]
                  %1007 = vst [vmem:[%s739 + $0x428] sm:$0xff] %v1006
                  %v1008 = vld [vmem:[%s738 + $0x670] sm:$0xff]
                  %1009 = vst [vmem:[%s739 + $0x430] sm:$0xff] %v1008
                  %v1010 = vld [vmem:[%s738 + $0x678] sm:$0xff]
                  %1011 = vst [vmem:[%s739 + $0x438] sm:$0xff] %v1010
                  %v1012 = vld [vmem:[%s738 + $0x680] sm:$0xff]
                  %1013 = vst [vmem:[%s739 + $0x440] sm:$0xff] %v1012
                  %v1014 = vld [vmem:[%s738 + $0x688] sm:$0xff]
                  %1015 = vst [vmem:[%s739 + $0x448] sm:$0xff] %v1014
                  %v1016 = vld [vmem:[%s738 + $0x690] sm:$0xff]
                  %1017 = vst [vmem:[%s739 + $0x450] sm:$0xff] %v1016
                  %v1018 = vld [vmem:[%s738 + $0x698] sm:$0xff]
                  %1019 = vst [vmem:[%s739 + $0x458] sm:$0xff] %v1018
                  %v1020 = vld [vmem:[%s738 + $0x6a0] sm:$0xff]
                  %1021 = vst [vmem:[%s739 + $0x460] sm:$0xff] %v1020
                  %v1022 = vld [vmem:[%s738 + $0x6a8] sm:$0xff]
                  %1023 = vst [vmem:[%s739 + $0x468] sm:$0xff] %v1022
                  %v1024 = vld [vmem:[%s738 + $0x6b0] sm:$0xff]
                  %1025 = vst [vmem:[%s739 + $0x470] sm:$0xff] %v1024
                  %v1026 = vld [vmem:[%s738 + $0x6b8] sm:$0xff]
                  %1027 = vst [vmem:[%s739 + $0x478] sm:$0xff] %v1026
                  %v1028 = vld [vmem:[%s738 + $0x900] sm:$0xff]
                  %1029 = vst [vmem:[%s739 + $0x480] sm:$0xff] %v1028
                  %v1030 = vld [vmem:[%s738 + $0x908] sm:$0xff]
                  %1031 = vst [vmem:[%s739 + $0x488] sm:$0xff] %v1030
                  %v1032 = vld [vmem:[%s738 + $0x910] sm:$0xff]
                  %1033 = vst [vmem:[%s739 + $0x490] sm:$0xff] %v1032
                  %v1034 = vld [vmem:[%s738 + $0x918] sm:$0xff]
                  %1035 = vst [vmem:[%s739 + $0x498] sm:$0xff] %v1034
                  %v1036 = vld [vmem:[%s738 + $0x920] sm:$0xff]
                  %1037 = vst [vmem:[%s739 + $0x4a0] sm:$0xff] %v1036
                  %v1038 = vld [vmem:[%s738 + $0x928] sm:$0xff]
                  %1039 = vst [vmem:[%s739 + $0x4a8] sm:$0xff] %v1038
                  %v1040 = vld [vmem:[%s738 + $0x930] sm:$0xff]
                  %1041 = vst [vmem:[%s739 + $0x4b0] sm:$0xff] %v1040
                  %v1042 = vld [vmem:[%s738 + $0x938] sm:$0xff]
                  %1043 = vst [vmem:[%s739 + $0x4b8] sm:$0xff] %v1042
                  %v1044 = vld [vmem:[%s738 + $0x940] sm:$0xff]
                  %1045 = vst [vmem:[%s739 + $0x4c0] sm:$0xff] %v1044
                  %v1046 = vld [vmem:[%s738 + $0x948] sm:$0xff]
                  %1047 = vst [vmem:[%s739 + $0x4c8] sm:$0xff] %v1046
                  %v1048 = vld [vmem:[%s738 + $0x950] sm:$0xff]
                  %1049 = vst [vmem:[%s739 + $0x4d0] sm:$0xff] %v1048
                  %v1050 = vld [vmem:[%s738 + $0x958] sm:$0xff]
                  %1051 = vst [vmem:[%s739 + $0x4d8] sm:$0xff] %v1050
                  %v1052 = vld [vmem:[%s738 + $0x960] sm:$0xff]
                  %1053 = vst [vmem:[%s739 + $0x4e0] sm:$0xff] %v1052
                  %v1054 = vld [vmem:[%s738 + $0x968] sm:$0xff]
                  %1055 = vst [vmem:[%s739 + $0x4e8] sm:$0xff] %v1054
                  %v1056 = vld [vmem:[%s738 + $0x970] sm:$0xff]
                  %1057 = vst [vmem:[%s739 + $0x4f0] sm:$0xff] %v1056
                  %v1058 = vld [vmem:[%s738 + $0x978] sm:$0xff]
                  %1059 = vst [vmem:[%s739 + $0x4f8] sm:$0xff] %v1058
                  %v1060 = vld [vmem:[%s738 + $0x980] sm:$0xff]
                  %1061 = vst [vmem:[%s739 + $0x500] sm:$0xff] %v1060
                  %v1062 = vld [vmem:[%s738 + $0x988] sm:$0xff]
                  %1063 = vst [vmem:[%s739 + $0x508] sm:$0xff] %v1062
                  %v1064 = vld [vmem:[%s738 + $0x990] sm:$0xff]
                  %1065 = vst [vmem:[%s739 + $0x510] sm:$0xff] %v1064
                  %v1066 = vld [vmem:[%s738 + $0x998] sm:$0xff]
                  %1067 = vst [vmem:[%s739 + $0x518] sm:$0xff] %v1066
                  %v1068 = vld [vmem:[%s738 + $0x9a0] sm:$0xff]
                  %1069 = vst [vmem:[%s739 + $0x520] sm:$0xff] %v1068
                  %v1070 = vld [vmem:[%s738 + $0x9a8] sm:$0xff]
                  %1071 = vst [vmem:[%s739 + $0x528] sm:$0xff] %v1070
                  %v1072 = vld [vmem:[%s738 + $0x9b0] sm:$0xff]
                  %1073 = vst [vmem:[%s739 + $0x530] sm:$0xff] %v1072
                  %v1074 = vld [vmem:[%s738 + $0x9b8] sm:$0xff]
                  %1075 = vst [vmem:[%s739 + $0x538] sm:$0xff] %v1074
                  %v1076 = vld [vmem:[%s738 + $0x9c0] sm:$0xff]
                  %1077 = vst [vmem:[%s739 + $0x540] sm:$0xff] %v1076
                  %v1078 = vld [vmem:[%s738 + $0x9c8] sm:$0xff]
                  %1079 = vst [vmem:[%s739 + $0x548] sm:$0xff] %v1078
                  %v1080 = vld [vmem:[%s738 + $0x9d0] sm:$0xff]
                  %1081 = vst [vmem:[%s739 + $0x550] sm:$0xff] %v1080
                  %v1082 = vld [vmem:[%s738 + $0x9d8] sm:$0xff]
                  %1083 = vst [vmem:[%s739 + $0x558] sm:$0xff] %v1082
                  %v1084 = vld [vmem:[%s738 + $0x9e0] sm:$0xff]
                  %1085 = vst [vmem:[%s739 + $0x560] sm:$0xff] %v1084
                  %v1086 = vld [vmem:[%s738 + $0x9e8] sm:$0xff]
                  %1087 = vst [vmem:[%s739 + $0x568] sm:$0xff] %v1086
                  %v1088 = vld [vmem:[%s738 + $0x9f0] sm:$0xff]
                  %1089 = vst [vmem:[%s739 + $0x570] sm:$0xff] %v1088
                  %v1090 = vld [vmem:[%s738 + $0x9f8] sm:$0xff]
                  %1091 = vst [vmem:[%s739 + $0x578] sm:$0xff] %v1090
                  %v1092 = vld [vmem:[%s738 + $0xa00] sm:$0xff]
                  %1093 = vst [vmem:[%s739 + $0x580] sm:$0xff] %v1092
                  %v1094 = vld [vmem:[%s738 + $0xa08] sm:$0xff]
                  %1095 = vst [vmem:[%s739 + $0x588] sm:$0xff] %v1094
                  %v1096 = vld [vmem:[%s738 + $0xa10] sm:$0xff]
                  %1097 = vst [vmem:[%s739 + $0x590] sm:$0xff] %v1096
                  %v1098 = vld [vmem:[%s738 + $0xa18] sm:$0xff]
                  %1099 = vst [vmem:[%s739 + $0x598] sm:$0xff] %v1098
                  %v1100 = vld [vmem:[%s738 + $0xa20] sm:$0xff]
                  %1101 = vst [vmem:[%s739 + $0x5a0] sm:$0xff] %v1100
                  %v1102 = vld [vmem:[%s738 + $0xa28] sm:$0xff]
                  %1103 = vst [vmem:[%s739 + $0x5a8] sm:$0xff] %v1102
                  %v1104 = vld [vmem:[%s738 + $0xa30] sm:$0xff]
                  %1105 = vst [vmem:[%s739 + $0x5b0] sm:$0xff] %v1104
                  %v1106 = vld [vmem:[%s738 + $0xa38] sm:$0xff]
                  %1107 = vst [vmem:[%s739 + $0x5b8] sm:$0xff] %v1106
                  %v1108 = vld [vmem:[%s738 + $0xa40] sm:$0xff]
                  %1109 = vst [vmem:[%s739 + $0x5c0] sm:$0xff] %v1108
                  %v1110 = vld [vmem:[%s738 + $0xa48] sm:$0xff]
                  %1111 = vst [vmem:[%s739 + $0x5c8] sm:$0xff] %v1110
                  %v1112 = vld [vmem:[%s738 + $0xa50] sm:$0xff]
                  %1113 = vst [vmem:[%s739 + $0x5d0] sm:$0xff] %v1112
                  %v1114 = vld [vmem:[%s738 + $0xa58] sm:$0xff]
                  %1115 = vst [vmem:[%s739 + $0x5d8] sm:$0xff] %v1114
                  %v1116 = vld [vmem:[%s738 + $0xa60] sm:$0xff]
                  %1117 = vst [vmem:[%s739 + $0x5e0] sm:$0xff] %v1116
                  %v1118 = vld [vmem:[%s738 + $0xa68] sm:$0xff]
                  %1119 = vst [vmem:[%s739 + $0x5e8] sm:$0xff] %v1118
                  %v1120 = vld [vmem:[%s738 + $0xa70] sm:$0xff]
                  %1121 = vst [vmem:[%s739 + $0x5f0] sm:$0xff] %v1120
                  %v1122 = vld [vmem:[%s738 + $0xa78] sm:$0xff]
                  %1123 = vst [vmem:[%s739 + $0x5f8] sm:$0xff] %v1122
                  %v1124 = vld [vmem:[%s738 + $0xa80] sm:$0xff]
                  %1125 = vst [vmem:[%s739 + $0x600] sm:$0xff] %v1124
                  %v1126 = vld [vmem:[%s738 + $0xa88] sm:$0xff]
                  %1127 = vst [vmem:[%s739 + $0x608] sm:$0xff] %v1126
                  %v1128 = vld [vmem:[%s738 + $0xa90] sm:$0xff]
                  %1129 = vst [vmem:[%s739 + $0x610] sm:$0xff] %v1128
                  %v1130 = vld [vmem:[%s738 + $0xa98] sm:$0xff]
                  %1131 = vst [vmem:[%s739 + $0x618] sm:$0xff] %v1130
                  %v1132 = vld [vmem:[%s738 + $0xaa0] sm:$0xff]
                  %1133 = vst [vmem:[%s739 + $0x620] sm:$0xff] %v1132
                  %v1134 = vld [vmem:[%s738 + $0xaa8] sm:$0xff]
                  %1135 = vst [vmem:[%s739 + $0x628] sm:$0xff] %v1134
                  %v1136 = vld [vmem:[%s738 + $0xab0] sm:$0xff]
                  %1137 = vst [vmem:[%s739 + $0x630] sm:$0xff] %v1136
                  %v1138 = vld [vmem:[%s738 + $0xab8] sm:$0xff]
                  %1139 = vst [vmem:[%s739 + $0x638] sm:$0xff] %v1138
                  %v1140 = vld [vmem:[%s738 + $0xac0] sm:$0xff]
                  %1141 = vst [vmem:[%s739 + $0x640] sm:$0xff] %v1140
                  %v1142 = vld [vmem:[%s738 + $0xac8] sm:$0xff]
                  %1143 = vst [vmem:[%s739 + $0x648] sm:$0xff] %v1142
                  %v1144 = vld [vmem:[%s738 + $0xad0] sm:$0xff]
                  %1145 = vst [vmem:[%s739 + $0x650] sm:$0xff] %v1144
                  %v1146 = vld [vmem:[%s738 + $0xad8] sm:$0xff]
                  %1147 = vst [vmem:[%s739 + $0x658] sm:$0xff] %v1146
                  %v1148 = vld [vmem:[%s738 + $0xae0] sm:$0xff]
                  %1149 = vst [vmem:[%s739 + $0x660] sm:$0xff] %v1148
                  %v1150 = vld [vmem:[%s738 + $0xae8] sm:$0xff]
                  %1151 = vst [vmem:[%s739 + $0x668] sm:$0xff] %v1150
                  %v1152 = vld [vmem:[%s738 + $0xaf0] sm:$0xff]
                  %1153 = vst [vmem:[%s739 + $0x670] sm:$0xff] %v1152
                  %v1154 = vld [vmem:[%s738 + $0xaf8] sm:$0xff]
                  %1155 = vst [vmem:[%s739 + $0x678] sm:$0xff] %v1154
                  %v1156 = vld [vmem:[%s738 + $0xb00] sm:$0xff]
                  %1157 = vst [vmem:[%s739 + $0x680] sm:$0xff] %v1156
                  %v1158 = vld [vmem:[%s738 + $0xb08] sm:$0xff]
                  %1159 = vst [vmem:[%s739 + $0x688] sm:$0xff] %v1158
                  %v1160 = vld [vmem:[%s738 + $0xb10] sm:$0xff]
                  %1161 = vst [vmem:[%s739 + $0x690] sm:$0xff] %v1160
                  %v1162 = vld [vmem:[%s738 + $0xb18] sm:$0xff]
                  %1163 = vst [vmem:[%s739 + $0x698] sm:$0xff] %v1162
                  %v1164 = vld [vmem:[%s738 + $0xb20] sm:$0xff]
                  %1165 = vst [vmem:[%s739 + $0x6a0] sm:$0xff] %v1164
                  %v1166 = vld [vmem:[%s738 + $0xb28] sm:$0xff]
                  %1167 = vst [vmem:[%s739 + $0x6a8] sm:$0xff] %v1166
                  %v1168 = vld [vmem:[%s738 + $0xb30] sm:$0xff]
                  %1169 = vst [vmem:[%s739 + $0x6b0] sm:$0xff] %v1168
                  %v1170 = vld [vmem:[%s738 + $0xb38] sm:$0xff]
                  %1171 = vst [vmem:[%s739 + $0x6b8] sm:$0xff] %v1170
                  %v1172 = vld [vmem:[%s738 + $0xd80] sm:$0xff]
                  %1173 = vst [vmem:[%s739 + $0x6c0] sm:$0xff] %v1172
                  %v1174 = vld [vmem:[%s738 + $0xd88] sm:$0xff]
                  %1175 = vst [vmem:[%s739 + $0x6c8] sm:$0xff] %v1174
                  %v1176 = vld [vmem:[%s738 + $0xd90] sm:$0xff]
                  %1177 = vst [vmem:[%s739 + $0x6d0] sm:$0xff] %v1176
                  %v1178 = vld [vmem:[%s738 + $0xd98] sm:$0xff]
                  %1179 = vst [vmem:[%s739 + $0x6d8] sm:$0xff] %v1178
                  %v1180 = vld [vmem:[%s738 + $0xda0] sm:$0xff]
                  %1181 = vst [vmem:[%s739 + $0x6e0] sm:$0xff] %v1180
                  %v1182 = vld [vmem:[%s738 + $0xda8] sm:$0xff]
                  %1183 = vst [vmem:[%s739 + $0x6e8] sm:$0xff] %v1182
                  %v1184 = vld [vmem:[%s738 + $0xdb0] sm:$0xff]
                  %1185 = vst [vmem:[%s739 + $0x6f0] sm:$0xff] %v1184
                  %v1186 = vld [vmem:[%s738 + $0xdb8] sm:$0xff]
                  %1187 = vst [vmem:[%s739 + $0x6f8] sm:$0xff] %v1186
                  %v1188 = vld [vmem:[%s738 + $0xdc0] sm:$0xff]
                  %1189 = vst [vmem:[%s739 + $0x700] sm:$0xff] %v1188
                  %v1190 = vld [vmem:[%s738 + $0xdc8] sm:$0xff]
                  %1191 = vst [vmem:[%s739 + $0x708] sm:$0xff] %v1190
                  %v1192 = vld [vmem:[%s738 + $0xdd0] sm:$0xff]
                  %1193 = vst [vmem:[%s739 + $0x710] sm:$0xff] %v1192
                  %v1194 = vld [vmem:[%s738 + $0xdd8] sm:$0xff]
                  %1195 = vst [vmem:[%s739 + $0x718] sm:$0xff] %v1194
                  %v1196 = vld [vmem:[%s738 + $0xde0] sm:$0xff]
                  %1197 = vst [vmem:[%s739 + $0x720] sm:$0xff] %v1196
                  %v1198 = vld [vmem:[%s738 + $0xde8] sm:$0xff]
                  %1199 = vst [vmem:[%s739 + $0x728] sm:$0xff] %v1198
                  %v1200 = vld [vmem:[%s738 + $0xdf0] sm:$0xff]
                  %1201 = vst [vmem:[%s739 + $0x730] sm:$0xff] %v1200
                  %v1202 = vld [vmem:[%s738 + $0xdf8] sm:$0xff]
                  %1203 = vst [vmem:[%s739 + $0x738] sm:$0xff] %v1202
                  %v1204 = vld [vmem:[%s738 + $0xe00] sm:$0xff]
                  %1205 = vst [vmem:[%s739 + $0x740] sm:$0xff] %v1204
                  %v1206 = vld [vmem:[%s738 + $0xe08] sm:$0xff]
                  %1207 = vst [vmem:[%s739 + $0x748] sm:$0xff] %v1206
                  %v1208 = vld [vmem:[%s738 + $0xe10] sm:$0xff]
                  %1209 = vst [vmem:[%s739 + $0x750] sm:$0xff] %v1208
                  %v1210 = vld [vmem:[%s738 + $0xe18] sm:$0xff]
                  %1211 = vst [vmem:[%s739 + $0x758] sm:$0xff] %v1210
                  %v1212 = vld [vmem:[%s738 + $0xe20] sm:$0xff]
                  %1213 = vst [vmem:[%s739 + $0x760] sm:$0xff] %v1212
                  %v1214 = vld [vmem:[%s738 + $0xe28] sm:$0xff]
                  %1215 = vst [vmem:[%s739 + $0x768] sm:$0xff] %v1214
                  %v1216 = vld [vmem:[%s738 + $0xe30] sm:$0xff]
                  %1217 = vst [vmem:[%s739 + $0x770] sm:$0xff] %v1216
                  %v1218 = vld [vmem:[%s738 + $0xe38] sm:$0xff]
                  %1219 = vst [vmem:[%s739 + $0x778] sm:$0xff] %v1218
                  %v1220 = vld [vmem:[%s738 + $0xe40] sm:$0xff]
                  %1221 = vst [vmem:[%s739 + $0x780] sm:$0xff] %v1220
                  %v1222 = vld [vmem:[%s738 + $0xe48] sm:$0xff]
                  %1223 = vst [vmem:[%s739 + $0x788] sm:$0xff] %v1222
                  %v1224 = vld [vmem:[%s738 + $0xe50] sm:$0xff]
                  %1225 = vst [vmem:[%s739 + $0x790] sm:$0xff] %v1224
                  %v1226 = vld [vmem:[%s738 + $0xe58] sm:$0xff]
                  %1227 = vst [vmem:[%s739 + $0x798] sm:$0xff] %v1226
                  %v1228 = vld [vmem:[%s738 + $0xe60] sm:$0xff]
                  %1229 = vst [vmem:[%s739 + $0x7a0] sm:$0xff] %v1228
                  %v1230 = vld [vmem:[%s738 + $0xe68] sm:$0xff]
                  %1231 = vst [vmem:[%s739 + $0x7a8] sm:$0xff] %v1230
                  %v1232 = vld [vmem:[%s738 + $0xe70] sm:$0xff]
                  %1233 = vst [vmem:[%s739 + $0x7b0] sm:$0xff] %v1232
                  %v1234 = vld [vmem:[%s738 + $0xe78] sm:$0xff]
                  %1235 = vst [vmem:[%s739 + $0x7b8] sm:$0xff] %v1234
                  %v1236 = vld [vmem:[%s738 + $0xe80] sm:$0xff]
                  %1237 = vst [vmem:[%s739 + $0x7c0] sm:$0xff] %v1236
                  %v1238 = vld [vmem:[%s738 + $0xe88] sm:$0xff]
                  %1239 = vst [vmem:[%s739 + $0x7c8] sm:$0xff] %v1238
                  %v1240 = vld [vmem:[%s738 + $0xe90] sm:$0xff]
                  %1241 = vst [vmem:[%s739 + $0x7d0] sm:$0xff] %v1240
                  %v1242 = vld [vmem:[%s738 + $0xe98] sm:$0xff]
                  %1243 = vst [vmem:[%s739 + $0x7d8] sm:$0xff] %v1242
                  %v1244 = vld [vmem:[%s738 + $0xea0] sm:$0xff]
                  %1245 = vst [vmem:[%s739 + $0x7e0] sm:$0xff] %v1244
                  %v1246 = vld [vmem:[%s738 + $0xea8] sm:$0xff]
                  %1247 = vst [vmem:[%s739 + $0x7e8] sm:$0xff] %v1246
                  %v1248 = vld [vmem:[%s738 + $0xeb0] sm:$0xff]
                  %1249 = vst [vmem:[%s739 + $0x7f0] sm:$0xff] %v1248
                  %v1250 = vld [vmem:[%s738 + $0xeb8] sm:$0xff]
                  %1251 = vst [vmem:[%s739 + $0x7f8] sm:$0xff] %v1250
                  %v1252 = vld [vmem:[%s738 + $0xec0] sm:$0xff]
                  %1253 = vst [vmem:[%s739 + $0x800] sm:$0xff] %v1252
                  %v1254 = vld [vmem:[%s738 + $0xec8] sm:$0xff]
                  %1255 = vst [vmem:[%s739 + $0x808] sm:$0xff] %v1254
                  %v1256 = vld [vmem:[%s738 + $0xed0] sm:$0xff]
                  %1257 = vst [vmem:[%s739 + $0x810] sm:$0xff] %v1256
                  %v1258 = vld [vmem:[%s738 + $0xed8] sm:$0xff]
                  %1259 = vst [vmem:[%s739 + $0x818] sm:$0xff] %v1258
                  %v1260 = vld [vmem:[%s738 + $0xee0] sm:$0xff]
                  %1261 = vst [vmem:[%s739 + $0x820] sm:$0xff] %v1260
                  %v1262 = vld [vmem:[%s738 + $0xee8] sm:$0xff]
                  %1263 = vst [vmem:[%s739 + $0x828] sm:$0xff] %v1262
                  %v1264 = vld [vmem:[%s738 + $0xef0] sm:$0xff]
                  %1265 = vst [vmem:[%s739 + $0x830] sm:$0xff] %v1264
                  %v1266 = vld [vmem:[%s738 + $0xef8] sm:$0xff]
                  %1267 = vst [vmem:[%s739 + $0x838] sm:$0xff] %v1266
                  %v1268 = vld [vmem:[%s738 + $0xf00] sm:$0xff]
                  %1269 = vst [vmem:[%s739 + $0x840] sm:$0xff] %v1268
                  %v1270 = vld [vmem:[%s738 + $0xf08] sm:$0xff]
                  %1271 = vst [vmem:[%s739 + $0x848] sm:$0xff] %v1270
                  %v1272 = vld [vmem:[%s738 + $0xf10] sm:$0xff]
                  %1273 = vst [vmem:[%s739 + $0x850] sm:$0xff] %v1272
                  %v1274 = vld [vmem:[%s738 + $0xf18] sm:$0xff]
                  %1275 = vst [vmem:[%s739 + $0x858] sm:$0xff] %v1274
                  %v1276 = vld [vmem:[%s738 + $0xf20] sm:$0xff]
                  %1277 = vst [vmem:[%s739 + $0x860] sm:$0xff] %v1276
                  %v1278 = vld [vmem:[%s738 + $0xf28] sm:$0xff]
                  %1279 = vst [vmem:[%s739 + $0x868] sm:$0xff] %v1278
                  %v1280 = vld [vmem:[%s738 + $0xf30] sm:$0xff]
                  %1281 = vst [vmem:[%s739 + $0x870] sm:$0xff] %v1280
                  %v1282 = vld [vmem:[%s738 + $0xf38] sm:$0xff]
                  %1283 = vst [vmem:[%s739 + $0x878] sm:$0xff] %v1282
                  %v1284 = vld [vmem:[%s738 + $0xf40] sm:$0xff]
                  %1285 = vst [vmem:[%s739 + $0x880] sm:$0xff] %v1284
                  %v1286 = vld [vmem:[%s738 + $0xf48] sm:$0xff]
                  %1287 = vst [vmem:[%s739 + $0x888] sm:$0xff] %v1286
                  %v1288 = vld [vmem:[%s738 + $0xf50] sm:$0xff]
                  %1289 = vst [vmem:[%s739 + $0x890] sm:$0xff] %v1288
                  %v1290 = vld [vmem:[%s738 + $0xf58] sm:$0xff]
                  %1291 = vst [vmem:[%s739 + $0x898] sm:$0xff] %v1290
                  %v1292 = vld [vmem:[%s738 + $0xf60] sm:$0xff]
                  %1293 = vst [vmem:[%s739 + $0x8a0] sm:$0xff] %v1292
                  %v1294 = vld [vmem:[%s738 + $0xf68] sm:$0xff]
                  %1295 = vst [vmem:[%s739 + $0x8a8] sm:$0xff] %v1294
                  %v1296 = vld [vmem:[%s738 + $0xf70] sm:$0xff]
                  %1297 = vst [vmem:[%s739 + $0x8b0] sm:$0xff] %v1296
                  %v1298 = vld [vmem:[%s738 + $0xf78] sm:$0xff]
                  %1299 = vst [vmem:[%s739 + $0x8b8] sm:$0xff] %v1298
                  %v1300 = vld [vmem:[%s738 + $0xf80] sm:$0xff]
                  %1301 = vst [vmem:[%s739 + $0x8c0] sm:$0xff] %v1300
                  %v1302 = vld [vmem:[%s738 + $0xf88] sm:$0xff]
                  %1303 = vst [vmem:[%s739 + $0x8c8] sm:$0xff] %v1302
                  %v1304 = vld [vmem:[%s738 + $0xf90] sm:$0xff]
                  %1305 = vst [vmem:[%s739 + $0x8d0] sm:$0xff] %v1304
                  %v1306 = vld [vmem:[%s738 + $0xf98] sm:$0xff]
                  %1307 = vst [vmem:[%s739 + $0x8d8] sm:$0xff] %v1306
                  %v1308 = vld [vmem:[%s738 + $0xfa0] sm:$0xff]
                  %1309 = vst [vmem:[%s739 + $0x8e0] sm:$0xff] %v1308
                  %v1310 = vld [vmem:[%s738 + $0xfa8] sm:$0xff]
                  %1311 = vst [vmem:[%s739 + $0x8e8] sm:$0xff] %v1310
                  %v1312 = vld [vmem:[%s738 + $0xfb0] sm:$0xff]
                  %1313 = vst [vmem:[%s739 + $0x8f0] sm:$0xff] %v1312
                  %v1314 = vld [vmem:[%s738 + $0xfb8] sm:$0xff]
                  %1315 = vst [vmem:[%s739 + $0x8f8] sm:$0xff] %v1314
                $region56: #{forward.2} parent=50 // loop_footer
                  %s737 = sadd.s32 1, %s733
                $region57: #{forward.2} parent=50 // loop_footer_branch
                  %732 = sbr.rel target = $region53
                $region58: #{forward.2} parent=50 // loop_exit
                  _
              $region51: #{forward.2} parent=35 // pred_fallthru
                _
              // Predicated region
              $region59: #{forward.2} parent=35 // pred_check
                _
              $region60: #{forward.2} parent=35 // pred_check_branch
                %1317 = sbr.rel target = $region62
              $region61: #{forward.2} parent=35 // pred_region
                _
              $region62: #{forward.2} parent=35 // pred_fallthru
                _
            $region36: #{forward.2} parent=31 // pred_fallthru
              _
            // Predicated region
            $region37: #{forward.2} parent=31 // pred_check
              _
            $region38: #{forward.2} parent=31 // pred_check_branch
              %143 = sbr.rel target = $region40
            $region39: #{forward.2} parent=31 // pred_region
              %s145 = ssub.s32 256, 1
              loop: start=0, step=1, limit=1
              $region41: #{forward.2} parent=39 // loop_pre_header
                _
              $region42: #{forward.2} parent=39 // loop_header
                %s147 = sphi 0, %s151
                %p148 = scmp.ge.s32.totalorder %s147, 1
                %s152 = sphi %s137, %s137
                %s153 = sphi %s134, %s134
              $region43: #{forward.2} parent=39 // loop_header_branch
                %150 = sbr.rel (%p148) target = $region47
              $region44: #{forward.2} parent=39 // loop_body
                %v154 = vld [vmem:[%s152] sm:%s145]
                %155 = vst [vmem:[%s153] sm:%s145] %v154
                %v156 = vld [vmem:[%s152 + $0x8] sm:%s145]
                %157 = vst [vmem:[%s153 + $0x8] sm:%s145] %v156
                %v158 = vld [vmem:[%s152 + $0x10] sm:%s145]
                %159 = vst [vmem:[%s153 + $0x10] sm:%s145] %v158
                %v160 = vld [vmem:[%s152 + $0x18] sm:%s145]
                %161 = vst [vmem:[%s153 + $0x18] sm:%s145] %v160
                %v162 = vld [vmem:[%s152 + $0x20] sm:%s145]
                %163 = vst [vmem:[%s153 + $0x20] sm:%s145] %v162
                %v164 = vld [vmem:[%s152 + $0x28] sm:%s145]
                %165 = vst [vmem:[%s153 + $0x28] sm:%s145] %v164
                %v166 = vld [vmem:[%s152 + $0x30] sm:%s145]
                %167 = vst [vmem:[%s153 + $0x30] sm:%s145] %v166
                %v168 = vld [vmem:[%s152 + $0x38] sm:%s145]
                %169 = vst [vmem:[%s153 + $0x38] sm:%s145] %v168
                %v170 = vld [vmem:[%s152 + $0x40] sm:%s145]
                %171 = vst [vmem:[%s153 + $0x40] sm:%s145] %v170
                %v172 = vld [vmem:[%s152 + $0x48] sm:%s145]
                %173 = vst [vmem:[%s153 + $0x48] sm:%s145] %v172
                %v174 = vld [vmem:[%s152 + $0x50] sm:%s145]
                %175 = vst [vmem:[%s153 + $0x50] sm:%s145] %v174
                %v176 = vld [vmem:[%s152 + $0x58] sm:%s145]
                %177 = vst [vmem:[%s153 + $0x58] sm:%s145] %v176
                %v178 = vld [vmem:[%s152 + $0x60] sm:%s145]
                %179 = vst [vmem:[%s153 + $0x60] sm:%s145] %v178
                %v180 = vld [vmem:[%s152 + $0x68] sm:%s145]
                %181 = vst [vmem:[%s153 + $0x68] sm:%s145] %v180
                %v182 = vld [vmem:[%s152 + $0x70] sm:%s145]
                %183 = vst [vmem:[%s153 + $0x70] sm:%s145] %v182
                %v184 = vld [vmem:[%s152 + $0x78] sm:%s145]
                %185 = vst [vmem:[%s153 + $0x78] sm:%s145] %v184
                %v186 = vld [vmem:[%s152 + $0x80] sm:%s145]
                %187 = vst [vmem:[%s153 + $0x80] sm:%s145] %v186
                %v188 = vld [vmem:[%s152 + $0x88] sm:%s145]
                %189 = vst [vmem:[%s153 + $0x88] sm:%s145] %v188
                %v190 = vld [vmem:[%s152 + $0x90] sm:%s145]
                %191 = vst [vmem:[%s153 + $0x90] sm:%s145] %v190
                %v192 = vld [vmem:[%s152 + $0x98] sm:%s145]
                %193 = vst [vmem:[%s153 + $0x98] sm:%s145] %v192
                %v194 = vld [vmem:[%s152 + $0xa0] sm:%s145]
                %195 = vst [vmem:[%s153 + $0xa0] sm:%s145] %v194
                %v196 = vld [vmem:[%s152 + $0xa8] sm:%s145]
                %197 = vst [vmem:[%s153 + $0xa8] sm:%s145] %v196
                %v198 = vld [vmem:[%s152 + $0xb0] sm:%s145]
                %199 = vst [vmem:[%s153 + $0xb0] sm:%s145] %v198
                %v200 = vld [vmem:[%s152 + $0xb8] sm:%s145]
                %201 = vst [vmem:[%s153 + $0xb8] sm:%s145] %v200
                %v202 = vld [vmem:[%s152 + $0xc0] sm:%s145]
                %203 = vst [vmem:[%s153 + $0xc0] sm:%s145] %v202
                %v204 = vld [vmem:[%s152 + $0xc8] sm:%s145]
                %205 = vst [vmem:[%s153 + $0xc8] sm:%s145] %v204
                %v206 = vld [vmem:[%s152 + $0xd0] sm:%s145]
                %207 = vst [vmem:[%s153 + $0xd0] sm:%s145] %v206
                %v208 = vld [vmem:[%s152 + $0xd8] sm:%s145]
                %209 = vst [vmem:[%s153 + $0xd8] sm:%s145] %v208
                %v210 = vld [vmem:[%s152 + $0xe0] sm:%s145]
                %211 = vst [vmem:[%s153 + $0xe0] sm:%s145] %v210
                %v212 = vld [vmem:[%s152 + $0xe8] sm:%s145]
                %213 = vst [vmem:[%s153 + $0xe8] sm:%s145] %v212
                %v214 = vld [vmem:[%s152 + $0xf0] sm:%s145]
                %215 = vst [vmem:[%s153 + $0xf0] sm:%s145] %v214
                %v216 = vld [vmem:[%s152 + $0xf8] sm:%s145]
                %217 = vst [vmem:[%s153 + $0xf8] sm:%s145] %v216
                %v218 = vld [vmem:[%s152 + $0x100] sm:%s145]
                %219 = vst [vmem:[%s153 + $0x100] sm:%s145] %v218
                %v220 = vld [vmem:[%s152 + $0x108] sm:%s145]
                %221 = vst [vmem:[%s153 + $0x108] sm:%s145] %v220
                %v222 = vld [vmem:[%s152 + $0x110] sm:%s145]
                %223 = vst [vmem:[%s153 + $0x110] sm:%s145] %v222
                %v224 = vld [vmem:[%s152 + $0x118] sm:%s145]
                %225 = vst [vmem:[%s153 + $0x118] sm:%s145] %v224
                %v226 = vld [vmem:[%s152 + $0x120] sm:%s145]
                %227 = vst [vmem:[%s153 + $0x120] sm:%s145] %v226
                %v228 = vld [vmem:[%s152 + $0x128] sm:%s145]
                %229 = vst [vmem:[%s153 + $0x128] sm:%s145] %v228
                %v230 = vld [vmem:[%s152 + $0x130] sm:%s145]
                %231 = vst [vmem:[%s153 + $0x130] sm:%s145] %v230
                %v232 = vld [vmem:[%s152 + $0x138] sm:%s145]
                %233 = vst [vmem:[%s153 + $0x138] sm:%s145] %v232
                %v234 = vld [vmem:[%s152 + $0x140] sm:%s145]
                %235 = vst [vmem:[%s153 + $0x140] sm:%s145] %v234
                %v236 = vld [vmem:[%s152 + $0x148] sm:%s145]
                %237 = vst [vmem:[%s153 + $0x148] sm:%s145] %v236
                %v238 = vld [vmem:[%s152 + $0x150] sm:%s145]
                %239 = vst [vmem:[%s153 + $0x150] sm:%s145] %v238
                %v240 = vld [vmem:[%s152 + $0x158] sm:%s145]
                %241 = vst [vmem:[%s153 + $0x158] sm:%s145] %v240
                %v242 = vld [vmem:[%s152 + $0x160] sm:%s145]
                %243 = vst [vmem:[%s153 + $0x160] sm:%s145] %v242
                %v244 = vld [vmem:[%s152 + $0x168] sm:%s145]
                %245 = vst [vmem:[%s153 + $0x168] sm:%s145] %v244
                %v246 = vld [vmem:[%s152 + $0x170] sm:%s145]
                %247 = vst [vmem:[%s153 + $0x170] sm:%s145] %v246
                %v248 = vld [vmem:[%s152 + $0x178] sm:%s145]
                %249 = vst [vmem:[%s153 + $0x178] sm:%s145] %v248
                %v250 = vld [vmem:[%s152 + $0x180] sm:%s145]
                %251 = vst [vmem:[%s153 + $0x180] sm:%s145] %v250
                %v252 = vld [vmem:[%s152 + $0x188] sm:%s145]
                %253 = vst [vmem:[%s153 + $0x188] sm:%s145] %v252
                %v254 = vld [vmem:[%s152 + $0x190] sm:%s145]
                %255 = vst [vmem:[%s153 + $0x190] sm:%s145] %v254
                %v256 = vld [vmem:[%s152 + $0x198] sm:%s145]
                %257 = vst [vmem:[%s153 + $0x198] sm:%s145] %v256
                %v258 = vld [vmem:[%s152 + $0x1a0] sm:%s145]
                %259 = vst [vmem:[%s153 + $0x1a0] sm:%s145] %v258
                %v260 = vld [vmem:[%s152 + $0x1a8] sm:%s145]
                %261 = vst [vmem:[%s153 + $0x1a8] sm:%s145] %v260
                %v262 = vld [vmem:[%s152 + $0x1b0] sm:%s145]
                %263 = vst [vmem:[%s153 + $0x1b0] sm:%s145] %v262
                %v264 = vld [vmem:[%s152 + $0x1b8] sm:%s145]
                %265 = vst [vmem:[%s153 + $0x1b8] sm:%s145] %v264
                %v266 = vld [vmem:[%s152 + $0x1c0] sm:%s145]
                %267 = vst [vmem:[%s153 + $0x1c0] sm:%s145] %v266
                %v268 = vld [vmem:[%s152 + $0x1c8] sm:%s145]
                %269 = vst [vmem:[%s153 + $0x1c8] sm:%s145] %v268
                %v270 = vld [vmem:[%s152 + $0x1d0] sm:%s145]
                %271 = vst [vmem:[%s153 + $0x1d0] sm:%s145] %v270
                %v272 = vld [vmem:[%s152 + $0x1d8] sm:%s145]
                %273 = vst [vmem:[%s153 + $0x1d8] sm:%s145] %v272
                %v274 = vld [vmem:[%s152 + $0x1e0] sm:%s145]
                %275 = vst [vmem:[%s153 + $0x1e0] sm:%s145] %v274
                %v276 = vld [vmem:[%s152 + $0x1e8] sm:%s145]
                %277 = vst [vmem:[%s153 + $0x1e8] sm:%s145] %v276
                %v278 = vld [vmem:[%s152 + $0x1f0] sm:%s145]
                %279 = vst [vmem:[%s153 + $0x1f0] sm:%s145] %v278
                %v280 = vld [vmem:[%s152 + $0x1f8] sm:%s145]
                %281 = vst [vmem:[%s153 + $0x1f8] sm:%s145] %v280
                %v282 = vld [vmem:[%s152 + $0x200] sm:%s145]
                %283 = vst [vmem:[%s153 + $0x200] sm:%s145] %v282
                %v284 = vld [vmem:[%s152 + $0x208] sm:%s145]
                %285 = vst [vmem:[%s153 + $0x208] sm:%s145] %v284
                %v286 = vld [vmem:[%s152 + $0x210] sm:%s145]
                %287 = vst [vmem:[%s153 + $0x210] sm:%s145] %v286
                %v288 = vld [vmem:[%s152 + $0x218] sm:%s145]
                %289 = vst [vmem:[%s153 + $0x218] sm:%s145] %v288
                %v290 = vld [vmem:[%s152 + $0x220] sm:%s145]
                %291 = vst [vmem:[%s153 + $0x220] sm:%s145] %v290
                %v292 = vld [vmem:[%s152 + $0x228] sm:%s145]
                %293 = vst [vmem:[%s153 + $0x228] sm:%s145] %v292
                %v294 = vld [vmem:[%s152 + $0x230] sm:%s145]
                %295 = vst [vmem:[%s153 + $0x230] sm:%s145] %v294
                %v296 = vld [vmem:[%s152 + $0x238] sm:%s145]
                %297 = vst [vmem:[%s153 + $0x238] sm:%s145] %v296
                %v298 = vld [vmem:[%s152 + $0x480] sm:%s145]
                %299 = vst [vmem:[%s153 + $0x240] sm:%s145] %v298
                %v300 = vld [vmem:[%s152 + $0x488] sm:%s145]
                %301 = vst [vmem:[%s153 + $0x248] sm:%s145] %v300
                %v302 = vld [vmem:[%s152 + $0x490] sm:%s145]
                %303 = vst [vmem:[%s153 + $0x250] sm:%s145] %v302
                %v304 = vld [vmem:[%s152 + $0x498] sm:%s145]
                %305 = vst [vmem:[%s153 + $0x258] sm:%s145] %v304
                %v306 = vld [vmem:[%s152 + $0x4a0] sm:%s145]
                %307 = vst [vmem:[%s153 + $0x260] sm:%s145] %v306
                %v308 = vld [vmem:[%s152 + $0x4a8] sm:%s145]
                %309 = vst [vmem:[%s153 + $0x268] sm:%s145] %v308
                %v310 = vld [vmem:[%s152 + $0x4b0] sm:%s145]
                %311 = vst [vmem:[%s153 + $0x270] sm:%s145] %v310
                %v312 = vld [vmem:[%s152 + $0x4b8] sm:%s145]
                %313 = vst [vmem:[%s153 + $0x278] sm:%s145] %v312
                %v314 = vld [vmem:[%s152 + $0x4c0] sm:%s145]
                %315 = vst [vmem:[%s153 + $0x280] sm:%s145] %v314
                %v316 = vld [vmem:[%s152 + $0x4c8] sm:%s145]
                %317 = vst [vmem:[%s153 + $0x288] sm:%s145] %v316
                %v318 = vld [vmem:[%s152 + $0x4d0] sm:%s145]
                %319 = vst [vmem:[%s153 + $0x290] sm:%s145] %v318
                %v320 = vld [vmem:[%s152 + $0x4d8] sm:%s145]
                %321 = vst [vmem:[%s153 + $0x298] sm:%s145] %v320
                %v322 = vld [vmem:[%s152 + $0x4e0] sm:%s145]
                %323 = vst [vmem:[%s153 + $0x2a0] sm:%s145] %v322
                %v324 = vld [vmem:[%s152 + $0x4e8] sm:%s145]
                %325 = vst [vmem:[%s153 + $0x2a8] sm:%s145] %v324
                %v326 = vld [vmem:[%s152 + $0x4f0] sm:%s145]
                %327 = vst [vmem:[%s153 + $0x2b0] sm:%s145] %v326
                %v328 = vld [vmem:[%s152 + $0x4f8] sm:%s145]
                %329 = vst [vmem:[%s153 + $0x2b8] sm:%s145] %v328
                %v330 = vld [vmem:[%s152 + $0x500] sm:%s145]
                %331 = vst [vmem:[%s153 + $0x2c0] sm:%s145] %v330
                %v332 = vld [vmem:[%s152 + $0x508] sm:%s145]
                %333 = vst [vmem:[%s153 + $0x2c8] sm:%s145] %v332
                %v334 = vld [vmem:[%s152 + $0x510] sm:%s145]
                %335 = vst [vmem:[%s153 + $0x2d0] sm:%s145] %v334
                %v336 = vld [vmem:[%s152 + $0x518] sm:%s145]
                %337 = vst [vmem:[%s153 + $0x2d8] sm:%s145] %v336
                %v338 = vld [vmem:[%s152 + $0x520] sm:%s145]
                %339 = vst [vmem:[%s153 + $0x2e0] sm:%s145] %v338
                %v340 = vld [vmem:[%s152 + $0x528] sm:%s145]
                %341 = vst [vmem:[%s153 + $0x2e8] sm:%s145] %v340
                %v342 = vld [vmem:[%s152 + $0x530] sm:%s145]
                %343 = vst [vmem:[%s153 + $0x2f0] sm:%s145] %v342
                %v344 = vld [vmem:[%s152 + $0x538] sm:%s145]
                %345 = vst [vmem:[%s153 + $0x2f8] sm:%s145] %v344
                %v346 = vld [vmem:[%s152 + $0x540] sm:%s145]
                %347 = vst [vmem:[%s153 + $0x300] sm:%s145] %v346
                %v348 = vld [vmem:[%s152 + $0x548] sm:%s145]
                %349 = vst [vmem:[%s153 + $0x308] sm:%s145] %v348
                %v350 = vld [vmem:[%s152 + $0x550] sm:%s145]
                %351 = vst [vmem:[%s153 + $0x310] sm:%s145] %v350
                %v352 = vld [vmem:[%s152 + $0x558] sm:%s145]
                %353 = vst [vmem:[%s153 + $0x318] sm:%s145] %v352
                %v354 = vld [vmem:[%s152 + $0x560] sm:%s145]
                %355 = vst [vmem:[%s153 + $0x320] sm:%s145] %v354
                %v356 = vld [vmem:[%s152 + $0x568] sm:%s145]
                %357 = vst [vmem:[%s153 + $0x328] sm:%s145] %v356
                %v358 = vld [vmem:[%s152 + $0x570] sm:%s145]
                %359 = vst [vmem:[%s153 + $0x330] sm:%s145] %v358
                %v360 = vld [vmem:[%s152 + $0x578] sm:%s145]
                %361 = vst [vmem:[%s153 + $0x338] sm:%s145] %v360
                %v362 = vld [vmem:[%s152 + $0x580] sm:%s145]
                %363 = vst [vmem:[%s153 + $0x340] sm:%s145] %v362
                %v364 = vld [vmem:[%s152 + $0x588] sm:%s145]
                %365 = vst [vmem:[%s153 + $0x348] sm:%s145] %v364
                %v366 = vld [vmem:[%s152 + $0x590] sm:%s145]
                %367 = vst [vmem:[%s153 + $0x350] sm:%s145] %v366
                %v368 = vld [vmem:[%s152 + $0x598] sm:%s145]
                %369 = vst [vmem:[%s153 + $0x358] sm:%s145] %v368
                %v370 = vld [vmem:[%s152 + $0x5a0] sm:%s145]
                %371 = vst [vmem:[%s153 + $0x360] sm:%s145] %v370
                %v372 = vld [vmem:[%s152 + $0x5a8] sm:%s145]
                %373 = vst [vmem:[%s153 + $0x368] sm:%s145] %v372
                %v374 = vld [vmem:[%s152 + $0x5b0] sm:%s145]
                %375 = vst [vmem:[%s153 + $0x370] sm:%s145] %v374
                %v376 = vld [vmem:[%s152 + $0x5b8] sm:%s145]
                %377 = vst [vmem:[%s153 + $0x378] sm:%s145] %v376
                %v378 = vld [vmem:[%s152 + $0x5c0] sm:%s145]
                %379 = vst [vmem:[%s153 + $0x380] sm:%s145] %v378
                %v380 = vld [vmem:[%s152 + $0x5c8] sm:%s145]
                %381 = vst [vmem:[%s153 + $0x388] sm:%s145] %v380
                %v382 = vld [vmem:[%s152 + $0x5d0] sm:%s145]
                %383 = vst [vmem:[%s153 + $0x390] sm:%s145] %v382
                %v384 = vld [vmem:[%s152 + $0x5d8] sm:%s145]
                %385 = vst [vmem:[%s153 + $0x398] sm:%s145] %v384
                %v386 = vld [vmem:[%s152 + $0x5e0] sm:%s145]
                %387 = vst [vmem:[%s153 + $0x3a0] sm:%s145] %v386
                %v388 = vld [vmem:[%s152 + $0x5e8] sm:%s145]
                %389 = vst [vmem:[%s153 + $0x3a8] sm:%s145] %v388
                %v390 = vld [vmem:[%s152 + $0x5f0] sm:%s145]
                %391 = vst [vmem:[%s153 + $0x3b0] sm:%s145] %v390
                %v392 = vld [vmem:[%s152 + $0x5f8] sm:%s145]
                %393 = vst [vmem:[%s153 + $0x3b8] sm:%s145] %v392
                %v394 = vld [vmem:[%s152 + $0x600] sm:%s145]
                %395 = vst [vmem:[%s153 + $0x3c0] sm:%s145] %v394
                %v396 = vld [vmem:[%s152 + $0x608] sm:%s145]
                %397 = vst [vmem:[%s153 + $0x3c8] sm:%s145] %v396
                %v398 = vld [vmem:[%s152 + $0x610] sm:%s145]
                %399 = vst [vmem:[%s153 + $0x3d0] sm:%s145] %v398
                %v400 = vld [vmem:[%s152 + $0x618] sm:%s145]
                %401 = vst [vmem:[%s153 + $0x3d8] sm:%s145] %v400
                %v402 = vld [vmem:[%s152 + $0x620] sm:%s145]
                %403 = vst [vmem:[%s153 + $0x3e0] sm:%s145] %v402
                %v404 = vld [vmem:[%s152 + $0x628] sm:%s145]
                %405 = vst [vmem:[%s153 + $0x3e8] sm:%s145] %v404
                %v406 = vld [vmem:[%s152 + $0x630] sm:%s145]
                %407 = vst [vmem:[%s153 + $0x3f0] sm:%s145] %v406
                %v408 = vld [vmem:[%s152 + $0x638] sm:%s145]
                %409 = vst [vmem:[%s153 + $0x3f8] sm:%s145] %v408
                %v410 = vld [vmem:[%s152 + $0x640] sm:%s145]
                %411 = vst [vmem:[%s153 + $0x400] sm:%s145] %v410
                %v412 = vld [vmem:[%s152 + $0x648] sm:%s145]
                %413 = vst [vmem:[%s153 + $0x408] sm:%s145] %v412
                %v414 = vld [vmem:[%s152 + $0x650] sm:%s145]
                %415 = vst [vmem:[%s153 + $0x410] sm:%s145] %v414
                %v416 = vld [vmem:[%s152 + $0x658] sm:%s145]
                %417 = vst [vmem:[%s153 + $0x418] sm:%s145] %v416
                %v418 = vld [vmem:[%s152 + $0x660] sm:%s145]
                %419 = vst [vmem:[%s153 + $0x420] sm:%s145] %v418
                %v420 = vld [vmem:[%s152 + $0x668] sm:%s145]
                %421 = vst [vmem:[%s153 + $0x428] sm:%s145] %v420
                %v422 = vld [vmem:[%s152 + $0x670] sm:%s145]
                %423 = vst [vmem:[%s153 + $0x430] sm:%s145] %v422
                %v424 = vld [vmem:[%s152 + $0x678] sm:%s145]
                %425 = vst [vmem:[%s153 + $0x438] sm:%s145] %v424
                %v426 = vld [vmem:[%s152 + $0x680] sm:%s145]
                %427 = vst [vmem:[%s153 + $0x440] sm:%s145] %v426
                %v428 = vld [vmem:[%s152 + $0x688] sm:%s145]
                %429 = vst [vmem:[%s153 + $0x448] sm:%s145] %v428
                %v430 = vld [vmem:[%s152 + $0x690] sm:%s145]
                %431 = vst [vmem:[%s153 + $0x450] sm:%s145] %v430
                %v432 = vld [vmem:[%s152 + $0x698] sm:%s145]
                %433 = vst [vmem:[%s153 + $0x458] sm:%s145] %v432
                %v434 = vld [vmem:[%s152 + $0x6a0] sm:%s145]
                %435 = vst [vmem:[%s153 + $0x460] sm:%s145] %v434
                %v436 = vld [vmem:[%s152 + $0x6a8] sm:%s145]
                %437 = vst [vmem:[%s153 + $0x468] sm:%s145] %v436
                %v438 = vld [vmem:[%s152 + $0x6b0] sm:%s145]
                %439 = vst [vmem:[%s153 + $0x470] sm:%s145] %v438
                %v440 = vld [vmem:[%s152 + $0x6b8] sm:%s145]
                %441 = vst [vmem:[%s153 + $0x478] sm:%s145] %v440
                %v442 = vld [vmem:[%s152 + $0x900] sm:%s145]
                %443 = vst [vmem:[%s153 + $0x480] sm:%s145] %v442
                %v444 = vld [vmem:[%s152 + $0x908] sm:%s145]
                %445 = vst [vmem:[%s153 + $0x488] sm:%s145] %v444
                %v446 = vld [vmem:[%s152 + $0x910] sm:%s145]
                %447 = vst [vmem:[%s153 + $0x490] sm:%s145] %v446
                %v448 = vld [vmem:[%s152 + $0x918] sm:%s145]
                %449 = vst [vmem:[%s153 + $0x498] sm:%s145] %v448
                %v450 = vld [vmem:[%s152 + $0x920] sm:%s145]
                %451 = vst [vmem:[%s153 + $0x4a0] sm:%s145] %v450
                %v452 = vld [vmem:[%s152 + $0x928] sm:%s145]
                %453 = vst [vmem:[%s153 + $0x4a8] sm:%s145] %v452
                %v454 = vld [vmem:[%s152 + $0x930] sm:%s145]
                %455 = vst [vmem:[%s153 + $0x4b0] sm:%s145] %v454
                %v456 = vld [vmem:[%s152 + $0x938] sm:%s145]
                %457 = vst [vmem:[%s153 + $0x4b8] sm:%s145] %v456
                %v458 = vld [vmem:[%s152 + $0x940] sm:%s145]
                %459 = vst [vmem:[%s153 + $0x4c0] sm:%s145] %v458
                %v460 = vld [vmem:[%s152 + $0x948] sm:%s145]
                %461 = vst [vmem:[%s153 + $0x4c8] sm:%s145] %v460
                %v462 = vld [vmem:[%s152 + $0x950] sm:%s145]
                %463 = vst [vmem:[%s153 + $0x4d0] sm:%s145] %v462
                %v464 = vld [vmem:[%s152 + $0x958] sm:%s145]
                %465 = vst [vmem:[%s153 + $0x4d8] sm:%s145] %v464
                %v466 = vld [vmem:[%s152 + $0x960] sm:%s145]
                %467 = vst [vmem:[%s153 + $0x4e0] sm:%s145] %v466
                %v468 = vld [vmem:[%s152 + $0x968] sm:%s145]
                %469 = vst [vmem:[%s153 + $0x4e8] sm:%s145] %v468
                %v470 = vld [vmem:[%s152 + $0x970] sm:%s145]
                %471 = vst [vmem:[%s153 + $0x4f0] sm:%s145] %v470
                %v472 = vld [vmem:[%s152 + $0x978] sm:%s145]
                %473 = vst [vmem:[%s153 + $0x4f8] sm:%s145] %v472
                %v474 = vld [vmem:[%s152 + $0x980] sm:%s145]
                %475 = vst [vmem:[%s153 + $0x500] sm:%s145] %v474
                %v476 = vld [vmem:[%s152 + $0x988] sm:%s145]
                %477 = vst [vmem:[%s153 + $0x508] sm:%s145] %v476
                %v478 = vld [vmem:[%s152 + $0x990] sm:%s145]
                %479 = vst [vmem:[%s153 + $0x510] sm:%s145] %v478
                %v480 = vld [vmem:[%s152 + $0x998] sm:%s145]
                %481 = vst [vmem:[%s153 + $0x518] sm:%s145] %v480
                %v482 = vld [vmem:[%s152 + $0x9a0] sm:%s145]
                %483 = vst [vmem:[%s153 + $0x520] sm:%s145] %v482
                %v484 = vld [vmem:[%s152 + $0x9a8] sm:%s145]
                %485 = vst [vmem:[%s153 + $0x528] sm:%s145] %v484
                %v486 = vld [vmem:[%s152 + $0x9b0] sm:%s145]
                %487 = vst [vmem:[%s153 + $0x530] sm:%s145] %v486
                %v488 = vld [vmem:[%s152 + $0x9b8] sm:%s145]
                %489 = vst [vmem:[%s153 + $0x538] sm:%s145] %v488
                %v490 = vld [vmem:[%s152 + $0x9c0] sm:%s145]
                %491 = vst [vmem:[%s153 + $0x540] sm:%s145] %v490
                %v492 = vld [vmem:[%s152 + $0x9c8] sm:%s145]
                %493 = vst [vmem:[%s153 + $0x548] sm:%s145] %v492
                %v494 = vld [vmem:[%s152 + $0x9d0] sm:%s145]
                %495 = vst [vmem:[%s153 + $0x550] sm:%s145] %v494
                %v496 = vld [vmem:[%s152 + $0x9d8] sm:%s145]
                %497 = vst [vmem:[%s153 + $0x558] sm:%s145] %v496
                %v498 = vld [vmem:[%s152 + $0x9e0] sm:%s145]
                %499 = vst [vmem:[%s153 + $0x560] sm:%s145] %v498
                %v500 = vld [vmem:[%s152 + $0x9e8] sm:%s145]
                %501 = vst [vmem:[%s153 + $0x568] sm:%s145] %v500
                %v502 = vld [vmem:[%s152 + $0x9f0] sm:%s145]
                %503 = vst [vmem:[%s153 + $0x570] sm:%s145] %v502
                %v504 = vld [vmem:[%s152 + $0x9f8] sm:%s145]
                %505 = vst [vmem:[%s153 + $0x578] sm:%s145] %v504
                %v506 = vld [vmem:[%s152 + $0xa00] sm:%s145]
                %507 = vst [vmem:[%s153 + $0x580] sm:%s145] %v506
                %v508 = vld [vmem:[%s152 + $0xa08] sm:%s145]
                %509 = vst [vmem:[%s153 + $0x588] sm:%s145] %v508
                %v510 = vld [vmem:[%s152 + $0xa10] sm:%s145]
                %511 = vst [vmem:[%s153 + $0x590] sm:%s145] %v510
                %v512 = vld [vmem:[%s152 + $0xa18] sm:%s145]
                %513 = vst [vmem:[%s153 + $0x598] sm:%s145] %v512
                %v514 = vld [vmem:[%s152 + $0xa20] sm:%s145]
                %515 = vst [vmem:[%s153 + $0x5a0] sm:%s145] %v514
                %v516 = vld [vmem:[%s152 + $0xa28] sm:%s145]
                %517 = vst [vmem:[%s153 + $0x5a8] sm:%s145] %v516
                %v518 = vld [vmem:[%s152 + $0xa30] sm:%s145]
                %519 = vst [vmem:[%s153 + $0x5b0] sm:%s145] %v518
                %v520 = vld [vmem:[%s152 + $0xa38] sm:%s145]
                %521 = vst [vmem:[%s153 + $0x5b8] sm:%s145] %v520
                %v522 = vld [vmem:[%s152 + $0xa40] sm:%s145]
                %523 = vst [vmem:[%s153 + $0x5c0] sm:%s145] %v522
                %v524 = vld [vmem:[%s152 + $0xa48] sm:%s145]
                %525 = vst [vmem:[%s153 + $0x5c8] sm:%s145] %v524
                %v526 = vld [vmem:[%s152 + $0xa50] sm:%s145]
                %527 = vst [vmem:[%s153 + $0x5d0] sm:%s145] %v526
                %v528 = vld [vmem:[%s152 + $0xa58] sm:%s145]
                %529 = vst [vmem:[%s153 + $0x5d8] sm:%s145] %v528
                %v530 = vld [vmem:[%s152 + $0xa60] sm:%s145]
                %531 = vst [vmem:[%s153 + $0x5e0] sm:%s145] %v530
                %v532 = vld [vmem:[%s152 + $0xa68] sm:%s145]
                %533 = vst [vmem:[%s153 + $0x5e8] sm:%s145] %v532
                %v534 = vld [vmem:[%s152 + $0xa70] sm:%s145]
                %535 = vst [vmem:[%s153 + $0x5f0] sm:%s145] %v534
                %v536 = vld [vmem:[%s152 + $0xa78] sm:%s145]
                %537 = vst [vmem:[%s153 + $0x5f8] sm:%s145] %v536
                %v538 = vld [vmem:[%s152 + $0xa80] sm:%s145]
                %539 = vst [vmem:[%s153 + $0x600] sm:%s145] %v538
                %v540 = vld [vmem:[%s152 + $0xa88] sm:%s145]
                %541 = vst [vmem:[%s153 + $0x608] sm:%s145] %v540
                %v542 = vld [vmem:[%s152 + $0xa90] sm:%s145]
                %543 = vst [vmem:[%s153 + $0x610] sm:%s145] %v542
                %v544 = vld [vmem:[%s152 + $0xa98] sm:%s145]
                %545 = vst [vmem:[%s153 + $0x618] sm:%s145] %v544
                %v546 = vld [vmem:[%s152 + $0xaa0] sm:%s145]
                %547 = vst [vmem:[%s153 + $0x620] sm:%s145] %v546
                %v548 = vld [vmem:[%s152 + $0xaa8] sm:%s145]
                %549 = vst [vmem:[%s153 + $0x628] sm:%s145] %v548
                %v550 = vld [vmem:[%s152 + $0xab0] sm:%s145]
                %551 = vst [vmem:[%s153 + $0x630] sm:%s145] %v550
                %v552 = vld [vmem:[%s152 + $0xab8] sm:%s145]
                %553 = vst [vmem:[%s153 + $0x638] sm:%s145] %v552
                %v554 = vld [vmem:[%s152 + $0xac0] sm:%s145]
                %555 = vst [vmem:[%s153 + $0x640] sm:%s145] %v554
                %v556 = vld [vmem:[%s152 + $0xac8] sm:%s145]
                %557 = vst [vmem:[%s153 + $0x648] sm:%s145] %v556
                %v558 = vld [vmem:[%s152 + $0xad0] sm:%s145]
                %559 = vst [vmem:[%s153 + $0x650] sm:%s145] %v558
                %v560 = vld [vmem:[%s152 + $0xad8] sm:%s145]
                %561 = vst [vmem:[%s153 + $0x658] sm:%s145] %v560
                %v562 = vld [vmem:[%s152 + $0xae0] sm:%s145]
                %563 = vst [vmem:[%s153 + $0x660] sm:%s145] %v562
                %v564 = vld [vmem:[%s152 + $0xae8] sm:%s145]
                %565 = vst [vmem:[%s153 + $0x668] sm:%s145] %v564
                %v566 = vld [vmem:[%s152 + $0xaf0] sm:%s145]
                %567 = vst [vmem:[%s153 + $0x670] sm:%s145] %v566
                %v568 = vld [vmem:[%s152 + $0xaf8] sm:%s145]
                %569 = vst [vmem:[%s153 + $0x678] sm:%s145] %v568
                %v570 = vld [vmem:[%s152 + $0xb00] sm:%s145]
                %571 = vst [vmem:[%s153 + $0x680] sm:%s145] %v570
                %v572 = vld [vmem:[%s152 + $0xb08] sm:%s145]
                %573 = vst [vmem:[%s153 + $0x688] sm:%s145] %v572
                %v574 = vld [vmem:[%s152 + $0xb10] sm:%s145]
                %575 = vst [vmem:[%s153 + $0x690] sm:%s145] %v574
                %v576 = vld [vmem:[%s152 + $0xb18] sm:%s145]
                %577 = vst [vmem:[%s153 + $0x698] sm:%s145] %v576
                %v578 = vld [vmem:[%s152 + $0xb20] sm:%s145]
                %579 = vst [vmem:[%s153 + $0x6a0] sm:%s145] %v578
                %v580 = vld [vmem:[%s152 + $0xb28] sm:%s145]
                %581 = vst [vmem:[%s153 + $0x6a8] sm:%s145] %v580
                %v582 = vld [vmem:[%s152 + $0xb30] sm:%s145]
                %583 = vst [vmem:[%s153 + $0x6b0] sm:%s145] %v582
                %v584 = vld [vmem:[%s152 + $0xb38] sm:%s145]
                %585 = vst [vmem:[%s153 + $0x6b8] sm:%s145] %v584
                %v586 = vld [vmem:[%s152 + $0xd80] sm:%s145]
                %587 = vst [vmem:[%s153 + $0x6c0] sm:%s145] %v586
                %v588 = vld [vmem:[%s152 + $0xd88] sm:%s145]
                %589 = vst [vmem:[%s153 + $0x6c8] sm:%s145] %v588
                %v590 = vld [vmem:[%s152 + $0xd90] sm:%s145]
                %591 = vst [vmem:[%s153 + $0x6d0] sm:%s145] %v590
                %v592 = vld [vmem:[%s152 + $0xd98] sm:%s145]
                %593 = vst [vmem:[%s153 + $0x6d8] sm:%s145] %v592
                %v594 = vld [vmem:[%s152 + $0xda0] sm:%s145]
                %595 = vst [vmem:[%s153 + $0x6e0] sm:%s145] %v594
                %v596 = vld [vmem:[%s152 + $0xda8] sm:%s145]
                %597 = vst [vmem:[%s153 + $0x6e8] sm:%s145] %v596
                %v598 = vld [vmem:[%s152 + $0xdb0] sm:%s145]
                %599 = vst [vmem:[%s153 + $0x6f0] sm:%s145] %v598
                %v600 = vld [vmem:[%s152 + $0xdb8] sm:%s145]
                %601 = vst [vmem:[%s153 + $0x6f8] sm:%s145] %v600
                %v602 = vld [vmem:[%s152 + $0xdc0] sm:%s145]
                %603 = vst [vmem:[%s153 + $0x700] sm:%s145] %v602
                %v604 = vld [vmem:[%s152 + $0xdc8] sm:%s145]
                %605 = vst [vmem:[%s153 + $0x708] sm:%s145] %v604
                %v606 = vld [vmem:[%s152 + $0xdd0] sm:%s145]
                %607 = vst [vmem:[%s153 + $0x710] sm:%s145] %v606
                %v608 = vld [vmem:[%s152 + $0xdd8] sm:%s145]
                %609 = vst [vmem:[%s153 + $0x718] sm:%s145] %v608
                %v610 = vld [vmem:[%s152 + $0xde0] sm:%s145]
                %611 = vst [vmem:[%s153 + $0x720] sm:%s145] %v610
                %v612 = vld [vmem:[%s152 + $0xde8] sm:%s145]
                %613 = vst [vmem:[%s153 + $0x728] sm:%s145] %v612
                %v614 = vld [vmem:[%s152 + $0xdf0] sm:%s145]
                %615 = vst [vmem:[%s153 + $0x730] sm:%s145] %v614
                %v616 = vld [vmem:[%s152 + $0xdf8] sm:%s145]
                %617 = vst [vmem:[%s153 + $0x738] sm:%s145] %v616
                %v618 = vld [vmem:[%s152 + $0xe00] sm:%s145]
                %619 = vst [vmem:[%s153 + $0x740] sm:%s145] %v618
                %v620 = vld [vmem:[%s152 + $0xe08] sm:%s145]
                %621 = vst [vmem:[%s153 + $0x748] sm:%s145] %v620
                %v622 = vld [vmem:[%s152 + $0xe10] sm:%s145]
                %623 = vst [vmem:[%s153 + $0x750] sm:%s145] %v622
                %v624 = vld [vmem:[%s152 + $0xe18] sm:%s145]
                %625 = vst [vmem:[%s153 + $0x758] sm:%s145] %v624
                %v626 = vld [vmem:[%s152 + $0xe20] sm:%s145]
                %627 = vst [vmem:[%s153 + $0x760] sm:%s145] %v626
                %v628 = vld [vmem:[%s152 + $0xe28] sm:%s145]
                %629 = vst [vmem:[%s153 + $0x768] sm:%s145] %v628
                %v630 = vld [vmem:[%s152 + $0xe30] sm:%s145]
                %631 = vst [vmem:[%s153 + $0x770] sm:%s145] %v630
                %v632 = vld [vmem:[%s152 + $0xe38] sm:%s145]
                %633 = vst [vmem:[%s153 + $0x778] sm:%s145] %v632
                %v634 = vld [vmem:[%s152 + $0xe40] sm:%s145]
                %635 = vst [vmem:[%s153 + $0x780] sm:%s145] %v634
                %v636 = vld [vmem:[%s152 + $0xe48] sm:%s145]
                %637 = vst [vmem:[%s153 + $0x788] sm:%s145] %v636
                %v638 = vld [vmem:[%s152 + $0xe50] sm:%s145]
                %639 = vst [vmem:[%s153 + $0x790] sm:%s145] %v638
                %v640 = vld [vmem:[%s152 + $0xe58] sm:%s145]
                %641 = vst [vmem:[%s153 + $0x798] sm:%s145] %v640
                %v642 = vld [vmem:[%s152 + $0xe60] sm:%s145]
                %643 = vst [vmem:[%s153 + $0x7a0] sm:%s145] %v642
                %v644 = vld [vmem:[%s152 + $0xe68] sm:%s145]
                %645 = vst [vmem:[%s153 + $0x7a8] sm:%s145] %v644
                %v646 = vld [vmem:[%s152 + $0xe70] sm:%s145]
                %647 = vst [vmem:[%s153 + $0x7b0] sm:%s145] %v646
                %v648 = vld [vmem:[%s152 + $0xe78] sm:%s145]
                %649 = vst [vmem:[%s153 + $0x7b8] sm:%s145] %v648
                %v650 = vld [vmem:[%s152 + $0xe80] sm:%s145]
                %651 = vst [vmem:[%s153 + $0x7c0] sm:%s145] %v650
                %v652 = vld [vmem:[%s152 + $0xe88] sm:%s145]
                %653 = vst [vmem:[%s153 + $0x7c8] sm:%s145] %v652
                %v654 = vld [vmem:[%s152 + $0xe90] sm:%s145]
                %655 = vst [vmem:[%s153 + $0x7d0] sm:%s145] %v654
                %v656 = vld [vmem:[%s152 + $0xe98] sm:%s145]
                %657 = vst [vmem:[%s153 + $0x7d8] sm:%s145] %v656
                %v658 = vld [vmem:[%s152 + $0xea0] sm:%s145]
                %659 = vst [vmem:[%s153 + $0x7e0] sm:%s145] %v658
                %v660 = vld [vmem:[%s152 + $0xea8] sm:%s145]
                %661 = vst [vmem:[%s153 + $0x7e8] sm:%s145] %v660
                %v662 = vld [vmem:[%s152 + $0xeb0] sm:%s145]
                %663 = vst [vmem:[%s153 + $0x7f0] sm:%s145] %v662
                %v664 = vld [vmem:[%s152 + $0xeb8] sm:%s145]
                %665 = vst [vmem:[%s153 + $0x7f8] sm:%s145] %v664
                %v666 = vld [vmem:[%s152 + $0xec0] sm:%s145]
                %667 = vst [vmem:[%s153 + $0x800] sm:%s145] %v666
                %v668 = vld [vmem:[%s152 + $0xec8] sm:%s145]
                %669 = vst [vmem:[%s153 + $0x808] sm:%s145] %v668
                %v670 = vld [vmem:[%s152 + $0xed0] sm:%s145]
                %671 = vst [vmem:[%s153 + $0x810] sm:%s145] %v670
                %v672 = vld [vmem:[%s152 + $0xed8] sm:%s145]
                %673 = vst [vmem:[%s153 + $0x818] sm:%s145] %v672
                %v674 = vld [vmem:[%s152 + $0xee0] sm:%s145]
                %675 = vst [vmem:[%s153 + $0x820] sm:%s145] %v674
                %v676 = vld [vmem:[%s152 + $0xee8] sm:%s145]
                %677 = vst [vmem:[%s153 + $0x828] sm:%s145] %v676
                %v678 = vld [vmem:[%s152 + $0xef0] sm:%s145]
                %679 = vst [vmem:[%s153 + $0x830] sm:%s145] %v678
                %v680 = vld [vmem:[%s152 + $0xef8] sm:%s145]
                %681 = vst [vmem:[%s153 + $0x838] sm:%s145] %v680
                %v682 = vld [vmem:[%s152 + $0xf00] sm:%s145]
                %683 = vst [vmem:[%s153 + $0x840] sm:%s145] %v682
                %v684 = vld [vmem:[%s152 + $0xf08] sm:%s145]
                %685 = vst [vmem:[%s153 + $0x848] sm:%s145] %v684
                %v686 = vld [vmem:[%s152 + $0xf10] sm:%s145]
                %687 = vst [vmem:[%s153 + $0x850] sm:%s145] %v686
                %v688 = vld [vmem:[%s152 + $0xf18] sm:%s145]
                %689 = vst [vmem:[%s153 + $0x858] sm:%s145] %v688
                %v690 = vld [vmem:[%s152 + $0xf20] sm:%s145]
                %691 = vst [vmem:[%s153 + $0x860] sm:%s145] %v690
                %v692 = vld [vmem:[%s152 + $0xf28] sm:%s145]
                %693 = vst [vmem:[%s153 + $0x868] sm:%s145] %v692
                %v694 = vld [vmem:[%s152 + $0xf30] sm:%s145]
                %695 = vst [vmem:[%s153 + $0x870] sm:%s145] %v694
                %v696 = vld [vmem:[%s152 + $0xf38] sm:%s145]
                %697 = vst [vmem:[%s153 + $0x878] sm:%s145] %v696
                %v698 = vld [vmem:[%s152 + $0xf40] sm:%s145]
                %699 = vst [vmem:[%s153 + $0x880] sm:%s145] %v698
                %v700 = vld [vmem:[%s152 + $0xf48] sm:%s145]
                %701 = vst [vmem:[%s153 + $0x888] sm:%s145] %v700
                %v702 = vld [vmem:[%s152 + $0xf50] sm:%s145]
                %703 = vst [vmem:[%s153 + $0x890] sm:%s145] %v702
                %v704 = vld [vmem:[%s152 + $0xf58] sm:%s145]
                %705 = vst [vmem:[%s153 + $0x898] sm:%s145] %v704
                %v706 = vld [vmem:[%s152 + $0xf60] sm:%s145]
                %707 = vst [vmem:[%s153 + $0x8a0] sm:%s145] %v706
                %v708 = vld [vmem:[%s152 + $0xf68] sm:%s145]
                %709 = vst [vmem:[%s153 + $0x8a8] sm:%s145] %v708
                %v710 = vld [vmem:[%s152 + $0xf70] sm:%s145]
                %711 = vst [vmem:[%s153 + $0x8b0] sm:%s145] %v710
                %v712 = vld [vmem:[%s152 + $0xf78] sm:%s145]
                %713 = vst [vmem:[%s153 + $0x8b8] sm:%s145] %v712
                %v714 = vld [vmem:[%s152 + $0xf80] sm:%s145]
                %715 = vst [vmem:[%s153 + $0x8c0] sm:%s145] %v714
                %v716 = vld [vmem:[%s152 + $0xf88] sm:%s145]
                %717 = vst [vmem:[%s153 + $0x8c8] sm:%s145] %v716
                %v718 = vld [vmem:[%s152 + $0xf90] sm:%s145]
                %719 = vst [vmem:[%s153 + $0x8d0] sm:%s145] %v718
                %v720 = vld [vmem:[%s152 + $0xf98] sm:%s145]
                %721 = vst [vmem:[%s153 + $0x8d8] sm:%s145] %v720
                %v722 = vld [vmem:[%s152 + $0xfa0] sm:%s145]
                %723 = vst [vmem:[%s153 + $0x8e0] sm:%s145] %v722
                %v724 = vld [vmem:[%s152 + $0xfa8] sm:%s145]
                %725 = vst [vmem:[%s153 + $0x8e8] sm:%s145] %v724
                %v726 = vld [vmem:[%s152 + $0xfb0] sm:%s145]
                %727 = vst [vmem:[%s153 + $0x8f0] sm:%s145] %v726
                %v728 = vld [vmem:[%s152 + $0xfb8] sm:%s145]
                %729 = vst [vmem:[%s153 + $0x8f8] sm:%s145] %v728
              $region45: #{forward.2} parent=39 // loop_footer
                %s151 = sadd.s32 1, %s147
              $region46: #{forward.2} parent=39 // loop_footer_branch
                %146 = sbr.rel target = $region42
              $region47: #{forward.2} parent=39 // loop_exit
                _
            $region40: #{forward.2} parent=31 // pred_fallthru
              _
          $region32: #{forward.2} parent=27 // pred_fallthru
            _
          %1318 = vnop
        $region28: #{forward.2} parent=23 // pred_fallthru
          _
      $region24: #{forward.2} parent=5 // pred_fallthru
        _
      %p1319 = scmp.le.s32.totalorder 1, %s9
      %p1320 = scmp.lt.s32.totalorder %s9, 3
      %p1321 = pnand %p1319, %p1320
      %p1322 = pneg %p1321
      // Predicated region
      $region63: #{forward.2} parent=5 // pred_check
        _
      $region64: #{forward.2} parent=5 // pred_check_branch
        %1324 = sbr.rel (%p1321) target = $region66
      $region65: #{forward.2} parent=5 // pred_region
        %s1325 = ssub.s32 %s9, 1
        %s1326 = sand.u32 %s22, 1
        %s1327 = sand.u32 %s22, 1
        %s1328 = smul.addr %s1327, 2304
        %s1329 = scalar_lea.vmem [#allocation2], %s1328
        // Predicated region
        $region67: #{forward.2} parent=65 // pred_check
          %p1330 = pneg %p35
        $region68: #{forward.2} parent=65 // pred_check_branch
          %1332 = sbr.rel (%p1330) target = $region70
        $region69: #{forward.2} parent=65 // pred_region
          _
        $region70: #{forward.2} parent=65 // pred_fallthru
          _
        %s1333 = sand.u32 %s22, 1
        %s1334 = sand.u32 %s22, 1
        %s1335 = smul.addr %s1334, 2304
        %s1336 = scalar_lea.vmem [#allocation2], %s1335
        %p1337 = pneg %p35
        %p1338 = pneg %p32
        %p1339 = pneg %p56
        %p1340 = pneg %p53
        %p1341 = pneg %p77
        %p1342 = pneg %p74
        %p1343 = pneg %p103
        %p1344 = pneg %p100
        %s1345 = smul.u32 72, %s14
        %p1346 = scmp.lt.s32.totalorder %s1345, 143
        %s1347 = scalar_select %p1346, %s1345, 143
        %s1348 = smul.addr %s1347, 8
        %s1349 = scalar_lea.vmem %s3, %s1348
        %s1350 = smul.u32 72, %s14
        %s1351 = smul.u32 72, %s14
        %p1352 = scmp.lt.s32.totalorder %s1351, 143
        %s1353 = scalar_select %p1352, %s1351, 143
        %s1354 = smul.addr %s1353, 8
        %s1355 = scalar_lea.vmem %s3, %s1354
        %s1356 = smul.u32 72, %s14
        %v1357 = vld [vmem:[%s1] sm:$0xff]
        %v1358 = vld [vmem:[%s1 + $0x8] sm:$0xff]
        %v1359 = vld [vmem:[%s1 + $0x10] sm:$0xff]
        %v1360 = vld [vmem:[%s1 + $0x18] sm:$0xff]
        %v1361 = vld [vmem:[%s1 + $0x20] sm:$0xff]
        %v1362 = vld [vmem:[%s1 + $0x28] sm:$0xff]
        %v1363 = vld [vmem:[%s1 + $0x30] sm:$0xff]
        %v1364 = vld [vmem:[%s1 + $0x38] sm:$0xff]
        %v1365 = vld [vmem:[%s1 + $0x40] sm:$0xff]
        %v1366 = vld [vmem:[%s1 + $0x48] sm:$0x7]
        %v1367 = vld [vmem:[%s2] sm:$0x1]
        %v1368 = vld [vmem:[%s1329] sm:$0xff]
        %v1369 = vld [vmem:[%s1329 + $0x8] sm:$0xff]
        %v1370 = vld [vmem:[%s1329 + $0x10] sm:$0xff]
        %v1371 = vld [vmem:[%s1329 + $0x18] sm:$0xff]
        %v1372 = vld [vmem:[%s1329 + $0x20] sm:$0xff]
        %v1373 = vld [vmem:[%s1329 + $0x28] sm:$0xff]
        %v1374 = vld [vmem:[%s1329 + $0x30] sm:$0xff]
        %v1375 = vld [vmem:[%s1329 + $0x38] sm:$0xff]
        %v1376 = vld [vmem:[%s1329 + $0x40] sm:$0xff]
        %v1377 = vld [vmem:[%s1329 + $0x48] sm:$0xff]
        %v1378 = vld [vmem:[%s1329 + $0x50] sm:$0xff]
        %v1379 = vld [vmem:[%s1329 + $0x58] sm:$0xff]
        %v1380 = vld [vmem:[%s1329 + $0x60] sm:$0xff]
        %v1381 = vld [vmem:[%s1329 + $0x68] sm:$0xff]
        %v1382 = vld [vmem:[%s1329 + $0x70] sm:$0xff]
        %v1383 = vld [vmem:[%s1329 + $0x78] sm:$0xff]
        %v1384 = vld [vmem:[%s1329 + $0x80] sm:$0xff]
        %v1385 = vld [vmem:[%s1329 + $0x88] sm:$0xff]
        %v1386 = vld [vmem:[%s1329 + $0x90] sm:$0xff]
        %v1387 = vld [vmem:[%s1329 + $0x98] sm:$0xff]
        %v1388 = vld [vmem:[%s1329 + $0xa0] sm:$0xff]
        %v1389 = vld [vmem:[%s1329 + $0xa8] sm:$0xff]
        %v1390 = vld [vmem:[%s1329 + $0xb0] sm:$0xff]
        %v1391 = vld [vmem:[%s1329 + $0xb8] sm:$0xff]
        %v1392 = vld [vmem:[%s1329 + $0xc0] sm:$0xff]
        %v1393 = vld [vmem:[%s1329 + $0xc8] sm:$0xff]
        %v1394 = vld [vmem:[%s1329 + $0xd0] sm:$0xff]
        %v1395 = vld [vmem:[%s1329 + $0xd8] sm:$0xff]
        %v1396 = vld [vmem:[%s1329 + $0xe0] sm:$0xff]
        %v1397 = vld [vmem:[%s1329 + $0xe8] sm:$0xff]
        %v1398 = vld [vmem:[%s1329 + $0xf0] sm:$0xff]
        %v1399 = vld [vmem:[%s1329 + $0xf8] sm:$0xff]
        %v1400 = vld [vmem:[%s1329 + $0x100] sm:$0xff]
        %v1401 = vld [vmem:[%s1329 + $0x108] sm:$0xff]
        %v1402 = vld [vmem:[%s1329 + $0x110] sm:$0xff]
        %v1403 = vld [vmem:[%s1329 + $0x118] sm:$0xff]
        %v1404 = vld [vmem:[%s1329 + $0x120] sm:$0xff]
        %v1405 = vld [vmem:[%s1329 + $0x128] sm:$0xff]
        %v1406 = vld [vmem:[%s1329 + $0x130] sm:$0xff]
        %v1407 = vld [vmem:[%s1329 + $0x138] sm:$0xff]
        %v1408 = vld [vmem:[%s1329 + $0x140] sm:$0xff]
        %v1409 = vld [vmem:[%s1329 + $0x148] sm:$0xff]
        %v1410 = vld [vmem:[%s1329 + $0x150] sm:$0xff]
        %v1411 = vld [vmem:[%s1329 + $0x158] sm:$0xff]
        %v1412 = vld [vmem:[%s1329 + $0x160] sm:$0xff]
        %v1413 = vld [vmem:[%s1329 + $0x168] sm:$0xff]
        %v1414 = vld [vmem:[%s1329 + $0x170] sm:$0xff]
        %v1415 = vld [vmem:[%s1329 + $0x178] sm:$0xff]
        %v1416 = vld [vmem:[%s1329 + $0x180] sm:$0xff]
        %v1417 = vld [vmem:[%s1329 + $0x188] sm:$0xff]
        %v1418 = vld [vmem:[%s1329 + $0x190] sm:$0xff]
        %v1419 = vld [vmem:[%s1329 + $0x198] sm:$0xff]
        %v1420 = vld [vmem:[%s1329 + $0x1a0] sm:$0xff]
        %v1421 = vld [vmem:[%s1329 + $0x1a8] sm:$0xff]
        %v1422 = vld [vmem:[%s1329 + $0x1b0] sm:$0xff]
        %v1423 = vld [vmem:[%s1329 + $0x1b8] sm:$0xff]
        %v1424 = vld [vmem:[%s1329 + $0x1c0] sm:$0xff]
        %v1425 = vld [vmem:[%s1329 + $0x1c8] sm:$0xff]
        %v1426 = vld [vmem:[%s1329 + $0x1d0] sm:$0xff]
        %v1427 = vld [vmem:[%s1329 + $0x1d8] sm:$0xff]
        %v1428 = vld [vmem:[%s1329 + $0x1e0] sm:$0xff]
        %v1429 = vld [vmem:[%s1329 + $0x1e8] sm:$0xff]
        %v1430 = vld [vmem:[%s1329 + $0x1f0] sm:$0xff]
        %v1431 = vld [vmem:[%s1329 + $0x1f8] sm:$0xff]
        %v1432 = vld [vmem:[%s1329 + $0x200] sm:$0xff]
        %v1433 = vld [vmem:[%s1329 + $0x208] sm:$0xff]
        %v1434 = vld [vmem:[%s1329 + $0x210] sm:$0xff]
        %v1435 = vld [vmem:[%s1329 + $0x218] sm:$0xff]
        %v1436 = vld [vmem:[%s1329 + $0x220] sm:$0xff]
        %v1437 = vld [vmem:[%s1329 + $0x228] sm:$0xff]
        %v1438 = vld [vmem:[%s1329 + $0x230] sm:$0xff]
        %v1439 = vld [vmem:[%s1329 + $0x238] sm:$0xff]
        %v1441 = vlaneseq
        %v1442 = vshrl.u32 %v1441, 7
        %v1443 = vsub.s32 0, %v1442
        %v1444 = vrot.slane %v1367, %v1443
        %vm1446 = vcmask 613376
        %v1448 = vsel %vm1446, %v1368, 0
        %v1451 = vsel %vm1446, %v1369, 0
        %v1454 = vsel %vm1446, %v1370, 0
        %v1457 = vsel %vm1446, %v1371, 0
        %v1460 = vsel %vm1446, %v1372, 0
        %v1463 = vsel %vm1446, %v1373, 0
        %v1466 = vsel %vm1446, %v1374, 0
        %v1469 = vsel %vm1446, %v1375, 0
        %v1472 = vsel %vm1446, %v1376, 0
        %v1475 = vsel %vm1446, %v1377, 0
        %v1478 = vsel %vm1446, %v1378, 0
        %v1481 = vsel %vm1446, %v1379, 0
        %v1484 = vsel %vm1446, %v1380, 0
        %v1487 = vsel %vm1446, %v1381, 0
        %v1490 = vsel %vm1446, %v1382, 0
        %v1493 = vsel %vm1446, %v1383, 0
        %v1496 = vsel %vm1446, %v1384, 0
        %v1499 = vsel %vm1446, %v1385, 0
        %v1502 = vsel %vm1446, %v1386, 0
        %v1505 = vsel %vm1446, %v1387, 0
        %v1508 = vsel %vm1446, %v1388, 0
        %v1511 = vsel %vm1446, %v1389, 0
        %v1514 = vsel %vm1446, %v1390, 0
        %v1517 = vsel %vm1446, %v1391, 0
        %v1520 = vsel %vm1446, %v1392, 0
        %v1523 = vsel %vm1446, %v1393, 0
        %v1526 = vsel %vm1446, %v1394, 0
        %v1529 = vsel %vm1446, %v1395, 0
        %v1532 = vsel %vm1446, %v1396, 0
        %v1535 = vsel %vm1446, %v1397, 0
        %v1538 = vsel %vm1446, %v1398, 0
        %v1541 = vsel %vm1446, %v1399, 0
        %v1544 = vsel %vm1446, %v1400, 0
        %v1547 = vsel %vm1446, %v1401, 0
        %v1550 = vsel %vm1446, %v1402, 0
        %v1553 = vsel %vm1446, %v1403, 0
        %v1556 = vsel %vm1446, %v1404, 0
        %v1559 = vsel %vm1446, %v1405, 0
        %v1562 = vsel %vm1446, %v1406, 0
        %v1565 = vsel %vm1446, %v1407, 0
        %v1568 = vsel %vm1446, %v1408, 0
        %v1571 = vsel %vm1446, %v1409, 0
        %v1574 = vsel %vm1446, %v1410, 0
        %v1577 = vsel %vm1446, %v1411, 0
        %v1580 = vsel %vm1446, %v1412, 0
        %v1583 = vsel %vm1446, %v1413, 0
        %v1586 = vsel %vm1446, %v1414, 0
        %v1589 = vsel %vm1446, %v1415, 0
        %v1592 = vsel %vm1446, %v1416, 0
        %v1595 = vsel %vm1446, %v1417, 0
        %v1598 = vsel %vm1446, %v1418, 0
        %v1601 = vsel %vm1446, %v1419, 0
        %v1604 = vsel %vm1446, %v1420, 0
        %v1607 = vsel %vm1446, %v1421, 0
        %v1610 = vsel %vm1446, %v1422, 0
        %v1613 = vsel %vm1446, %v1423, 0
        %v1616 = vsel %vm1446, %v1424, 0
        %v1619 = vsel %vm1446, %v1425, 0
        %v1622 = vsel %vm1446, %v1426, 0
        %v1625 = vsel %vm1446, %v1427, 0
        %v1628 = vsel %vm1446, %v1428, 0
        %v1631 = vsel %vm1446, %v1429, 0
        %v1634 = vsel %vm1446, %v1430, 0
        %v1637 = vsel %vm1446, %v1431, 0
        %v1640 = vsel %vm1446, %v1432, 0
        %v1643 = vsel %vm1446, %v1433, 0
        %v1646 = vsel %vm1446, %v1434, 0
        %v1649 = vsel %vm1446, %v1435, 0
        %v1652 = vsel %vm1446, %v1436, 0
        %v1655 = vsel %vm1446, %v1437, 0
        %v1658 = vsel %vm1446, %v1438, 0
        %v1661 = vsel %vm1446, %v1439, 0
        %vm1663 = vcmask 1042432
        %v1665 = vsel %vm1663, %v1366, 0
        %1667 = vmatprep.subr.mxu0 0.0
        %1668 = vmatpush1.msra.mxu0 0.0
        %1669 = vmatprep.subr.mxu0 0.0
        %1670 = vmatpush1.msra.mxu0 0.0
        %1671 = vmatprep.subr.mxu0 0.0
        %1672 = vmatpush1.msra.mxu0 0.0
        %1673 = vmatprep.subr.mxu0 0.0
        %1674 = vmatpush1.msra.mxu0 0.0
        %1675 = vmatprep.subr.mxu0 0.0
        %1676 = vmatpush1.msra.mxu0 0.0
        %1677 = vmatprep.subr.mxu0 0.0
        %1678 = vmatpush1.msra.mxu0 0.0
        %1679 = vmatprep.subr.mxu0 0.0
        %1680 = vmatpush1.msra.mxu0 %v1665
        %1681 = vmatprep.subr.mxu0 0.0
        %1682 = vmatpush1.msra.mxu0 %v1365
        %1683 = vmatprep.subr.mxu0 0.0
        %1684 = vmatpush1.msra.mxu0 %v1364
        %1685 = vmatprep.subr.mxu0 0.0
        %1686 = vmatpush1.msra.mxu0 %v1363
        %1687 = vmatprep.subr.mxu0 0.0
        %1688 = vmatpush1.msra.mxu0 %v1362
        %1689 = vmatprep.subr.mxu0 0.0
        %1690 = vmatpush1.msra.mxu0 %v1361
        %1691 = vmatprep.subr.mxu0 0.0
        %1692 = vmatpush1.msra.mxu0 %v1360
        %1693 = vmatprep.subr.mxu0 0.0
        %1694 = vmatpush1.msra.mxu0 %v1359
        %1695 = vmatprep.subr.mxu0 0.0
        %1696 = vmatpush1.msra.mxu0 %v1358
        %1697 = vmatprep.subr.mxu0 0.0
        %1698 = vmatpush1.msra.mxu0 %v1357
        %1699 = vmatprep.subr.mxu0 0.0
        %1700 = vmatpush2.msra.mxu0 0.0
        %1701 = vmatprep.subr.mxu0 0.0
        %1702 = vmatpush2.msra.mxu0 0.0
        %1703 = vmatprep.subr.mxu0 0.0
        %1704 = vmatpush2.msra.mxu0 0.0
        %1705 = vmatprep.subr.mxu0 0.0
        %1706 = vmatpush2.msra.mxu0 0.0
        %1707 = vmatprep.subr.mxu0 0.0
        %1708 = vmatpush2.msra.mxu0 0.0
        %1709 = vmatprep.subr.mxu0 0.0
        %1710 = vmatpush2.msra.mxu0 0.0
        %1711 = vmatprep.subr.mxu0 0.0
        %1712 = vmatpush2.msra.mxu0 0.0
        %1713 = vmatprep.subr.mxu0 0.0
        %1714 = vmatpush2.msra.mxu0 0.0
        %1715 = vmatprep.subr.mxu0 0.0
        %1716 = vmatpush2.msra.mxu0 0.0
        %1717 = vmatprep.subr.mxu0 0.0
        %1718 = vmatpush2.msra.mxu0 0.0
        %1719 = vmatprep.subr.mxu0 0.0
        %1720 = vmatpush2.msra.mxu0 0.0
        %1721 = vmatprep.subr.mxu0 0.0
        %1722 = vmatpush2.msra.mxu0 0.0
        %1723 = vmatprep.subr.mxu0 0.0
        %1724 = vmatpush2.msra.mxu0 0.0
        %1725 = vmatprep.subr.mxu0 0.0
        %1726 = vmatpush2.msra.mxu0 0.0
        %1727 = vmatprep.subr.mxu0 0.0
        %1728 = vmatpush2.msra.mxu0 0.0
        %1729 = vmatprep.subr.mxu0 0.0
        %1730 = vmatpush2.msra.mxu0 0.0
        %1731 = vmatprep.mubr.f32.mxu0 0.0
        %1732 = vmatmul.mubr.f32.gmra.mxu0 %v1448
        %v1733 = vpop.f32.mrf.mxu0
        %v1734 = vadd.f32 %v1444, %v1733
        %v1735 = vpop.f32.mrf.mxu0
        %1736 = vmatprep.mubr.f32.mxu0 0.0
        %1737 = vmatmul.mubr.f32.gmra.mxu0 %v1451
        %v1738 = vpop.f32.mrf.mxu0
        %v1739 = vadd.f32 %v1444, %v1738
        %v1740 = vpop.f32.mrf.mxu0
        %1741 = vmatprep.mubr.f32.mxu0 0.0
        %1742 = vmatmul.mubr.f32.gmra.mxu0 %v1454
        %v1743 = vpop.f32.mrf.mxu0
        %v1744 = vadd.f32 %v1444, %v1743
        %v1745 = vpop.f32.mrf.mxu0
        %1746 = vmatprep.mubr.f32.mxu0 0.0
        %1747 = vmatmul.mubr.f32.gmra.mxu0 %v1457
        %v1748 = vpop.f32.mrf.mxu0
        %v1749 = vadd.f32 %v1444, %v1748
        %v1750 = vpop.f32.mrf.mxu0
        %1751 = vmatprep.mubr.f32.mxu0 0.0
        %1752 = vmatmul.mubr.f32.gmra.mxu0 %v1460
        %v1753 = vpop.f32.mrf.mxu0
        %v1754 = vadd.f32 %v1444, %v1753
        %v1755 = vpop.f32.mrf.mxu0
        %1756 = vmatprep.mubr.f32.mxu0 0.0
        %1757 = vmatmul.mubr.f32.gmra.mxu0 %v1463
        %v1758 = vpop.f32.mrf.mxu0
        %v1759 = vadd.f32 %v1444, %v1758
        %v1760 = vpop.f32.mrf.mxu0
        %1761 = vmatprep.mubr.f32.mxu0 0.0
        %1762 = vmatmul.mubr.f32.gmra.mxu0 %v1466
        %v1763 = vpop.f32.mrf.mxu0
        %v1764 = vadd.f32 %v1444, %v1763
        %v1765 = vpop.f32.mrf.mxu0
        %1766 = vmatprep.mubr.f32.mxu0 0.0
        %1767 = vmatmul.mubr.f32.gmra.mxu0 %v1469
        %v1768 = vpop.f32.mrf.mxu0
        %v1769 = vadd.f32 %v1444, %v1768
        %v1770 = vpop.f32.mrf.mxu0
        %1771 = vmatprep.mubr.f32.mxu0 0.0
        %1772 = vmatmul.mubr.f32.gmra.mxu0 %v1472
        %v1773 = vpop.f32.mrf.mxu0
        %v1774 = vadd.f32 %v1444, %v1773
        %v1775 = vpop.f32.mrf.mxu0
        %1776 = vmatprep.mubr.f32.mxu0 0.0
        %1777 = vmatmul.mubr.f32.gmra.mxu0 %v1475
        %v1778 = vpop.f32.mrf.mxu0
        %v1779 = vadd.f32 %v1444, %v1778
        %v1780 = vpop.f32.mrf.mxu0
        %1781 = vmatprep.mubr.f32.mxu0 0.0
        %1782 = vmatmul.mubr.f32.gmra.mxu0 %v1478
        %v1783 = vpop.f32.mrf.mxu0
        %v1784 = vadd.f32 %v1444, %v1783
        %v1785 = vpop.f32.mrf.mxu0
        %1786 = vmatprep.mubr.f32.mxu0 0.0
        %1787 = vmatmul.mubr.f32.gmra.mxu0 %v1481
        %v1788 = vpop.f32.mrf.mxu0
        %v1789 = vadd.f32 %v1444, %v1788
        %v1790 = vpop.f32.mrf.mxu0
        %1791 = vmatprep.mubr.f32.mxu0 0.0
        %1792 = vmatmul.mubr.f32.gmra.mxu0 %v1484
        %v1793 = vpop.f32.mrf.mxu0
        %v1794 = vadd.f32 %v1444, %v1793
        %v1795 = vpop.f32.mrf.mxu0
        %1796 = vmatprep.mubr.f32.mxu0 0.0
        %1797 = vmatmul.mubr.f32.gmra.mxu0 %v1487
        %v1798 = vpop.f32.mrf.mxu0
        %v1799 = vadd.f32 %v1444, %v1798
        %v1800 = vpop.f32.mrf.mxu0
        %1801 = vmatprep.mubr.f32.mxu0 0.0
        %1802 = vmatmul.mubr.f32.gmra.mxu0 %v1490
        %v1803 = vpop.f32.mrf.mxu0
        %v1804 = vadd.f32 %v1444, %v1803
        %v1805 = vpop.f32.mrf.mxu0
        %1806 = vmatprep.mubr.f32.mxu0 0.0
        %1807 = vmatmul.mubr.f32.gmra.mxu0 %v1493
        %v1808 = vpop.f32.mrf.mxu0
        %v1809 = vadd.f32 %v1444, %v1808
        %v1810 = vpop.f32.mrf.mxu0
        %1811 = vmatprep.mubr.f32.mxu0 0.0
        %1812 = vmatmul.mubr.f32.gmra.mxu0 %v1496
        %v1813 = vpop.f32.mrf.mxu0
        %v1814 = vadd.f32 %v1444, %v1813
        %v1815 = vpop.f32.mrf.mxu0
        %1816 = vmatprep.mubr.f32.mxu0 0.0
        %1817 = vmatmul.mubr.f32.gmra.mxu0 %v1499
        %v1818 = vpop.f32.mrf.mxu0
        %v1819 = vadd.f32 %v1444, %v1818
        %v1820 = vpop.f32.mrf.mxu0
        %1821 = vmatprep.mubr.f32.mxu0 0.0
        %1822 = vmatmul.mubr.f32.gmra.mxu0 %v1502
        %v1823 = vpop.f32.mrf.mxu0
        %v1824 = vadd.f32 %v1444, %v1823
        %v1825 = vpop.f32.mrf.mxu0
        %1826 = vmatprep.mubr.f32.mxu0 0.0
        %1827 = vmatmul.mubr.f32.gmra.mxu0 %v1505
        %v1828 = vpop.f32.mrf.mxu0
        %v1829 = vadd.f32 %v1444, %v1828
        %v1830 = vpop.f32.mrf.mxu0
        %1831 = vmatprep.mubr.f32.mxu0 0.0
        %1832 = vmatmul.mubr.f32.gmra.mxu0 %v1508
        %v1833 = vpop.f32.mrf.mxu0
        %v1834 = vadd.f32 %v1444, %v1833
        %v1835 = vpop.f32.mrf.mxu0
        %1836 = vmatprep.mubr.f32.mxu0 0.0
        %1837 = vmatmul.mubr.f32.gmra.mxu0 %v1511
        %v1838 = vpop.f32.mrf.mxu0
        %v1839 = vadd.f32 %v1444, %v1838
        %v1840 = vpop.f32.mrf.mxu0
        %1841 = vmatprep.mubr.f32.mxu0 0.0
        %1842 = vmatmul.mubr.f32.gmra.mxu0 %v1514
        %v1843 = vpop.f32.mrf.mxu0
        %v1844 = vadd.f32 %v1444, %v1843
        %v1845 = vpop.f32.mrf.mxu0
        %1846 = vmatprep.mubr.f32.mxu0 0.0
        %1847 = vmatmul.mubr.f32.gmra.mxu0 %v1517
        %v1848 = vpop.f32.mrf.mxu0
        %v1849 = vadd.f32 %v1444, %v1848
        %v1850 = vpop.f32.mrf.mxu0
        %1851 = vmatprep.mubr.f32.mxu0 0.0
        %1852 = vmatmul.mubr.f32.gmra.mxu0 %v1520
        %v1853 = vpop.f32.mrf.mxu0
        %v1854 = vadd.f32 %v1444, %v1853
        %v1855 = vpop.f32.mrf.mxu0
        %1856 = vmatprep.mubr.f32.mxu0 0.0
        %1857 = vmatmul.mubr.f32.gmra.mxu0 %v1523
        %v1858 = vpop.f32.mrf.mxu0
        %v1859 = vadd.f32 %v1444, %v1858
        %v1860 = vpop.f32.mrf.mxu0
        %1861 = vmatprep.mubr.f32.mxu0 0.0
        %1862 = vmatmul.mubr.f32.gmra.mxu0 %v1526
        %v1863 = vpop.f32.mrf.mxu0
        %v1864 = vadd.f32 %v1444, %v1863
        %v1865 = vpop.f32.mrf.mxu0
        %1866 = vmatprep.mubr.f32.mxu0 0.0
        %1867 = vmatmul.mubr.f32.gmra.mxu0 %v1529
        %v1868 = vpop.f32.mrf.mxu0
        %v1869 = vadd.f32 %v1444, %v1868
        %v1870 = vpop.f32.mrf.mxu0
        %1871 = vmatprep.mubr.f32.mxu0 0.0
        %1872 = vmatmul.mubr.f32.gmra.mxu0 %v1532
        %v1873 = vpop.f32.mrf.mxu0
        %v1874 = vadd.f32 %v1444, %v1873
        %v1875 = vpop.f32.mrf.mxu0
        %1876 = vmatprep.mubr.f32.mxu0 0.0
        %1877 = vmatmul.mubr.f32.gmra.mxu0 %v1535
        %v1878 = vpop.f32.mrf.mxu0
        %v1879 = vadd.f32 %v1444, %v1878
        %v1880 = vpop.f32.mrf.mxu0
        %1881 = vmatprep.mubr.f32.mxu0 0.0
        %1882 = vmatmul.mubr.f32.gmra.mxu0 %v1538
        %v1883 = vpop.f32.mrf.mxu0
        %v1884 = vadd.f32 %v1444, %v1883
        %v1885 = vpop.f32.mrf.mxu0
        %1886 = vmatprep.mubr.f32.mxu0 0.0
        %1887 = vmatmul.mubr.f32.gmra.mxu0 %v1541
        %v1888 = vpop.f32.mrf.mxu0
        %v1889 = vadd.f32 %v1444, %v1888
        %v1890 = vpop.f32.mrf.mxu0
        %1891 = vmatprep.mubr.f32.mxu0 0.0
        %1892 = vmatmul.mubr.f32.gmra.mxu0 %v1544
        %v1893 = vpop.f32.mrf.mxu0
        %v1894 = vadd.f32 %v1444, %v1893
        %v1895 = vpop.f32.mrf.mxu0
        %1896 = vmatprep.mubr.f32.mxu0 0.0
        %1897 = vmatmul.mubr.f32.gmra.mxu0 %v1547
        %v1898 = vpop.f32.mrf.mxu0
        %v1899 = vadd.f32 %v1444, %v1898
        %v1900 = vpop.f32.mrf.mxu0
        %1901 = vmatprep.mubr.f32.mxu0 0.0
        %1902 = vmatmul.mubr.f32.gmra.mxu0 %v1550
        %v1903 = vpop.f32.mrf.mxu0
        %v1904 = vadd.f32 %v1444, %v1903
        %v1905 = vpop.f32.mrf.mxu0
        %1906 = vmatprep.mubr.f32.mxu0 0.0
        %1907 = vmatmul.mubr.f32.gmra.mxu0 %v1553
        %v1908 = vpop.f32.mrf.mxu0
        %v1909 = vadd.f32 %v1444, %v1908
        %v1910 = vpop.f32.mrf.mxu0
        %1911 = vmatprep.mubr.f32.mxu0 0.0
        %1912 = vmatmul.mubr.f32.gmra.mxu0 %v1556
        %v1913 = vpop.f32.mrf.mxu0
        %v1914 = vadd.f32 %v1444, %v1913
        %v1915 = vpop.f32.mrf.mxu0
        %1916 = vmatprep.mubr.f32.mxu0 0.0
        %1917 = vmatmul.mubr.f32.gmra.mxu0 %v1559
        %v1918 = vpop.f32.mrf.mxu0
        %v1919 = vadd.f32 %v1444, %v1918
        %v1920 = vpop.f32.mrf.mxu0
        %1921 = vmatprep.mubr.f32.mxu0 0.0
        %1922 = vmatmul.mubr.f32.gmra.mxu0 %v1562
        %v1923 = vpop.f32.mrf.mxu0
        %v1924 = vadd.f32 %v1444, %v1923
        %v1925 = vpop.f32.mrf.mxu0
        %1926 = vmatprep.mubr.f32.mxu0 0.0
        %1927 = vmatmul.mubr.f32.gmra.mxu0 %v1565
        %v1928 = vpop.f32.mrf.mxu0
        %v1929 = vadd.f32 %v1444, %v1928
        %v1930 = vpop.f32.mrf.mxu0
        %1931 = vmatprep.mubr.f32.mxu0 0.0
        %1932 = vmatmul.mubr.f32.gmra.mxu0 %v1568
        %v1933 = vpop.f32.mrf.mxu0
        %v1934 = vadd.f32 %v1444, %v1933
        %v1935 = vpop.f32.mrf.mxu0
        %1936 = vmatprep.mubr.f32.mxu0 0.0
        %1937 = vmatmul.mubr.f32.gmra.mxu0 %v1571
        %v1938 = vpop.f32.mrf.mxu0
        %v1939 = vadd.f32 %v1444, %v1938
        %v1940 = vpop.f32.mrf.mxu0
        %1941 = vmatprep.mubr.f32.mxu0 0.0
        %1942 = vmatmul.mubr.f32.gmra.mxu0 %v1574
        %v1943 = vpop.f32.mrf.mxu0
        %v1944 = vadd.f32 %v1444, %v1943
        %v1945 = vpop.f32.mrf.mxu0
        %1946 = vmatprep.mubr.f32.mxu0 0.0
        %1947 = vmatmul.mubr.f32.gmra.mxu0 %v1577
        %v1948 = vpop.f32.mrf.mxu0
        %v1949 = vadd.f32 %v1444, %v1948
        %v1950 = vpop.f32.mrf.mxu0
        %1951 = vmatprep.mubr.f32.mxu0 0.0
        %1952 = vmatmul.mubr.f32.gmra.mxu0 %v1580
        %v1953 = vpop.f32.mrf.mxu0
        %v1954 = vadd.f32 %v1444, %v1953
        %v1955 = vpop.f32.mrf.mxu0
        %1956 = vmatprep.mubr.f32.mxu0 0.0
        %1957 = vmatmul.mubr.f32.gmra.mxu0 %v1583
        %v1958 = vpop.f32.mrf.mxu0
        %v1959 = vadd.f32 %v1444, %v1958
        %v1960 = vpop.f32.mrf.mxu0
        %1961 = vmatprep.mubr.f32.mxu0 0.0
        %1962 = vmatmul.mubr.f32.gmra.mxu0 %v1586
        %v1963 = vpop.f32.mrf.mxu0
        %v1964 = vadd.f32 %v1444, %v1963
        %v1965 = vpop.f32.mrf.mxu0
        %1966 = vmatprep.mubr.f32.mxu0 0.0
        %1967 = vmatmul.mubr.f32.gmra.mxu0 %v1589
        %v1968 = vpop.f32.mrf.mxu0
        %v1969 = vadd.f32 %v1444, %v1968
        %v1970 = vpop.f32.mrf.mxu0
        %1971 = vmatprep.mubr.f32.mxu0 0.0
        %1972 = vmatmul.mubr.f32.gmra.mxu0 %v1592
        %v1973 = vpop.f32.mrf.mxu0
        %v1974 = vadd.f32 %v1444, %v1973
        %v1975 = vpop.f32.mrf.mxu0
        %1976 = vmatprep.mubr.f32.mxu0 0.0
        %1977 = vmatmul.mubr.f32.gmra.mxu0 %v1595
        %v1978 = vpop.f32.mrf.mxu0
        %v1979 = vadd.f32 %v1444, %v1978
        %v1980 = vpop.f32.mrf.mxu0
        %1981 = vmatprep.mubr.f32.mxu0 0.0
        %1982 = vmatmul.mubr.f32.gmra.mxu0 %v1598
        %v1983 = vpop.f32.mrf.mxu0
        %v1984 = vadd.f32 %v1444, %v1983
        %v1985 = vpop.f32.mrf.mxu0
        %1986 = vmatprep.mubr.f32.mxu0 0.0
        %1987 = vmatmul.mubr.f32.gmra.mxu0 %v1601
        %v1988 = vpop.f32.mrf.mxu0
        %v1989 = vadd.f32 %v1444, %v1988
        %v1990 = vpop.f32.mrf.mxu0
        %1991 = vmatprep.mubr.f32.mxu0 0.0
        %1992 = vmatmul.mubr.f32.gmra.mxu0 %v1604
        %v1993 = vpop.f32.mrf.mxu0
        %v1994 = vadd.f32 %v1444, %v1993
        %v1995 = vpop.f32.mrf.mxu0
        %1996 = vmatprep.mubr.f32.mxu0 0.0
        %1997 = vmatmul.mubr.f32.gmra.mxu0 %v1607
        %v1998 = vpop.f32.mrf.mxu0
        %v1999 = vadd.f32 %v1444, %v1998
        %v2000 = vpop.f32.mrf.mxu0
        %2001 = vmatprep.mubr.f32.mxu0 0.0
        %2002 = vmatmul.mubr.f32.gmra.mxu0 %v1610
        %v2003 = vpop.f32.mrf.mxu0
        %v2004 = vadd.f32 %v1444, %v2003
        %v2005 = vpop.f32.mrf.mxu0
        %2006 = vmatprep.mubr.f32.mxu0 0.0
        %2007 = vmatmul.mubr.f32.gmra.mxu0 %v1613
        %v2008 = vpop.f32.mrf.mxu0
        %v2009 = vadd.f32 %v1444, %v2008
        %v2010 = vpop.f32.mrf.mxu0
        %2011 = vmatprep.mubr.f32.mxu0 0.0
        %2012 = vmatmul.mubr.f32.gmra.mxu0 %v1616
        %v2013 = vpop.f32.mrf.mxu0
        %v2014 = vadd.f32 %v1444, %v2013
        %v2015 = vpop.f32.mrf.mxu0
        %2016 = vmatprep.mubr.f32.mxu0 0.0
        %2017 = vmatmul.mubr.f32.gmra.mxu0 %v1619
        %v2018 = vpop.f32.mrf.mxu0
        %v2019 = vadd.f32 %v1444, %v2018
        %v2020 = vpop.f32.mrf.mxu0
        %2021 = vmatprep.mubr.f32.mxu0 0.0
        %2022 = vmatmul.mubr.f32.gmra.mxu0 %v1622
        %v2023 = vpop.f32.mrf.mxu0
        %v2024 = vadd.f32 %v1444, %v2023
        %v2025 = vpop.f32.mrf.mxu0
        %2026 = vmatprep.mubr.f32.mxu0 0.0
        %2027 = vmatmul.mubr.f32.gmra.mxu0 %v1625
        %v2028 = vpop.f32.mrf.mxu0
        %v2029 = vadd.f32 %v1444, %v2028
        %v2030 = vpop.f32.mrf.mxu0
        %2031 = vmatprep.mubr.f32.mxu0 0.0
        %2032 = vmatmul.mubr.f32.gmra.mxu0 %v1628
        %v2033 = vpop.f32.mrf.mxu0
        %v2034 = vadd.f32 %v1444, %v2033
        %v2035 = vpop.f32.mrf.mxu0
        %2036 = vmatprep.mubr.f32.mxu0 0.0
        %2037 = vmatmul.mubr.f32.gmra.mxu0 %v1631
        %v2038 = vpop.f32.mrf.mxu0
        %v2039 = vadd.f32 %v1444, %v2038
        %v2040 = vpop.f32.mrf.mxu0
        %2041 = vmatprep.mubr.f32.mxu0 0.0
        %2042 = vmatmul.mubr.f32.gmra.mxu0 %v1634
        %v2043 = vpop.f32.mrf.mxu0
        %v2044 = vadd.f32 %v1444, %v2043
        %v2045 = vpop.f32.mrf.mxu0
        %2046 = vmatprep.mubr.f32.mxu0 0.0
        %2047 = vmatmul.mubr.f32.gmra.mxu0 %v1637
        %v2048 = vpop.f32.mrf.mxu0
        %v2049 = vadd.f32 %v1444, %v2048
        %v2050 = vpop.f32.mrf.mxu0
        %2051 = vmatprep.mubr.f32.mxu0 0.0
        %2052 = vmatmul.mubr.f32.gmra.mxu0 %v1640
        %v2053 = vpop.f32.mrf.mxu0
        %v2054 = vadd.f32 %v1444, %v2053
        %v2055 = vpop.f32.mrf.mxu0
        %2056 = vmatprep.mubr.f32.mxu0 0.0
        %2057 = vmatmul.mubr.f32.gmra.mxu0 %v1643
        %v2058 = vpop.f32.mrf.mxu0
        %v2059 = vadd.f32 %v1444, %v2058
        %v2060 = vpop.f32.mrf.mxu0
        %2061 = vmatprep.mubr.f32.mxu0 0.0
        %2062 = vmatmul.mubr.f32.gmra.mxu0 %v1646
        %v2063 = vpop.f32.mrf.mxu0
        %v2064 = vadd.f32 %v1444, %v2063
        %v2065 = vpop.f32.mrf.mxu0
        %2066 = vmatprep.mubr.f32.mxu0 0.0
        %2067 = vmatmul.mubr.f32.gmra.mxu0 %v1649
        %v2068 = vpop.f32.mrf.mxu0
        %v2069 = vadd.f32 %v1444, %v2068
        %v2070 = vpop.f32.mrf.mxu0
        %2071 = vmatprep.mubr.f32.mxu0 0.0
        %2072 = vmatmul.mubr.f32.gmra.mxu0 %v1652
        %v2073 = vpop.f32.mrf.mxu0
        %v2074 = vadd.f32 %v1444, %v2073
        %v2075 = vpop.f32.mrf.mxu0
        %2076 = vmatprep.mubr.f32.mxu0 0.0
        %2077 = vmatmul.mubr.f32.gmra.mxu0 %v1655
        %v2078 = vpop.f32.mrf.mxu0
        %v2079 = vadd.f32 %v1444, %v2078
        %v2080 = vpop.f32.mrf.mxu0
        %2081 = vmatprep.mubr.f32.mxu0 0.0
        %2082 = vmatmul.mubr.f32.gmra.mxu0 %v1658
        %v2083 = vpop.f32.mrf.mxu0
        %v2084 = vadd.f32 %v1444, %v2083
        %v2085 = vpop.f32.mrf.mxu0
        %2086 = vmatprep.mubr.f32.mxu0 0.0
        %2087 = vmatmul.mubr.f32.gmra.mxu0 %v1661
        %v2088 = vpop.f32.mrf.mxu0
        %v2089 = vadd.f32 %v1444, %v2088
        %v2090 = vpop.f32.mrf.mxu0
        %2091 = vdwg.mxu0
        %vm2092 = vcmp.ge.f32.partialorder %v1734, 0.0
        %vm2093 = vcmp.ge.f32.partialorder %v1739, 0.0
        %vm2094 = vcmp.ge.f32.partialorder %v1744, 0.0
        %vm2095 = vcmp.ge.f32.partialorder %v1749, 0.0
        %vm2096 = vcmp.ge.f32.partialorder %v1754, 0.0
        %vm2097 = vcmp.ge.f32.partialorder %v1759, 0.0
        %vm2098 = vcmp.ge.f32.partialorder %v1764, 0.0
        %vm2099 = vcmp.ge.f32.partialorder %v1769, 0.0
        %vm2100 = vcmp.ge.f32.partialorder %v1774, 0.0
        %vm2101 = vcmp.ge.f32.partialorder %v1779, 0.0
        %vm2102 = vcmp.ge.f32.partialorder %v1784, 0.0
        %vm2103 = vcmp.ge.f32.partialorder %v1789, 0.0
        %vm2104 = vcmp.ge.f32.partialorder %v1794, 0.0
        %vm2105 = vcmp.ge.f32.partialorder %v1799, 0.0
        %vm2106 = vcmp.ge.f32.partialorder %v1804, 0.0
        %vm2107 = vcmp.ge.f32.partialorder %v1809, 0.0
        %vm2108 = vcmp.ge.f32.partialorder %v1814, 0.0
        %vm2109 = vcmp.ge.f32.partialorder %v1819, 0.0
        %vm2110 = vcmp.ge.f32.partialorder %v1824, 0.0
        %vm2111 = vcmp.ge.f32.partialorder %v1829, 0.0
        %vm2112 = vcmp.ge.f32.partialorder %v1834, 0.0
        %vm2113 = vcmp.ge.f32.partialorder %v1839, 0.0
        %vm2114 = vcmp.ge.f32.partialorder %v1844, 0.0
        %vm2115 = vcmp.ge.f32.partialorder %v1849, 0.0
        %vm2116 = vcmp.ge.f32.partialorder %v1854, 0.0
        %vm2117 = vcmp.ge.f32.partialorder %v1859, 0.0
        %vm2118 = vcmp.ge.f32.partialorder %v1864, 0.0
        %vm2119 = vcmp.ge.f32.partialorder %v1869, 0.0
        %vm2120 = vcmp.ge.f32.partialorder %v1874, 0.0
        %vm2121 = vcmp.ge.f32.partialorder %v1879, 0.0
        %vm2122 = vcmp.ge.f32.partialorder %v1884, 0.0
        %vm2123 = vcmp.ge.f32.partialorder %v1889, 0.0
        %vm2124 = vcmp.ge.f32.partialorder %v1894, 0.0
        %vm2125 = vcmp.ge.f32.partialorder %v1899, 0.0
        %vm2126 = vcmp.ge.f32.partialorder %v1904, 0.0
        %vm2127 = vcmp.ge.f32.partialorder %v1909, 0.0
        %vm2128 = vcmp.ge.f32.partialorder %v1914, 0.0
        %vm2129 = vcmp.ge.f32.partialorder %v1919, 0.0
        %vm2130 = vcmp.ge.f32.partialorder %v1924, 0.0
        %vm2131 = vcmp.ge.f32.partialorder %v1929, 0.0
        %vm2132 = vcmp.ge.f32.partialorder %v1934, 0.0
        %vm2133 = vcmp.ge.f32.partialorder %v1939, 0.0
        %vm2134 = vcmp.ge.f32.partialorder %v1944, 0.0
        %vm2135 = vcmp.ge.f32.partialorder %v1949, 0.0
        %vm2136 = vcmp.ge.f32.partialorder %v1954, 0.0
        %vm2137 = vcmp.ge.f32.partialorder %v1959, 0.0
        %vm2138 = vcmp.ge.f32.partialorder %v1964, 0.0
        %vm2139 = vcmp.ge.f32.partialorder %v1969, 0.0
        %vm2140 = vcmp.ge.f32.partialorder %v1974, 0.0
        %vm2141 = vcmp.ge.f32.partialorder %v1979, 0.0
        %vm2142 = vcmp.ge.f32.partialorder %v1984, 0.0
        %vm2143 = vcmp.ge.f32.partialorder %v1989, 0.0
        %vm2144 = vcmp.ge.f32.partialorder %v1994, 0.0
        %vm2145 = vcmp.ge.f32.partialorder %v1999, 0.0
        %vm2146 = vcmp.ge.f32.partialorder %v2004, 0.0
        %vm2147 = vcmp.ge.f32.partialorder %v2009, 0.0
        %vm2148 = vcmp.ge.f32.partialorder %v2014, 0.0
        %vm2149 = vcmp.ge.f32.partialorder %v2019, 0.0
        %vm2150 = vcmp.ge.f32.partialorder %v2024, 0.0
        %vm2151 = vcmp.ge.f32.partialorder %v2029, 0.0
        %vm2152 = vcmp.ge.f32.partialorder %v2034, 0.0
        %vm2153 = vcmp.ge.f32.partialorder %v2039, 0.0
        %vm2154 = vcmp.ge.f32.partialorder %v2044, 0.0
        %vm2155 = vcmp.ge.f32.partialorder %v2049, 0.0
        %vm2156 = vcmp.ge.f32.partialorder %v2054, 0.0
        %vm2157 = vcmp.ge.f32.partialorder %v2059, 0.0
        %vm2158 = vcmp.ge.f32.partialorder %v2064, 0.0
        %vm2159 = vcmp.ge.f32.partialorder %v2069, 0.0
        %vm2160 = vcmp.ge.f32.partialorder %v2074, 0.0
        %vm2161 = vcmp.ge.f32.partialorder %v2079, 0.0
        %vm2162 = vcmp.ge.f32.partialorder %v2084, 0.0
        %vm2163 = vcmp.ge.f32.partialorder %v2089, 0.0
        %v2164 = vmul.f32 %v1734, 0.01
        %v2165 = vmul.f32 %v1739, 0.01
        %v2166 = vmul.f32 %v1744, 0.01
        %v2167 = vmul.f32 %v1749, 0.01
        %v2168 = vmul.f32 %v1754, 0.01
        %v2169 = vmul.f32 %v1759, 0.01
        %v2170 = vmul.f32 %v1764, 0.01
        %v2171 = vmul.f32 %v1769, 0.01
        %v2172 = vmul.f32 %v1774, 0.01
        %v2173 = vmul.f32 %v1779, 0.01
        %v2174 = vmul.f32 %v1784, 0.01
        %v2175 = vmul.f32 %v1789, 0.01
        %v2176 = vmul.f32 %v1794, 0.01
        %v2177 = vmul.f32 %v1799, 0.01
        %v2178 = vmul.f32 %v1804, 0.01
        %v2179 = vmul.f32 %v1809, 0.01
        %v2180 = vmul.f32 %v1814, 0.01
        %v2181 = vmul.f32 %v1819, 0.01
        %v2182 = vmul.f32 %v1824, 0.01
        %v2183 = vmul.f32 %v1829, 0.01
        %v2184 = vmul.f32 %v1834, 0.01
        %v2185 = vmul.f32 %v1839, 0.01
        %v2186 = vmul.f32 %v1844, 0.01
        %v2187 = vmul.f32 %v1849, 0.01
        %v2188 = vmul.f32 %v1854, 0.01
        %v2189 = vmul.f32 %v1859, 0.01
        %v2190 = vmul.f32 %v1864, 0.01
        %v2191 = vmul.f32 %v1869, 0.01
        %v2192 = vmul.f32 %v1874, 0.01
        %v2193 = vmul.f32 %v1879, 0.01
        %v2194 = vmul.f32 %v1884, 0.01
        %v2195 = vmul.f32 %v1889, 0.01
        %v2196 = vmul.f32 %v1894, 0.01
        %v2197 = vmul.f32 %v1899, 0.01
        %v2198 = vmul.f32 %v1904, 0.01
        %v2199 = vmul.f32 %v1909, 0.01
        %v2200 = vmul.f32 %v1914, 0.01
        %v2201 = vmul.f32 %v1919, 0.01
        %v2202 = vmul.f32 %v1924, 0.01
        %v2203 = vmul.f32 %v1929, 0.01
        %v2204 = vmul.f32 %v1934, 0.01
        %v2205 = vmul.f32 %v1939, 0.01
        %v2206 = vmul.f32 %v1944, 0.01
        %v2207 = vmul.f32 %v1949, 0.01
        %v2208 = vmul.f32 %v1954, 0.01
        %v2209 = vmul.f32 %v1959, 0.01
        %v2210 = vmul.f32 %v1964, 0.01
        %v2211 = vmul.f32 %v1969, 0.01
        %v2212 = vmul.f32 %v1974, 0.01
        %v2213 = vmul.f32 %v1979, 0.01
        %v2214 = vmul.f32 %v1984, 0.01
        %v2215 = vmul.f32 %v1989, 0.01
        %v2216 = vmul.f32 %v1994, 0.01
        %v2217 = vmul.f32 %v1999, 0.01
        %v2218 = vmul.f32 %v2004, 0.01
        %v2219 = vmul.f32 %v2009, 0.01
        %v2220 = vmul.f32 %v2014, 0.01
        %v2221 = vmul.f32 %v2019, 0.01
        %v2222 = vmul.f32 %v2024, 0.01
        %v2223 = vmul.f32 %v2029, 0.01
        %v2224 = vmul.f32 %v2034, 0.01
        %v2225 = vmul.f32 %v2039, 0.01
        %v2226 = vmul.f32 %v2044, 0.01
        %v2227 = vmul.f32 %v2049, 0.01
        %v2228 = vmul.f32 %v2054, 0.01
        %v2229 = vmul.f32 %v2059, 0.01
        %v2230 = vmul.f32 %v2064, 0.01
        %v2231 = vmul.f32 %v2069, 0.01
        %v2232 = vmul.f32 %v2074, 0.01
        %v2233 = vmul.f32 %v2079, 0.01
        %v2234 = vmul.f32 %v2084, 0.01
        %v2235 = vmul.f32 %v2089, 0.01
        %v2236 = vsel %vm2092, %v1734, %v2164
        %v2237 = vsel %vm2093, %v1739, %v2165
        %v2238 = vsel %vm2094, %v1744, %v2166
        %v2239 = vsel %vm2095, %v1749, %v2167
        %v2240 = vsel %vm2096, %v1754, %v2168
        %v2241 = vsel %vm2097, %v1759, %v2169
        %v2242 = vsel %vm2098, %v1764, %v2170
        %v2243 = vsel %vm2099, %v1769, %v2171
        %v2244 = vsel %vm2100, %v1774, %v2172
        %v2245 = vsel %vm2101, %v1779, %v2173
        %v2246 = vsel %vm2102, %v1784, %v2174
        %v2247 = vsel %vm2103, %v1789, %v2175
        %v2248 = vsel %vm2104, %v1794, %v2176
        %v2249 = vsel %vm2105, %v1799, %v2177
        %v2250 = vsel %vm2106, %v1804, %v2178
        %v2251 = vsel %vm2107, %v1809, %v2179
        %v2252 = vsel %vm2108, %v1814, %v2180
        %v2253 = vsel %vm2109, %v1819, %v2181
        %v2254 = vsel %vm2110, %v1824, %v2182
        %v2255 = vsel %vm2111, %v1829, %v2183
        %v2256 = vsel %vm2112, %v1834, %v2184
        %v2257 = vsel %vm2113, %v1839, %v2185
        %v2258 = vsel %vm2114, %v1844, %v2186
        %v2259 = vsel %vm2115, %v1849, %v2187
        %v2260 = vsel %vm2116, %v1854, %v2188
        %v2261 = vsel %vm2117, %v1859, %v2189
        %v2262 = vsel %vm2118, %v1864, %v2190
        %v2263 = vsel %vm2119, %v1869, %v2191
        %v2264 = vsel %vm2120, %v1874, %v2192
        %v2265 = vsel %vm2121, %v1879, %v2193
        %v2266 = vsel %vm2122, %v1884, %v2194
        %v2267 = vsel %vm2123, %v1889, %v2195
        %v2268 = vsel %vm2124, %v1894, %v2196
        %v2269 = vsel %vm2125, %v1899, %v2197
        %v2270 = vsel %vm2126, %v1904, %v2198
        %v2271 = vsel %vm2127, %v1909, %v2199
        %v2272 = vsel %vm2128, %v1914, %v2200
        %v2273 = vsel %vm2129, %v1919, %v2201
        %v2274 = vsel %vm2130, %v1924, %v2202
        %v2275 = vsel %vm2131, %v1929, %v2203
        %v2276 = vsel %vm2132, %v1934, %v2204
        %v2277 = vsel %vm2133, %v1939, %v2205
        %v2278 = vsel %vm2134, %v1944, %v2206
        %v2279 = vsel %vm2135, %v1949, %v2207
        %v2280 = vsel %vm2136, %v1954, %v2208
        %v2281 = vsel %vm2137, %v1959, %v2209
        %v2282 = vsel %vm2138, %v1964, %v2210
        %v2283 = vsel %vm2139, %v1969, %v2211
        %v2284 = vsel %vm2140, %v1974, %v2212
        %v2285 = vsel %vm2141, %v1979, %v2213
        %v2286 = vsel %vm2142, %v1984, %v2214
        %v2287 = vsel %vm2143, %v1989, %v2215
        %v2288 = vsel %vm2144, %v1994, %v2216
        %v2289 = vsel %vm2145, %v1999, %v2217
        %v2290 = vsel %vm2146, %v2004, %v2218
        %v2291 = vsel %vm2147, %v2009, %v2219
        %v2292 = vsel %vm2148, %v2014, %v2220
        %v2293 = vsel %vm2149, %v2019, %v2221
        %v2294 = vsel %vm2150, %v2024, %v2222
        %v2295 = vsel %vm2151, %v2029, %v2223
        %v2296 = vsel %vm2152, %v2034, %v2224
        %v2297 = vsel %vm2153, %v2039, %v2225
        %v2298 = vsel %vm2154, %v2044, %v2226
        %v2299 = vsel %vm2155, %v2049, %v2227
        %v2300 = vsel %vm2156, %v2054, %v2228
        %v2301 = vsel %vm2157, %v2059, %v2229
        %v2302 = vsel %vm2158, %v2064, %v2230
        %v2303 = vsel %vm2159, %v2069, %v2231
        %v2304 = vsel %vm2160, %v2074, %v2232
        %v2305 = vsel %vm2161, %v2079, %v2233
        %v2306 = vsel %vm2162, %v2084, %v2234
        %v2307 = vsel %vm2163, %v2089, %v2235
        %s2308 = scalar_lea.vmem %s1329, 576 [#allocation2]
        %v2309 = vld [vmem:[%s2308] sm:$0xff]
        %v2310 = vld [vmem:[%s2308 + $0x8] sm:$0xff]
        %v2311 = vld [vmem:[%s2308 + $0x10] sm:$0xff]
        %v2312 = vld [vmem:[%s2308 + $0x18] sm:$0xff]
        %v2313 = vld [vmem:[%s2308 + $0x20] sm:$0xff]
        %v2314 = vld [vmem:[%s2308 + $0x28] sm:$0xff]
        %v2315 = vld [vmem:[%s2308 + $0x30] sm:$0xff]
        %v2316 = vld [vmem:[%s2308 + $0x38] sm:$0xff]
        %v2317 = vld [vmem:[%s2308 + $0x40] sm:$0xff]
        %v2318 = vld [vmem:[%s2308 + $0x48] sm:$0xff]
        %v2319 = vld [vmem:[%s2308 + $0x50] sm:$0xff]
        %v2320 = vld [vmem:[%s2308 + $0x58] sm:$0xff]
        %v2321 = vld [vmem:[%s2308 + $0x60] sm:$0xff]
        %v2322 = vld [vmem:[%s2308 + $0x68] sm:$0xff]
        %v2323 = vld [vmem:[%s2308 + $0x70] sm:$0xff]
        %v2324 = vld [vmem:[%s2308 + $0x78] sm:$0xff]
        %v2325 = vld [vmem:[%s2308 + $0x80] sm:$0xff]
        %v2326 = vld [vmem:[%s2308 + $0x88] sm:$0xff]
        %v2327 = vld [vmem:[%s2308 + $0x90] sm:$0xff]
        %v2328 = vld [vmem:[%s2308 + $0x98] sm:$0xff]
        %v2329 = vld [vmem:[%s2308 + $0xa0] sm:$0xff]
        %v2330 = vld [vmem:[%s2308 + $0xa8] sm:$0xff]
        %v2331 = vld [vmem:[%s2308 + $0xb0] sm:$0xff]
        %v2332 = vld [vmem:[%s2308 + $0xb8] sm:$0xff]
        %v2333 = vld [vmem:[%s2308 + $0xc0] sm:$0xff]
        %v2334 = vld [vmem:[%s2308 + $0xc8] sm:$0xff]
        %v2335 = vld [vmem:[%s2308 + $0xd0] sm:$0xff]
        %v2336 = vld [vmem:[%s2308 + $0xd8] sm:$0xff]
        %v2337 = vld [vmem:[%s2308 + $0xe0] sm:$0xff]
        %v2338 = vld [vmem:[%s2308 + $0xe8] sm:$0xff]
        %v2339 = vld [vmem:[%s2308 + $0xf0] sm:$0xff]
        %v2340 = vld [vmem:[%s2308 + $0xf8] sm:$0xff]
        %v2341 = vld [vmem:[%s2308 + $0x100] sm:$0xff]
        %v2342 = vld [vmem:[%s2308 + $0x108] sm:$0xff]
        %v2343 = vld [vmem:[%s2308 + $0x110] sm:$0xff]
        %v2344 = vld [vmem:[%s2308 + $0x118] sm:$0xff]
        %v2345 = vld [vmem:[%s2308 + $0x120] sm:$0xff]
        %v2346 = vld [vmem:[%s2308 + $0x128] sm:$0xff]
        %v2347 = vld [vmem:[%s2308 + $0x130] sm:$0xff]
        %v2348 = vld [vmem:[%s2308 + $0x138] sm:$0xff]
        %v2349 = vld [vmem:[%s2308 + $0x140] sm:$0xff]
        %v2350 = vld [vmem:[%s2308 + $0x148] sm:$0xff]
        %v2351 = vld [vmem:[%s2308 + $0x150] sm:$0xff]
        %v2352 = vld [vmem:[%s2308 + $0x158] sm:$0xff]
        %v2353 = vld [vmem:[%s2308 + $0x160] sm:$0xff]
        %v2354 = vld [vmem:[%s2308 + $0x168] sm:$0xff]
        %v2355 = vld [vmem:[%s2308 + $0x170] sm:$0xff]
        %v2356 = vld [vmem:[%s2308 + $0x178] sm:$0xff]
        %v2357 = vld [vmem:[%s2308 + $0x180] sm:$0xff]
        %v2358 = vld [vmem:[%s2308 + $0x188] sm:$0xff]
        %v2359 = vld [vmem:[%s2308 + $0x190] sm:$0xff]
        %v2360 = vld [vmem:[%s2308 + $0x198] sm:$0xff]
        %v2361 = vld [vmem:[%s2308 + $0x1a0] sm:$0xff]
        %v2362 = vld [vmem:[%s2308 + $0x1a8] sm:$0xff]
        %v2363 = vld [vmem:[%s2308 + $0x1b0] sm:$0xff]
        %v2364 = vld [vmem:[%s2308 + $0x1b8] sm:$0xff]
        %v2365 = vld [vmem:[%s2308 + $0x1c0] sm:$0xff]
        %v2366 = vld [vmem:[%s2308 + $0x1c8] sm:$0xff]
        %v2367 = vld [vmem:[%s2308 + $0x1d0] sm:$0xff]
        %v2368 = vld [vmem:[%s2308 + $0x1d8] sm:$0xff]
        %v2369 = vld [vmem:[%s2308 + $0x1e0] sm:$0xff]
        %v2370 = vld [vmem:[%s2308 + $0x1e8] sm:$0xff]
        %v2371 = vld [vmem:[%s2308 + $0x1f0] sm:$0xff]
        %v2372 = vld [vmem:[%s2308 + $0x1f8] sm:$0xff]
        %v2373 = vld [vmem:[%s2308 + $0x200] sm:$0xff]
        %v2374 = vld [vmem:[%s2308 + $0x208] sm:$0xff]
        %v2375 = vld [vmem:[%s2308 + $0x210] sm:$0xff]
        %v2376 = vld [vmem:[%s2308 + $0x218] sm:$0xff]
        %v2377 = vld [vmem:[%s2308 + $0x220] sm:$0xff]
        %v2378 = vld [vmem:[%s2308 + $0x228] sm:$0xff]
        %v2379 = vld [vmem:[%s2308 + $0x230] sm:$0xff]
        %v2380 = vld [vmem:[%s2308 + $0x238] sm:$0xff]
        %v2382 = vsel %vm1446, %v2309, 0
        %v2385 = vsel %vm1446, %v2310, 0
        %v2388 = vsel %vm1446, %v2311, 0
        %v2391 = vsel %vm1446, %v2312, 0
        %v2394 = vsel %vm1446, %v2313, 0
        %v2397 = vsel %vm1446, %v2314, 0
        %v2400 = vsel %vm1446, %v2315, 0
        %v2403 = vsel %vm1446, %v2316, 0
        %v2406 = vsel %vm1446, %v2317, 0
        %v2409 = vsel %vm1446, %v2318, 0
        %v2412 = vsel %vm1446, %v2319, 0
        %v2415 = vsel %vm1446, %v2320, 0
        %v2418 = vsel %vm1446, %v2321, 0
        %v2421 = vsel %vm1446, %v2322, 0
        %v2424 = vsel %vm1446, %v2323, 0
        %v2427 = vsel %vm1446, %v2324, 0
        %v2430 = vsel %vm1446, %v2325, 0
        %v2433 = vsel %vm1446, %v2326, 0
        %v2436 = vsel %vm1446, %v2327, 0
        %v2439 = vsel %vm1446, %v2328, 0
        %v2442 = vsel %vm1446, %v2329, 0
        %v2445 = vsel %vm1446, %v2330, 0
        %v2448 = vsel %vm1446, %v2331, 0
        %v2451 = vsel %vm1446, %v2332, 0
        %v2454 = vsel %vm1446, %v2333, 0
        %v2457 = vsel %vm1446, %v2334, 0
        %v2460 = vsel %vm1446, %v2335, 0
        %v2463 = vsel %vm1446, %v2336, 0
        %v2466 = vsel %vm1446, %v2337, 0
        %v2469 = vsel %vm1446, %v2338, 0
        %v2472 = vsel %vm1446, %v2339, 0
        %v2475 = vsel %vm1446, %v2340, 0
        %v2478 = vsel %vm1446, %v2341, 0
        %v2481 = vsel %vm1446, %v2342, 0
        %v2484 = vsel %vm1446, %v2343, 0
        %v2487 = vsel %vm1446, %v2344, 0
        %v2490 = vsel %vm1446, %v2345, 0
        %v2493 = vsel %vm1446, %v2346, 0
        %v2496 = vsel %vm1446, %v2347, 0
        %v2499 = vsel %vm1446, %v2348, 0
        %v2502 = vsel %vm1446, %v2349, 0
        %v2505 = vsel %vm1446, %v2350, 0
        %v2508 = vsel %vm1446, %v2351, 0
        %v2511 = vsel %vm1446, %v2352, 0
        %v2514 = vsel %vm1446, %v2353, 0
        %v2517 = vsel %vm1446, %v2354, 0
        %v2520 = vsel %vm1446, %v2355, 0
        %v2523 = vsel %vm1446, %v2356, 0
        %v2526 = vsel %vm1446, %v2357, 0
        %v2529 = vsel %vm1446, %v2358, 0
        %v2532 = vsel %vm1446, %v2359, 0
        %v2535 = vsel %vm1446, %v2360, 0
        %v2538 = vsel %vm1446, %v2361, 0
        %v2541 = vsel %vm1446, %v2362, 0
        %v2544 = vsel %vm1446, %v2363, 0
        %v2547 = vsel %vm1446, %v2364, 0
        %v2550 = vsel %vm1446, %v2365, 0
        %v2553 = vsel %vm1446, %v2366, 0
        %v2556 = vsel %vm1446, %v2367, 0
        %v2559 = vsel %vm1446, %v2368, 0
        %v2562 = vsel %vm1446, %v2369, 0
        %v2565 = vsel %vm1446, %v2370, 0
        %v2568 = vsel %vm1446, %v2371, 0
        %v2571 = vsel %vm1446, %v2372, 0
        %v2574 = vsel %vm1446, %v2373, 0
        %v2577 = vsel %vm1446, %v2374, 0
        %v2580 = vsel %vm1446, %v2375, 0
        %v2583 = vsel %vm1446, %v2376, 0
        %v2586 = vsel %vm1446, %v2377, 0
        %v2589 = vsel %vm1446, %v2378, 0
        %v2592 = vsel %vm1446, %v2379, 0
        %v2595 = vsel %vm1446, %v2380, 0
        %2597 = vmatprep.subr.mxu0 0.0
        %2598 = vmatpush1.msra.mxu0 0.0
        %2599 = vmatprep.subr.mxu0 0.0
        %2600 = vmatpush1.msra.mxu0 0.0
        %2601 = vmatprep.subr.mxu0 0.0
        %2602 = vmatpush1.msra.mxu0 0.0
        %2603 = vmatprep.subr.mxu0 0.0
        %2604 = vmatpush1.msra.mxu0 0.0
        %2605 = vmatprep.subr.mxu0 0.0
        %2606 = vmatpush1.msra.mxu0 0.0
        %2607 = vmatprep.subr.mxu0 0.0
        %2608 = vmatpush1.msra.mxu0 0.0
        %2609 = vmatprep.subr.mxu0 0.0
        %2610 = vmatpush1.msra.mxu0 %v1665
        %2611 = vmatprep.subr.mxu0 0.0
        %2612 = vmatpush1.msra.mxu0 %v1365
        %2613 = vmatprep.subr.mxu0 0.0
        %2614 = vmatpush1.msra.mxu0 %v1364
        %2615 = vmatprep.subr.mxu0 0.0
        %2616 = vmatpush1.msra.mxu0 %v1363
        %2617 = vmatprep.subr.mxu0 0.0
        %2618 = vmatpush1.msra.mxu0 %v1362
        %2619 = vmatprep.subr.mxu0 0.0
        %2620 = vmatpush1.msra.mxu0 %v1361
        %2621 = vmatprep.subr.mxu0 0.0
        %2622 = vmatpush1.msra.mxu0 %v1360
        %2623 = vmatprep.subr.mxu0 0.0
        %2624 = vmatpush1.msra.mxu0 %v1359
        %2625 = vmatprep.subr.mxu0 0.0
        %2626 = vmatpush1.msra.mxu0 %v1358
        %2627 = vmatprep.subr.mxu0 0.0
        %2628 = vmatpush1.msra.mxu0 %v1357
        %2629 = vmatprep.subr.mxu0 0.0
        %2630 = vmatpush2.msra.mxu0 0.0
        %2631 = vmatprep.subr.mxu0 0.0
        %2632 = vmatpush2.msra.mxu0 0.0
        %2633 = vmatprep.subr.mxu0 0.0
        %2634 = vmatpush2.msra.mxu0 0.0
        %2635 = vmatprep.subr.mxu0 0.0
        %2636 = vmatpush2.msra.mxu0 0.0
        %2637 = vmatprep.subr.mxu0 0.0
        %2638 = vmatpush2.msra.mxu0 0.0
        %2639 = vmatprep.subr.mxu0 0.0
        %2640 = vmatpush2.msra.mxu0 0.0
        %2641 = vmatprep.subr.mxu0 0.0
        %2642 = vmatpush2.msra.mxu0 0.0
        %2643 = vmatprep.subr.mxu0 0.0
        %2644 = vmatpush2.msra.mxu0 0.0
        %2645 = vmatprep.subr.mxu0 0.0
        %2646 = vmatpush2.msra.mxu0 0.0
        %2647 = vmatprep.subr.mxu0 0.0
        %2648 = vmatpush2.msra.mxu0 0.0
        %2649 = vmatprep.subr.mxu0 0.0
        %2650 = vmatpush2.msra.mxu0 0.0
        %2651 = vmatprep.subr.mxu0 0.0
        %2652 = vmatpush2.msra.mxu0 0.0
        %2653 = vmatprep.subr.mxu0 0.0
        %2654 = vmatpush2.msra.mxu0 0.0
        %2655 = vmatprep.subr.mxu0 0.0
        %2656 = vmatpush2.msra.mxu0 0.0
        %2657 = vmatprep.subr.mxu0 0.0
        %2658 = vmatpush2.msra.mxu0 0.0
        %2659 = vmatprep.subr.mxu0 0.0
        %2660 = vmatpush2.msra.mxu0 0.0
        %2661 = vmatprep.mubr.f32.mxu0 0.0
        %2662 = vmatmul.mubr.f32.gmra.mxu0 %v2382
        %v2663 = vpop.f32.mrf.mxu0
        %v2664 = vadd.f32 %v1444, %v2663
        %v2665 = vpop.f32.mrf.mxu0
        %2666 = vmatprep.mubr.f32.mxu0 0.0
        %2667 = vmatmul.mubr.f32.gmra.mxu0 %v2385
        %v2668 = vpop.f32.mrf.mxu0
        %v2669 = vadd.f32 %v1444, %v2668
        %v2670 = vpop.f32.mrf.mxu0
        %2671 = vmatprep.mubr.f32.mxu0 0.0
        %2672 = vmatmul.mubr.f32.gmra.mxu0 %v2388
        %v2673 = vpop.f32.mrf.mxu0
        %v2674 = vadd.f32 %v1444, %v2673
        %v2675 = vpop.f32.mrf.mxu0
        %2676 = vmatprep.mubr.f32.mxu0 0.0
        %2677 = vmatmul.mubr.f32.gmra.mxu0 %v2391
        %v2678 = vpop.f32.mrf.mxu0
        %v2679 = vadd.f32 %v1444, %v2678
        %v2680 = vpop.f32.mrf.mxu0
        %2681 = vmatprep.mubr.f32.mxu0 0.0
        %2682 = vmatmul.mubr.f32.gmra.mxu0 %v2394
        %v2683 = vpop.f32.mrf.mxu0
        %v2684 = vadd.f32 %v1444, %v2683
        %v2685 = vpop.f32.mrf.mxu0
        %2686 = vmatprep.mubr.f32.mxu0 0.0
        %2687 = vmatmul.mubr.f32.gmra.mxu0 %v2397
        %v2688 = vpop.f32.mrf.mxu0
        %v2689 = vadd.f32 %v1444, %v2688
        %v2690 = vpop.f32.mrf.mxu0
        %2691 = vmatprep.mubr.f32.mxu0 0.0
        %2692 = vmatmul.mubr.f32.gmra.mxu0 %v2400
        %v2693 = vpop.f32.mrf.mxu0
        %v2694 = vadd.f32 %v1444, %v2693
        %v2695 = vpop.f32.mrf.mxu0
        %2696 = vmatprep.mubr.f32.mxu0 0.0
        %2697 = vmatmul.mubr.f32.gmra.mxu0 %v2403
        %v2698 = vpop.f32.mrf.mxu0
        %v2699 = vadd.f32 %v1444, %v2698
        %v2700 = vpop.f32.mrf.mxu0
        %2701 = vmatprep.mubr.f32.mxu0 0.0
        %2702 = vmatmul.mubr.f32.gmra.mxu0 %v2406
        %v2703 = vpop.f32.mrf.mxu0
        %v2704 = vadd.f32 %v1444, %v2703
        %v2705 = vpop.f32.mrf.mxu0
        %2706 = vmatprep.mubr.f32.mxu0 0.0
        %2707 = vmatmul.mubr.f32.gmra.mxu0 %v2409
        %v2708 = vpop.f32.mrf.mxu0
        %v2709 = vadd.f32 %v1444, %v2708
        %v2710 = vpop.f32.mrf.mxu0
        %2711 = vmatprep.mubr.f32.mxu0 0.0
        %2712 = vmatmul.mubr.f32.gmra.mxu0 %v2412
        %v2713 = vpop.f32.mrf.mxu0
        %v2714 = vadd.f32 %v1444, %v2713
        %v2715 = vpop.f32.mrf.mxu0
        %2716 = vmatprep.mubr.f32.mxu0 0.0
        %2717 = vmatmul.mubr.f32.gmra.mxu0 %v2415
        %v2718 = vpop.f32.mrf.mxu0
        %v2719 = vadd.f32 %v1444, %v2718
        %v2720 = vpop.f32.mrf.mxu0
        %2721 = vmatprep.mubr.f32.mxu0 0.0
        %2722 = vmatmul.mubr.f32.gmra.mxu0 %v2418
        %v2723 = vpop.f32.mrf.mxu0
        %v2724 = vadd.f32 %v1444, %v2723
        %v2725 = vpop.f32.mrf.mxu0
        %2726 = vmatprep.mubr.f32.mxu0 0.0
        %2727 = vmatmul.mubr.f32.gmra.mxu0 %v2421
        %v2728 = vpop.f32.mrf.mxu0
        %v2729 = vadd.f32 %v1444, %v2728
        %v2730 = vpop.f32.mrf.mxu0
        %2731 = vmatprep.mubr.f32.mxu0 0.0
        %2732 = vmatmul.mubr.f32.gmra.mxu0 %v2424
        %v2733 = vpop.f32.mrf.mxu0
        %v2734 = vadd.f32 %v1444, %v2733
        %v2735 = vpop.f32.mrf.mxu0
        %2736 = vmatprep.mubr.f32.mxu0 0.0
        %2737 = vmatmul.mubr.f32.gmra.mxu0 %v2427
        %v2738 = vpop.f32.mrf.mxu0
        %v2739 = vadd.f32 %v1444, %v2738
        %v2740 = vpop.f32.mrf.mxu0
        %2741 = vmatprep.mubr.f32.mxu0 0.0
        %2742 = vmatmul.mubr.f32.gmra.mxu0 %v2430
        %v2743 = vpop.f32.mrf.mxu0
        %v2744 = vadd.f32 %v1444, %v2743
        %v2745 = vpop.f32.mrf.mxu0
        %2746 = vmatprep.mubr.f32.mxu0 0.0
        %2747 = vmatmul.mubr.f32.gmra.mxu0 %v2433
        %v2748 = vpop.f32.mrf.mxu0
        %v2749 = vadd.f32 %v1444, %v2748
        %v2750 = vpop.f32.mrf.mxu0
        %2751 = vmatprep.mubr.f32.mxu0 0.0
        %2752 = vmatmul.mubr.f32.gmra.mxu0 %v2436
        %v2753 = vpop.f32.mrf.mxu0
        %v2754 = vadd.f32 %v1444, %v2753
        %v2755 = vpop.f32.mrf.mxu0
        %2756 = vmatprep.mubr.f32.mxu0 0.0
        %2757 = vmatmul.mubr.f32.gmra.mxu0 %v2439
        %v2758 = vpop.f32.mrf.mxu0
        %v2759 = vadd.f32 %v1444, %v2758
        %v2760 = vpop.f32.mrf.mxu0
        %2761 = vmatprep.mubr.f32.mxu0 0.0
        %2762 = vmatmul.mubr.f32.gmra.mxu0 %v2442
        %v2763 = vpop.f32.mrf.mxu0
        %v2764 = vadd.f32 %v1444, %v2763
        %v2765 = vpop.f32.mrf.mxu0
        %2766 = vmatprep.mubr.f32.mxu0 0.0
        %2767 = vmatmul.mubr.f32.gmra.mxu0 %v2445
        %v2768 = vpop.f32.mrf.mxu0
        %v2769 = vadd.f32 %v1444, %v2768
        %v2770 = vpop.f32.mrf.mxu0
        %2771 = vmatprep.mubr.f32.mxu0 0.0
        %2772 = vmatmul.mubr.f32.gmra.mxu0 %v2448
        %v2773 = vpop.f32.mrf.mxu0
        %v2774 = vadd.f32 %v1444, %v2773
        %v2775 = vpop.f32.mrf.mxu0
        %2776 = vmatprep.mubr.f32.mxu0 0.0
        %2777 = vmatmul.mubr.f32.gmra.mxu0 %v2451
        %v2778 = vpop.f32.mrf.mxu0
        %v2779 = vadd.f32 %v1444, %v2778
        %v2780 = vpop.f32.mrf.mxu0
        %2781 = vmatprep.mubr.f32.mxu0 0.0
        %2782 = vmatmul.mubr.f32.gmra.mxu0 %v2454
        %v2783 = vpop.f32.mrf.mxu0
        %v2784 = vadd.f32 %v1444, %v2783
        %v2785 = vpop.f32.mrf.mxu0
        %2786 = vmatprep.mubr.f32.mxu0 0.0
        %2787 = vmatmul.mubr.f32.gmra.mxu0 %v2457
        %v2788 = vpop.f32.mrf.mxu0
        %v2789 = vadd.f32 %v1444, %v2788
        %v2790 = vpop.f32.mrf.mxu0
        %2791 = vmatprep.mubr.f32.mxu0 0.0
        %2792 = vmatmul.mubr.f32.gmra.mxu0 %v2460
        %v2793 = vpop.f32.mrf.mxu0
        %v2794 = vadd.f32 %v1444, %v2793
        %v2795 = vpop.f32.mrf.mxu0
        %2796 = vmatprep.mubr.f32.mxu0 0.0
        %2797 = vmatmul.mubr.f32.gmra.mxu0 %v2463
        %v2798 = vpop.f32.mrf.mxu0
        %v2799 = vadd.f32 %v1444, %v2798
        %v2800 = vpop.f32.mrf.mxu0
        %2801 = vmatprep.mubr.f32.mxu0 0.0
        %2802 = vmatmul.mubr.f32.gmra.mxu0 %v2466
        %v2803 = vpop.f32.mrf.mxu0
        %v2804 = vadd.f32 %v1444, %v2803
        %v2805 = vpop.f32.mrf.mxu0
        %2806 = vmatprep.mubr.f32.mxu0 0.0
        %2807 = vmatmul.mubr.f32.gmra.mxu0 %v2469
        %v2808 = vpop.f32.mrf.mxu0
        %v2809 = vadd.f32 %v1444, %v2808
        %v2810 = vpop.f32.mrf.mxu0
        %2811 = vmatprep.mubr.f32.mxu0 0.0
        %2812 = vmatmul.mubr.f32.gmra.mxu0 %v2472
        %v2813 = vpop.f32.mrf.mxu0
        %v2814 = vadd.f32 %v1444, %v2813
        %v2815 = vpop.f32.mrf.mxu0
        %2816 = vmatprep.mubr.f32.mxu0 0.0
        %2817 = vmatmul.mubr.f32.gmra.mxu0 %v2475
        %v2818 = vpop.f32.mrf.mxu0
        %v2819 = vadd.f32 %v1444, %v2818
        %v2820 = vpop.f32.mrf.mxu0
        %2821 = vmatprep.mubr.f32.mxu0 0.0
        %2822 = vmatmul.mubr.f32.gmra.mxu0 %v2478
        %v2823 = vpop.f32.mrf.mxu0
        %v2824 = vadd.f32 %v1444, %v2823
        %v2825 = vpop.f32.mrf.mxu0
        %2826 = vmatprep.mubr.f32.mxu0 0.0
        %2827 = vmatmul.mubr.f32.gmra.mxu0 %v2481
        %v2828 = vpop.f32.mrf.mxu0
        %v2829 = vadd.f32 %v1444, %v2828
        %v2830 = vpop.f32.mrf.mxu0
        %2831 = vmatprep.mubr.f32.mxu0 0.0
        %2832 = vmatmul.mubr.f32.gmra.mxu0 %v2484
        %v2833 = vpop.f32.mrf.mxu0
        %v2834 = vadd.f32 %v1444, %v2833
        %v2835 = vpop.f32.mrf.mxu0
        %2836 = vmatprep.mubr.f32.mxu0 0.0
        %2837 = vmatmul.mubr.f32.gmra.mxu0 %v2487
        %v2838 = vpop.f32.mrf.mxu0
        %v2839 = vadd.f32 %v1444, %v2838
        %v2840 = vpop.f32.mrf.mxu0
        %2841 = vmatprep.mubr.f32.mxu0 0.0
        %2842 = vmatmul.mubr.f32.gmra.mxu0 %v2490
        %v2843 = vpop.f32.mrf.mxu0
        %v2844 = vadd.f32 %v1444, %v2843
        %v2845 = vpop.f32.mrf.mxu0
        %2846 = vmatprep.mubr.f32.mxu0 0.0
        %2847 = vmatmul.mubr.f32.gmra.mxu0 %v2493
        %v2848 = vpop.f32.mrf.mxu0
        %v2849 = vadd.f32 %v1444, %v2848
        %v2850 = vpop.f32.mrf.mxu0
        %2851 = vmatprep.mubr.f32.mxu0 0.0
        %2852 = vmatmul.mubr.f32.gmra.mxu0 %v2496
        %v2853 = vpop.f32.mrf.mxu0
        %v2854 = vadd.f32 %v1444, %v2853
        %v2855 = vpop.f32.mrf.mxu0
        %2856 = vmatprep.mubr.f32.mxu0 0.0
        %2857 = vmatmul.mubr.f32.gmra.mxu0 %v2499
        %v2858 = vpop.f32.mrf.mxu0
        %v2859 = vadd.f32 %v1444, %v2858
        %v2860 = vpop.f32.mrf.mxu0
        %2861 = vmatprep.mubr.f32.mxu0 0.0
        %2862 = vmatmul.mubr.f32.gmra.mxu0 %v2502
        %v2863 = vpop.f32.mrf.mxu0
        %v2864 = vadd.f32 %v1444, %v2863
        %v2865 = vpop.f32.mrf.mxu0
        %2866 = vmatprep.mubr.f32.mxu0 0.0
        %2867 = vmatmul.mubr.f32.gmra.mxu0 %v2505
        %v2868 = vpop.f32.mrf.mxu0
        %v2869 = vadd.f32 %v1444, %v2868
        %v2870 = vpop.f32.mrf.mxu0
        %2871 = vmatprep.mubr.f32.mxu0 0.0
        %2872 = vmatmul.mubr.f32.gmra.mxu0 %v2508
        %v2873 = vpop.f32.mrf.mxu0
        %v2874 = vadd.f32 %v1444, %v2873
        %v2875 = vpop.f32.mrf.mxu0
        %2876 = vmatprep.mubr.f32.mxu0 0.0
        %2877 = vmatmul.mubr.f32.gmra.mxu0 %v2511
        %v2878 = vpop.f32.mrf.mxu0
        %v2879 = vadd.f32 %v1444, %v2878
        %v2880 = vpop.f32.mrf.mxu0
        %2881 = vmatprep.mubr.f32.mxu0 0.0
        %2882 = vmatmul.mubr.f32.gmra.mxu0 %v2514
        %v2883 = vpop.f32.mrf.mxu0
        %v2884 = vadd.f32 %v1444, %v2883
        %v2885 = vpop.f32.mrf.mxu0
        %2886 = vmatprep.mubr.f32.mxu0 0.0
        %2887 = vmatmul.mubr.f32.gmra.mxu0 %v2517
        %v2888 = vpop.f32.mrf.mxu0
        %v2889 = vadd.f32 %v1444, %v2888
        %v2890 = vpop.f32.mrf.mxu0
        %2891 = vmatprep.mubr.f32.mxu0 0.0
        %2892 = vmatmul.mubr.f32.gmra.mxu0 %v2520
        %v2893 = vpop.f32.mrf.mxu0
        %v2894 = vadd.f32 %v1444, %v2893
        %v2895 = vpop.f32.mrf.mxu0
        %2896 = vmatprep.mubr.f32.mxu0 0.0
        %2897 = vmatmul.mubr.f32.gmra.mxu0 %v2523
        %v2898 = vpop.f32.mrf.mxu0
        %v2899 = vadd.f32 %v1444, %v2898
        %v2900 = vpop.f32.mrf.mxu0
        %2901 = vmatprep.mubr.f32.mxu0 0.0
        %2902 = vmatmul.mubr.f32.gmra.mxu0 %v2526
        %v2903 = vpop.f32.mrf.mxu0
        %v2904 = vadd.f32 %v1444, %v2903
        %v2905 = vpop.f32.mrf.mxu0
        %2906 = vmatprep.mubr.f32.mxu0 0.0
        %2907 = vmatmul.mubr.f32.gmra.mxu0 %v2529
        %v2908 = vpop.f32.mrf.mxu0
        %v2909 = vadd.f32 %v1444, %v2908
        %v2910 = vpop.f32.mrf.mxu0
        %2911 = vmatprep.mubr.f32.mxu0 0.0
        %2912 = vmatmul.mubr.f32.gmra.mxu0 %v2532
        %v2913 = vpop.f32.mrf.mxu0
        %v2914 = vadd.f32 %v1444, %v2913
        %v2915 = vpop.f32.mrf.mxu0
        %2916 = vmatprep.mubr.f32.mxu0 0.0
        %2917 = vmatmul.mubr.f32.gmra.mxu0 %v2535
        %v2918 = vpop.f32.mrf.mxu0
        %v2919 = vadd.f32 %v1444, %v2918
        %v2920 = vpop.f32.mrf.mxu0
        %2921 = vmatprep.mubr.f32.mxu0 0.0
        %2922 = vmatmul.mubr.f32.gmra.mxu0 %v2538
        %v2923 = vpop.f32.mrf.mxu0
        %v2924 = vadd.f32 %v1444, %v2923
        %v2925 = vpop.f32.mrf.mxu0
        %2926 = vmatprep.mubr.f32.mxu0 0.0
        %2927 = vmatmul.mubr.f32.gmra.mxu0 %v2541
        %v2928 = vpop.f32.mrf.mxu0
        %v2929 = vadd.f32 %v1444, %v2928
        %v2930 = vpop.f32.mrf.mxu0
        %2931 = vmatprep.mubr.f32.mxu0 0.0
        %2932 = vmatmul.mubr.f32.gmra.mxu0 %v2544
        %v2933 = vpop.f32.mrf.mxu0
        %v2934 = vadd.f32 %v1444, %v2933
        %v2935 = vpop.f32.mrf.mxu0
        %2936 = vmatprep.mubr.f32.mxu0 0.0
        %2937 = vmatmul.mubr.f32.gmra.mxu0 %v2547
        %v2938 = vpop.f32.mrf.mxu0
        %v2939 = vadd.f32 %v1444, %v2938
        %v2940 = vpop.f32.mrf.mxu0
        %2941 = vmatprep.mubr.f32.mxu0 0.0
        %2942 = vmatmul.mubr.f32.gmra.mxu0 %v2550
        %v2943 = vpop.f32.mrf.mxu0
        %v2944 = vadd.f32 %v1444, %v2943
        %v2945 = vpop.f32.mrf.mxu0
        %2946 = vmatprep.mubr.f32.mxu0 0.0
        %2947 = vmatmul.mubr.f32.gmra.mxu0 %v2553
        %v2948 = vpop.f32.mrf.mxu0
        %v2949 = vadd.f32 %v1444, %v2948
        %v2950 = vpop.f32.mrf.mxu0
        %2951 = vmatprep.mubr.f32.mxu0 0.0
        %2952 = vmatmul.mubr.f32.gmra.mxu0 %v2556
        %v2953 = vpop.f32.mrf.mxu0
        %v2954 = vadd.f32 %v1444, %v2953
        %v2955 = vpop.f32.mrf.mxu0
        %2956 = vmatprep.mubr.f32.mxu0 0.0
        %2957 = vmatmul.mubr.f32.gmra.mxu0 %v2559
        %v2958 = vpop.f32.mrf.mxu0
        %v2959 = vadd.f32 %v1444, %v2958
        %v2960 = vpop.f32.mrf.mxu0
        %2961 = vmatprep.mubr.f32.mxu0 0.0
        %2962 = vmatmul.mubr.f32.gmra.mxu0 %v2562
        %v2963 = vpop.f32.mrf.mxu0
        %v2964 = vadd.f32 %v1444, %v2963
        %v2965 = vpop.f32.mrf.mxu0
        %2966 = vmatprep.mubr.f32.mxu0 0.0
        %2967 = vmatmul.mubr.f32.gmra.mxu0 %v2565
        %v2968 = vpop.f32.mrf.mxu0
        %v2969 = vadd.f32 %v1444, %v2968
        %v2970 = vpop.f32.mrf.mxu0
        %2971 = vmatprep.mubr.f32.mxu0 0.0
        %2972 = vmatmul.mubr.f32.gmra.mxu0 %v2568
        %v2973 = vpop.f32.mrf.mxu0
        %v2974 = vadd.f32 %v1444, %v2973
        %v2975 = vpop.f32.mrf.mxu0
        %2976 = vmatprep.mubr.f32.mxu0 0.0
        %2977 = vmatmul.mubr.f32.gmra.mxu0 %v2571
        %v2978 = vpop.f32.mrf.mxu0
        %v2979 = vadd.f32 %v1444, %v2978
        %v2980 = vpop.f32.mrf.mxu0
        %2981 = vmatprep.mubr.f32.mxu0 0.0
        %2982 = vmatmul.mubr.f32.gmra.mxu0 %v2574
        %v2983 = vpop.f32.mrf.mxu0
        %v2984 = vadd.f32 %v1444, %v2983
        %v2985 = vpop.f32.mrf.mxu0
        %2986 = vmatprep.mubr.f32.mxu0 0.0
        %2987 = vmatmul.mubr.f32.gmra.mxu0 %v2577
        %v2988 = vpop.f32.mrf.mxu0
        %v2989 = vadd.f32 %v1444, %v2988
        %v2990 = vpop.f32.mrf.mxu0
        %2991 = vmatprep.mubr.f32.mxu0 0.0
        %2992 = vmatmul.mubr.f32.gmra.mxu0 %v2580
        %v2993 = vpop.f32.mrf.mxu0
        %v2994 = vadd.f32 %v1444, %v2993
        %v2995 = vpop.f32.mrf.mxu0
        %2996 = vmatprep.mubr.f32.mxu0 0.0
        %2997 = vmatmul.mubr.f32.gmra.mxu0 %v2583
        %v2998 = vpop.f32.mrf.mxu0
        %v2999 = vadd.f32 %v1444, %v2998
        %v3000 = vpop.f32.mrf.mxu0
        %3001 = vmatprep.mubr.f32.mxu0 0.0
        %3002 = vmatmul.mubr.f32.gmra.mxu0 %v2586
        %v3003 = vpop.f32.mrf.mxu0
        %v3004 = vadd.f32 %v1444, %v3003
        %v3005 = vpop.f32.mrf.mxu0
        %3006 = vmatprep.mubr.f32.mxu0 0.0
        %3007 = vmatmul.mubr.f32.gmra.mxu0 %v2589
        %v3008 = vpop.f32.mrf.mxu0
        %v3009 = vadd.f32 %v1444, %v3008
        %v3010 = vpop.f32.mrf.mxu0
        %3011 = vmatprep.mubr.f32.mxu0 0.0
        %3012 = vmatmul.mubr.f32.gmra.mxu0 %v2592
        %v3013 = vpop.f32.mrf.mxu0
        %v3014 = vadd.f32 %v1444, %v3013
        %v3015 = vpop.f32.mrf.mxu0
        %3016 = vmatprep.mubr.f32.mxu0 0.0
        %3017 = vmatmul.mubr.f32.gmra.mxu0 %v2595
        %v3018 = vpop.f32.mrf.mxu0
        %v3019 = vadd.f32 %v1444, %v3018
        %v3020 = vpop.f32.mrf.mxu0
        %3021 = vdwg.mxu0
        %vm3022 = vcmp.ge.f32.partialorder %v2664, 0.0
        %vm3023 = vcmp.ge.f32.partialorder %v2669, 0.0
        %vm3024 = vcmp.ge.f32.partialorder %v2674, 0.0
        %vm3025 = vcmp.ge.f32.partialorder %v2679, 0.0
        %vm3026 = vcmp.ge.f32.partialorder %v2684, 0.0
        %vm3027 = vcmp.ge.f32.partialorder %v2689, 0.0
        %vm3028 = vcmp.ge.f32.partialorder %v2694, 0.0
        %vm3029 = vcmp.ge.f32.partialorder %v2699, 0.0
        %vm3030 = vcmp.ge.f32.partialorder %v2704, 0.0
        %vm3031 = vcmp.ge.f32.partialorder %v2709, 0.0
        %vm3032 = vcmp.ge.f32.partialorder %v2714, 0.0
        %vm3033 = vcmp.ge.f32.partialorder %v2719, 0.0
        %vm3034 = vcmp.ge.f32.partialorder %v2724, 0.0
        %vm3035 = vcmp.ge.f32.partialorder %v2729, 0.0
        %vm3036 = vcmp.ge.f32.partialorder %v2734, 0.0
        %vm3037 = vcmp.ge.f32.partialorder %v2739, 0.0
        %vm3038 = vcmp.ge.f32.partialorder %v2744, 0.0
        %vm3039 = vcmp.ge.f32.partialorder %v2749, 0.0
        %vm3040 = vcmp.ge.f32.partialorder %v2754, 0.0
        %vm3041 = vcmp.ge.f32.partialorder %v2759, 0.0
        %vm3042 = vcmp.ge.f32.partialorder %v2764, 0.0
        %vm3043 = vcmp.ge.f32.partialorder %v2769, 0.0
        %vm3044 = vcmp.ge.f32.partialorder %v2774, 0.0
        %vm3045 = vcmp.ge.f32.partialorder %v2779, 0.0
        %vm3046 = vcmp.ge.f32.partialorder %v2784, 0.0
        %vm3047 = vcmp.ge.f32.partialorder %v2789, 0.0
        %vm3048 = vcmp.ge.f32.partialorder %v2794, 0.0
        %vm3049 = vcmp.ge.f32.partialorder %v2799, 0.0
        %vm3050 = vcmp.ge.f32.partialorder %v2804, 0.0
        %vm3051 = vcmp.ge.f32.partialorder %v2809, 0.0
        %vm3052 = vcmp.ge.f32.partialorder %v2814, 0.0
        %vm3053 = vcmp.ge.f32.partialorder %v2819, 0.0
        %vm3054 = vcmp.ge.f32.partialorder %v2824, 0.0
        %vm3055 = vcmp.ge.f32.partialorder %v2829, 0.0
        %vm3056 = vcmp.ge.f32.partialorder %v2834, 0.0
        %vm3057 = vcmp.ge.f32.partialorder %v2839, 0.0
        %vm3058 = vcmp.ge.f32.partialorder %v2844, 0.0
        %vm3059 = vcmp.ge.f32.partialorder %v2849, 0.0
        %vm3060 = vcmp.ge.f32.partialorder %v2854, 0.0
        %vm3061 = vcmp.ge.f32.partialorder %v2859, 0.0
        %vm3062 = vcmp.ge.f32.partialorder %v2864, 0.0
        %vm3063 = vcmp.ge.f32.partialorder %v2869, 0.0
        %vm3064 = vcmp.ge.f32.partialorder %v2874, 0.0
        %vm3065 = vcmp.ge.f32.partialorder %v2879, 0.0
        %vm3066 = vcmp.ge.f32.partialorder %v2884, 0.0
        %vm3067 = vcmp.ge.f32.partialorder %v2889, 0.0
        %vm3068 = vcmp.ge.f32.partialorder %v2894, 0.0
        %vm3069 = vcmp.ge.f32.partialorder %v2899, 0.0
        %vm3070 = vcmp.ge.f32.partialorder %v2904, 0.0
        %vm3071 = vcmp.ge.f32.partialorder %v2909, 0.0
        %vm3072 = vcmp.ge.f32.partialorder %v2914, 0.0
        %vm3073 = vcmp.ge.f32.partialorder %v2919, 0.0
        %vm3074 = vcmp.ge.f32.partialorder %v2924, 0.0
        %vm3075 = vcmp.ge.f32.partialorder %v2929, 0.0
        %vm3076 = vcmp.ge.f32.partialorder %v2934, 0.0
        %vm3077 = vcmp.ge.f32.partialorder %v2939, 0.0
        %vm3078 = vcmp.ge.f32.partialorder %v2944, 0.0
        %vm3079 = vcmp.ge.f32.partialorder %v2949, 0.0
        %vm3080 = vcmp.ge.f32.partialorder %v2954, 0.0
        %vm3081 = vcmp.ge.f32.partialorder %v2959, 0.0
        %vm3082 = vcmp.ge.f32.partialorder %v2964, 0.0
        %vm3083 = vcmp.ge.f32.partialorder %v2969, 0.0
        %vm3084 = vcmp.ge.f32.partialorder %v2974, 0.0
        %vm3085 = vcmp.ge.f32.partialorder %v2979, 0.0
        %vm3086 = vcmp.ge.f32.partialorder %v2984, 0.0
        %vm3087 = vcmp.ge.f32.partialorder %v2989, 0.0
        %vm3088 = vcmp.ge.f32.partialorder %v2994, 0.0
        %vm3089 = vcmp.ge.f32.partialorder %v2999, 0.0
        %vm3090 = vcmp.ge.f32.partialorder %v3004, 0.0
        %vm3091 = vcmp.ge.f32.partialorder %v3009, 0.0
        %vm3092 = vcmp.ge.f32.partialorder %v3014, 0.0
        %vm3093 = vcmp.ge.f32.partialorder %v3019, 0.0
        %v3094 = vmul.f32 %v2664, 0.01
        %v3095 = vmul.f32 %v2669, 0.01
        %v3096 = vmul.f32 %v2674, 0.01
        %v3097 = vmul.f32 %v2679, 0.01
        %v3098 = vmul.f32 %v2684, 0.01
        %v3099 = vmul.f32 %v2689, 0.01
        %v3100 = vmul.f32 %v2694, 0.01
        %v3101 = vmul.f32 %v2699, 0.01
        %v3102 = vmul.f32 %v2704, 0.01
        %v3103 = vmul.f32 %v2709, 0.01
        %v3104 = vmul.f32 %v2714, 0.01
        %v3105 = vmul.f32 %v2719, 0.01
        %v3106 = vmul.f32 %v2724, 0.01
        %v3107 = vmul.f32 %v2729, 0.01
        %v3108 = vmul.f32 %v2734, 0.01
        %v3109 = vmul.f32 %v2739, 0.01
        %v3110 = vmul.f32 %v2744, 0.01
        %v3111 = vmul.f32 %v2749, 0.01
        %v3112 = vmul.f32 %v2754, 0.01
        %v3113 = vmul.f32 %v2759, 0.01
        %v3114 = vmul.f32 %v2764, 0.01
        %v3115 = vmul.f32 %v2769, 0.01
        %v3116 = vmul.f32 %v2774, 0.01
        %v3117 = vmul.f32 %v2779, 0.01
        %v3118 = vmul.f32 %v2784, 0.01
        %v3119 = vmul.f32 %v2789, 0.01
        %v3120 = vmul.f32 %v2794, 0.01
        %v3121 = vmul.f32 %v2799, 0.01
        %v3122 = vmul.f32 %v2804, 0.01
        %v3123 = vmul.f32 %v2809, 0.01
        %v3124 = vmul.f32 %v2814, 0.01
        %v3125 = vmul.f32 %v2819, 0.01
        %v3126 = vmul.f32 %v2824, 0.01
        %v3127 = vmul.f32 %v2829, 0.01
        %v3128 = vmul.f32 %v2834, 0.01
        %v3129 = vmul.f32 %v2839, 0.01
        %v3130 = vmul.f32 %v2844, 0.01
        %v3131 = vmul.f32 %v2849, 0.01
        %v3132 = vmul.f32 %v2854, 0.01
        %v3133 = vmul.f32 %v2859, 0.01
        %v3134 = vmul.f32 %v2864, 0.01
        %v3135 = vmul.f32 %v2869, 0.01
        %v3136 = vmul.f32 %v2874, 0.01
        %v3137 = vmul.f32 %v2879, 0.01
        %v3138 = vmul.f32 %v2884, 0.01
        %v3139 = vmul.f32 %v2889, 0.01
        %v3140 = vmul.f32 %v2894, 0.01
        %v3141 = vmul.f32 %v2899, 0.01
        %v3142 = vmul.f32 %v2904, 0.01
        %v3143 = vmul.f32 %v2909, 0.01
        %v3144 = vmul.f32 %v2914, 0.01
        %v3145 = vmul.f32 %v2919, 0.01
        %v3146 = vmul.f32 %v2924, 0.01
        %v3147 = vmul.f32 %v2929, 0.01
        %v3148 = vmul.f32 %v2934, 0.01
        %v3149 = vmul.f32 %v2939, 0.01
        %v3150 = vmul.f32 %v2944, 0.01
        %v3151 = vmul.f32 %v2949, 0.01
        %v3152 = vmul.f32 %v2954, 0.01
        %v3153 = vmul.f32 %v2959, 0.01
        %v3154 = vmul.f32 %v2964, 0.01
        %v3155 = vmul.f32 %v2969, 0.01
        %v3156 = vmul.f32 %v2974, 0.01
        %v3157 = vmul.f32 %v2979, 0.01
        %v3158 = vmul.f32 %v2984, 0.01
        %v3159 = vmul.f32 %v2989, 0.01
        %v3160 = vmul.f32 %v2994, 0.01
        %v3161 = vmul.f32 %v2999, 0.01
        %v3162 = vmul.f32 %v3004, 0.01
        %v3163 = vmul.f32 %v3009, 0.01
        %v3164 = vmul.f32 %v3014, 0.01
        %v3165 = vmul.f32 %v3019, 0.01
        %v3166 = vsel %vm3022, %v2664, %v3094
        %v3167 = vsel %vm3023, %v2669, %v3095
        %v3168 = vsel %vm3024, %v2674, %v3096
        %v3169 = vsel %vm3025, %v2679, %v3097
        %v3170 = vsel %vm3026, %v2684, %v3098
        %v3171 = vsel %vm3027, %v2689, %v3099
        %v3172 = vsel %vm3028, %v2694, %v3100
        %v3173 = vsel %vm3029, %v2699, %v3101
        %v3174 = vsel %vm3030, %v2704, %v3102
        %v3175 = vsel %vm3031, %v2709, %v3103
        %v3176 = vsel %vm3032, %v2714, %v3104
        %v3177 = vsel %vm3033, %v2719, %v3105
        %v3178 = vsel %vm3034, %v2724, %v3106
        %v3179 = vsel %vm3035, %v2729, %v3107
        %v3180 = vsel %vm3036, %v2734, %v3108
        %v3181 = vsel %vm3037, %v2739, %v3109
        %v3182 = vsel %vm3038, %v2744, %v3110
        %v3183 = vsel %vm3039, %v2749, %v3111
        %v3184 = vsel %vm3040, %v2754, %v3112
        %v3185 = vsel %vm3041, %v2759, %v3113
        %v3186 = vsel %vm3042, %v2764, %v3114
        %v3187 = vsel %vm3043, %v2769, %v3115
        %v3188 = vsel %vm3044, %v2774, %v3116
        %v3189 = vsel %vm3045, %v2779, %v3117
        %v3190 = vsel %vm3046, %v2784, %v3118
        %v3191 = vsel %vm3047, %v2789, %v3119
        %v3192 = vsel %vm3048, %v2794, %v3120
        %v3193 = vsel %vm3049, %v2799, %v3121
        %v3194 = vsel %vm3050, %v2804, %v3122
        %v3195 = vsel %vm3051, %v2809, %v3123
        %v3196 = vsel %vm3052, %v2814, %v3124
        %v3197 = vsel %vm3053, %v2819, %v3125
        %v3198 = vsel %vm3054, %v2824, %v3126
        %v3199 = vsel %vm3055, %v2829, %v3127
        %v3200 = vsel %vm3056, %v2834, %v3128
        %v3201 = vsel %vm3057, %v2839, %v3129
        %v3202 = vsel %vm3058, %v2844, %v3130
        %v3203 = vsel %vm3059, %v2849, %v3131
        %v3204 = vsel %vm3060, %v2854, %v3132
        %v3205 = vsel %vm3061, %v2859, %v3133
        %v3206 = vsel %vm3062, %v2864, %v3134
        %v3207 = vsel %vm3063, %v2869, %v3135
        %v3208 = vsel %vm3064, %v2874, %v3136
        %v3209 = vsel %vm3065, %v2879, %v3137
        %v3210 = vsel %vm3066, %v2884, %v3138
        %v3211 = vsel %vm3067, %v2889, %v3139
        %v3212 = vsel %vm3068, %v2894, %v3140
        %v3213 = vsel %vm3069, %v2899, %v3141
        %v3214 = vsel %vm3070, %v2904, %v3142
        %v3215 = vsel %vm3071, %v2909, %v3143
        %v3216 = vsel %vm3072, %v2914, %v3144
        %v3217 = vsel %vm3073, %v2919, %v3145
        %v3218 = vsel %vm3074, %v2924, %v3146
        %v3219 = vsel %vm3075, %v2929, %v3147
        %v3220 = vsel %vm3076, %v2934, %v3148
        %v3221 = vsel %vm3077, %v2939, %v3149
        %v3222 = vsel %vm3078, %v2944, %v3150
        %v3223 = vsel %vm3079, %v2949, %v3151
        %v3224 = vsel %vm3080, %v2954, %v3152
        %v3225 = vsel %vm3081, %v2959, %v3153
        %v3226 = vsel %vm3082, %v2964, %v3154
        %v3227 = vsel %vm3083, %v2969, %v3155
        %v3228 = vsel %vm3084, %v2974, %v3156
        %v3229 = vsel %vm3085, %v2979, %v3157
        %v3230 = vsel %vm3086, %v2984, %v3158
        %v3231 = vsel %vm3087, %v2989, %v3159
        %v3232 = vsel %vm3088, %v2994, %v3160
        %v3233 = vsel %vm3089, %v2999, %v3161
        %v3234 = vsel %vm3090, %v3004, %v3162
        %v3235 = vsel %vm3091, %v3009, %v3163
        %v3236 = vsel %vm3092, %v3014, %v3164
        %v3237 = vsel %vm3093, %v3019, %v3165
        %v3238 = vmax.f32 %v2236, %v3166
        %v3239 = vmax.f32 %v2237, %v3167
        %v3240 = vmax.f32 %v2238, %v3168
        %v3241 = vmax.f32 %v2239, %v3169
        %v3242 = vmax.f32 %v2240, %v3170
        %v3243 = vmax.f32 %v2241, %v3171
        %v3244 = vmax.f32 %v2242, %v3172
        %v3245 = vmax.f32 %v2243, %v3173
        %v3246 = vmax.f32 %v2244, %v3174
        %v3247 = vmax.f32 %v2245, %v3175
        %v3248 = vmax.f32 %v2246, %v3176
        %v3249 = vmax.f32 %v2247, %v3177
        %v3250 = vmax.f32 %v2248, %v3178
        %v3251 = vmax.f32 %v2249, %v3179
        %v3252 = vmax.f32 %v2250, %v3180
        %v3253 = vmax.f32 %v2251, %v3181
        %v3254 = vmax.f32 %v2252, %v3182
        %v3255 = vmax.f32 %v2253, %v3183
        %v3256 = vmax.f32 %v2254, %v3184
        %v3257 = vmax.f32 %v2255, %v3185
        %v3258 = vmax.f32 %v2256, %v3186
        %v3259 = vmax.f32 %v2257, %v3187
        %v3260 = vmax.f32 %v2258, %v3188
        %v3261 = vmax.f32 %v2259, %v3189
        %v3262 = vmax.f32 %v2260, %v3190
        %v3263 = vmax.f32 %v2261, %v3191
        %v3264 = vmax.f32 %v2262, %v3192
        %v3265 = vmax.f32 %v2263, %v3193
        %v3266 = vmax.f32 %v2264, %v3194
        %v3267 = vmax.f32 %v2265, %v3195
        %v3268 = vmax.f32 %v2266, %v3196
        %v3269 = vmax.f32 %v2267, %v3197
        %v3270 = vmax.f32 %v2268, %v3198
        %v3271 = vmax.f32 %v2269, %v3199
        %v3272 = vmax.f32 %v2270, %v3200
        %v3273 = vmax.f32 %v2271, %v3201
        %v3274 = vmax.f32 %v2272, %v3202
        %v3275 = vmax.f32 %v2273, %v3203
        %v3276 = vmax.f32 %v2274, %v3204
        %v3277 = vmax.f32 %v2275, %v3205
        %v3278 = vmax.f32 %v2276, %v3206
        %v3279 = vmax.f32 %v2277, %v3207
        %v3280 = vmax.f32 %v2278, %v3208
        %v3281 = vmax.f32 %v2279, %v3209
        %v3282 = vmax.f32 %v2280, %v3210
        %v3283 = vmax.f32 %v2281, %v3211
        %v3284 = vmax.f32 %v2282, %v3212
        %v3285 = vmax.f32 %v2283, %v3213
        %v3286 = vmax.f32 %v2284, %v3214
        %v3287 = vmax.f32 %v2285, %v3215
        %v3288 = vmax.f32 %v2286, %v3216
        %v3289 = vmax.f32 %v2287, %v3217
        %v3290 = vmax.f32 %v2288, %v3218
        %v3291 = vmax.f32 %v2289, %v3219
        %v3292 = vmax.f32 %v2290, %v3220
        %v3293 = vmax.f32 %v2291, %v3221
        %v3294 = vmax.f32 %v2292, %v3222
        %v3295 = vmax.f32 %v2293, %v3223
        %v3296 = vmax.f32 %v2294, %v3224
        %v3297 = vmax.f32 %v2295, %v3225
        %v3298 = vmax.f32 %v2296, %v3226
        %v3299 = vmax.f32 %v2297, %v3227
        %v3300 = vmax.f32 %v2298, %v3228
        %v3301 = vmax.f32 %v2299, %v3229
        %v3302 = vmax.f32 %v2300, %v3230
        %v3303 = vmax.f32 %v2301, %v3231
        %v3304 = vmax.f32 %v2302, %v3232
        %v3305 = vmax.f32 %v2303, %v3233
        %v3306 = vmax.f32 %v2304, %v3234
        %v3307 = vmax.f32 %v2305, %v3235
        %v3308 = vmax.f32 %v2306, %v3236
        %v3309 = vmax.f32 %v2307, %v3237
        %s3310 = scalar_lea.vmem %s1329, 1152 [#allocation2]
        %v3311 = vld [vmem:[%s3310] sm:$0xff]
        %v3312 = vld [vmem:[%s3310 + $0x8] sm:$0xff]
        %v3313 = vld [vmem:[%s3310 + $0x10] sm:$0xff]
        %v3314 = vld [vmem:[%s3310 + $0x18] sm:$0xff]
        %v3315 = vld [vmem:[%s3310 + $0x20] sm:$0xff]
        %v3316 = vld [vmem:[%s3310 + $0x28] sm:$0xff]
        %v3317 = vld [vmem:[%s3310 + $0x30] sm:$0xff]
        %v3318 = vld [vmem:[%s3310 + $0x38] sm:$0xff]
        %v3319 = vld [vmem:[%s3310 + $0x40] sm:$0xff]
        %v3320 = vld [vmem:[%s3310 + $0x48] sm:$0xff]
        %v3321 = vld [vmem:[%s3310 + $0x50] sm:$0xff]
        %v3322 = vld [vmem:[%s3310 + $0x58] sm:$0xff]
        %v3323 = vld [vmem:[%s3310 + $0x60] sm:$0xff]
        %v3324 = vld [vmem:[%s3310 + $0x68] sm:$0xff]
        %v3325 = vld [vmem:[%s3310 + $0x70] sm:$0xff]
        %v3326 = vld [vmem:[%s3310 + $0x78] sm:$0xff]
        %v3327 = vld [vmem:[%s3310 + $0x80] sm:$0xff]
        %v3328 = vld [vmem:[%s3310 + $0x88] sm:$0xff]
        %v3329 = vld [vmem:[%s3310 + $0x90] sm:$0xff]
        %v3330 = vld [vmem:[%s3310 + $0x98] sm:$0xff]
        %v3331 = vld [vmem:[%s3310 + $0xa0] sm:$0xff]
        %v3332 = vld [vmem:[%s3310 + $0xa8] sm:$0xff]
        %v3333 = vld [vmem:[%s3310 + $0xb0] sm:$0xff]
        %v3334 = vld [vmem:[%s3310 + $0xb8] sm:$0xff]
        %v3335 = vld [vmem:[%s3310 + $0xc0] sm:$0xff]
        %v3336 = vld [vmem:[%s3310 + $0xc8] sm:$0xff]
        %v3337 = vld [vmem:[%s3310 + $0xd0] sm:$0xff]
        %v3338 = vld [vmem:[%s3310 + $0xd8] sm:$0xff]
        %v3339 = vld [vmem:[%s3310 + $0xe0] sm:$0xff]
        %v3340 = vld [vmem:[%s3310 + $0xe8] sm:$0xff]
        %v3341 = vld [vmem:[%s3310 + $0xf0] sm:$0xff]
        %v3342 = vld [vmem:[%s3310 + $0xf8] sm:$0xff]
        %v3343 = vld [vmem:[%s3310 + $0x100] sm:$0xff]
        %v3344 = vld [vmem:[%s3310 + $0x108] sm:$0xff]
        %v3345 = vld [vmem:[%s3310 + $0x110] sm:$0xff]
        %v3346 = vld [vmem:[%s3310 + $0x118] sm:$0xff]
        %v3347 = vld [vmem:[%s3310 + $0x120] sm:$0xff]
        %v3348 = vld [vmem:[%s3310 + $0x128] sm:$0xff]
        %v3349 = vld [vmem:[%s3310 + $0x130] sm:$0xff]
        %v3350 = vld [vmem:[%s3310 + $0x138] sm:$0xff]
        %v3351 = vld [vmem:[%s3310 + $0x140] sm:$0xff]
        %v3352 = vld [vmem:[%s3310 + $0x148] sm:$0xff]
        %v3353 = vld [vmem:[%s3310 + $0x150] sm:$0xff]
        %v3354 = vld [vmem:[%s3310 + $0x158] sm:$0xff]
        %v3355 = vld [vmem:[%s3310 + $0x160] sm:$0xff]
        %v3356 = vld [vmem:[%s3310 + $0x168] sm:$0xff]
        %v3357 = vld [vmem:[%s3310 + $0x170] sm:$0xff]
        %v3358 = vld [vmem:[%s3310 + $0x178] sm:$0xff]
        %v3359 = vld [vmem:[%s3310 + $0x180] sm:$0xff]
        %v3360 = vld [vmem:[%s3310 + $0x188] sm:$0xff]
        %v3361 = vld [vmem:[%s3310 + $0x190] sm:$0xff]
        %v3362 = vld [vmem:[%s3310 + $0x198] sm:$0xff]
        %v3363 = vld [vmem:[%s3310 + $0x1a0] sm:$0xff]
        %v3364 = vld [vmem:[%s3310 + $0x1a8] sm:$0xff]
        %v3365 = vld [vmem:[%s3310 + $0x1b0] sm:$0xff]
        %v3366 = vld [vmem:[%s3310 + $0x1b8] sm:$0xff]
        %v3367 = vld [vmem:[%s3310 + $0x1c0] sm:$0xff]
        %v3368 = vld [vmem:[%s3310 + $0x1c8] sm:$0xff]
        %v3369 = vld [vmem:[%s3310 + $0x1d0] sm:$0xff]
        %v3370 = vld [vmem:[%s3310 + $0x1d8] sm:$0xff]
        %v3371 = vld [vmem:[%s3310 + $0x1e0] sm:$0xff]
        %v3372 = vld [vmem:[%s3310 + $0x1e8] sm:$0xff]
        %v3373 = vld [vmem:[%s3310 + $0x1f0] sm:$0xff]
        %v3374 = vld [vmem:[%s3310 + $0x1f8] sm:$0xff]
        %v3375 = vld [vmem:[%s3310 + $0x200] sm:$0xff]
        %v3376 = vld [vmem:[%s3310 + $0x208] sm:$0xff]
        %v3377 = vld [vmem:[%s3310 + $0x210] sm:$0xff]
        %v3378 = vld [vmem:[%s3310 + $0x218] sm:$0xff]
        %v3379 = vld [vmem:[%s3310 + $0x220] sm:$0xff]
        %v3380 = vld [vmem:[%s3310 + $0x228] sm:$0xff]
        %v3381 = vld [vmem:[%s3310 + $0x230] sm:$0xff]
        %v3382 = vld [vmem:[%s3310 + $0x238] sm:$0xff]
        %v3384 = vsel %vm1446, %v3311, 0
        %v3387 = vsel %vm1446, %v3312, 0
        %v3390 = vsel %vm1446, %v3313, 0
        %v3393 = vsel %vm1446, %v3314, 0
        %v3396 = vsel %vm1446, %v3315, 0
        %v3399 = vsel %vm1446, %v3316, 0
        %v3402 = vsel %vm1446, %v3317, 0
        %v3405 = vsel %vm1446, %v3318, 0
        %v3408 = vsel %vm1446, %v3319, 0
        %v3411 = vsel %vm1446, %v3320, 0
        %v3414 = vsel %vm1446, %v3321, 0
        %v3417 = vsel %vm1446, %v3322, 0
        %v3420 = vsel %vm1446, %v3323, 0
        %v3423 = vsel %vm1446, %v3324, 0
        %v3426 = vsel %vm1446, %v3325, 0
        %v3429 = vsel %vm1446, %v3326, 0
        %v3432 = vsel %vm1446, %v3327, 0
        %v3435 = vsel %vm1446, %v3328, 0
        %v3438 = vsel %vm1446, %v3329, 0
        %v3441 = vsel %vm1446, %v3330, 0
        %v3444 = vsel %vm1446, %v3331, 0
        %v3447 = vsel %vm1446, %v3332, 0
        %v3450 = vsel %vm1446, %v3333, 0
        %v3453 = vsel %vm1446, %v3334, 0
        %v3456 = vsel %vm1446, %v3335, 0
        %v3459 = vsel %vm1446, %v3336, 0
        %v3462 = vsel %vm1446, %v3337, 0
        %v3465 = vsel %vm1446, %v3338, 0
        %v3468 = vsel %vm1446, %v3339, 0
        %v3471 = vsel %vm1446, %v3340, 0
        %v3474 = vsel %vm1446, %v3341, 0
        %v3477 = vsel %vm1446, %v3342, 0
        %v3480 = vsel %vm1446, %v3343, 0
        %v3483 = vsel %vm1446, %v3344, 0
        %v3486 = vsel %vm1446, %v3345, 0
        %v3489 = vsel %vm1446, %v3346, 0
        %v3492 = vsel %vm1446, %v3347, 0
        %v3495 = vsel %vm1446, %v3348, 0
        %v3498 = vsel %vm1446, %v3349, 0
        %v3501 = vsel %vm1446, %v3350, 0
        %v3504 = vsel %vm1446, %v3351, 0
        %v3507 = vsel %vm1446, %v3352, 0
        %v3510 = vsel %vm1446, %v3353, 0
        %v3513 = vsel %vm1446, %v3354, 0
        %v3516 = vsel %vm1446, %v3355, 0
        %v3519 = vsel %vm1446, %v3356, 0
        %v3522 = vsel %vm1446, %v3357, 0
        %v3525 = vsel %vm1446, %v3358, 0
        %v3528 = vsel %vm1446, %v3359, 0
        %v3531 = vsel %vm1446, %v3360, 0
        %v3534 = vsel %vm1446, %v3361, 0
        %v3537 = vsel %vm1446, %v3362, 0
        %v3540 = vsel %vm1446, %v3363, 0
        %v3543 = vsel %vm1446, %v3364, 0
        %v3546 = vsel %vm1446, %v3365, 0
        %v3549 = vsel %vm1446, %v3366, 0
        %v3552 = vsel %vm1446, %v3367, 0
        %v3555 = vsel %vm1446, %v3368, 0
        %v3558 = vsel %vm1446, %v3369, 0
        %v3561 = vsel %vm1446, %v3370, 0
        %v3564 = vsel %vm1446, %v3371, 0
        %v3567 = vsel %vm1446, %v3372, 0
        %v3570 = vsel %vm1446, %v3373, 0
        %v3573 = vsel %vm1446, %v3374, 0
        %v3576 = vsel %vm1446, %v3375, 0
        %v3579 = vsel %vm1446, %v3376, 0
        %v3582 = vsel %vm1446, %v3377, 0
        %v3585 = vsel %vm1446, %v3378, 0
        %v3588 = vsel %vm1446, %v3379, 0
        %v3591 = vsel %vm1446, %v3380, 0
        %v3594 = vsel %vm1446, %v3381, 0
        %v3597 = vsel %vm1446, %v3382, 0
        %3599 = vmatprep.subr.mxu0 0.0
        %3600 = vmatpush1.msra.mxu0 0.0
        %3601 = vmatprep.subr.mxu0 0.0
        %3602 = vmatpush1.msra.mxu0 0.0
        %3603 = vmatprep.subr.mxu0 0.0
        %3604 = vmatpush1.msra.mxu0 0.0
        %3605 = vmatprep.subr.mxu0 0.0
        %3606 = vmatpush1.msra.mxu0 0.0
        %3607 = vmatprep.subr.mxu0 0.0
        %3608 = vmatpush1.msra.mxu0 0.0
        %3609 = vmatprep.subr.mxu0 0.0
        %3610 = vmatpush1.msra.mxu0 0.0
        %3611 = vmatprep.subr.mxu0 0.0
        %3612 = vmatpush1.msra.mxu0 %v1665
        %3613 = vmatprep.subr.mxu0 0.0
        %3614 = vmatpush1.msra.mxu0 %v1365
        %3615 = vmatprep.subr.mxu0 0.0
        %3616 = vmatpush1.msra.mxu0 %v1364
        %3617 = vmatprep.subr.mxu0 0.0
        %3618 = vmatpush1.msra.mxu0 %v1363
        %3619 = vmatprep.subr.mxu0 0.0
        %3620 = vmatpush1.msra.mxu0 %v1362
        %3621 = vmatprep.subr.mxu0 0.0
        %3622 = vmatpush1.msra.mxu0 %v1361
        %3623 = vmatprep.subr.mxu0 0.0
        %3624 = vmatpush1.msra.mxu0 %v1360
        %3625 = vmatprep.subr.mxu0 0.0
        %3626 = vmatpush1.msra.mxu0 %v1359
        %3627 = vmatprep.subr.mxu0 0.0
        %3628 = vmatpush1.msra.mxu0 %v1358
        %3629 = vmatprep.subr.mxu0 0.0
        %3630 = vmatpush1.msra.mxu0 %v1357
        %3631 = vmatprep.subr.mxu0 0.0
        %3632 = vmatpush2.msra.mxu0 0.0
        %3633 = vmatprep.subr.mxu0 0.0
        %3634 = vmatpush2.msra.mxu0 0.0
        %3635 = vmatprep.subr.mxu0 0.0
        %3636 = vmatpush2.msra.mxu0 0.0
        %3637 = vmatprep.subr.mxu0 0.0
        %3638 = vmatpush2.msra.mxu0 0.0
        %3639 = vmatprep.subr.mxu0 0.0
        %3640 = vmatpush2.msra.mxu0 0.0
        %3641 = vmatprep.subr.mxu0 0.0
        %3642 = vmatpush2.msra.mxu0 0.0
        %3643 = vmatprep.subr.mxu0 0.0
        %3644 = vmatpush2.msra.mxu0 0.0
        %3645 = vmatprep.subr.mxu0 0.0
        %3646 = vmatpush2.msra.mxu0 0.0
        %3647 = vmatprep.subr.mxu0 0.0
        %3648 = vmatpush2.msra.mxu0 0.0
        %3649 = vmatprep.subr.mxu0 0.0
        %3650 = vmatpush2.msra.mxu0 0.0
        %3651 = vmatprep.subr.mxu0 0.0
        %3652 = vmatpush2.msra.mxu0 0.0
        %3653 = vmatprep.subr.mxu0 0.0
        %3654 = vmatpush2.msra.mxu0 0.0
        %3655 = vmatprep.subr.mxu0 0.0
        %3656 = vmatpush2.msra.mxu0 0.0
        %3657 = vmatprep.subr.mxu0 0.0
        %3658 = vmatpush2.msra.mxu0 0.0
        %3659 = vmatprep.subr.mxu0 0.0
        %3660 = vmatpush2.msra.mxu0 0.0
        %3661 = vmatprep.subr.mxu0 0.0
        %3662 = vmatpush2.msra.mxu0 0.0
        %3663 = vmatprep.mubr.f32.mxu0 0.0
        %3664 = vmatmul.mubr.f32.gmra.mxu0 %v3384
        %v3665 = vpop.f32.mrf.mxu0
        %v3666 = vadd.f32 %v1444, %v3665
        %v3667 = vpop.f32.mrf.mxu0
        %3668 = vmatprep.mubr.f32.mxu0 0.0
        %3669 = vmatmul.mubr.f32.gmra.mxu0 %v3387
        %v3670 = vpop.f32.mrf.mxu0
        %v3671 = vadd.f32 %v1444, %v3670
        %v3672 = vpop.f32.mrf.mxu0
        %3673 = vmatprep.mubr.f32.mxu0 0.0
        %3674 = vmatmul.mubr.f32.gmra.mxu0 %v3390
        %v3675 = vpop.f32.mrf.mxu0
        %v3676 = vadd.f32 %v1444, %v3675
        %v3677 = vpop.f32.mrf.mxu0
        %3678 = vmatprep.mubr.f32.mxu0 0.0
        %3679 = vmatmul.mubr.f32.gmra.mxu0 %v3393
        %v3680 = vpop.f32.mrf.mxu0
        %v3681 = vadd.f32 %v1444, %v3680
        %v3682 = vpop.f32.mrf.mxu0
        %3683 = vmatprep.mubr.f32.mxu0 0.0
        %3684 = vmatmul.mubr.f32.gmra.mxu0 %v3396
        %v3685 = vpop.f32.mrf.mxu0
        %v3686 = vadd.f32 %v1444, %v3685
        %v3687 = vpop.f32.mrf.mxu0
        %3688 = vmatprep.mubr.f32.mxu0 0.0
        %3689 = vmatmul.mubr.f32.gmra.mxu0 %v3399
        %v3690 = vpop.f32.mrf.mxu0
        %v3691 = vadd.f32 %v1444, %v3690
        %v3692 = vpop.f32.mrf.mxu0
        %3693 = vmatprep.mubr.f32.mxu0 0.0
        %3694 = vmatmul.mubr.f32.gmra.mxu0 %v3402
        %v3695 = vpop.f32.mrf.mxu0
        %v3696 = vadd.f32 %v1444, %v3695
        %v3697 = vpop.f32.mrf.mxu0
        %3698 = vmatprep.mubr.f32.mxu0 0.0
        %3699 = vmatmul.mubr.f32.gmra.mxu0 %v3405
        %v3700 = vpop.f32.mrf.mxu0
        %v3701 = vadd.f32 %v1444, %v3700
        %v3702 = vpop.f32.mrf.mxu0
        %3703 = vmatprep.mubr.f32.mxu0 0.0
        %3704 = vmatmul.mubr.f32.gmra.mxu0 %v3408
        %v3705 = vpop.f32.mrf.mxu0
        %v3706 = vadd.f32 %v1444, %v3705
        %v3707 = vpop.f32.mrf.mxu0
        %3708 = vmatprep.mubr.f32.mxu0 0.0
        %3709 = vmatmul.mubr.f32.gmra.mxu0 %v3411
        %v3710 = vpop.f32.mrf.mxu0
        %v3711 = vadd.f32 %v1444, %v3710
        %v3712 = vpop.f32.mrf.mxu0
        %3713 = vmatprep.mubr.f32.mxu0 0.0
        %3714 = vmatmul.mubr.f32.gmra.mxu0 %v3414
        %v3715 = vpop.f32.mrf.mxu0
        %v3716 = vadd.f32 %v1444, %v3715
        %v3717 = vpop.f32.mrf.mxu0
        %3718 = vmatprep.mubr.f32.mxu0 0.0
        %3719 = vmatmul.mubr.f32.gmra.mxu0 %v3417
        %v3720 = vpop.f32.mrf.mxu0
        %v3721 = vadd.f32 %v1444, %v3720
        %v3722 = vpop.f32.mrf.mxu0
        %3723 = vmatprep.mubr.f32.mxu0 0.0
        %3724 = vmatmul.mubr.f32.gmra.mxu0 %v3420
        %v3725 = vpop.f32.mrf.mxu0
        %v3726 = vadd.f32 %v1444, %v3725
        %v3727 = vpop.f32.mrf.mxu0
        %3728 = vmatprep.mubr.f32.mxu0 0.0
        %3729 = vmatmul.mubr.f32.gmra.mxu0 %v3423
        %v3730 = vpop.f32.mrf.mxu0
        %v3731 = vadd.f32 %v1444, %v3730
        %v3732 = vpop.f32.mrf.mxu0
        %3733 = vmatprep.mubr.f32.mxu0 0.0
        %3734 = vmatmul.mubr.f32.gmra.mxu0 %v3426
        %v3735 = vpop.f32.mrf.mxu0
        %v3736 = vadd.f32 %v1444, %v3735
        %v3737 = vpop.f32.mrf.mxu0
        %3738 = vmatprep.mubr.f32.mxu0 0.0
        %3739 = vmatmul.mubr.f32.gmra.mxu0 %v3429
        %v3740 = vpop.f32.mrf.mxu0
        %v3741 = vadd.f32 %v1444, %v3740
        %v3742 = vpop.f32.mrf.mxu0
        %3743 = vmatprep.mubr.f32.mxu0 0.0
        %3744 = vmatmul.mubr.f32.gmra.mxu0 %v3432
        %v3745 = vpop.f32.mrf.mxu0
        %v3746 = vadd.f32 %v1444, %v3745
        %v3747 = vpop.f32.mrf.mxu0
        %3748 = vmatprep.mubr.f32.mxu0 0.0
        %3749 = vmatmul.mubr.f32.gmra.mxu0 %v3435
        %v3750 = vpop.f32.mrf.mxu0
        %v3751 = vadd.f32 %v1444, %v3750
        %v3752 = vpop.f32.mrf.mxu0
        %3753 = vmatprep.mubr.f32.mxu0 0.0
        %3754 = vmatmul.mubr.f32.gmra.mxu0 %v3438
        %v3755 = vpop.f32.mrf.mxu0
        %v3756 = vadd.f32 %v1444, %v3755
        %v3757 = vpop.f32.mrf.mxu0
        %3758 = vmatprep.mubr.f32.mxu0 0.0
        %3759 = vmatmul.mubr.f32.gmra.mxu0 %v3441
        %v3760 = vpop.f32.mrf.mxu0
        %v3761 = vadd.f32 %v1444, %v3760
        %v3762 = vpop.f32.mrf.mxu0
        %3763 = vmatprep.mubr.f32.mxu0 0.0
        %3764 = vmatmul.mubr.f32.gmra.mxu0 %v3444
        %v3765 = vpop.f32.mrf.mxu0
        %v3766 = vadd.f32 %v1444, %v3765
        %v3767 = vpop.f32.mrf.mxu0
        %3768 = vmatprep.mubr.f32.mxu0 0.0
        %3769 = vmatmul.mubr.f32.gmra.mxu0 %v3447
        %v3770 = vpop.f32.mrf.mxu0
        %v3771 = vadd.f32 %v1444, %v3770
        %v3772 = vpop.f32.mrf.mxu0
        %3773 = vmatprep.mubr.f32.mxu0 0.0
        %3774 = vmatmul.mubr.f32.gmra.mxu0 %v3450
        %v3775 = vpop.f32.mrf.mxu0
        %v3776 = vadd.f32 %v1444, %v3775
        %v3777 = vpop.f32.mrf.mxu0
        %3778 = vmatprep.mubr.f32.mxu0 0.0
        %3779 = vmatmul.mubr.f32.gmra.mxu0 %v3453
        %v3780 = vpop.f32.mrf.mxu0
        %v3781 = vadd.f32 %v1444, %v3780
        %v3782 = vpop.f32.mrf.mxu0
        %3783 = vmatprep.mubr.f32.mxu0 0.0
        %3784 = vmatmul.mubr.f32.gmra.mxu0 %v3456
        %v3785 = vpop.f32.mrf.mxu0
        %v3786 = vadd.f32 %v1444, %v3785
        %v3787 = vpop.f32.mrf.mxu0
        %3788 = vmatprep.mubr.f32.mxu0 0.0
        %3789 = vmatmul.mubr.f32.gmra.mxu0 %v3459
        %v3790 = vpop.f32.mrf.mxu0
        %v3791 = vadd.f32 %v1444, %v3790
        %v3792 = vpop.f32.mrf.mxu0
        %3793 = vmatprep.mubr.f32.mxu0 0.0
        %3794 = vmatmul.mubr.f32.gmra.mxu0 %v3462
        %v3795 = vpop.f32.mrf.mxu0
        %v3796 = vadd.f32 %v1444, %v3795
        %v3797 = vpop.f32.mrf.mxu0
        %3798 = vmatprep.mubr.f32.mxu0 0.0
        %3799 = vmatmul.mubr.f32.gmra.mxu0 %v3465
        %v3800 = vpop.f32.mrf.mxu0
        %v3801 = vadd.f32 %v1444, %v3800
        %v3802 = vpop.f32.mrf.mxu0
        %3803 = vmatprep.mubr.f32.mxu0 0.0
        %3804 = vmatmul.mubr.f32.gmra.mxu0 %v3468
        %v3805 = vpop.f32.mrf.mxu0
        %v3806 = vadd.f32 %v1444, %v3805
        %v3807 = vpop.f32.mrf.mxu0
        %3808 = vmatprep.mubr.f32.mxu0 0.0
        %3809 = vmatmul.mubr.f32.gmra.mxu0 %v3471
        %v3810 = vpop.f32.mrf.mxu0
        %v3811 = vadd.f32 %v1444, %v3810
        %v3812 = vpop.f32.mrf.mxu0
        %3813 = vmatprep.mubr.f32.mxu0 0.0
        %3814 = vmatmul.mubr.f32.gmra.mxu0 %v3474
        %v3815 = vpop.f32.mrf.mxu0
        %v3816 = vadd.f32 %v1444, %v3815
        %v3817 = vpop.f32.mrf.mxu0
        %3818 = vmatprep.mubr.f32.mxu0 0.0
        %3819 = vmatmul.mubr.f32.gmra.mxu0 %v3477
        %v3820 = vpop.f32.mrf.mxu0
        %v3821 = vadd.f32 %v1444, %v3820
        %v3822 = vpop.f32.mrf.mxu0
        %3823 = vmatprep.mubr.f32.mxu0 0.0
        %3824 = vmatmul.mubr.f32.gmra.mxu0 %v3480
        %v3825 = vpop.f32.mrf.mxu0
        %v3826 = vadd.f32 %v1444, %v3825
        %v3827 = vpop.f32.mrf.mxu0
        %3828 = vmatprep.mubr.f32.mxu0 0.0
        %3829 = vmatmul.mubr.f32.gmra.mxu0 %v3483
        %v3830 = vpop.f32.mrf.mxu0
        %v3831 = vadd.f32 %v1444, %v3830
        %v3832 = vpop.f32.mrf.mxu0
        %3833 = vmatprep.mubr.f32.mxu0 0.0
        %3834 = vmatmul.mubr.f32.gmra.mxu0 %v3486
        %v3835 = vpop.f32.mrf.mxu0
        %v3836 = vadd.f32 %v1444, %v3835
        %v3837 = vpop.f32.mrf.mxu0
        %3838 = vmatprep.mubr.f32.mxu0 0.0
        %3839 = vmatmul.mubr.f32.gmra.mxu0 %v3489
        %v3840 = vpop.f32.mrf.mxu0
        %v3841 = vadd.f32 %v1444, %v3840
        %v3842 = vpop.f32.mrf.mxu0
        %3843 = vmatprep.mubr.f32.mxu0 0.0
        %3844 = vmatmul.mubr.f32.gmra.mxu0 %v3492
        %v3845 = vpop.f32.mrf.mxu0
        %v3846 = vadd.f32 %v1444, %v3845
        %v3847 = vpop.f32.mrf.mxu0
        %3848 = vmatprep.mubr.f32.mxu0 0.0
        %3849 = vmatmul.mubr.f32.gmra.mxu0 %v3495
        %v3850 = vpop.f32.mrf.mxu0
        %v3851 = vadd.f32 %v1444, %v3850
        %v3852 = vpop.f32.mrf.mxu0
        %3853 = vmatprep.mubr.f32.mxu0 0.0
        %3854 = vmatmul.mubr.f32.gmra.mxu0 %v3498
        %v3855 = vpop.f32.mrf.mxu0
        %v3856 = vadd.f32 %v1444, %v3855
        %v3857 = vpop.f32.mrf.mxu0
        %3858 = vmatprep.mubr.f32.mxu0 0.0
        %3859 = vmatmul.mubr.f32.gmra.mxu0 %v3501
        %v3860 = vpop.f32.mrf.mxu0
        %v3861 = vadd.f32 %v1444, %v3860
        %v3862 = vpop.f32.mrf.mxu0
        %3863 = vmatprep.mubr.f32.mxu0 0.0
        %3864 = vmatmul.mubr.f32.gmra.mxu0 %v3504
        %v3865 = vpop.f32.mrf.mxu0
        %v3866 = vadd.f32 %v1444, %v3865
        %v3867 = vpop.f32.mrf.mxu0
        %3868 = vmatprep.mubr.f32.mxu0 0.0
        %3869 = vmatmul.mubr.f32.gmra.mxu0 %v3507
        %v3870 = vpop.f32.mrf.mxu0
        %v3871 = vadd.f32 %v1444, %v3870
        %v3872 = vpop.f32.mrf.mxu0
        %3873 = vmatprep.mubr.f32.mxu0 0.0
        %3874 = vmatmul.mubr.f32.gmra.mxu0 %v3510
        %v3875 = vpop.f32.mrf.mxu0
        %v3876 = vadd.f32 %v1444, %v3875
        %v3877 = vpop.f32.mrf.mxu0
        %3878 = vmatprep.mubr.f32.mxu0 0.0
        %3879 = vmatmul.mubr.f32.gmra.mxu0 %v3513
        %v3880 = vpop.f32.mrf.mxu0
        %v3881 = vadd.f32 %v1444, %v3880
        %v3882 = vpop.f32.mrf.mxu0
        %3883 = vmatprep.mubr.f32.mxu0 0.0
        %3884 = vmatmul.mubr.f32.gmra.mxu0 %v3516
        %v3885 = vpop.f32.mrf.mxu0
        %v3886 = vadd.f32 %v1444, %v3885
        %v3887 = vpop.f32.mrf.mxu0
        %3888 = vmatprep.mubr.f32.mxu0 0.0
        %3889 = vmatmul.mubr.f32.gmra.mxu0 %v3519
        %v3890 = vpop.f32.mrf.mxu0
        %v3891 = vadd.f32 %v1444, %v3890
        %v3892 = vpop.f32.mrf.mxu0
        %3893 = vmatprep.mubr.f32.mxu0 0.0
        %3894 = vmatmul.mubr.f32.gmra.mxu0 %v3522
        %v3895 = vpop.f32.mrf.mxu0
        %v3896 = vadd.f32 %v1444, %v3895
        %v3897 = vpop.f32.mrf.mxu0
        %3898 = vmatprep.mubr.f32.mxu0 0.0
        %3899 = vmatmul.mubr.f32.gmra.mxu0 %v3525
        %v3900 = vpop.f32.mrf.mxu0
        %v3901 = vadd.f32 %v1444, %v3900
        %v3902 = vpop.f32.mrf.mxu0
        %3903 = vmatprep.mubr.f32.mxu0 0.0
        %3904 = vmatmul.mubr.f32.gmra.mxu0 %v3528
        %v3905 = vpop.f32.mrf.mxu0
        %v3906 = vadd.f32 %v1444, %v3905
        %v3907 = vpop.f32.mrf.mxu0
        %3908 = vmatprep.mubr.f32.mxu0 0.0
        %3909 = vmatmul.mubr.f32.gmra.mxu0 %v3531
        %v3910 = vpop.f32.mrf.mxu0
        %v3911 = vadd.f32 %v1444, %v3910
        %v3912 = vpop.f32.mrf.mxu0
        %3913 = vmatprep.mubr.f32.mxu0 0.0
        %3914 = vmatmul.mubr.f32.gmra.mxu0 %v3534
        %v3915 = vpop.f32.mrf.mxu0
        %v3916 = vadd.f32 %v1444, %v3915
        %v3917 = vpop.f32.mrf.mxu0
        %3918 = vmatprep.mubr.f32.mxu0 0.0
        %3919 = vmatmul.mubr.f32.gmra.mxu0 %v3537
        %v3920 = vpop.f32.mrf.mxu0
        %v3921 = vadd.f32 %v1444, %v3920
        %v3922 = vpop.f32.mrf.mxu0
        %3923 = vmatprep.mubr.f32.mxu0 0.0
        %3924 = vmatmul.mubr.f32.gmra.mxu0 %v3540
        %v3925 = vpop.f32.mrf.mxu0
        %v3926 = vadd.f32 %v1444, %v3925
        %v3927 = vpop.f32.mrf.mxu0
        %3928 = vmatprep.mubr.f32.mxu0 0.0
        %3929 = vmatmul.mubr.f32.gmra.mxu0 %v3543
        %v3930 = vpop.f32.mrf.mxu0
        %v3931 = vadd.f32 %v1444, %v3930
        %v3932 = vpop.f32.mrf.mxu0
        %3933 = vmatprep.mubr.f32.mxu0 0.0
        %3934 = vmatmul.mubr.f32.gmra.mxu0 %v3546
        %v3935 = vpop.f32.mrf.mxu0
        %v3936 = vadd.f32 %v1444, %v3935
        %v3937 = vpop.f32.mrf.mxu0
        %3938 = vmatprep.mubr.f32.mxu0 0.0
        %3939 = vmatmul.mubr.f32.gmra.mxu0 %v3549
        %v3940 = vpop.f32.mrf.mxu0
        %v3941 = vadd.f32 %v1444, %v3940
        %v3942 = vpop.f32.mrf.mxu0
        %3943 = vmatprep.mubr.f32.mxu0 0.0
        %3944 = vmatmul.mubr.f32.gmra.mxu0 %v3552
        %v3945 = vpop.f32.mrf.mxu0
        %v3946 = vadd.f32 %v1444, %v3945
        %v3947 = vpop.f32.mrf.mxu0
        %3948 = vmatprep.mubr.f32.mxu0 0.0
        %3949 = vmatmul.mubr.f32.gmra.mxu0 %v3555
        %v3950 = vpop.f32.mrf.mxu0
        %v3951 = vadd.f32 %v1444, %v3950
        %v3952 = vpop.f32.mrf.mxu0
        %3953 = vmatprep.mubr.f32.mxu0 0.0
        %3954 = vmatmul.mubr.f32.gmra.mxu0 %v3558
        %v3955 = vpop.f32.mrf.mxu0
        %v3956 = vadd.f32 %v1444, %v3955
        %v3957 = vpop.f32.mrf.mxu0
        %3958 = vmatprep.mubr.f32.mxu0 0.0
        %3959 = vmatmul.mubr.f32.gmra.mxu0 %v3561
        %v3960 = vpop.f32.mrf.mxu0
        %v3961 = vadd.f32 %v1444, %v3960
        %v3962 = vpop.f32.mrf.mxu0
        %3963 = vmatprep.mubr.f32.mxu0 0.0
        %3964 = vmatmul.mubr.f32.gmra.mxu0 %v3564
        %v3965 = vpop.f32.mrf.mxu0
        %v3966 = vadd.f32 %v1444, %v3965
        %v3967 = vpop.f32.mrf.mxu0
        %3968 = vmatprep.mubr.f32.mxu0 0.0
        %3969 = vmatmul.mubr.f32.gmra.mxu0 %v3567
        %v3970 = vpop.f32.mrf.mxu0
        %v3971 = vadd.f32 %v1444, %v3970
        %v3972 = vpop.f32.mrf.mxu0
        %3973 = vmatprep.mubr.f32.mxu0 0.0
        %3974 = vmatmul.mubr.f32.gmra.mxu0 %v3570
        %v3975 = vpop.f32.mrf.mxu0
        %v3976 = vadd.f32 %v1444, %v3975
        %v3977 = vpop.f32.mrf.mxu0
        %3978 = vmatprep.mubr.f32.mxu0 0.0
        %3979 = vmatmul.mubr.f32.gmra.mxu0 %v3573
        %v3980 = vpop.f32.mrf.mxu0
        %v3981 = vadd.f32 %v1444, %v3980
        %v3982 = vpop.f32.mrf.mxu0
        %3983 = vmatprep.mubr.f32.mxu0 0.0
        %3984 = vmatmul.mubr.f32.gmra.mxu0 %v3576
        %v3985 = vpop.f32.mrf.mxu0
        %v3986 = vadd.f32 %v1444, %v3985
        %v3987 = vpop.f32.mrf.mxu0
        %3988 = vmatprep.mubr.f32.mxu0 0.0
        %3989 = vmatmul.mubr.f32.gmra.mxu0 %v3579
        %v3990 = vpop.f32.mrf.mxu0
        %v3991 = vadd.f32 %v1444, %v3990
        %v3992 = vpop.f32.mrf.mxu0
        %3993 = vmatprep.mubr.f32.mxu0 0.0
        %3994 = vmatmul.mubr.f32.gmra.mxu0 %v3582
        %v3995 = vpop.f32.mrf.mxu0
        %v3996 = vadd.f32 %v1444, %v3995
        %v3997 = vpop.f32.mrf.mxu0
        %3998 = vmatprep.mubr.f32.mxu0 0.0
        %3999 = vmatmul.mubr.f32.gmra.mxu0 %v3585
        %v4000 = vpop.f32.mrf.mxu0
        %v4001 = vadd.f32 %v1444, %v4000
        %v4002 = vpop.f32.mrf.mxu0
        %4003 = vmatprep.mubr.f32.mxu0 0.0
        %4004 = vmatmul.mubr.f32.gmra.mxu0 %v3588
        %v4005 = vpop.f32.mrf.mxu0
        %v4006 = vadd.f32 %v1444, %v4005
        %v4007 = vpop.f32.mrf.mxu0
        %4008 = vmatprep.mubr.f32.mxu0 0.0
        %4009 = vmatmul.mubr.f32.gmra.mxu0 %v3591
        %v4010 = vpop.f32.mrf.mxu0
        %v4011 = vadd.f32 %v1444, %v4010
        %v4012 = vpop.f32.mrf.mxu0
        %4013 = vmatprep.mubr.f32.mxu0 0.0
        %4014 = vmatmul.mubr.f32.gmra.mxu0 %v3594
        %v4015 = vpop.f32.mrf.mxu0
        %v4016 = vadd.f32 %v1444, %v4015
        %v4017 = vpop.f32.mrf.mxu0
        %4018 = vmatprep.mubr.f32.mxu0 0.0
        %4019 = vmatmul.mubr.f32.gmra.mxu0 %v3597
        %v4020 = vpop.f32.mrf.mxu0
        %v4021 = vadd.f32 %v1444, %v4020
        %v4022 = vpop.f32.mrf.mxu0
        %4023 = vdwg.mxu0
        %vm4024 = vcmp.ge.f32.partialorder %v3666, 0.0
        %vm4025 = vcmp.ge.f32.partialorder %v3671, 0.0
        %vm4026 = vcmp.ge.f32.partialorder %v3676, 0.0
        %vm4027 = vcmp.ge.f32.partialorder %v3681, 0.0
        %vm4028 = vcmp.ge.f32.partialorder %v3686, 0.0
        %vm4029 = vcmp.ge.f32.partialorder %v3691, 0.0
        %vm4030 = vcmp.ge.f32.partialorder %v3696, 0.0
        %vm4031 = vcmp.ge.f32.partialorder %v3701, 0.0
        %vm4032 = vcmp.ge.f32.partialorder %v3706, 0.0
        %vm4033 = vcmp.ge.f32.partialorder %v3711, 0.0
        %vm4034 = vcmp.ge.f32.partialorder %v3716, 0.0
        %vm4035 = vcmp.ge.f32.partialorder %v3721, 0.0
        %vm4036 = vcmp.ge.f32.partialorder %v3726, 0.0
        %vm4037 = vcmp.ge.f32.partialorder %v3731, 0.0
        %vm4038 = vcmp.ge.f32.partialorder %v3736, 0.0
        %vm4039 = vcmp.ge.f32.partialorder %v3741, 0.0
        %vm4040 = vcmp.ge.f32.partialorder %v3746, 0.0
        %vm4041 = vcmp.ge.f32.partialorder %v3751, 0.0
        %vm4042 = vcmp.ge.f32.partialorder %v3756, 0.0
        %vm4043 = vcmp.ge.f32.partialorder %v3761, 0.0
        %vm4044 = vcmp.ge.f32.partialorder %v3766, 0.0
        %vm4045 = vcmp.ge.f32.partialorder %v3771, 0.0
        %vm4046 = vcmp.ge.f32.partialorder %v3776, 0.0
        %vm4047 = vcmp.ge.f32.partialorder %v3781, 0.0
        %vm4048 = vcmp.ge.f32.partialorder %v3786, 0.0
        %vm4049 = vcmp.ge.f32.partialorder %v3791, 0.0
        %vm4050 = vcmp.ge.f32.partialorder %v3796, 0.0
        %vm4051 = vcmp.ge.f32.partialorder %v3801, 0.0
        %vm4052 = vcmp.ge.f32.partialorder %v3806, 0.0
        %vm4053 = vcmp.ge.f32.partialorder %v3811, 0.0
        %vm4054 = vcmp.ge.f32.partialorder %v3816, 0.0
        %vm4055 = vcmp.ge.f32.partialorder %v3821, 0.0
        %vm4056 = vcmp.ge.f32.partialorder %v3826, 0.0
        %vm4057 = vcmp.ge.f32.partialorder %v3831, 0.0
        %vm4058 = vcmp.ge.f32.partialorder %v3836, 0.0
        %vm4059 = vcmp.ge.f32.partialorder %v3841, 0.0
        %vm4060 = vcmp.ge.f32.partialorder %v3846, 0.0
        %vm4061 = vcmp.ge.f32.partialorder %v3851, 0.0
        %vm4062 = vcmp.ge.f32.partialorder %v3856, 0.0
        %vm4063 = vcmp.ge.f32.partialorder %v3861, 0.0
        %vm4064 = vcmp.ge.f32.partialorder %v3866, 0.0
        %vm4065 = vcmp.ge.f32.partialorder %v3871, 0.0
        %vm4066 = vcmp.ge.f32.partialorder %v3876, 0.0
        %vm4067 = vcmp.ge.f32.partialorder %v3881, 0.0
        %vm4068 = vcmp.ge.f32.partialorder %v3886, 0.0
        %vm4069 = vcmp.ge.f32.partialorder %v3891, 0.0
        %vm4070 = vcmp.ge.f32.partialorder %v3896, 0.0
        %vm4071 = vcmp.ge.f32.partialorder %v3901, 0.0
        %vm4072 = vcmp.ge.f32.partialorder %v3906, 0.0
        %vm4073 = vcmp.ge.f32.partialorder %v3911, 0.0
        %vm4074 = vcmp.ge.f32.partialorder %v3916, 0.0
        %vm4075 = vcmp.ge.f32.partialorder %v3921, 0.0
        %vm4076 = vcmp.ge.f32.partialorder %v3926, 0.0
        %vm4077 = vcmp.ge.f32.partialorder %v3931, 0.0
        %vm4078 = vcmp.ge.f32.partialorder %v3936, 0.0
        %vm4079 = vcmp.ge.f32.partialorder %v3941, 0.0
        %vm4080 = vcmp.ge.f32.partialorder %v3946, 0.0
        %vm4081 = vcmp.ge.f32.partialorder %v3951, 0.0
        %vm4082 = vcmp.ge.f32.partialorder %v3956, 0.0
        %vm4083 = vcmp.ge.f32.partialorder %v3961, 0.0
        %vm4084 = vcmp.ge.f32.partialorder %v3966, 0.0
        %vm4085 = vcmp.ge.f32.partialorder %v3971, 0.0
        %vm4086 = vcmp.ge.f32.partialorder %v3976, 0.0
        %vm4087 = vcmp.ge.f32.partialorder %v3981, 0.0
        %vm4088 = vcmp.ge.f32.partialorder %v3986, 0.0
        %vm4089 = vcmp.ge.f32.partialorder %v3991, 0.0
        %vm4090 = vcmp.ge.f32.partialorder %v3996, 0.0
        %vm4091 = vcmp.ge.f32.partialorder %v4001, 0.0
        %vm4092 = vcmp.ge.f32.partialorder %v4006, 0.0
        %vm4093 = vcmp.ge.f32.partialorder %v4011, 0.0
        %vm4094 = vcmp.ge.f32.partialorder %v4016, 0.0
        %vm4095 = vcmp.ge.f32.partialorder %v4021, 0.0
        %v4096 = vmul.f32 %v3666, 0.01
        %v4097 = vmul.f32 %v3671, 0.01
        %v4098 = vmul.f32 %v3676, 0.01
        %v4099 = vmul.f32 %v3681, 0.01
        %v4100 = vmul.f32 %v3686, 0.01
        %v4101 = vmul.f32 %v3691, 0.01
        %v4102 = vmul.f32 %v3696, 0.01
        %v4103 = vmul.f32 %v3701, 0.01
        %v4104 = vmul.f32 %v3706, 0.01
        %v4105 = vmul.f32 %v3711, 0.01
        %v4106 = vmul.f32 %v3716, 0.01
        %v4107 = vmul.f32 %v3721, 0.01
        %v4108 = vmul.f32 %v3726, 0.01
        %v4109 = vmul.f32 %v3731, 0.01
        %v4110 = vmul.f32 %v3736, 0.01
        %v4111 = vmul.f32 %v3741, 0.01
        %v4112 = vmul.f32 %v3746, 0.01
        %v4113 = vmul.f32 %v3751, 0.01
        %v4114 = vmul.f32 %v3756, 0.01
        %v4115 = vmul.f32 %v3761, 0.01
        %v4116 = vmul.f32 %v3766, 0.01
        %v4117 = vmul.f32 %v3771, 0.01
        %v4118 = vmul.f32 %v3776, 0.01
        %v4119 = vmul.f32 %v3781, 0.01
        %v4120 = vmul.f32 %v3786, 0.01
        %v4121 = vmul.f32 %v3791, 0.01
        %v4122 = vmul.f32 %v3796, 0.01
        %v4123 = vmul.f32 %v3801, 0.01
        %v4124 = vmul.f32 %v3806, 0.01
        %v4125 = vmul.f32 %v3811, 0.01
        %v4126 = vmul.f32 %v3816, 0.01
        %v4127 = vmul.f32 %v3821, 0.01
        %v4128 = vmul.f32 %v3826, 0.01
        %v4129 = vmul.f32 %v3831, 0.01
        %v4130 = vmul.f32 %v3836, 0.01
        %v4131 = vmul.f32 %v3841, 0.01
        %v4132 = vmul.f32 %v3846, 0.01
        %v4133 = vmul.f32 %v3851, 0.01
        %v4134 = vmul.f32 %v3856, 0.01
        %v4135 = vmul.f32 %v3861, 0.01
        %v4136 = vmul.f32 %v3866, 0.01
        %v4137 = vmul.f32 %v3871, 0.01
        %v4138 = vmul.f32 %v3876, 0.01
        %v4139 = vmul.f32 %v3881, 0.01
        %v4140 = vmul.f32 %v3886, 0.01
        %v4141 = vmul.f32 %v3891, 0.01
        %v4142 = vmul.f32 %v3896, 0.01
        %v4143 = vmul.f32 %v3901, 0.01
        %v4144 = vmul.f32 %v3906, 0.01
        %v4145 = vmul.f32 %v3911, 0.01
        %v4146 = vmul.f32 %v3916, 0.01
        %v4147 = vmul.f32 %v3921, 0.01
        %v4148 = vmul.f32 %v3926, 0.01
        %v4149 = vmul.f32 %v3931, 0.01
        %v4150 = vmul.f32 %v3936, 0.01
        %v4151 = vmul.f32 %v3941, 0.01
        %v4152 = vmul.f32 %v3946, 0.01
        %v4153 = vmul.f32 %v3951, 0.01
        %v4154 = vmul.f32 %v3956, 0.01
        %v4155 = vmul.f32 %v3961, 0.01
        %v4156 = vmul.f32 %v3966, 0.01
        %v4157 = vmul.f32 %v3971, 0.01
        %v4158 = vmul.f32 %v3976, 0.01
        %v4159 = vmul.f32 %v3981, 0.01
        %v4160 = vmul.f32 %v3986, 0.01
        %v4161 = vmul.f32 %v3991, 0.01
        %v4162 = vmul.f32 %v3996, 0.01
        %v4163 = vmul.f32 %v4001, 0.01
        %v4164 = vmul.f32 %v4006, 0.01
        %v4165 = vmul.f32 %v4011, 0.01
        %v4166 = vmul.f32 %v4016, 0.01
        %v4167 = vmul.f32 %v4021, 0.01
        %v4168 = vsel %vm4024, %v3666, %v4096
        %v4169 = vsel %vm4025, %v3671, %v4097
        %v4170 = vsel %vm4026, %v3676, %v4098
        %v4171 = vsel %vm4027, %v3681, %v4099
        %v4172 = vsel %vm4028, %v3686, %v4100
        %v4173 = vsel %vm4029, %v3691, %v4101
        %v4174 = vsel %vm4030, %v3696, %v4102
        %v4175 = vsel %vm4031, %v3701, %v4103
        %v4176 = vsel %vm4032, %v3706, %v4104
        %v4177 = vsel %vm4033, %v3711, %v4105
        %v4178 = vsel %vm4034, %v3716, %v4106
        %v4179 = vsel %vm4035, %v3721, %v4107
        %v4180 = vsel %vm4036, %v3726, %v4108
        %v4181 = vsel %vm4037, %v3731, %v4109
        %v4182 = vsel %vm4038, %v3736, %v4110
        %v4183 = vsel %vm4039, %v3741, %v4111
        %v4184 = vsel %vm4040, %v3746, %v4112
        %v4185 = vsel %vm4041, %v3751, %v4113
        %v4186 = vsel %vm4042, %v3756, %v4114
        %v4187 = vsel %vm4043, %v3761, %v4115
        %v4188 = vsel %vm4044, %v3766, %v4116
        %v4189 = vsel %vm4045, %v3771, %v4117
        %v4190 = vsel %vm4046, %v3776, %v4118
        %v4191 = vsel %vm4047, %v3781, %v4119
        %v4192 = vsel %vm4048, %v3786, %v4120
        %v4193 = vsel %vm4049, %v3791, %v4121
        %v4194 = vsel %vm4050, %v3796, %v4122
        %v4195 = vsel %vm4051, %v3801, %v4123
        %v4196 = vsel %vm4052, %v3806, %v4124
        %v4197 = vsel %vm4053, %v3811, %v4125
        %v4198 = vsel %vm4054, %v3816, %v4126
        %v4199 = vsel %vm4055, %v3821, %v4127
        %v4200 = vsel %vm4056, %v3826, %v4128
        %v4201 = vsel %vm4057, %v3831, %v4129
        %v4202 = vsel %vm4058, %v3836, %v4130
        %v4203 = vsel %vm4059, %v3841, %v4131
        %v4204 = vsel %vm4060, %v3846, %v4132
        %v4205 = vsel %vm4061, %v3851, %v4133
        %v4206 = vsel %vm4062, %v3856, %v4134
        %v4207 = vsel %vm4063, %v3861, %v4135
        %v4208 = vsel %vm4064, %v3866, %v4136
        %v4209 = vsel %vm4065, %v3871, %v4137
        %v4210 = vsel %vm4066, %v3876, %v4138
        %v4211 = vsel %vm4067, %v3881, %v4139
        %v4212 = vsel %vm4068, %v3886, %v4140
        %v4213 = vsel %vm4069, %v3891, %v4141
        %v4214 = vsel %vm4070, %v3896, %v4142
        %v4215 = vsel %vm4071, %v3901, %v4143
        %v4216 = vsel %vm4072, %v3906, %v4144
        %v4217 = vsel %vm4073, %v3911, %v4145
        %v4218 = vsel %vm4074, %v3916, %v4146
        %v4219 = vsel %vm4075, %v3921, %v4147
        %v4220 = vsel %vm4076, %v3926, %v4148
        %v4221 = vsel %vm4077, %v3931, %v4149
        %v4222 = vsel %vm4078, %v3936, %v4150
        %v4223 = vsel %vm4079, %v3941, %v4151
        %v4224 = vsel %vm4080, %v3946, %v4152
        %v4225 = vsel %vm4081, %v3951, %v4153
        %v4226 = vsel %vm4082, %v3956, %v4154
        %v4227 = vsel %vm4083, %v3961, %v4155
        %v4228 = vsel %vm4084, %v3966, %v4156
        %v4229 = vsel %vm4085, %v3971, %v4157
        %v4230 = vsel %vm4086, %v3976, %v4158
        %v4231 = vsel %vm4087, %v3981, %v4159
        %v4232 = vsel %vm4088, %v3986, %v4160
        %v4233 = vsel %vm4089, %v3991, %v4161
        %v4234 = vsel %vm4090, %v3996, %v4162
        %v4235 = vsel %vm4091, %v4001, %v4163
        %v4236 = vsel %vm4092, %v4006, %v4164
        %v4237 = vsel %vm4093, %v4011, %v4165
        %v4238 = vsel %vm4094, %v4016, %v4166
        %v4239 = vsel %vm4095, %v4021, %v4167
        %v4240 = vmax.f32 %v3238, %v4168
        %v4241 = vmax.f32 %v3239, %v4169
        %v4242 = vmax.f32 %v3240, %v4170
        %v4243 = vmax.f32 %v3241, %v4171
        %v4244 = vmax.f32 %v3242, %v4172
        %v4245 = vmax.f32 %v3243, %v4173
        %v4246 = vmax.f32 %v3244, %v4174
        %v4247 = vmax.f32 %v3245, %v4175
        %v4248 = vmax.f32 %v3246, %v4176
        %v4249 = vmax.f32 %v3247, %v4177
        %v4250 = vmax.f32 %v3248, %v4178
        %v4251 = vmax.f32 %v3249, %v4179
        %v4252 = vmax.f32 %v3250, %v4180
        %v4253 = vmax.f32 %v3251, %v4181
        %v4254 = vmax.f32 %v3252, %v4182
        %v4255 = vmax.f32 %v3253, %v4183
        %v4256 = vmax.f32 %v3254, %v4184
        %v4257 = vmax.f32 %v3255, %v4185
        %v4258 = vmax.f32 %v3256, %v4186
        %v4259 = vmax.f32 %v3257, %v4187
        %v4260 = vmax.f32 %v3258, %v4188
        %v4261 = vmax.f32 %v3259, %v4189
        %v4262 = vmax.f32 %v3260, %v4190
        %v4263 = vmax.f32 %v3261, %v4191
        %v4264 = vmax.f32 %v3262, %v4192
        %v4265 = vmax.f32 %v3263, %v4193
        %v4266 = vmax.f32 %v3264, %v4194
        %v4267 = vmax.f32 %v3265, %v4195
        %v4268 = vmax.f32 %v3266, %v4196
        %v4269 = vmax.f32 %v3267, %v4197
        %v4270 = vmax.f32 %v3268, %v4198
        %v4271 = vmax.f32 %v3269, %v4199
        %v4272 = vmax.f32 %v3270, %v4200
        %v4273 = vmax.f32 %v3271, %v4201
        %v4274 = vmax.f32 %v3272, %v4202
        %v4275 = vmax.f32 %v3273, %v4203
        %v4276 = vmax.f32 %v3274, %v4204
        %v4277 = vmax.f32 %v3275, %v4205
        %v4278 = vmax.f32 %v3276, %v4206
        %v4279 = vmax.f32 %v3277, %v4207
        %v4280 = vmax.f32 %v3278, %v4208
        %v4281 = vmax.f32 %v3279, %v4209
        %v4282 = vmax.f32 %v3280, %v4210
        %v4283 = vmax.f32 %v3281, %v4211
        %v4284 = vmax.f32 %v3282, %v4212
        %v4285 = vmax.f32 %v3283, %v4213
        %v4286 = vmax.f32 %v3284, %v4214
        %v4287 = vmax.f32 %v3285, %v4215
        %v4288 = vmax.f32 %v3286, %v4216
        %v4289 = vmax.f32 %v3287, %v4217
        %v4290 = vmax.f32 %v3288, %v4218
        %v4291 = vmax.f32 %v3289, %v4219
        %v4292 = vmax.f32 %v3290, %v4220
        %v4293 = vmax.f32 %v3291, %v4221
        %v4294 = vmax.f32 %v3292, %v4222
        %v4295 = vmax.f32 %v3293, %v4223
        %v4296 = vmax.f32 %v3294, %v4224
        %v4297 = vmax.f32 %v3295, %v4225
        %v4298 = vmax.f32 %v3296, %v4226
        %v4299 = vmax.f32 %v3297, %v4227
        %v4300 = vmax.f32 %v3298, %v4228
        %v4301 = vmax.f32 %v3299, %v4229
        %v4302 = vmax.f32 %v3300, %v4230
        %v4303 = vmax.f32 %v3301, %v4231
        %v4304 = vmax.f32 %v3302, %v4232
        %v4305 = vmax.f32 %v3303, %v4233
        %v4306 = vmax.f32 %v3304, %v4234
        %v4307 = vmax.f32 %v3305, %v4235
        %v4308 = vmax.f32 %v3306, %v4236
        %v4309 = vmax.f32 %v3307, %v4237
        %v4310 = vmax.f32 %v3308, %v4238
        %v4311 = vmax.f32 %v3309, %v4239
        %s4312 = scalar_lea.vmem %s1329, 1728 [#allocation2]
        %v4313 = vld [vmem:[%s4312] sm:$0xff]
        %v4314 = vld [vmem:[%s4312 + $0x8] sm:$0xff]
        %v4315 = vld [vmem:[%s4312 + $0x10] sm:$0xff]
        %v4316 = vld [vmem:[%s4312 + $0x18] sm:$0xff]
        %v4317 = vld [vmem:[%s4312 + $0x20] sm:$0xff]
        %v4318 = vld [vmem:[%s4312 + $0x28] sm:$0xff]
        %v4319 = vld [vmem:[%s4312 + $0x30] sm:$0xff]
        %v4320 = vld [vmem:[%s4312 + $0x38] sm:$0xff]
        %v4321 = vld [vmem:[%s4312 + $0x40] sm:$0xff]
        %v4322 = vld [vmem:[%s4312 + $0x48] sm:$0xff]
        %v4323 = vld [vmem:[%s4312 + $0x50] sm:$0xff]
        %v4324 = vld [vmem:[%s4312 + $0x58] sm:$0xff]
        %v4325 = vld [vmem:[%s4312 + $0x60] sm:$0xff]
        %v4326 = vld [vmem:[%s4312 + $0x68] sm:$0xff]
        %v4327 = vld [vmem:[%s4312 + $0x70] sm:$0xff]
        %v4328 = vld [vmem:[%s4312 + $0x78] sm:$0xff]
        %v4329 = vld [vmem:[%s4312 + $0x80] sm:$0xff]
        %v4330 = vld [vmem:[%s4312 + $0x88] sm:$0xff]
        %v4331 = vld [vmem:[%s4312 + $0x90] sm:$0xff]
        %v4332 = vld [vmem:[%s4312 + $0x98] sm:$0xff]
        %v4333 = vld [vmem:[%s4312 + $0xa0] sm:$0xff]
        %v4334 = vld [vmem:[%s4312 + $0xa8] sm:$0xff]
        %v4335 = vld [vmem:[%s4312 + $0xb0] sm:$0xff]
        %v4336 = vld [vmem:[%s4312 + $0xb8] sm:$0xff]
        %v4337 = vld [vmem:[%s4312 + $0xc0] sm:$0xff]
        %v4338 = vld [vmem:[%s4312 + $0xc8] sm:$0xff]
        %v4339 = vld [vmem:[%s4312 + $0xd0] sm:$0xff]
        %v4340 = vld [vmem:[%s4312 + $0xd8] sm:$0xff]
        %v4341 = vld [vmem:[%s4312 + $0xe0] sm:$0xff]
        %v4342 = vld [vmem:[%s4312 + $0xe8] sm:$0xff]
        %v4343 = vld [vmem:[%s4312 + $0xf0] sm:$0xff]
        %v4344 = vld [vmem:[%s4312 + $0xf8] sm:$0xff]
        %v4345 = vld [vmem:[%s4312 + $0x100] sm:$0xff]
        %v4346 = vld [vmem:[%s4312 + $0x108] sm:$0xff]
        %v4347 = vld [vmem:[%s4312 + $0x110] sm:$0xff]
        %v4348 = vld [vmem:[%s4312 + $0x118] sm:$0xff]
        %v4349 = vld [vmem:[%s4312 + $0x120] sm:$0xff]
        %v4350 = vld [vmem:[%s4312 + $0x128] sm:$0xff]
        %v4351 = vld [vmem:[%s4312 + $0x130] sm:$0xff]
        %v4352 = vld [vmem:[%s4312 + $0x138] sm:$0xff]
        %v4353 = vld [vmem:[%s4312 + $0x140] sm:$0xff]
        %v4354 = vld [vmem:[%s4312 + $0x148] sm:$0xff]
        %v4355 = vld [vmem:[%s4312 + $0x150] sm:$0xff]
        %v4356 = vld [vmem:[%s4312 + $0x158] sm:$0xff]
        %v4357 = vld [vmem:[%s4312 + $0x160] sm:$0xff]
        %v4358 = vld [vmem:[%s4312 + $0x168] sm:$0xff]
        %v4359 = vld [vmem:[%s4312 + $0x170] sm:$0xff]
        %v4360 = vld [vmem:[%s4312 + $0x178] sm:$0xff]
        %v4361 = vld [vmem:[%s4312 + $0x180] sm:$0xff]
        %v4362 = vld [vmem:[%s4312 + $0x188] sm:$0xff]
        %v4363 = vld [vmem:[%s4312 + $0x190] sm:$0xff]
        %v4364 = vld [vmem:[%s4312 + $0x198] sm:$0xff]
        %v4365 = vld [vmem:[%s4312 + $0x1a0] sm:$0xff]
        %v4366 = vld [vmem:[%s4312 + $0x1a8] sm:$0xff]
        %v4367 = vld [vmem:[%s4312 + $0x1b0] sm:$0xff]
        %v4368 = vld [vmem:[%s4312 + $0x1b8] sm:$0xff]
        %v4369 = vld [vmem:[%s4312 + $0x1c0] sm:$0xff]
        %v4370 = vld [vmem:[%s4312 + $0x1c8] sm:$0xff]
        %v4371 = vld [vmem:[%s4312 + $0x1d0] sm:$0xff]
        %v4372 = vld [vmem:[%s4312 + $0x1d8] sm:$0xff]
        %v4373 = vld [vmem:[%s4312 + $0x1e0] sm:$0xff]
        %v4374 = vld [vmem:[%s4312 + $0x1e8] sm:$0xff]
        %v4375 = vld [vmem:[%s4312 + $0x1f0] sm:$0xff]
        %v4376 = vld [vmem:[%s4312 + $0x1f8] sm:$0xff]
        %v4377 = vld [vmem:[%s4312 + $0x200] sm:$0xff]
        %v4378 = vld [vmem:[%s4312 + $0x208] sm:$0xff]
        %v4379 = vld [vmem:[%s4312 + $0x210] sm:$0xff]
        %v4380 = vld [vmem:[%s4312 + $0x218] sm:$0xff]
        %v4381 = vld [vmem:[%s4312 + $0x220] sm:$0xff]
        %v4382 = vld [vmem:[%s4312 + $0x228] sm:$0xff]
        %v4383 = vld [vmem:[%s4312 + $0x230] sm:$0xff]
        %v4384 = vld [vmem:[%s4312 + $0x238] sm:$0xff]
        %v4386 = vsel %vm1446, %v4313, 0
        %v4389 = vsel %vm1446, %v4314, 0
        %v4392 = vsel %vm1446, %v4315, 0
        %v4395 = vsel %vm1446, %v4316, 0
        %v4398 = vsel %vm1446, %v4317, 0
        %v4401 = vsel %vm1446, %v4318, 0
        %v4404 = vsel %vm1446, %v4319, 0
        %v4407 = vsel %vm1446, %v4320, 0
        %v4410 = vsel %vm1446, %v4321, 0
        %v4413 = vsel %vm1446, %v4322, 0
        %v4416 = vsel %vm1446, %v4323, 0
        %v4419 = vsel %vm1446, %v4324, 0
        %v4422 = vsel %vm1446, %v4325, 0
        %v4425 = vsel %vm1446, %v4326, 0
        %v4428 = vsel %vm1446, %v4327, 0
        %v4431 = vsel %vm1446, %v4328, 0
        %v4434 = vsel %vm1446, %v4329, 0
        %v4437 = vsel %vm1446, %v4330, 0
        %v4440 = vsel %vm1446, %v4331, 0
        %v4443 = vsel %vm1446, %v4332, 0
        %v4446 = vsel %vm1446, %v4333, 0
        %v4449 = vsel %vm1446, %v4334, 0
        %v4452 = vsel %vm1446, %v4335, 0
        %v4455 = vsel %vm1446, %v4336, 0
        %v4458 = vsel %vm1446, %v4337, 0
        %v4461 = vsel %vm1446, %v4338, 0
        %v4464 = vsel %vm1446, %v4339, 0
        %v4467 = vsel %vm1446, %v4340, 0
        %v4470 = vsel %vm1446, %v4341, 0
        %v4473 = vsel %vm1446, %v4342, 0
        %v4476 = vsel %vm1446, %v4343, 0
        %v4479 = vsel %vm1446, %v4344, 0
        %v4482 = vsel %vm1446, %v4345, 0
        %v4485 = vsel %vm1446, %v4346, 0
        %v4488 = vsel %vm1446, %v4347, 0
        %v4491 = vsel %vm1446, %v4348, 0
        %v4494 = vsel %vm1446, %v4349, 0
        %v4497 = vsel %vm1446, %v4350, 0
        %v4500 = vsel %vm1446, %v4351, 0
        %v4503 = vsel %vm1446, %v4352, 0
        %v4506 = vsel %vm1446, %v4353, 0
        %v4509 = vsel %vm1446, %v4354, 0
        %v4512 = vsel %vm1446, %v4355, 0
        %v4515 = vsel %vm1446, %v4356, 0
        %v4518 = vsel %vm1446, %v4357, 0
        %v4521 = vsel %vm1446, %v4358, 0
        %v4524 = vsel %vm1446, %v4359, 0
        %v4527 = vsel %vm1446, %v4360, 0
        %v4530 = vsel %vm1446, %v4361, 0
        %v4533 = vsel %vm1446, %v4362, 0
        %v4536 = vsel %vm1446, %v4363, 0
        %v4539 = vsel %vm1446, %v4364, 0
        %v4542 = vsel %vm1446, %v4365, 0
        %v4545 = vsel %vm1446, %v4366, 0
        %v4548 = vsel %vm1446, %v4367, 0
        %v4551 = vsel %vm1446, %v4368, 0
        %v4554 = vsel %vm1446, %v4369, 0
        %v4557 = vsel %vm1446, %v4370, 0
        %v4560 = vsel %vm1446, %v4371, 0
        %v4563 = vsel %vm1446, %v4372, 0
        %v4566 = vsel %vm1446, %v4373, 0
        %v4569 = vsel %vm1446, %v4374, 0
        %v4572 = vsel %vm1446, %v4375, 0
        %v4575 = vsel %vm1446, %v4376, 0
        %v4578 = vsel %vm1446, %v4377, 0
        %v4581 = vsel %vm1446, %v4378, 0
        %v4584 = vsel %vm1446, %v4379, 0
        %v4587 = vsel %vm1446, %v4380, 0
        %v4590 = vsel %vm1446, %v4381, 0
        %v4593 = vsel %vm1446, %v4382, 0
        %v4596 = vsel %vm1446, %v4383, 0
        %v4599 = vsel %vm1446, %v4384, 0
        %4601 = vmatprep.subr.mxu0 0.0
        %4602 = vmatpush1.msra.mxu0 0.0
        %4603 = vmatprep.subr.mxu0 0.0
        %4604 = vmatpush1.msra.mxu0 0.0
        %4605 = vmatprep.subr.mxu0 0.0
        %4606 = vmatpush1.msra.mxu0 0.0
        %4607 = vmatprep.subr.mxu0 0.0
        %4608 = vmatpush1.msra.mxu0 0.0
        %4609 = vmatprep.subr.mxu0 0.0
        %4610 = vmatpush1.msra.mxu0 0.0
        %4611 = vmatprep.subr.mxu0 0.0
        %4612 = vmatpush1.msra.mxu0 0.0
        %4613 = vmatprep.subr.mxu0 0.0
        %4614 = vmatpush1.msra.mxu0 %v1665
        %4615 = vmatprep.subr.mxu0 0.0
        %4616 = vmatpush1.msra.mxu0 %v1365
        %4617 = vmatprep.subr.mxu0 0.0
        %4618 = vmatpush1.msra.mxu0 %v1364
        %4619 = vmatprep.subr.mxu0 0.0
        %4620 = vmatpush1.msra.mxu0 %v1363
        %4621 = vmatprep.subr.mxu0 0.0
        %4622 = vmatpush1.msra.mxu0 %v1362
        %4623 = vmatprep.subr.mxu0 0.0
        %4624 = vmatpush1.msra.mxu0 %v1361
        %4625 = vmatprep.subr.mxu0 0.0
        %4626 = vmatpush1.msra.mxu0 %v1360
        %4627 = vmatprep.subr.mxu0 0.0
        %4628 = vmatpush1.msra.mxu0 %v1359
        %4629 = vmatprep.subr.mxu0 0.0
        %4630 = vmatpush1.msra.mxu0 %v1358
        %4631 = vmatprep.subr.mxu0 0.0
        %4632 = vmatpush1.msra.mxu0 %v1357
        %4633 = vmatprep.subr.mxu0 0.0
        %4634 = vmatpush2.msra.mxu0 0.0
        %4635 = vmatprep.subr.mxu0 0.0
        %4636 = vmatpush2.msra.mxu0 0.0
        %4637 = vmatprep.subr.mxu0 0.0
        %4638 = vmatpush2.msra.mxu0 0.0
        %4639 = vmatprep.subr.mxu0 0.0
        %4640 = vmatpush2.msra.mxu0 0.0
        %4641 = vmatprep.subr.mxu0 0.0
        %4642 = vmatpush2.msra.mxu0 0.0
        %4643 = vmatprep.subr.mxu0 0.0
        %4644 = vmatpush2.msra.mxu0 0.0
        %4645 = vmatprep.subr.mxu0 0.0
        %4646 = vmatpush2.msra.mxu0 0.0
        %4647 = vmatprep.subr.mxu0 0.0
        %4648 = vmatpush2.msra.mxu0 0.0
        %4649 = vmatprep.subr.mxu0 0.0
        %4650 = vmatpush2.msra.mxu0 0.0
        %4651 = vmatprep.subr.mxu0 0.0
        %4652 = vmatpush2.msra.mxu0 0.0
        %4653 = vmatprep.subr.mxu0 0.0
        %4654 = vmatpush2.msra.mxu0 0.0
        %4655 = vmatprep.subr.mxu0 0.0
        %4656 = vmatpush2.msra.mxu0 0.0
        %4657 = vmatprep.subr.mxu0 0.0
        %4658 = vmatpush2.msra.mxu0 0.0
        %4659 = vmatprep.subr.mxu0 0.0
        %4660 = vmatpush2.msra.mxu0 0.0
        %4661 = vmatprep.subr.mxu0 0.0
        %4662 = vmatpush2.msra.mxu0 0.0
        %4663 = vmatprep.subr.mxu0 0.0
        %4664 = vmatpush2.msra.mxu0 0.0
        %4665 = vmatprep.mubr.f32.mxu0 0.0
        %4666 = vmatmul.mubr.f32.gmra.mxu0 %v4386
        %v4667 = vpop.f32.mrf.mxu0
        %v4668 = vadd.f32 %v1444, %v4667
        %v4669 = vpop.f32.mrf.mxu0
        %4670 = vmatprep.mubr.f32.mxu0 0.0
        %4671 = vmatmul.mubr.f32.gmra.mxu0 %v4389
        %v4672 = vpop.f32.mrf.mxu0
        %v4673 = vadd.f32 %v1444, %v4672
        %v4674 = vpop.f32.mrf.mxu0
        %4675 = vmatprep.mubr.f32.mxu0 0.0
        %4676 = vmatmul.mubr.f32.gmra.mxu0 %v4392
        %v4677 = vpop.f32.mrf.mxu0
        %v4678 = vadd.f32 %v1444, %v4677
        %v4679 = vpop.f32.mrf.mxu0
        %4680 = vmatprep.mubr.f32.mxu0 0.0
        %4681 = vmatmul.mubr.f32.gmra.mxu0 %v4395
        %v4682 = vpop.f32.mrf.mxu0
        %v4683 = vadd.f32 %v1444, %v4682
        %v4684 = vpop.f32.mrf.mxu0
        %4685 = vmatprep.mubr.f32.mxu0 0.0
        %4686 = vmatmul.mubr.f32.gmra.mxu0 %v4398
        %v4687 = vpop.f32.mrf.mxu0
        %v4688 = vadd.f32 %v1444, %v4687
        %v4689 = vpop.f32.mrf.mxu0
        %4690 = vmatprep.mubr.f32.mxu0 0.0
        %4691 = vmatmul.mubr.f32.gmra.mxu0 %v4401
        %v4692 = vpop.f32.mrf.mxu0
        %v4693 = vadd.f32 %v1444, %v4692
        %v4694 = vpop.f32.mrf.mxu0
        %4695 = vmatprep.mubr.f32.mxu0 0.0
        %4696 = vmatmul.mubr.f32.gmra.mxu0 %v4404
        %v4697 = vpop.f32.mrf.mxu0
        %v4698 = vadd.f32 %v1444, %v4697
        %v4699 = vpop.f32.mrf.mxu0
        %4700 = vmatprep.mubr.f32.mxu0 0.0
        %4701 = vmatmul.mubr.f32.gmra.mxu0 %v4407
        %v4702 = vpop.f32.mrf.mxu0
        %v4703 = vadd.f32 %v1444, %v4702
        %v4704 = vpop.f32.mrf.mxu0
        %4705 = vmatprep.mubr.f32.mxu0 0.0
        %4706 = vmatmul.mubr.f32.gmra.mxu0 %v4410
        %v4707 = vpop.f32.mrf.mxu0
        %v4708 = vadd.f32 %v1444, %v4707
        %v4709 = vpop.f32.mrf.mxu0
        %4710 = vmatprep.mubr.f32.mxu0 0.0
        %4711 = vmatmul.mubr.f32.gmra.mxu0 %v4413
        %v4712 = vpop.f32.mrf.mxu0
        %v4713 = vadd.f32 %v1444, %v4712
        %v4714 = vpop.f32.mrf.mxu0
        %4715 = vmatprep.mubr.f32.mxu0 0.0
        %4716 = vmatmul.mubr.f32.gmra.mxu0 %v4416
        %v4717 = vpop.f32.mrf.mxu0
        %v4718 = vadd.f32 %v1444, %v4717
        %v4719 = vpop.f32.mrf.mxu0
        %4720 = vmatprep.mubr.f32.mxu0 0.0
        %4721 = vmatmul.mubr.f32.gmra.mxu0 %v4419
        %v4722 = vpop.f32.mrf.mxu0
        %v4723 = vadd.f32 %v1444, %v4722
        %v4724 = vpop.f32.mrf.mxu0
        %4725 = vmatprep.mubr.f32.mxu0 0.0
        %4726 = vmatmul.mubr.f32.gmra.mxu0 %v4422
        %v4727 = vpop.f32.mrf.mxu0
        %v4728 = vadd.f32 %v1444, %v4727
        %v4729 = vpop.f32.mrf.mxu0
        %4730 = vmatprep.mubr.f32.mxu0 0.0
        %4731 = vmatmul.mubr.f32.gmra.mxu0 %v4425
        %v4732 = vpop.f32.mrf.mxu0
        %v4733 = vadd.f32 %v1444, %v4732
        %v4734 = vpop.f32.mrf.mxu0
        %4735 = vmatprep.mubr.f32.mxu0 0.0
        %4736 = vmatmul.mubr.f32.gmra.mxu0 %v4428
        %v4737 = vpop.f32.mrf.mxu0
        %v4738 = vadd.f32 %v1444, %v4737
        %v4739 = vpop.f32.mrf.mxu0
        %4740 = vmatprep.mubr.f32.mxu0 0.0
        %4741 = vmatmul.mubr.f32.gmra.mxu0 %v4431
        %v4742 = vpop.f32.mrf.mxu0
        %v4743 = vadd.f32 %v1444, %v4742
        %v4744 = vpop.f32.mrf.mxu0
        %4745 = vmatprep.mubr.f32.mxu0 0.0
        %4746 = vmatmul.mubr.f32.gmra.mxu0 %v4434
        %v4747 = vpop.f32.mrf.mxu0
        %v4748 = vadd.f32 %v1444, %v4747
        %v4749 = vpop.f32.mrf.mxu0
        %4750 = vmatprep.mubr.f32.mxu0 0.0
        %4751 = vmatmul.mubr.f32.gmra.mxu0 %v4437
        %v4752 = vpop.f32.mrf.mxu0
        %v4753 = vadd.f32 %v1444, %v4752
        %v4754 = vpop.f32.mrf.mxu0
        %4755 = vmatprep.mubr.f32.mxu0 0.0
        %4756 = vmatmul.mubr.f32.gmra.mxu0 %v4440
        %v4757 = vpop.f32.mrf.mxu0
        %v4758 = vadd.f32 %v1444, %v4757
        %v4759 = vpop.f32.mrf.mxu0
        %4760 = vmatprep.mubr.f32.mxu0 0.0
        %4761 = vmatmul.mubr.f32.gmra.mxu0 %v4443
        %v4762 = vpop.f32.mrf.mxu0
        %v4763 = vadd.f32 %v1444, %v4762
        %v4764 = vpop.f32.mrf.mxu0
        %4765 = vmatprep.mubr.f32.mxu0 0.0
        %4766 = vmatmul.mubr.f32.gmra.mxu0 %v4446
        %v4767 = vpop.f32.mrf.mxu0
        %v4768 = vadd.f32 %v1444, %v4767
        %v4769 = vpop.f32.mrf.mxu0
        %4770 = vmatprep.mubr.f32.mxu0 0.0
        %4771 = vmatmul.mubr.f32.gmra.mxu0 %v4449
        %v4772 = vpop.f32.mrf.mxu0
        %v4773 = vadd.f32 %v1444, %v4772
        %v4774 = vpop.f32.mrf.mxu0
        %4775 = vmatprep.mubr.f32.mxu0 0.0
        %4776 = vmatmul.mubr.f32.gmra.mxu0 %v4452
        %v4777 = vpop.f32.mrf.mxu0
        %v4778 = vadd.f32 %v1444, %v4777
        %v4779 = vpop.f32.mrf.mxu0
        %4780 = vmatprep.mubr.f32.mxu0 0.0
        %4781 = vmatmul.mubr.f32.gmra.mxu0 %v4455
        %v4782 = vpop.f32.mrf.mxu0
        %v4783 = vadd.f32 %v1444, %v4782
        %v4784 = vpop.f32.mrf.mxu0
        %4785 = vmatprep.mubr.f32.mxu0 0.0
        %4786 = vmatmul.mubr.f32.gmra.mxu0 %v4458
        %v4787 = vpop.f32.mrf.mxu0
        %v4788 = vadd.f32 %v1444, %v4787
        %v4789 = vpop.f32.mrf.mxu0
        %4790 = vmatprep.mubr.f32.mxu0 0.0
        %4791 = vmatmul.mubr.f32.gmra.mxu0 %v4461
        %v4792 = vpop.f32.mrf.mxu0
        %v4793 = vadd.f32 %v1444, %v4792
        %v4794 = vpop.f32.mrf.mxu0
        %4795 = vmatprep.mubr.f32.mxu0 0.0
        %4796 = vmatmul.mubr.f32.gmra.mxu0 %v4464
        %v4797 = vpop.f32.mrf.mxu0
        %v4798 = vadd.f32 %v1444, %v4797
        %v4799 = vpop.f32.mrf.mxu0
        %4800 = vmatprep.mubr.f32.mxu0 0.0
        %4801 = vmatmul.mubr.f32.gmra.mxu0 %v4467
        %v4802 = vpop.f32.mrf.mxu0
        %v4803 = vadd.f32 %v1444, %v4802
        %v4804 = vpop.f32.mrf.mxu0
        %4805 = vmatprep.mubr.f32.mxu0 0.0
        %4806 = vmatmul.mubr.f32.gmra.mxu0 %v4470
        %v4807 = vpop.f32.mrf.mxu0
        %v4808 = vadd.f32 %v1444, %v4807
        %v4809 = vpop.f32.mrf.mxu0
        %4810 = vmatprep.mubr.f32.mxu0 0.0
        %4811 = vmatmul.mubr.f32.gmra.mxu0 %v4473
        %v4812 = vpop.f32.mrf.mxu0
        %v4813 = vadd.f32 %v1444, %v4812
        %v4814 = vpop.f32.mrf.mxu0
        %4815 = vmatprep.mubr.f32.mxu0 0.0
        %4816 = vmatmul.mubr.f32.gmra.mxu0 %v4476
        %v4817 = vpop.f32.mrf.mxu0
        %v4818 = vadd.f32 %v1444, %v4817
        %v4819 = vpop.f32.mrf.mxu0
        %4820 = vmatprep.mubr.f32.mxu0 0.0
        %4821 = vmatmul.mubr.f32.gmra.mxu0 %v4479
        %v4822 = vpop.f32.mrf.mxu0
        %v4823 = vadd.f32 %v1444, %v4822
        %v4824 = vpop.f32.mrf.mxu0
        %4825 = vmatprep.mubr.f32.mxu0 0.0
        %4826 = vmatmul.mubr.f32.gmra.mxu0 %v4482
        %v4827 = vpop.f32.mrf.mxu0
        %v4828 = vadd.f32 %v1444, %v4827
        %v4829 = vpop.f32.mrf.mxu0
        %4830 = vmatprep.mubr.f32.mxu0 0.0
        %4831 = vmatmul.mubr.f32.gmra.mxu0 %v4485
        %v4832 = vpop.f32.mrf.mxu0
        %v4833 = vadd.f32 %v1444, %v4832
        %v4834 = vpop.f32.mrf.mxu0
        %4835 = vmatprep.mubr.f32.mxu0 0.0
        %4836 = vmatmul.mubr.f32.gmra.mxu0 %v4488
        %v4837 = vpop.f32.mrf.mxu0
        %v4838 = vadd.f32 %v1444, %v4837
        %v4839 = vpop.f32.mrf.mxu0
        %4840 = vmatprep.mubr.f32.mxu0 0.0
        %4841 = vmatmul.mubr.f32.gmra.mxu0 %v4491
        %v4842 = vpop.f32.mrf.mxu0
        %v4843 = vadd.f32 %v1444, %v4842
        %v4844 = vpop.f32.mrf.mxu0
        %4845 = vmatprep.mubr.f32.mxu0 0.0
        %4846 = vmatmul.mubr.f32.gmra.mxu0 %v4494
        %v4847 = vpop.f32.mrf.mxu0
        %v4848 = vadd.f32 %v1444, %v4847
        %v4849 = vpop.f32.mrf.mxu0
        %4850 = vmatprep.mubr.f32.mxu0 0.0
        %4851 = vmatmul.mubr.f32.gmra.mxu0 %v4497
        %v4852 = vpop.f32.mrf.mxu0
        %v4853 = vadd.f32 %v1444, %v4852
        %v4854 = vpop.f32.mrf.mxu0
        %4855 = vmatprep.mubr.f32.mxu0 0.0
        %4856 = vmatmul.mubr.f32.gmra.mxu0 %v4500
        %v4857 = vpop.f32.mrf.mxu0
        %v4858 = vadd.f32 %v1444, %v4857
        %v4859 = vpop.f32.mrf.mxu0
        %4860 = vmatprep.mubr.f32.mxu0 0.0
        %4861 = vmatmul.mubr.f32.gmra.mxu0 %v4503
        %v4862 = vpop.f32.mrf.mxu0
        %v4863 = vadd.f32 %v1444, %v4862
        %v4864 = vpop.f32.mrf.mxu0
        %4865 = vmatprep.mubr.f32.mxu0 0.0
        %4866 = vmatmul.mubr.f32.gmra.mxu0 %v4506
        %v4867 = vpop.f32.mrf.mxu0
        %v4868 = vadd.f32 %v1444, %v4867
        %v4869 = vpop.f32.mrf.mxu0
        %4870 = vmatprep.mubr.f32.mxu0 0.0
        %4871 = vmatmul.mubr.f32.gmra.mxu0 %v4509
        %v4872 = vpop.f32.mrf.mxu0
        %v4873 = vadd.f32 %v1444, %v4872
        %v4874 = vpop.f32.mrf.mxu0
        %4875 = vmatprep.mubr.f32.mxu0 0.0
        %4876 = vmatmul.mubr.f32.gmra.mxu0 %v4512
        %v4877 = vpop.f32.mrf.mxu0
        %v4878 = vadd.f32 %v1444, %v4877
        %v4879 = vpop.f32.mrf.mxu0
        %4880 = vmatprep.mubr.f32.mxu0 0.0
        %4881 = vmatmul.mubr.f32.gmra.mxu0 %v4515
        %v4882 = vpop.f32.mrf.mxu0
        %v4883 = vadd.f32 %v1444, %v4882
        %v4884 = vpop.f32.mrf.mxu0
        %4885 = vmatprep.mubr.f32.mxu0 0.0
        %4886 = vmatmul.mubr.f32.gmra.mxu0 %v4518
        %v4887 = vpop.f32.mrf.mxu0
        %v4888 = vadd.f32 %v1444, %v4887
        %v4889 = vpop.f32.mrf.mxu0
        %4890 = vmatprep.mubr.f32.mxu0 0.0
        %4891 = vmatmul.mubr.f32.gmra.mxu0 %v4521
        %v4892 = vpop.f32.mrf.mxu0
        %v4893 = vadd.f32 %v1444, %v4892
        %v4894 = vpop.f32.mrf.mxu0
        %4895 = vmatprep.mubr.f32.mxu0 0.0
        %4896 = vmatmul.mubr.f32.gmra.mxu0 %v4524
        %v4897 = vpop.f32.mrf.mxu0
        %v4898 = vadd.f32 %v1444, %v4897
        %v4899 = vpop.f32.mrf.mxu0
        %4900 = vmatprep.mubr.f32.mxu0 0.0
        %4901 = vmatmul.mubr.f32.gmra.mxu0 %v4527
        %v4902 = vpop.f32.mrf.mxu0
        %v4903 = vadd.f32 %v1444, %v4902
        %v4904 = vpop.f32.mrf.mxu0
        %4905 = vmatprep.mubr.f32.mxu0 0.0
        %4906 = vmatmul.mubr.f32.gmra.mxu0 %v4530
        %v4907 = vpop.f32.mrf.mxu0
        %v4908 = vadd.f32 %v1444, %v4907
        %v4909 = vpop.f32.mrf.mxu0
        %4910 = vmatprep.mubr.f32.mxu0 0.0
        %4911 = vmatmul.mubr.f32.gmra.mxu0 %v4533
        %v4912 = vpop.f32.mrf.mxu0
        %v4913 = vadd.f32 %v1444, %v4912
        %v4914 = vpop.f32.mrf.mxu0
        %4915 = vmatprep.mubr.f32.mxu0 0.0
        %4916 = vmatmul.mubr.f32.gmra.mxu0 %v4536
        %v4917 = vpop.f32.mrf.mxu0
        %v4918 = vadd.f32 %v1444, %v4917
        %v4919 = vpop.f32.mrf.mxu0
        %4920 = vmatprep.mubr.f32.mxu0 0.0
        %4921 = vmatmul.mubr.f32.gmra.mxu0 %v4539
        %v4922 = vpop.f32.mrf.mxu0
        %v4923 = vadd.f32 %v1444, %v4922
        %v4924 = vpop.f32.mrf.mxu0
        %4925 = vmatprep.mubr.f32.mxu0 0.0
        %4926 = vmatmul.mubr.f32.gmra.mxu0 %v4542
        %v4927 = vpop.f32.mrf.mxu0
        %v4928 = vadd.f32 %v1444, %v4927
        %v4929 = vpop.f32.mrf.mxu0
        %4930 = vmatprep.mubr.f32.mxu0 0.0
        %4931 = vmatmul.mubr.f32.gmra.mxu0 %v4545
        %v4932 = vpop.f32.mrf.mxu0
        %v4933 = vadd.f32 %v1444, %v4932
        %v4934 = vpop.f32.mrf.mxu0
        %4935 = vmatprep.mubr.f32.mxu0 0.0
        %4936 = vmatmul.mubr.f32.gmra.mxu0 %v4548
        %v4937 = vpop.f32.mrf.mxu0
        %v4938 = vadd.f32 %v1444, %v4937
        %v4939 = vpop.f32.mrf.mxu0
        %4940 = vmatprep.mubr.f32.mxu0 0.0
        %4941 = vmatmul.mubr.f32.gmra.mxu0 %v4551
        %v4942 = vpop.f32.mrf.mxu0
        %v4943 = vadd.f32 %v1444, %v4942
        %v4944 = vpop.f32.mrf.mxu0
        %4945 = vmatprep.mubr.f32.mxu0 0.0
        %4946 = vmatmul.mubr.f32.gmra.mxu0 %v4554
        %v4947 = vpop.f32.mrf.mxu0
        %v4948 = vadd.f32 %v1444, %v4947
        %v4949 = vpop.f32.mrf.mxu0
        %4950 = vmatprep.mubr.f32.mxu0 0.0
        %4951 = vmatmul.mubr.f32.gmra.mxu0 %v4557
        %v4952 = vpop.f32.mrf.mxu0
        %v4953 = vadd.f32 %v1444, %v4952
        %v4954 = vpop.f32.mrf.mxu0
        %4955 = vmatprep.mubr.f32.mxu0 0.0
        %4956 = vmatmul.mubr.f32.gmra.mxu0 %v4560
        %v4957 = vpop.f32.mrf.mxu0
        %v4958 = vadd.f32 %v1444, %v4957
        %v4959 = vpop.f32.mrf.mxu0
        %4960 = vmatprep.mubr.f32.mxu0 0.0
        %4961 = vmatmul.mubr.f32.gmra.mxu0 %v4563
        %v4962 = vpop.f32.mrf.mxu0
        %v4963 = vadd.f32 %v1444, %v4962
        %v4964 = vpop.f32.mrf.mxu0
        %4965 = vmatprep.mubr.f32.mxu0 0.0
        %4966 = vmatmul.mubr.f32.gmra.mxu0 %v4566
        %v4967 = vpop.f32.mrf.mxu0
        %v4968 = vadd.f32 %v1444, %v4967
        %v4969 = vpop.f32.mrf.mxu0
        %4970 = vmatprep.mubr.f32.mxu0 0.0
        %4971 = vmatmul.mubr.f32.gmra.mxu0 %v4569
        %v4972 = vpop.f32.mrf.mxu0
        %v4973 = vadd.f32 %v1444, %v4972
        %v4974 = vpop.f32.mrf.mxu0
        %4975 = vmatprep.mubr.f32.mxu0 0.0
        %4976 = vmatmul.mubr.f32.gmra.mxu0 %v4572
        %v4977 = vpop.f32.mrf.mxu0
        %v4978 = vadd.f32 %v1444, %v4977
        %v4979 = vpop.f32.mrf.mxu0
        %4980 = vmatprep.mubr.f32.mxu0 0.0
        %4981 = vmatmul.mubr.f32.gmra.mxu0 %v4575
        %v4982 = vpop.f32.mrf.mxu0
        %v4983 = vadd.f32 %v1444, %v4982
        %v4984 = vpop.f32.mrf.mxu0
        %4985 = vmatprep.mubr.f32.mxu0 0.0
        %4986 = vmatmul.mubr.f32.gmra.mxu0 %v4578
        %v4987 = vpop.f32.mrf.mxu0
        %v4988 = vadd.f32 %v1444, %v4987
        %v4989 = vpop.f32.mrf.mxu0
        %4990 = vmatprep.mubr.f32.mxu0 0.0
        %4991 = vmatmul.mubr.f32.gmra.mxu0 %v4581
        %v4992 = vpop.f32.mrf.mxu0
        %v4993 = vadd.f32 %v1444, %v4992
        %v4994 = vpop.f32.mrf.mxu0
        %4995 = vmatprep.mubr.f32.mxu0 0.0
        %4996 = vmatmul.mubr.f32.gmra.mxu0 %v4584
        %v4997 = vpop.f32.mrf.mxu0
        %v4998 = vadd.f32 %v1444, %v4997
        %v4999 = vpop.f32.mrf.mxu0
        %5000 = vmatprep.mubr.f32.mxu0 0.0
        %5001 = vmatmul.mubr.f32.gmra.mxu0 %v4587
        %v5002 = vpop.f32.mrf.mxu0
        %v5003 = vadd.f32 %v1444, %v5002
        %v5004 = vpop.f32.mrf.mxu0
        %5005 = vmatprep.mubr.f32.mxu0 0.0
        %5006 = vmatmul.mubr.f32.gmra.mxu0 %v4590
        %v5007 = vpop.f32.mrf.mxu0
        %v5008 = vadd.f32 %v1444, %v5007
        %v5009 = vpop.f32.mrf.mxu0
        %5010 = vmatprep.mubr.f32.mxu0 0.0
        %5011 = vmatmul.mubr.f32.gmra.mxu0 %v4593
        %v5012 = vpop.f32.mrf.mxu0
        %v5013 = vadd.f32 %v1444, %v5012
        %v5014 = vpop.f32.mrf.mxu0
        %5015 = vmatprep.mubr.f32.mxu0 0.0
        %5016 = vmatmul.mubr.f32.gmra.mxu0 %v4596
        %v5017 = vpop.f32.mrf.mxu0
        %v5018 = vadd.f32 %v1444, %v5017
        %v5019 = vpop.f32.mrf.mxu0
        %5020 = vmatprep.mubr.f32.mxu0 0.0
        %5021 = vmatmul.mubr.f32.gmra.mxu0 %v4599
        %v5022 = vpop.f32.mrf.mxu0
        %v5023 = vadd.f32 %v1444, %v5022
        %v5024 = vpop.f32.mrf.mxu0
        %5025 = vdwg.mxu0
        %vm5026 = vcmp.ge.f32.partialorder %v4668, 0.0
        %vm5027 = vcmp.ge.f32.partialorder %v4673, 0.0
        %vm5028 = vcmp.ge.f32.partialorder %v4678, 0.0
        %vm5029 = vcmp.ge.f32.partialorder %v4683, 0.0
        %vm5030 = vcmp.ge.f32.partialorder %v4688, 0.0
        %vm5031 = vcmp.ge.f32.partialorder %v4693, 0.0
        %vm5032 = vcmp.ge.f32.partialorder %v4698, 0.0
        %vm5033 = vcmp.ge.f32.partialorder %v4703, 0.0
        %vm5034 = vcmp.ge.f32.partialorder %v4708, 0.0
        %vm5035 = vcmp.ge.f32.partialorder %v4713, 0.0
        %vm5036 = vcmp.ge.f32.partialorder %v4718, 0.0
        %vm5037 = vcmp.ge.f32.partialorder %v4723, 0.0
        %vm5038 = vcmp.ge.f32.partialorder %v4728, 0.0
        %vm5039 = vcmp.ge.f32.partialorder %v4733, 0.0
        %vm5040 = vcmp.ge.f32.partialorder %v4738, 0.0
        %vm5041 = vcmp.ge.f32.partialorder %v4743, 0.0
        %vm5042 = vcmp.ge.f32.partialorder %v4748, 0.0
        %vm5043 = vcmp.ge.f32.partialorder %v4753, 0.0
        %vm5044 = vcmp.ge.f32.partialorder %v4758, 0.0
        %vm5045 = vcmp.ge.f32.partialorder %v4763, 0.0
        %vm5046 = vcmp.ge.f32.partialorder %v4768, 0.0
        %vm5047 = vcmp.ge.f32.partialorder %v4773, 0.0
        %vm5048 = vcmp.ge.f32.partialorder %v4778, 0.0
        %vm5049 = vcmp.ge.f32.partialorder %v4783, 0.0
        %vm5050 = vcmp.ge.f32.partialorder %v4788, 0.0
        %vm5051 = vcmp.ge.f32.partialorder %v4793, 0.0
        %vm5052 = vcmp.ge.f32.partialorder %v4798, 0.0
        %vm5053 = vcmp.ge.f32.partialorder %v4803, 0.0
        %vm5054 = vcmp.ge.f32.partialorder %v4808, 0.0
        %vm5055 = vcmp.ge.f32.partialorder %v4813, 0.0
        %vm5056 = vcmp.ge.f32.partialorder %v4818, 0.0
        %vm5057 = vcmp.ge.f32.partialorder %v4823, 0.0
        %vm5058 = vcmp.ge.f32.partialorder %v4828, 0.0
        %vm5059 = vcmp.ge.f32.partialorder %v4833, 0.0
        %vm5060 = vcmp.ge.f32.partialorder %v4838, 0.0
        %vm5061 = vcmp.ge.f32.partialorder %v4843, 0.0
        %vm5062 = vcmp.ge.f32.partialorder %v4848, 0.0
        %vm5063 = vcmp.ge.f32.partialorder %v4853, 0.0
        %vm5064 = vcmp.ge.f32.partialorder %v4858, 0.0
        %vm5065 = vcmp.ge.f32.partialorder %v4863, 0.0
        %vm5066 = vcmp.ge.f32.partialorder %v4868, 0.0
        %vm5067 = vcmp.ge.f32.partialorder %v4873, 0.0
        %vm5068 = vcmp.ge.f32.partialorder %v4878, 0.0
        %vm5069 = vcmp.ge.f32.partialorder %v4883, 0.0
        %vm5070 = vcmp.ge.f32.partialorder %v4888, 0.0
        %vm5071 = vcmp.ge.f32.partialorder %v4893, 0.0
        %vm5072 = vcmp.ge.f32.partialorder %v4898, 0.0
        %vm5073 = vcmp.ge.f32.partialorder %v4903, 0.0
        %vm5074 = vcmp.ge.f32.partialorder %v4908, 0.0
        %vm5075 = vcmp.ge.f32.partialorder %v4913, 0.0
        %vm5076 = vcmp.ge.f32.partialorder %v4918, 0.0
        %vm5077 = vcmp.ge.f32.partialorder %v4923, 0.0
        %vm5078 = vcmp.ge.f32.partialorder %v4928, 0.0
        %vm5079 = vcmp.ge.f32.partialorder %v4933, 0.0
        %vm5080 = vcmp.ge.f32.partialorder %v4938, 0.0
        %vm5081 = vcmp.ge.f32.partialorder %v4943, 0.0
        %vm5082 = vcmp.ge.f32.partialorder %v4948, 0.0
        %vm5083 = vcmp.ge.f32.partialorder %v4953, 0.0
        %vm5084 = vcmp.ge.f32.partialorder %v4958, 0.0
        %vm5085 = vcmp.ge.f32.partialorder %v4963, 0.0
        %vm5086 = vcmp.ge.f32.partialorder %v4968, 0.0
        %vm5087 = vcmp.ge.f32.partialorder %v4973, 0.0
        %vm5088 = vcmp.ge.f32.partialorder %v4978, 0.0
        %vm5089 = vcmp.ge.f32.partialorder %v4983, 0.0
        %vm5090 = vcmp.ge.f32.partialorder %v4988, 0.0
        %vm5091 = vcmp.ge.f32.partialorder %v4993, 0.0
        %vm5092 = vcmp.ge.f32.partialorder %v4998, 0.0
        %vm5093 = vcmp.ge.f32.partialorder %v5003, 0.0
        %vm5094 = vcmp.ge.f32.partialorder %v5008, 0.0
        %vm5095 = vcmp.ge.f32.partialorder %v5013, 0.0
        %vm5096 = vcmp.ge.f32.partialorder %v5018, 0.0
        %vm5097 = vcmp.ge.f32.partialorder %v5023, 0.0
        %v5098 = vmul.f32 %v4668, 0.01
        %v5099 = vmul.f32 %v4673, 0.01
        %v5100 = vmul.f32 %v4678, 0.01
        %v5101 = vmul.f32 %v4683, 0.01
        %v5102 = vmul.f32 %v4688, 0.01
        %v5103 = vmul.f32 %v4693, 0.01
        %v5104 = vmul.f32 %v4698, 0.01
        %v5105 = vmul.f32 %v4703, 0.01
        %v5106 = vmul.f32 %v4708, 0.01
        %v5107 = vmul.f32 %v4713, 0.01
        %v5108 = vmul.f32 %v4718, 0.01
        %v5109 = vmul.f32 %v4723, 0.01
        %v5110 = vmul.f32 %v4728, 0.01
        %v5111 = vmul.f32 %v4733, 0.01
        %v5112 = vmul.f32 %v4738, 0.01
        %v5113 = vmul.f32 %v4743, 0.01
        %v5114 = vmul.f32 %v4748, 0.01
        %v5115 = vmul.f32 %v4753, 0.01
        %v5116 = vmul.f32 %v4758, 0.01
        %v5117 = vmul.f32 %v4763, 0.01
        %v5118 = vmul.f32 %v4768, 0.01
        %v5119 = vmul.f32 %v4773, 0.01
        %v5120 = vmul.f32 %v4778, 0.01
        %v5121 = vmul.f32 %v4783, 0.01
        %v5122 = vmul.f32 %v4788, 0.01
        %v5123 = vmul.f32 %v4793, 0.01
        %v5124 = vmul.f32 %v4798, 0.01
        %v5125 = vmul.f32 %v4803, 0.01
        %v5126 = vmul.f32 %v4808, 0.01
        %v5127 = vmul.f32 %v4813, 0.01
        %v5128 = vmul.f32 %v4818, 0.01
        %v5129 = vmul.f32 %v4823, 0.01
        %v5130 = vmul.f32 %v4828, 0.01
        %v5131 = vmul.f32 %v4833, 0.01
        %v5132 = vmul.f32 %v4838, 0.01
        %v5133 = vmul.f32 %v4843, 0.01
        %v5134 = vmul.f32 %v4848, 0.01
        %v5135 = vmul.f32 %v4853, 0.01
        %v5136 = vmul.f32 %v4858, 0.01
        %v5137 = vmul.f32 %v4863, 0.01
        %v5138 = vmul.f32 %v4868, 0.01
        %v5139 = vmul.f32 %v4873, 0.01
        %v5140 = vmul.f32 %v4878, 0.01
        %v5141 = vmul.f32 %v4883, 0.01
        %v5142 = vmul.f32 %v4888, 0.01
        %v5143 = vmul.f32 %v4893, 0.01
        %v5144 = vmul.f32 %v4898, 0.01
        %v5145 = vmul.f32 %v4903, 0.01
        %v5146 = vmul.f32 %v4908, 0.01
        %v5147 = vmul.f32 %v4913, 0.01
        %v5148 = vmul.f32 %v4918, 0.01
        %v5149 = vmul.f32 %v4923, 0.01
        %v5150 = vmul.f32 %v4928, 0.01
        %v5151 = vmul.f32 %v4933, 0.01
        %v5152 = vmul.f32 %v4938, 0.01
        %v5153 = vmul.f32 %v4943, 0.01
        %v5154 = vmul.f32 %v4948, 0.01
        %v5155 = vmul.f32 %v4953, 0.01
        %v5156 = vmul.f32 %v4958, 0.01
        %v5157 = vmul.f32 %v4963, 0.01
        %v5158 = vmul.f32 %v4968, 0.01
        %v5159 = vmul.f32 %v4973, 0.01
        %v5160 = vmul.f32 %v4978, 0.01
        %v5161 = vmul.f32 %v4983, 0.01
        %v5162 = vmul.f32 %v4988, 0.01
        %v5163 = vmul.f32 %v4993, 0.01
        %v5164 = vmul.f32 %v4998, 0.01
        %v5165 = vmul.f32 %v5003, 0.01
        %v5166 = vmul.f32 %v5008, 0.01
        %v5167 = vmul.f32 %v5013, 0.01
        %v5168 = vmul.f32 %v5018, 0.01
        %v5169 = vmul.f32 %v5023, 0.01
        %v5170 = vsel %vm5026, %v4668, %v5098
        %v5171 = vsel %vm5027, %v4673, %v5099
        %v5172 = vsel %vm5028, %v4678, %v5100
        %v5173 = vsel %vm5029, %v4683, %v5101
        %v5174 = vsel %vm5030, %v4688, %v5102
        %v5175 = vsel %vm5031, %v4693, %v5103
        %v5176 = vsel %vm5032, %v4698, %v5104
        %v5177 = vsel %vm5033, %v4703, %v5105
        %v5178 = vsel %vm5034, %v4708, %v5106
        %v5179 = vsel %vm5035, %v4713, %v5107
        %v5180 = vsel %vm5036, %v4718, %v5108
        %v5181 = vsel %vm5037, %v4723, %v5109
        %v5182 = vsel %vm5038, %v4728, %v5110
        %v5183 = vsel %vm5039, %v4733, %v5111
        %v5184 = vsel %vm5040, %v4738, %v5112
        %v5185 = vsel %vm5041, %v4743, %v5113
        %v5186 = vsel %vm5042, %v4748, %v5114
        %v5187 = vsel %vm5043, %v4753, %v5115
        %v5188 = vsel %vm5044, %v4758, %v5116
        %v5189 = vsel %vm5045, %v4763, %v5117
        %v5190 = vsel %vm5046, %v4768, %v5118
        %v5191 = vsel %vm5047, %v4773, %v5119
        %v5192 = vsel %vm5048, %v4778, %v5120
        %v5193 = vsel %vm5049, %v4783, %v5121
        %v5194 = vsel %vm5050, %v4788, %v5122
        %v5195 = vsel %vm5051, %v4793, %v5123
        %v5196 = vsel %vm5052, %v4798, %v5124
        %v5197 = vsel %vm5053, %v4803, %v5125
        %v5198 = vsel %vm5054, %v4808, %v5126
        %v5199 = vsel %vm5055, %v4813, %v5127
        %v5200 = vsel %vm5056, %v4818, %v5128
        %v5201 = vsel %vm5057, %v4823, %v5129
        %v5202 = vsel %vm5058, %v4828, %v5130
        %v5203 = vsel %vm5059, %v4833, %v5131
        %v5204 = vsel %vm5060, %v4838, %v5132
        %v5205 = vsel %vm5061, %v4843, %v5133
        %v5206 = vsel %vm5062, %v4848, %v5134
        %v5207 = vsel %vm5063, %v4853, %v5135
        %v5208 = vsel %vm5064, %v4858, %v5136
        %v5209 = vsel %vm5065, %v4863, %v5137
        %v5210 = vsel %vm5066, %v4868, %v5138
        %v5211 = vsel %vm5067, %v4873, %v5139
        %v5212 = vsel %vm5068, %v4878, %v5140
        %v5213 = vsel %vm5069, %v4883, %v5141
        %v5214 = vsel %vm5070, %v4888, %v5142
        %v5215 = vsel %vm5071, %v4893, %v5143
        %v5216 = vsel %vm5072, %v4898, %v5144
        %v5217 = vsel %vm5073, %v4903, %v5145
        %v5218 = vsel %vm5074, %v4908, %v5146
        %v5219 = vsel %vm5075, %v4913, %v5147
        %v5220 = vsel %vm5076, %v4918, %v5148
        %v5221 = vsel %vm5077, %v4923, %v5149
        %v5222 = vsel %vm5078, %v4928, %v5150
        %v5223 = vsel %vm5079, %v4933, %v5151
        %v5224 = vsel %vm5080, %v4938, %v5152
        %v5225 = vsel %vm5081, %v4943, %v5153
        %v5226 = vsel %vm5082, %v4948, %v5154
        %v5227 = vsel %vm5083, %v4953, %v5155
        %v5228 = vsel %vm5084, %v4958, %v5156
        %v5229 = vsel %vm5085, %v4963, %v5157
        %v5230 = vsel %vm5086, %v4968, %v5158
        %v5231 = vsel %vm5087, %v4973, %v5159
        %v5232 = vsel %vm5088, %v4978, %v5160
        %v5233 = vsel %vm5089, %v4983, %v5161
        %v5234 = vsel %vm5090, %v4988, %v5162
        %v5235 = vsel %vm5091, %v4993, %v5163
        %v5236 = vsel %vm5092, %v4998, %v5164
        %v5237 = vsel %vm5093, %v5003, %v5165
        %v5238 = vsel %vm5094, %v5008, %v5166
        %v5239 = vsel %vm5095, %v5013, %v5167
        %v5240 = vsel %vm5096, %v5018, %v5168
        %v5241 = vsel %vm5097, %v5023, %v5169
        %v5242 = vmax.f32 %v4240, %v5170
        %v5243 = vmax.f32 %v4241, %v5171
        %v5244 = vmax.f32 %v4242, %v5172
        %v5245 = vmax.f32 %v4243, %v5173
        %v5246 = vmax.f32 %v4244, %v5174
        %v5247 = vmax.f32 %v4245, %v5175
        %v5248 = vmax.f32 %v4246, %v5176
        %v5249 = vmax.f32 %v4247, %v5177
        %v5250 = vmax.f32 %v4248, %v5178
        %v5251 = vmax.f32 %v4249, %v5179
        %v5252 = vmax.f32 %v4250, %v5180
        %v5253 = vmax.f32 %v4251, %v5181
        %v5254 = vmax.f32 %v4252, %v5182
        %v5255 = vmax.f32 %v4253, %v5183
        %v5256 = vmax.f32 %v4254, %v5184
        %v5257 = vmax.f32 %v4255, %v5185
        %v5258 = vmax.f32 %v4256, %v5186
        %v5259 = vmax.f32 %v4257, %v5187
        %v5260 = vmax.f32 %v4258, %v5188
        %v5261 = vmax.f32 %v4259, %v5189
        %v5262 = vmax.f32 %v4260, %v5190
        %v5263 = vmax.f32 %v4261, %v5191
        %v5264 = vmax.f32 %v4262, %v5192
        %v5265 = vmax.f32 %v4263, %v5193
        %v5266 = vmax.f32 %v4264, %v5194
        %v5267 = vmax.f32 %v4265, %v5195
        %v5268 = vmax.f32 %v4266, %v5196
        %v5269 = vmax.f32 %v4267, %v5197
        %v5270 = vmax.f32 %v4268, %v5198
        %v5271 = vmax.f32 %v4269, %v5199
        %v5272 = vmax.f32 %v4270, %v5200
        %v5273 = vmax.f32 %v4271, %v5201
        %v5274 = vmax.f32 %v4272, %v5202
        %v5275 = vmax.f32 %v4273, %v5203
        %v5276 = vmax.f32 %v4274, %v5204
        %v5277 = vmax.f32 %v4275, %v5205
        %v5278 = vmax.f32 %v4276, %v5206
        %v5279 = vmax.f32 %v4277, %v5207
        %v5280 = vmax.f32 %v4278, %v5208
        %v5281 = vmax.f32 %v4279, %v5209
        %v5282 = vmax.f32 %v4280, %v5210
        %v5283 = vmax.f32 %v4281, %v5211
        %v5284 = vmax.f32 %v4282, %v5212
        %v5285 = vmax.f32 %v4283, %v5213
        %v5286 = vmax.f32 %v4284, %v5214
        %v5287 = vmax.f32 %v4285, %v5215
        %v5288 = vmax.f32 %v4286, %v5216
        %v5289 = vmax.f32 %v4287, %v5217
        %v5290 = vmax.f32 %v4288, %v5218
        %v5291 = vmax.f32 %v4289, %v5219
        %v5292 = vmax.f32 %v4290, %v5220
        %v5293 = vmax.f32 %v4291, %v5221
        %v5294 = vmax.f32 %v4292, %v5222
        %v5295 = vmax.f32 %v4293, %v5223
        %v5296 = vmax.f32 %v4294, %v5224
        %v5297 = vmax.f32 %v4295, %v5225
        %v5298 = vmax.f32 %v4296, %v5226
        %v5299 = vmax.f32 %v4297, %v5227
        %v5300 = vmax.f32 %v4298, %v5228
        %v5301 = vmax.f32 %v4299, %v5229
        %v5302 = vmax.f32 %v4300, %v5230
        %v5303 = vmax.f32 %v4301, %v5231
        %v5304 = vmax.f32 %v4302, %v5232
        %v5305 = vmax.f32 %v4303, %v5233
        %v5306 = vmax.f32 %v4304, %v5234
        %v5307 = vmax.f32 %v4305, %v5235
        %v5308 = vmax.f32 %v4306, %v5236
        %v5309 = vmax.f32 %v4307, %v5237
        %v5310 = vmax.f32 %v4308, %v5238
        %v5311 = vmax.f32 %v4309, %v5239
        %v5312 = vmax.f32 %v4310, %v5240
        %v5313 = vmax.f32 %v4311, %v5241
        %vm5314 = vcmask 80896
        %5315 = vst.msk [vmem:[%s1355] sm:$0xff] %vm5314, %v5242
        %5316 = vst.msk [vmem:[%s1355 + $0x8] sm:$0xff] %vm5314, %v5243
        %5317 = vst.msk [vmem:[%s1355 + $0x10] sm:$0xff] %vm5314, %v5244
        %5318 = vst.msk [vmem:[%s1355 + $0x18] sm:$0xff] %vm5314, %v5245
        %5319 = vst.msk [vmem:[%s1355 + $0x20] sm:$0xff] %vm5314, %v5246
        %5320 = vst.msk [vmem:[%s1355 + $0x28] sm:$0xff] %vm5314, %v5247
        %5321 = vst.msk [vmem:[%s1355 + $0x30] sm:$0xff] %vm5314, %v5248
        %5322 = vst.msk [vmem:[%s1355 + $0x38] sm:$0xff] %vm5314, %v5249
        %5323 = vst.msk [vmem:[%s1355 + $0x40] sm:$0xff] %vm5314, %v5250
        %5324 = vst.msk [vmem:[%s1355 + $0x48] sm:$0xff] %vm5314, %v5251
        %5325 = vst.msk [vmem:[%s1355 + $0x50] sm:$0xff] %vm5314, %v5252
        %5326 = vst.msk [vmem:[%s1355 + $0x58] sm:$0xff] %vm5314, %v5253
        %5327 = vst.msk [vmem:[%s1355 + $0x60] sm:$0xff] %vm5314, %v5254
        %5328 = vst.msk [vmem:[%s1355 + $0x68] sm:$0xff] %vm5314, %v5255
        %5329 = vst.msk [vmem:[%s1355 + $0x70] sm:$0xff] %vm5314, %v5256
        %5330 = vst.msk [vmem:[%s1355 + $0x78] sm:$0xff] %vm5314, %v5257
        %5331 = vst.msk [vmem:[%s1355 + $0x80] sm:$0xff] %vm5314, %v5258
        %5332 = vst.msk [vmem:[%s1355 + $0x88] sm:$0xff] %vm5314, %v5259
        %5333 = vst.msk [vmem:[%s1355 + $0x90] sm:$0xff] %vm5314, %v5260
        %5334 = vst.msk [vmem:[%s1355 + $0x98] sm:$0xff] %vm5314, %v5261
        %5335 = vst.msk [vmem:[%s1355 + $0xa0] sm:$0xff] %vm5314, %v5262
        %5336 = vst.msk [vmem:[%s1355 + $0xa8] sm:$0xff] %vm5314, %v5263
        %5337 = vst.msk [vmem:[%s1355 + $0xb0] sm:$0xff] %vm5314, %v5264
        %5338 = vst.msk [vmem:[%s1355 + $0xb8] sm:$0xff] %vm5314, %v5265
        %5339 = vst.msk [vmem:[%s1355 + $0xc0] sm:$0xff] %vm5314, %v5266
        %5340 = vst.msk [vmem:[%s1355 + $0xc8] sm:$0xff] %vm5314, %v5267
        %5341 = vst.msk [vmem:[%s1355 + $0xd0] sm:$0xff] %vm5314, %v5268
        %5342 = vst.msk [vmem:[%s1355 + $0xd8] sm:$0xff] %vm5314, %v5269
        %5343 = vst.msk [vmem:[%s1355 + $0xe0] sm:$0xff] %vm5314, %v5270
        %5344 = vst.msk [vmem:[%s1355 + $0xe8] sm:$0xff] %vm5314, %v5271
        %5345 = vst.msk [vmem:[%s1355 + $0xf0] sm:$0xff] %vm5314, %v5272
        %5346 = vst.msk [vmem:[%s1355 + $0xf8] sm:$0xff] %vm5314, %v5273
        %5347 = vst.msk [vmem:[%s1355 + $0x100] sm:$0xff] %vm5314, %v5274
        %5348 = vst.msk [vmem:[%s1355 + $0x108] sm:$0xff] %vm5314, %v5275
        %5349 = vst.msk [vmem:[%s1355 + $0x110] sm:$0xff] %vm5314, %v5276
        %5350 = vst.msk [vmem:[%s1355 + $0x118] sm:$0xff] %vm5314, %v5277
        %5351 = vst.msk [vmem:[%s1355 + $0x120] sm:$0xff] %vm5314, %v5278
        %5352 = vst.msk [vmem:[%s1355 + $0x128] sm:$0xff] %vm5314, %v5279
        %5353 = vst.msk [vmem:[%s1355 + $0x130] sm:$0xff] %vm5314, %v5280
        %5354 = vst.msk [vmem:[%s1355 + $0x138] sm:$0xff] %vm5314, %v5281
        %5355 = vst.msk [vmem:[%s1355 + $0x140] sm:$0xff] %vm5314, %v5282
        %5356 = vst.msk [vmem:[%s1355 + $0x148] sm:$0xff] %vm5314, %v5283
        %5357 = vst.msk [vmem:[%s1355 + $0x150] sm:$0xff] %vm5314, %v5284
        %5358 = vst.msk [vmem:[%s1355 + $0x158] sm:$0xff] %vm5314, %v5285
        %5359 = vst.msk [vmem:[%s1355 + $0x160] sm:$0xff] %vm5314, %v5286
        %5360 = vst.msk [vmem:[%s1355 + $0x168] sm:$0xff] %vm5314, %v5287
        %5361 = vst.msk [vmem:[%s1355 + $0x170] sm:$0xff] %vm5314, %v5288
        %5362 = vst.msk [vmem:[%s1355 + $0x178] sm:$0xff] %vm5314, %v5289
        %5363 = vst.msk [vmem:[%s1355 + $0x180] sm:$0xff] %vm5314, %v5290
        %5364 = vst.msk [vmem:[%s1355 + $0x188] sm:$0xff] %vm5314, %v5291
        %5365 = vst.msk [vmem:[%s1355 + $0x190] sm:$0xff] %vm5314, %v5292
        %5366 = vst.msk [vmem:[%s1355 + $0x198] sm:$0xff] %vm5314, %v5293
        %5367 = vst.msk [vmem:[%s1355 + $0x1a0] sm:$0xff] %vm5314, %v5294
        %5368 = vst.msk [vmem:[%s1355 + $0x1a8] sm:$0xff] %vm5314, %v5295
        %5369 = vst.msk [vmem:[%s1355 + $0x1b0] sm:$0xff] %vm5314, %v5296
        %5370 = vst.msk [vmem:[%s1355 + $0x1b8] sm:$0xff] %vm5314, %v5297
        %5371 = vst.msk [vmem:[%s1355 + $0x1c0] sm:$0xff] %vm5314, %v5298
        %5372 = vst.msk [vmem:[%s1355 + $0x1c8] sm:$0xff] %vm5314, %v5299
        %5373 = vst.msk [vmem:[%s1355 + $0x1d0] sm:$0xff] %vm5314, %v5300
        %5374 = vst.msk [vmem:[%s1355 + $0x1d8] sm:$0xff] %vm5314, %v5301
        %5375 = vst.msk [vmem:[%s1355 + $0x1e0] sm:$0xff] %vm5314, %v5302
        %5376 = vst.msk [vmem:[%s1355 + $0x1e8] sm:$0xff] %vm5314, %v5303
        %5377 = vst.msk [vmem:[%s1355 + $0x1f0] sm:$0xff] %vm5314, %v5304
        %5378 = vst.msk [vmem:[%s1355 + $0x1f8] sm:$0xff] %vm5314, %v5305
        %5379 = vst.msk [vmem:[%s1355 + $0x200] sm:$0xff] %vm5314, %v5306
        %5380 = vst.msk [vmem:[%s1355 + $0x208] sm:$0xff] %vm5314, %v5307
        %5381 = vst.msk [vmem:[%s1355 + $0x210] sm:$0xff] %vm5314, %v5308
        %5382 = vst.msk [vmem:[%s1355 + $0x218] sm:$0xff] %vm5314, %v5309
        %5383 = vst.msk [vmem:[%s1355 + $0x220] sm:$0xff] %vm5314, %v5310
        %5384 = vst.msk [vmem:[%s1355 + $0x228] sm:$0xff] %vm5314, %v5311
        %5385 = vst.msk [vmem:[%s1355 + $0x230] sm:$0xff] %vm5314, %v5312
        %5386 = vst.msk [vmem:[%s1355 + $0x238] sm:$0xff] %vm5314, %v5313
        %s5387 = smul.u32 72, %s14
        %p5388 = scmp.lt.s32.totalorder %s5387, 143
        %s5389 = scalar_select %p5388, %s5387, 143
        %s5390 = smul.addr %s5389, 8
        %s5391 = scalar_lea.vmem %s3, %s5390
        // Predicated region
        $region71: #{forward.2} parent=65 // pred_check
          %p5392 = pneg %p100
        $region72: #{forward.2} parent=65 // pred_check_branch
          %5394 = sbr.rel (%p5392) target = $region74
        $region73: #{forward.2} parent=65 // pred_region
          %s5395 = smul.u32 72, %s14
        $region74: #{forward.2} parent=65 // pred_fallthru
          _
      $region66: #{forward.2} parent=5 // pred_fallthru
        _
      %p5396 = scmp.le.s32.totalorder 2, %s9
      // Predicated region
      $region75: #{forward.2} parent=5 // pred_check
        %p5397 = pneg %p5396
      $region76: #{forward.2} parent=5 // pred_check_branch
        %5399 = sbr.rel (%p5397) target = $region78
      $region77: #{forward.2} parent=5 // pred_region
        %s5400 = ssub.s32 %s9, 2
        // Predicated region
        $region79: #{forward.2} parent=77 // pred_check
          %p5401 = pneg %p106
        $region80: #{forward.2} parent=77 // pred_check_branch
          %5403 = sbr.rel (%p5401) target = $region82
        $region81: #{forward.2} parent=77 // pred_region
          %s5404 = smul.u32 72, %s15
          %p5405 = scmp.lt.s32.totalorder %s5404, 143
          %s5406 = scalar_select %p5405, %s5404, 143
          %s5407 = smul.addr %s5406, 8
          %s5408 = scalar_lea.vmem %s3, %s5407
        $region82: #{forward.2} parent=77 // pred_fallthru
          _
      $region78: #{forward.2} parent=5 // pred_fallthru
        _
    $region6: #{forward.2} parent=1 // loop_footer
      %s13 = sadd.s32 1, %s9
    $region7: #{forward.2} parent=1 // loop_footer_branch
      %8 = sbr.rel target = $region3
    $region8: #{forward.2} parent=1 // loop_exit
      _

// kernel: forward.3
$region0: #{forward.3}
  #allocation0 [shape = 'u32[]', space=smem, size = 0x4, offset = 0x4, fixed_abs, tag = 'smem constant byte address 0x4 - core index']
  #allocation1 [shape = 'u32[144,128]{1,0:T(1,128)}', space=vmem, size = 0x12000, scoped, tag = 'internal scratch']
  %s0 = inlined_call_operand.vmem [shape: f32[4,50,250], index: 0, kind: input, shape index: {}]
  %s1 = inlined_call_operand.vmem [shape: f32[250,20], index: 1, kind: input, shape index: {}]
  %s2 = inlined_call_operand.vmem [shape: f32[1,20], index: 2, kind: input, shape index: {}]
  %s3 = inlined_call_operand.vmem [shape: f32[50,20], index: 3, kind: output, shape index: {}]
  %s4 = sld [smem:[#allocation0]]
  $region22: #{forward.3} parent=0
    _
  %s6 = ssub.s32 1, %s4
  %s7 = scalar_select 0, %s6, %s4
  // Predicated region
  $region2: #{forward.3} parent=0 // pred_check
    _
  $region3: #{forward.3} parent=0 // pred_check_branch
    %9 = sbr.rel (0) target = $region5
  $region4: #{forward.3} parent=0 // pred_region
    _
  $region5: #{forward.3} parent=0 // pred_fallthru
    _
  // Predicated region
  $region6: #{forward.3} parent=0 // pred_check
    _
  $region7: #{forward.3} parent=0 // pred_check_branch
    %11 = sbr.rel (0) target = $region9
  $region8: #{forward.3} parent=0 // pred_region
    _
  $region9: #{forward.3} parent=0 // pred_fallthru
    _
  // Predicated region
  $region10: #{forward.3} parent=0 // pred_check
    _
  $region11: #{forward.3} parent=0 // pred_check_branch
    %13 = sbr.rel (0) target = $region13
  $region12: #{forward.3} parent=0 // pred_region
    _
  $region13: #{forward.3} parent=0 // pred_fallthru
    _
  %v14 = vld [vmem:[%s1] sm:$0xff]
  %v15 = vld [vmem:[%s1 + $0x8] sm:$0xff]
  %v16 = vld [vmem:[%s1 + $0x10] sm:$0xff]
  %v17 = vld [vmem:[%s1 + $0x18] sm:$0xff]
  %v18 = vld [vmem:[%s1 + $0x20] sm:$0xff]
  %v19 = vld [vmem:[%s1 + $0x28] sm:$0xff]
  %v20 = vld [vmem:[%s1 + $0x30] sm:$0xff]
  %v21 = vld [vmem:[%s1 + $0x38] sm:$0xff]
  %v22 = vld [vmem:[%s1 + $0x40] sm:$0xff]
  %v23 = vld [vmem:[%s1 + $0x48] sm:$0xff]
  %v24 = vld [vmem:[%s1 + $0x50] sm:$0xff]
  %v25 = vld [vmem:[%s1 + $0x58] sm:$0xff]
  %v26 = vld [vmem:[%s1 + $0x60] sm:$0xff]
  %v27 = vld [vmem:[%s1 + $0x68] sm:$0xff]
  %v28 = vld [vmem:[%s1 + $0x70] sm:$0xff]
  %v29 = vld [vmem:[%s1 + $0x78] sm:$0xff]
  %v30 = vld [vmem:[%s1 + $0x80] sm:$0xff]
  %v31 = vld [vmem:[%s1 + $0x88] sm:$0xff]
  %v32 = vld [vmem:[%s1 + $0x90] sm:$0xff]
  %v33 = vld [vmem:[%s1 + $0x98] sm:$0xff]
  %v34 = vld [vmem:[%s1 + $0xa0] sm:$0xff]
  %v35 = vld [vmem:[%s1 + $0xa8] sm:$0xff]
  %v36 = vld [vmem:[%s1 + $0xb0] sm:$0xff]
  %v37 = vld [vmem:[%s1 + $0xb8] sm:$0xff]
  %v38 = vld [vmem:[%s1 + $0xc0] sm:$0xff]
  %v39 = vld [vmem:[%s1 + $0xc8] sm:$0xff]
  %v40 = vld [vmem:[%s1 + $0xd0] sm:$0xff]
  %v41 = vld [vmem:[%s1 + $0xd8] sm:$0xff]
  %v42 = vld [vmem:[%s1 + $0xe0] sm:$0xff]
  %v43 = vld [vmem:[%s1 + $0xe8] sm:$0xff]
  %v44 = vld [vmem:[%s1 + $0xf0] sm:$0xff]
  %v45 = vld [vmem:[%s1 + $0xf8] sm:$0x3]
  %v46 = vld [vmem:[%s2] sm:$0x1]
  %v47 = vld [vmem:[%s0] sm:$0xff]
  %v48 = vld [vmem:[%s0 + $0x8] sm:$0xff]
  %v49 = vld [vmem:[%s0 + $0x10] sm:$0xff]
  %v50 = vld [vmem:[%s0 + $0x18] sm:$0xff]
  %v51 = vld [vmem:[%s0 + $0x20] sm:$0xff]
  %v52 = vld [vmem:[%s0 + $0x28] sm:$0xff]
  %v53 = vld [vmem:[%s0 + $0x30] sm:$0xff]
  %v54 = vld [vmem:[%s0 + $0x38] sm:$0xff]
  %v55 = vld [vmem:[%s0 + $0x40] sm:$0xff]
  %v56 = vld [vmem:[%s0 + $0x48] sm:$0xff]
  %v57 = vld [vmem:[%s0 + $0x50] sm:$0xff]
  %v58 = vld [vmem:[%s0 + $0x58] sm:$0xff]
  %v59 = vld [vmem:[%s0 + $0x60] sm:$0x3]
  %v60 = vld [vmem:[%s0 + $0x68] sm:$0x3]
  %v62 = vlaneseq
  %v63 = vshrl.u32 %v62, 7
  %v64 = vsub.s32 0, %v63
  %v65 = vrot.slane %v46, %v64
  %vm67 = vcmask 998400
  %v69 = vsel %vm67, %v48, 0
  %v72 = vsel %vm67, %v50, 0
  %v75 = vsel %vm67, %v52, 0
  %v78 = vsel %vm67, %v54, 0
  %v81 = vsel %vm67, %v56, 0
  %v84 = vsel %vm67, %v58, 0
  %v87 = vsel %vm67, %v60, 0
  %vm89 = vcmask 1041408
  %v91 = vsel %vm89, %v45, 0
  %93 = vmatprep.subr.mxu0 0.0
  %94 = vmatpush1.msra.mxu0 %v29
  %95 = vmatprep.subr.mxu0 0.0
  %96 = vmatpush1.msra.mxu0 %v28
  %97 = vmatprep.subr.mxu0 0.0
  %98 = vmatpush1.msra.mxu0 %v27
  %99 = vmatprep.subr.mxu0 0.0
  %100 = vmatpush1.msra.mxu0 %v26
  %101 = vmatprep.subr.mxu0 0.0
  %102 = vmatpush1.msra.mxu0 %v25
  %103 = vmatprep.subr.mxu0 0.0
  %104 = vmatpush1.msra.mxu0 %v24
  %105 = vmatprep.subr.mxu0 0.0
  %106 = vmatpush1.msra.mxu0 %v23
  %107 = vmatprep.subr.mxu0 0.0
  %108 = vmatpush1.msra.mxu0 %v22
  %109 = vmatprep.subr.mxu0 0.0
  %110 = vmatpush1.msra.mxu0 %v21
  %111 = vmatprep.subr.mxu0 0.0
  %112 = vmatpush1.msra.mxu0 %v20
  %113 = vmatprep.subr.mxu0 0.0
  %114 = vmatpush1.msra.mxu0 %v19
  %115 = vmatprep.subr.mxu0 0.0
  %116 = vmatpush1.msra.mxu0 %v18
  %117 = vmatprep.subr.mxu0 0.0
  %118 = vmatpush1.msra.mxu0 %v17
  %119 = vmatprep.subr.mxu0 0.0
  %120 = vmatpush1.msra.mxu0 %v16
  %121 = vmatprep.subr.mxu0 0.0
  %122 = vmatpush1.msra.mxu0 %v15
  %123 = vmatprep.subr.mxu0 0.0
  %124 = vmatpush1.msra.mxu0 %v14
  %125 = vmatprep.subr.mxu0 0.0
  %126 = vmatpush2.msra.mxu0 %v91
  %127 = vmatprep.subr.mxu0 0.0
  %128 = vmatpush2.msra.mxu0 %v44
  %129 = vmatprep.subr.mxu0 0.0
  %130 = vmatpush2.msra.mxu0 %v43
  %131 = vmatprep.subr.mxu0 0.0
  %132 = vmatpush2.msra.mxu0 %v42
  %133 = vmatprep.subr.mxu0 0.0
  %134 = vmatpush2.msra.mxu0 %v41
  %135 = vmatprep.subr.mxu0 0.0
  %136 = vmatpush2.msra.mxu0 %v40
  %137 = vmatprep.subr.mxu0 0.0
  %138 = vmatpush2.msra.mxu0 %v39
  %139 = vmatprep.subr.mxu0 0.0
  %140 = vmatpush2.msra.mxu0 %v38
  %141 = vmatprep.subr.mxu0 0.0
  %142 = vmatpush2.msra.mxu0 %v37
  %143 = vmatprep.subr.mxu0 0.0
  %144 = vmatpush2.msra.mxu0 %v36
  %145 = vmatprep.subr.mxu0 0.0
  %146 = vmatpush2.msra.mxu0 %v35
  %147 = vmatprep.subr.mxu0 0.0
  %148 = vmatpush2.msra.mxu0 %v34
  %149 = vmatprep.subr.mxu0 0.0
  %150 = vmatpush2.msra.mxu0 %v33
  %151 = vmatprep.subr.mxu0 0.0
  %152 = vmatpush2.msra.mxu0 %v32
  %153 = vmatprep.subr.mxu0 0.0
  %154 = vmatpush2.msra.mxu0 %v31
  %155 = vmatprep.subr.mxu0 0.0
  %156 = vmatpush2.msra.mxu0 %v30
  %157 = vmatprep.mubr.f32.mxu0 %v69
  %158 = vmatmul.mubr.f32.gmra.mxu0 %v47
  %v159 = vpop.f32.mrf.mxu0
  %v160 = vadd.f32 %v65, %v159
  %v161 = vpop.f32.mrf.mxu0
  %162 = vmatprep.mubr.f32.mxu0 %v72
  %163 = vmatmul.mubr.f32.gmra.mxu0 %v49
  %v164 = vpop.f32.mrf.mxu0
  %v165 = vadd.f32 %v65, %v164
  %v166 = vpop.f32.mrf.mxu0
  %167 = vmatprep.mubr.f32.mxu0 %v75
  %168 = vmatmul.mubr.f32.gmra.mxu0 %v51
  %v169 = vpop.f32.mrf.mxu0
  %v170 = vadd.f32 %v65, %v169
  %v171 = vpop.f32.mrf.mxu0
  %172 = vmatprep.mubr.f32.mxu0 %v78
  %173 = vmatmul.mubr.f32.gmra.mxu0 %v53
  %v174 = vpop.f32.mrf.mxu0
  %v175 = vadd.f32 %v65, %v174
  %v176 = vpop.f32.mrf.mxu0
  %177 = vmatprep.mubr.f32.mxu0 %v81
  %178 = vmatmul.mubr.f32.gmra.mxu0 %v55
  %v179 = vpop.f32.mrf.mxu0
  %v180 = vadd.f32 %v65, %v179
  %v181 = vpop.f32.mrf.mxu0
  %182 = vmatprep.mubr.f32.mxu0 %v84
  %183 = vmatmul.mubr.f32.gmra.mxu0 %v57
  %v184 = vpop.f32.mrf.mxu0
  %v185 = vadd.f32 %v65, %v184
  %v186 = vpop.f32.mrf.mxu0
  %187 = vmatprep.mubr.f32.mxu0 %v87
  %188 = vmatmul.mubr.f32.gmra.mxu0 %v59
  %v189 = vpop.f32.mrf.mxu0
  %v190 = vadd.f32 %v65, %v189
  %v191 = vpop.f32.mrf.mxu0
  %192 = vdwg.mxu0
  %vm193 = vcmp.ge.f32.partialorder %v160, 0.0
  %vm194 = vcmp.ge.f32.partialorder %v165, 0.0
  %vm195 = vcmp.ge.f32.partialorder %v170, 0.0
  %vm196 = vcmp.ge.f32.partialorder %v175, 0.0
  %vm197 = vcmp.ge.f32.partialorder %v180, 0.0
  %vm198 = vcmp.ge.f32.partialorder %v185, 0.0
  %vm199 = vcmp.ge.f32.partialorder %v190, 0.0
  %v200 = vmul.f32 %v160, 0.01
  %v201 = vmul.f32 %v165, 0.01
  %v202 = vmul.f32 %v170, 0.01
  %v203 = vmul.f32 %v175, 0.01
  %v204 = vmul.f32 %v180, 0.01
  %v205 = vmul.f32 %v185, 0.01
  %v206 = vmul.f32 %v190, 0.01
  %v207 = vsel %vm193, %v160, %v200
  %v208 = vsel %vm194, %v165, %v201
  %v209 = vsel %vm195, %v170, %v202
  %v210 = vsel %vm196, %v175, %v203
  %v211 = vsel %vm197, %v180, %v204
  %v212 = vsel %vm198, %v185, %v205
  %v213 = vsel %vm199, %v190, %v206
  %s214 = scalar_lea.vmem %s0, 112
  %v215 = vld [vmem:[%s214] sm:$0xff]
  %v216 = vld [vmem:[%s214 + $0x8] sm:$0xff]
  %v217 = vld [vmem:[%s214 + $0x10] sm:$0xff]
  %v218 = vld [vmem:[%s214 + $0x18] sm:$0xff]
  %v219 = vld [vmem:[%s214 + $0x20] sm:$0xff]
  %v220 = vld [vmem:[%s214 + $0x28] sm:$0xff]
  %v221 = vld [vmem:[%s214 + $0x30] sm:$0xff]
  %v222 = vld [vmem:[%s214 + $0x38] sm:$0xff]
  %v223 = vld [vmem:[%s214 + $0x40] sm:$0xff]
  %v224 = vld [vmem:[%s214 + $0x48] sm:$0xff]
  %v225 = vld [vmem:[%s214 + $0x50] sm:$0xff]
  %v226 = vld [vmem:[%s214 + $0x58] sm:$0xff]
  %v227 = vld [vmem:[%s214 + $0x60] sm:$0x3]
  %v228 = vld [vmem:[%s214 + $0x68] sm:$0x3]
  %v230 = vsel %vm67, %v216, 0
  %v233 = vsel %vm67, %v218, 0
  %v236 = vsel %vm67, %v220, 0
  %v239 = vsel %vm67, %v222, 0
  %v242 = vsel %vm67, %v224, 0
  %v245 = vsel %vm67, %v226, 0
  %v248 = vsel %vm67, %v228, 0
  %250 = vmatprep.subr.mxu0 0.0
  %251 = vmatpush1.msra.mxu0 %v29
  %252 = vmatprep.subr.mxu0 0.0
  %253 = vmatpush1.msra.mxu0 %v28
  %254 = vmatprep.subr.mxu0 0.0
  %255 = vmatpush1.msra.mxu0 %v27
  %256 = vmatprep.subr.mxu0 0.0
  %257 = vmatpush1.msra.mxu0 %v26
  %258 = vmatprep.subr.mxu0 0.0
  %259 = vmatpush1.msra.mxu0 %v25
  %260 = vmatprep.subr.mxu0 0.0
  %261 = vmatpush1.msra.mxu0 %v24
  %262 = vmatprep.subr.mxu0 0.0
  %263 = vmatpush1.msra.mxu0 %v23
  %264 = vmatprep.subr.mxu0 0.0
  %265 = vmatpush1.msra.mxu0 %v22
  %266 = vmatprep.subr.mxu0 0.0
  %267 = vmatpush1.msra.mxu0 %v21
  %268 = vmatprep.subr.mxu0 0.0
  %269 = vmatpush1.msra.mxu0 %v20
  %270 = vmatprep.subr.mxu0 0.0
  %271 = vmatpush1.msra.mxu0 %v19
  %272 = vmatprep.subr.mxu0 0.0
  %273 = vmatpush1.msra.mxu0 %v18
  %274 = vmatprep.subr.mxu0 0.0
  %275 = vmatpush1.msra.mxu0 %v17
  %276 = vmatprep.subr.mxu0 0.0
  %277 = vmatpush1.msra.mxu0 %v16
  %278 = vmatprep.subr.mxu0 0.0
  %279 = vmatpush1.msra.mxu0 %v15
  %280 = vmatprep.subr.mxu0 0.0
  %281 = vmatpush1.msra.mxu0 %v14
  %282 = vmatprep.subr.mxu0 0.0
  %283 = vmatpush2.msra.mxu0 %v91
  %284 = vmatprep.subr.mxu0 0.0
  %285 = vmatpush2.msra.mxu0 %v44
  %286 = vmatprep.subr.mxu0 0.0
  %287 = vmatpush2.msra.mxu0 %v43
  %288 = vmatprep.subr.mxu0 0.0
  %289 = vmatpush2.msra.mxu0 %v42
  %290 = vmatprep.subr.mxu0 0.0
  %291 = vmatpush2.msra.mxu0 %v41
  %292 = vmatprep.subr.mxu0 0.0
  %293 = vmatpush2.msra.mxu0 %v40
  %294 = vmatprep.subr.mxu0 0.0
  %295 = vmatpush2.msra.mxu0 %v39
  %296 = vmatprep.subr.mxu0 0.0
  %297 = vmatpush2.msra.mxu0 %v38
  %298 = vmatprep.subr.mxu0 0.0
  %299 = vmatpush2.msra.mxu0 %v37
  %300 = vmatprep.subr.mxu0 0.0
  %301 = vmatpush2.msra.mxu0 %v36
  %302 = vmatprep.subr.mxu0 0.0
  %303 = vmatpush2.msra.mxu0 %v35
  %304 = vmatprep.subr.mxu0 0.0
  %305 = vmatpush2.msra.mxu0 %v34
  %306 = vmatprep.subr.mxu0 0.0
  %307 = vmatpush2.msra.mxu0 %v33
  %308 = vmatprep.subr.mxu0 0.0
  %309 = vmatpush2.msra.mxu0 %v32
  %310 = vmatprep.subr.mxu0 0.0
  %311 = vmatpush2.msra.mxu0 %v31
  %312 = vmatprep.subr.mxu0 0.0
  %313 = vmatpush2.msra.mxu0 %v30
  %314 = vmatprep.mubr.f32.mxu0 %v230
  %315 = vmatmul.mubr.f32.gmra.mxu0 %v215
  %v316 = vpop.f32.mrf.mxu0
  %v317 = vadd.f32 %v65, %v316
  %v318 = vpop.f32.mrf.mxu0
  %319 = vmatprep.mubr.f32.mxu0 %v233
  %320 = vmatmul.mubr.f32.gmra.mxu0 %v217
  %v321 = vpop.f32.mrf.mxu0
  %v322 = vadd.f32 %v65, %v321
  %v323 = vpop.f32.mrf.mxu0
  %324 = vmatprep.mubr.f32.mxu0 %v236
  %325 = vmatmul.mubr.f32.gmra.mxu0 %v219
  %v326 = vpop.f32.mrf.mxu0
  %v327 = vadd.f32 %v65, %v326
  %v328 = vpop.f32.mrf.mxu0
  %329 = vmatprep.mubr.f32.mxu0 %v239
  %330 = vmatmul.mubr.f32.gmra.mxu0 %v221
  %v331 = vpop.f32.mrf.mxu0
  %v332 = vadd.f32 %v65, %v331
  %v333 = vpop.f32.mrf.mxu0
  %334 = vmatprep.mubr.f32.mxu0 %v242
  %335 = vmatmul.mubr.f32.gmra.mxu0 %v223
  %v336 = vpop.f32.mrf.mxu0
  %v337 = vadd.f32 %v65, %v336
  %v338 = vpop.f32.mrf.mxu0
  %339 = vmatprep.mubr.f32.mxu0 %v245
  %340 = vmatmul.mubr.f32.gmra.mxu0 %v225
  %v341 = vpop.f32.mrf.mxu0
  %v342 = vadd.f32 %v65, %v341
  %v343 = vpop.f32.mrf.mxu0
  %344 = vmatprep.mubr.f32.mxu0 %v248
  %345 = vmatmul.mubr.f32.gmra.mxu0 %v227
  %v346 = vpop.f32.mrf.mxu0
  %v347 = vadd.f32 %v65, %v346
  %v348 = vpop.f32.mrf.mxu0
  %349 = vdwg.mxu0
  %vm350 = vcmp.ge.f32.partialorder %v317, 0.0
  %vm351 = vcmp.ge.f32.partialorder %v322, 0.0
  %vm352 = vcmp.ge.f32.partialorder %v327, 0.0
  %vm353 = vcmp.ge.f32.partialorder %v332, 0.0
  %vm354 = vcmp.ge.f32.partialorder %v337, 0.0
  %vm355 = vcmp.ge.f32.partialorder %v342, 0.0
  %vm356 = vcmp.ge.f32.partialorder %v347, 0.0
  %v357 = vmul.f32 %v317, 0.01
  %v358 = vmul.f32 %v322, 0.01
  %v359 = vmul.f32 %v327, 0.01
  %v360 = vmul.f32 %v332, 0.01
  %v361 = vmul.f32 %v337, 0.01
  %v362 = vmul.f32 %v342, 0.01
  %v363 = vmul.f32 %v347, 0.01
  %v364 = vsel %vm350, %v317, %v357
  %v365 = vsel %vm351, %v322, %v358
  %v366 = vsel %vm352, %v327, %v359
  %v367 = vsel %vm353, %v332, %v360
  %v368 = vsel %vm354, %v337, %v361
  %v369 = vsel %vm355, %v342, %v362
  %v370 = vsel %vm356, %v347, %v363
  %v371 = vmax.f32 %v207, %v364
  %v372 = vmax.f32 %v208, %v365
  %v373 = vmax.f32 %v209, %v366
  %v374 = vmax.f32 %v210, %v367
  %v375 = vmax.f32 %v211, %v368
  %v376 = vmax.f32 %v212, %v369
  %v377 = vmax.f32 %v213, %v370
  %s378 = scalar_lea.vmem %s0, 224
  %v379 = vld [vmem:[%s378] sm:$0xff]
  %v380 = vld [vmem:[%s378 + $0x8] sm:$0xff]
  %v381 = vld [vmem:[%s378 + $0x10] sm:$0xff]
  %v382 = vld [vmem:[%s378 + $0x18] sm:$0xff]
  %v383 = vld [vmem:[%s378 + $0x20] sm:$0xff]
  %v384 = vld [vmem:[%s378 + $0x28] sm:$0xff]
  %v385 = vld [vmem:[%s378 + $0x30] sm:$0xff]
  %v386 = vld [vmem:[%s378 + $0x38] sm:$0xff]
  %v387 = vld [vmem:[%s378 + $0x40] sm:$0xff]
  %v388 = vld [vmem:[%s378 + $0x48] sm:$0xff]
  %v389 = vld [vmem:[%s378 + $0x50] sm:$0xff]
  %v390 = vld [vmem:[%s378 + $0x58] sm:$0xff]
  %v391 = vld [vmem:[%s378 + $0x60] sm:$0x3]
  %v392 = vld [vmem:[%s378 + $0x68] sm:$0x3]
  %v394 = vsel %vm67, %v380, 0
  %v397 = vsel %vm67, %v382, 0
  %v400 = vsel %vm67, %v384, 0
  %v403 = vsel %vm67, %v386, 0
  %v406 = vsel %vm67, %v388, 0
  %v409 = vsel %vm67, %v390, 0
  %v412 = vsel %vm67, %v392, 0
  %414 = vmatprep.subr.mxu0 0.0
  %415 = vmatpush1.msra.mxu0 %v29
  %416 = vmatprep.subr.mxu0 0.0
  %417 = vmatpush1.msra.mxu0 %v28
  %418 = vmatprep.subr.mxu0 0.0
  %419 = vmatpush1.msra.mxu0 %v27
  %420 = vmatprep.subr.mxu0 0.0
  %421 = vmatpush1.msra.mxu0 %v26
  %422 = vmatprep.subr.mxu0 0.0
  %423 = vmatpush1.msra.mxu0 %v25
  %424 = vmatprep.subr.mxu0 0.0
  %425 = vmatpush1.msra.mxu0 %v24
  %426 = vmatprep.subr.mxu0 0.0
  %427 = vmatpush1.msra.mxu0 %v23
  %428 = vmatprep.subr.mxu0 0.0
  %429 = vmatpush1.msra.mxu0 %v22
  %430 = vmatprep.subr.mxu0 0.0
  %431 = vmatpush1.msra.mxu0 %v21
  %432 = vmatprep.subr.mxu0 0.0
  %433 = vmatpush1.msra.mxu0 %v20
  %434 = vmatprep.subr.mxu0 0.0
  %435 = vmatpush1.msra.mxu0 %v19
  %436 = vmatprep.subr.mxu0 0.0
  %437 = vmatpush1.msra.mxu0 %v18
  %438 = vmatprep.subr.mxu0 0.0
  %439 = vmatpush1.msra.mxu0 %v17
  %440 = vmatprep.subr.mxu0 0.0
  %441 = vmatpush1.msra.mxu0 %v16
  %442 = vmatprep.subr.mxu0 0.0
  %443 = vmatpush1.msra.mxu0 %v15
  %444 = vmatprep.subr.mxu0 0.0
  %445 = vmatpush1.msra.mxu0 %v14
  %446 = vmatprep.subr.mxu0 0.0
  %447 = vmatpush2.msra.mxu0 %v91
  %448 = vmatprep.subr.mxu0 0.0
  %449 = vmatpush2.msra.mxu0 %v44
  %450 = vmatprep.subr.mxu0 0.0
  %451 = vmatpush2.msra.mxu0 %v43
  %452 = vmatprep.subr.mxu0 0.0
  %453 = vmatpush2.msra.mxu0 %v42
  %454 = vmatprep.subr.mxu0 0.0
  %455 = vmatpush2.msra.mxu0 %v41
  %456 = vmatprep.subr.mxu0 0.0
  %457 = vmatpush2.msra.mxu0 %v40
  %458 = vmatprep.subr.mxu0 0.0
  %459 = vmatpush2.msra.mxu0 %v39
  %460 = vmatprep.subr.mxu0 0.0
  %461 = vmatpush2.msra.mxu0 %v38
  %462 = vmatprep.subr.mxu0 0.0
  %463 = vmatpush2.msra.mxu0 %v37
  %464 = vmatprep.subr.mxu0 0.0
  %465 = vmatpush2.msra.mxu0 %v36
  %466 = vmatprep.subr.mxu0 0.0
  %467 = vmatpush2.msra.mxu0 %v35
  %468 = vmatprep.subr.mxu0 0.0
  %469 = vmatpush2.msra.mxu0 %v34
  %470 = vmatprep.subr.mxu0 0.0
  %471 = vmatpush2.msra.mxu0 %v33
  %472 = vmatprep.subr.mxu0 0.0
  %473 = vmatpush2.msra.mxu0 %v32
  %474 = vmatprep.subr.mxu0 0.0
  %475 = vmatpush2.msra.mxu0 %v31
  %476 = vmatprep.subr.mxu0 0.0
  %477 = vmatpush2.msra.mxu0 %v30
  %478 = vmatprep.mubr.f32.mxu0 %v394
  %479 = vmatmul.mubr.f32.gmra.mxu0 %v379
  %v480 = vpop.f32.mrf.mxu0
  %v481 = vadd.f32 %v65, %v480
  %v482 = vpop.f32.mrf.mxu0
  %483 = vmatprep.mubr.f32.mxu0 %v397
  %484 = vmatmul.mubr.f32.gmra.mxu0 %v381
  %v485 = vpop.f32.mrf.mxu0
  %v486 = vadd.f32 %v65, %v485
  %v487 = vpop.f32.mrf.mxu0
  %488 = vmatprep.mubr.f32.mxu0 %v400
  %489 = vmatmul.mubr.f32.gmra.mxu0 %v383
  %v490 = vpop.f32.mrf.mxu0
  %v491 = vadd.f32 %v65, %v490
  %v492 = vpop.f32.mrf.mxu0
  %493 = vmatprep.mubr.f32.mxu0 %v403
  %494 = vmatmul.mubr.f32.gmra.mxu0 %v385
  %v495 = vpop.f32.mrf.mxu0
  %v496 = vadd.f32 %v65, %v495
  %v497 = vpop.f32.mrf.mxu0
  %498 = vmatprep.mubr.f32.mxu0 %v406
  %499 = vmatmul.mubr.f32.gmra.mxu0 %v387
  %v500 = vpop.f32.mrf.mxu0
  %v501 = vadd.f32 %v65, %v500
  %v502 = vpop.f32.mrf.mxu0
  %503 = vmatprep.mubr.f32.mxu0 %v409
  %504 = vmatmul.mubr.f32.gmra.mxu0 %v389
  %v505 = vpop.f32.mrf.mxu0
  %v506 = vadd.f32 %v65, %v505
  %v507 = vpop.f32.mrf.mxu0
  %508 = vmatprep.mubr.f32.mxu0 %v412
  %509 = vmatmul.mubr.f32.gmra.mxu0 %v391
  %v510 = vpop.f32.mrf.mxu0
  %v511 = vadd.f32 %v65, %v510
  %v512 = vpop.f32.mrf.mxu0
  %513 = vdwg.mxu0
  %vm514 = vcmp.ge.f32.partialorder %v481, 0.0
  %vm515 = vcmp.ge.f32.partialorder %v486, 0.0
  %vm516 = vcmp.ge.f32.partialorder %v491, 0.0
  %vm517 = vcmp.ge.f32.partialorder %v496, 0.0
  %vm518 = vcmp.ge.f32.partialorder %v501, 0.0
  %vm519 = vcmp.ge.f32.partialorder %v506, 0.0
  %vm520 = vcmp.ge.f32.partialorder %v511, 0.0
  %v521 = vmul.f32 %v481, 0.01
  %v522 = vmul.f32 %v486, 0.01
  %v523 = vmul.f32 %v491, 0.01
  %v524 = vmul.f32 %v496, 0.01
  %v525 = vmul.f32 %v501, 0.01
  %v526 = vmul.f32 %v506, 0.01
  %v527 = vmul.f32 %v511, 0.01
  %v528 = vsel %vm514, %v481, %v521
  %v529 = vsel %vm515, %v486, %v522
  %v530 = vsel %vm516, %v491, %v523
  %v531 = vsel %vm517, %v496, %v524
  %v532 = vsel %vm518, %v501, %v525
  %v533 = vsel %vm519, %v506, %v526
  %v534 = vsel %vm520, %v511, %v527
  %v535 = vmax.f32 %v371, %v528
  %v536 = vmax.f32 %v372, %v529
  %v537 = vmax.f32 %v373, %v530
  %v538 = vmax.f32 %v374, %v531
  %v539 = vmax.f32 %v375, %v532
  %v540 = vmax.f32 %v376, %v533
  %v541 = vmax.f32 %v377, %v534
  %s542 = scalar_lea.vmem %s0, 336
  %v543 = vld [vmem:[%s542] sm:$0xff]
  %v544 = vld [vmem:[%s542 + $0x8] sm:$0xff]
  %v545 = vld [vmem:[%s542 + $0x10] sm:$0xff]
  %v546 = vld [vmem:[%s542 + $0x18] sm:$0xff]
  %v547 = vld [vmem:[%s542 + $0x20] sm:$0xff]
  %v548 = vld [vmem:[%s542 + $0x28] sm:$0xff]
  %v549 = vld [vmem:[%s542 + $0x30] sm:$0xff]
  %v550 = vld [vmem:[%s542 + $0x38] sm:$0xff]
  %v551 = vld [vmem:[%s542 + $0x40] sm:$0xff]
  %v552 = vld [vmem:[%s542 + $0x48] sm:$0xff]
  %v553 = vld [vmem:[%s542 + $0x50] sm:$0xff]
  %v554 = vld [vmem:[%s542 + $0x58] sm:$0xff]
  %v555 = vld [vmem:[%s542 + $0x60] sm:$0x3]
  %v556 = vld [vmem:[%s542 + $0x68] sm:$0x3]
  %v558 = vsel %vm67, %v544, 0
  %v561 = vsel %vm67, %v546, 0
  %v564 = vsel %vm67, %v548, 0
  %v567 = vsel %vm67, %v550, 0
  %v570 = vsel %vm67, %v552, 0
  %v573 = vsel %vm67, %v554, 0
  %v576 = vsel %vm67, %v556, 0
  %578 = vmatprep.subr.mxu0 0.0
  %579 = vmatpush1.msra.mxu0 %v29
  %580 = vmatprep.subr.mxu0 0.0
  %581 = vmatpush1.msra.mxu0 %v28
  %582 = vmatprep.subr.mxu0 0.0
  %583 = vmatpush1.msra.mxu0 %v27
  %584 = vmatprep.subr.mxu0 0.0
  %585 = vmatpush1.msra.mxu0 %v26
  %586 = vmatprep.subr.mxu0 0.0
  %587 = vmatpush1.msra.mxu0 %v25
  %588 = vmatprep.subr.mxu0 0.0
  %589 = vmatpush1.msra.mxu0 %v24
  %590 = vmatprep.subr.mxu0 0.0
  %591 = vmatpush1.msra.mxu0 %v23
  %592 = vmatprep.subr.mxu0 0.0
  %593 = vmatpush1.msra.mxu0 %v22
  %594 = vmatprep.subr.mxu0 0.0
  %595 = vmatpush1.msra.mxu0 %v21
  %596 = vmatprep.subr.mxu0 0.0
  %597 = vmatpush1.msra.mxu0 %v20
  %598 = vmatprep.subr.mxu0 0.0
  %599 = vmatpush1.msra.mxu0 %v19
  %600 = vmatprep.subr.mxu0 0.0
  %601 = vmatpush1.msra.mxu0 %v18
  %602 = vmatprep.subr.mxu0 0.0
  %603 = vmatpush1.msra.mxu0 %v17
  %604 = vmatprep.subr.mxu0 0.0
  %605 = vmatpush1.msra.mxu0 %v16
  %606 = vmatprep.subr.mxu0 0.0
  %607 = vmatpush1.msra.mxu0 %v15
  %608 = vmatprep.subr.mxu0 0.0
  %609 = vmatpush1.msra.mxu0 %v14
  %610 = vmatprep.subr.mxu0 0.0
  %611 = vmatpush2.msra.mxu0 %v91
  %612 = vmatprep.subr.mxu0 0.0
  %613 = vmatpush2.msra.mxu0 %v44
  %614 = vmatprep.subr.mxu0 0.0
  %615 = vmatpush2.msra.mxu0 %v43
  %616 = vmatprep.subr.mxu0 0.0
  %617 = vmatpush2.msra.mxu0 %v42
  %618 = vmatprep.subr.mxu0 0.0
  %619 = vmatpush2.msra.mxu0 %v41
  %620 = vmatprep.subr.mxu0 0.0
  %621 = vmatpush2.msra.mxu0 %v40
  %622 = vmatprep.subr.mxu0 0.0
  %623 = vmatpush2.msra.mxu0 %v39
  %624 = vmatprep.subr.mxu0 0.0
  %625 = vmatpush2.msra.mxu0 %v38
  %626 = vmatprep.subr.mxu0 0.0
  %627 = vmatpush2.msra.mxu0 %v37
  %628 = vmatprep.subr.mxu0 0.0
  %629 = vmatpush2.msra.mxu0 %v36
  %630 = vmatprep.subr.mxu0 0.0
  %631 = vmatpush2.msra.mxu0 %v35
  %632 = vmatprep.subr.mxu0 0.0
  %633 = vmatpush2.msra.mxu0 %v34
  %634 = vmatprep.subr.mxu0 0.0
  %635 = vmatpush2.msra.mxu0 %v33
  %636 = vmatprep.subr.mxu0 0.0
  %637 = vmatpush2.msra.mxu0 %v32
  %638 = vmatprep.subr.mxu0 0.0
  %639 = vmatpush2.msra.mxu0 %v31
  %640 = vmatprep.subr.mxu0 0.0
  %641 = vmatpush2.msra.mxu0 %v30
  %642 = vmatprep.mubr.f32.mxu0 %v558
  %643 = vmatmul.mubr.f32.gmra.mxu0 %v543
  %v644 = vpop.f32.mrf.mxu0
  %v645 = vadd.f32 %v65, %v644
  %v646 = vpop.f32.mrf.mxu0
  %647 = vmatprep.mubr.f32.mxu0 %v561
  %648 = vmatmul.mubr.f32.gmra.mxu0 %v545
  %v649 = vpop.f32.mrf.mxu0
  %v650 = vadd.f32 %v65, %v649
  %v651 = vpop.f32.mrf.mxu0
  %652 = vmatprep.mubr.f32.mxu0 %v564
  %653 = vmatmul.mubr.f32.gmra.mxu0 %v547
  %v654 = vpop.f32.mrf.mxu0
  %v655 = vadd.f32 %v65, %v654
  %v656 = vpop.f32.mrf.mxu0
  %657 = vmatprep.mubr.f32.mxu0 %v567
  %658 = vmatmul.mubr.f32.gmra.mxu0 %v549
  %v659 = vpop.f32.mrf.mxu0
  %v660 = vadd.f32 %v65, %v659
  %v661 = vpop.f32.mrf.mxu0
  %662 = vmatprep.mubr.f32.mxu0 %v570
  %663 = vmatmul.mubr.f32.gmra.mxu0 %v551
  %v664 = vpop.f32.mrf.mxu0
  %v665 = vadd.f32 %v65, %v664
  %v666 = vpop.f32.mrf.mxu0
  %667 = vmatprep.mubr.f32.mxu0 %v573
  %668 = vmatmul.mubr.f32.gmra.mxu0 %v553
  %v669 = vpop.f32.mrf.mxu0
  %v670 = vadd.f32 %v65, %v669
  %v671 = vpop.f32.mrf.mxu0
  %672 = vmatprep.mubr.f32.mxu0 %v576
  %673 = vmatmul.mubr.f32.gmra.mxu0 %v555
  %v674 = vpop.f32.mrf.mxu0
  %v675 = vadd.f32 %v65, %v674
  %v676 = vpop.f32.mrf.mxu0
  %677 = vdwg.mxu0
  %vm678 = vcmp.ge.f32.partialorder %v645, 0.0
  %vm679 = vcmp.ge.f32.partialorder %v650, 0.0
  %vm680 = vcmp.ge.f32.partialorder %v655, 0.0
  %vm681 = vcmp.ge.f32.partialorder %v660, 0.0
  %vm682 = vcmp.ge.f32.partialorder %v665, 0.0
  %vm683 = vcmp.ge.f32.partialorder %v670, 0.0
  %vm684 = vcmp.ge.f32.partialorder %v675, 0.0
  %v685 = vmul.f32 %v645, 0.01
  %v686 = vmul.f32 %v650, 0.01
  %v687 = vmul.f32 %v655, 0.01
  %v688 = vmul.f32 %v660, 0.01
  %v689 = vmul.f32 %v665, 0.01
  %v690 = vmul.f32 %v670, 0.01
  %v691 = vmul.f32 %v675, 0.01
  %v692 = vsel %vm678, %v645, %v685
  %v693 = vsel %vm679, %v650, %v686
  %v694 = vsel %vm680, %v655, %v687
  %v695 = vsel %vm681, %v660, %v688
  %v696 = vsel %vm682, %v665, %v689
  %v697 = vsel %vm683, %v670, %v690
  %v698 = vsel %vm684, %v675, %v691
  %v699 = vmax.f32 %v535, %v692
  %v700 = vmax.f32 %v536, %v693
  %v701 = vmax.f32 %v537, %v694
  %v702 = vmax.f32 %v538, %v695
  %v703 = vmax.f32 %v539, %v696
  %v704 = vmax.f32 %v540, %v697
  %v705 = vmax.f32 %v541, %v698
  %vm706 = vcmask 162816
  %707 = vst.msk [vmem:[%s3] sm:$0xff] %vm706, %v699
  %708 = vst.msk [vmem:[%s3 + $0x8] sm:$0xff] %vm706, %v700
  %709 = vst.msk [vmem:[%s3 + $0x10] sm:$0xff] %vm706, %v701
  %710 = vst.msk [vmem:[%s3 + $0x18] sm:$0xff] %vm706, %v702
  %711 = vst.msk [vmem:[%s3 + $0x20] sm:$0xff] %vm706, %v703
  %712 = vst.msk [vmem:[%s3 + $0x28] sm:$0xff] %vm706, %v704
  %vm713 = vcmask 156672
  %714 = vst.msk [vmem:[%s3 + $0x30] sm:$0x3] %vm713, %v705
  // Predicated region
  $region14: #{forward.3} parent=0 // pred_check
    _
  $region15: #{forward.3} parent=0 // pred_check_branch
    %716 = sbr.rel (0) target = $region17
  $region16: #{forward.3} parent=0 // pred_region
    _
  $region17: #{forward.3} parent=0 // pred_fallthru
    _
  // Predicated region
  $region18: #{forward.3} parent=0 // pred_check
    _
  $region19: #{forward.3} parent=0 // pred_check_branch
    %718 = sbr.rel (0) target = $region21
  $region20: #{forward.3} parent=0 // pred_region
    _
  $region21: #{forward.3} parent=0 // pred_fallthru
    _

</llo_original>
